<compile_context>
chip_gen: v5e
topology: v5e:2x2
jax: 0.10.0
libtpu: 0.0.40
codegen_flags: <defaults>
</compile_context>

<pallas_src>
import jax
import jax.numpy as jnp
from jax import lax
from jax.experimental import pallas as pl
from jax.experimental.pallas import tpu as pltpu

RELU_SLOPE = 0.2
MID_C = 128


def _round_up(x, m):
    return (x + m - 1) // m * m


def _leaky(v):
    return jnp.where(v >= 0, v, RELU_SLOPE * v)


def _vmem_capacity_bytes():
    # v5e/v6e: 128 MiB, v7x: 64 MiB.  Conservative fallback if the query fails.
    try:
        return int(pltpu.get_tpu_info().vmem_capacity_bytes)
    except Exception:
        return 64 * 1024 * 1024


def _pack_w3(w9, center_first=False):
    """(9, Ci, Co) conv3x3 weights (k = 3*dy + dx) -> (3, 3*Ci, Co) bf16 with the
    three horizontal taps of each kernel row fused into the MXU K dim.

    Channel-chunk order within a row group:
      plain        : [dx=0, dx=1, dx=2]  (matches in-kernel [roll+1, A, roll-1])
      center_first : [dx=1, dx=0, dx=2]  (matches wrapper im2col [x, x_l, x_r])
    """
    _, ci, co = w9.shape
    w = w9.reshape(3, 3, ci, co)
    if center_first:
        w = w[:, jnp.array([1, 0, 2])]
    return w.reshape(3, 3 * ci, co).astype(jnp.bfloat16)


def _pick_strip(N, H, W, Wq, nb, cin3, chans, cb, im2col, budget):
    """Largest divisor-of-H row strip whose conservative VMEM footprint fits."""
    P = 2 * nb
    wbytes = 2 * sum((9 * ci * co + 9 * co * co + 2 * ci * co) * 2
                     for ci, co in chans)

    def footprint(th):
        b = wbytes
        b += 3 * 2 * th * W * cin3 * 2            # x prev/cur/next (2x buffered)
        b += 2 * th * W * cb * 4                  # out block (2x buffered, f32)
        b += (th + 2 * P) * Wq * cin3 * 2         # assembled halo strip
        p = P
        for i, (ci, co) in enumerate(chans):
            r_in, r1, r2 = th + 2 * p, th + 2 * p - 2, th + 2 * p - 4
            if not (i == 0 and im2col):
                b += r_in * Wq * 3 * ci * 2       # conv1 im2col slab (bf16)
            b += r1 * Wq * co * 4                 # conv1 f32 accumulator
            b += r1 * Wq * co * 2                 # h1 (bf16)
            b += r1 * Wq * 3 * co * 2             # conv2 im2col slab (bf16)
            b += r2 * Wq * co * 8                 # conv2 acc + residual (f32)
            if i < nb - 1:
                b += r2 * Wq * co * 2             # next block input (bf16)
            p -= 2
        return b

    cands = [d for d in range(H, 0, -1) if H % d == 0 and d >= min(P, H)]
    th = next((d for d in cands if footprint(d) <= budget), cands[-1])
    ns = H // th
    if N * ns < 2:                                # keep both v7x TensorCores busy
        for d in cands:
            if d < H and footprint(d) <= budget:
                th, ns = d, H // d
                break
    return th, ns


# ----------------------------------------------------------------------------
# Fused kernel
# ----------------------------------------------------------------------------
def _fused_skip_blocks_call(x_in, wargs, *, H, W, Wq, TH, NS, nb, im2col, in_c,
                            cb, vmem_limit):
    N = x_in.shape[0]
    cin3 = x_in.shape[-1]
    P = 2 * nb                        # input halo rows per side
    has_halo = NS > 1

    def kernel(*refs):
        if has_halo:
            xprev, xcur, xnext = refs[0], refs[1], refs[2]
            woff = 3
        else:
            xcur = refs[0]
            woff = 1
        wrefs = refs[woff:woff + 6 * nb]
        out_ref = refs[woff + 6 * nb]

        s = pl.program_id(1)
        r0 = s * TH

        # ---- assemble the (TH + 2P)-row halo strip; zero outside the image,
        #      zero pad columns [W:Wq) (needed for the width-roll wraparound).
        mid = xcur[0]
        if has_halo:
            gate_t = (s > 0).astype(mid.dtype)
            gate_b = (s < NS - 1).astype(mid.dtype)
            top = xprev[0][TH - P:TH] * gate_t
            bot = xnext[0][0:P] * gate_b
        else:
            top = jnp.zeros((P, W, cin3), mid.dtype)
            bot = jnp.zeros((P, W, cin3), mid.dtype)
        xa = jnp.concatenate([top, mid, bot], axis=0)
        xa = jnp.concatenate(
            [xa, jnp.zeros((TH + 2 * P, Wq - W, cin3), xa.dtype)], axis=1)

        def conv3(src, oh, w_ref, b_ref):
            # src is an im2col slab (rows, Wq, K); one matmul per vertical tap.
            k = src.shape[-1]
            co = w_ref.shape[-1]
            acc = None
            for dy in range(3):
                lhs = src[dy:dy + oh].reshape(oh * Wq, k)
                y = jnp.dot(lhs, w_ref[dy], preferred_element_type=jnp.float32)
                acc = y if acc is None else acc + y
            return (acc + b_ref[...]).reshape(oh, Wq, co)

        def hrolls(a):
            # channel chunks [dx=0 (left), dx=1 (center), dx=2 (right)]; the
            # roll wraparound only lands in the zero pad columns [W:Wq).
            # TODO(synk): switch to pltpu.roll (XLU) once its shift convention
            # is verified on-device; rolls are already hoisted to 2 per conv.
            return jnp.concatenate(
                [jnp.roll(a, 1, axis=1), a, jnp.roll(a, -1, axis=1)], axis=-1)

        def keep_mask(oh, poff):
            rg = (r0 - poff) + lax.broadcasted_iota(jnp.int32, (oh, Wq, 1), 0)
            col = lax.broadcasted_iota(jnp.int32, (oh, Wq, 1), 1)
            return jnp.logical_and(jnp.logical_and(rg >= 0, rg < H), col < W)

        a_in = xa                      # current block input (bf16, zero padded)
        p = P
        for b in range(nb):
            w1, b1, w2, b2, wid, bid = wrefs[6 * b:6 * b + 6]
            co = w2.shape[-1]
            oh1 = TH + 2 * p - 2       # conv1 extended output rows
            oh2 = TH + 2 * p - 4       # block output rows

            src1 = a_in if (b == 0 and im2col) else hrolls(a_in)
            a1 = conv3(src1, oh1, w1, b1)
            # zero outside the image so conv1's output doubles as conv2 padding
            h1 = jnp.where(keep_mask(oh1, p - 1), _leaky(a1), 0.0
                           ).astype(jnp.bfloat16)

            a2 = _leaky(conv3(hrolls(h1), oh2, w2, b2))

            # 1x1 identity conv (+ the SkipBlocks 1x1 shortcut K-fused into the
            # same matmul on the last block).
            a_c = (a_in[2:2 + oh2, :, :in_c] if (b == 0 and im2col)
                   else a_in[2:2 + oh2])
            if b == nb - 1:
                x_c = xa[P:P + TH, :, :in_c] if im2col else xa[P:P + TH]
                lhs = jnp.concatenate([a_c, x_c], axis=-1)
            else:
                lhs = a_c
            ident = jnp.dot(lhs.reshape(oh2 * Wq, lhs.shape[-1]), wid[...],
                            preferred_element_type=jnp.float32) + bid[...]
            res = a2 + ident.reshape(oh2, Wq, co)

            if b < nb - 1:
                a_in = jnp.where(keep_mask(oh2, p - 2), res, 0.0
                                 ).astype(jnp.bfloat16)
                p -= 2
            else:
                # TODO(synk): repack to a lane-dense (W*cb) store for cb << 128
                # once Mosaic's minor-dim reshape is verified; the fused kernel
                # is MXU-bound so this store sits off the critical path.
                out_ref[0] = res[:, :W, :].astype(out_ref.dtype)

    def x_spec(imap):
        return pl.BlockSpec((1, TH, W, cin3), imap)

    in_specs, args = [], []
    if has_halo:
        in_specs += [
            x_spec(lambda n, s: (n, jnp.maximum(s - 1, 0), 0, 0)),
            x_spec(lambda n, s: (n, s, 0, 0)),
            x_spec(lambda n, s: (n, jnp.minimum(s + 1, NS - 1), 0, 0)),
        ]
        args += [x_in, x_in, x_in]
    else:
        in_specs.append(x_spec(lambda n, s: (n, s, 0, 0)))
        args.append(x_in)
    for w in wargs:
        in_specs.append(pl.BlockSpec(w.shape, lambda n, s, _r=w.ndim: (0,) * _r))
        args.append(w)

    return pl.pallas_call(
        kernel,
        out_shape=jax.ShapeDtypeStruct((N, H, W, cb), jnp.float32),
        grid_spec=pltpu.PrefetchScalarGridSpec(
            num_scalar_prefetch=0,
            grid=(N, NS),
            in_specs=in_specs,
            out_specs=pl.BlockSpec((1, TH, W, cb), lambda n, s: (n, s, 0, 0)),
        ),
        compiler_params=pltpu.CompilerParams(
            dimension_semantics=("parallel", "parallel"),
            vmem_limit_bytes=vmem_limit,
        ),
    )(*args)


# ----------------------------------------------------------------------------
# Wrapper
# ----------------------------------------------------------------------------
def skip_blocks_forward(x_nchw, params):
    """SkipBlocks.forward: x (N, Cin, H, W) -> (N, Cout, H, W)."""
    x = jnp.transpose(x_nchw, (0, 2, 3, 1)).astype(jnp.bfloat16)   # NCHW -> NHWC
    N, H, W, in_c = x.shape
    blocks = params["blocks"]
    nb = len(blocks)
    cb = blocks[-1]["w2"].shape[-1]

    # Wrapper-side horizontal im2col of the (small-channel) input: block 0 then
    # needs no in-kernel width rolls / concatenation.
    im2col = in_c <= 16
    if im2col:
        xl = jnp.pad(x[:, :, :-1, :], ((0, 0), (0, 0), (1, 0), (0, 0)))
        xr = jnp.pad(x[:, :, 1:, :], ((0, 0), (0, 0), (0, 1), (0, 0)))
        x_in = jnp.concatenate([x, xl, xr], axis=-1)   # chunks [center, dx0, dx2]
    else:
        x_in = x
    cin3 = x_in.shape[-1]

    Wq = _round_up(W + 1, 8)            # >= 1 zero pad column for the rolls
    chans = [(bp["w1"].shape[1], bp["w1"].shape[2]) for bp in blocks]
    cap = _vmem_capacity_bytes()
    vmem_limit = min(int(cap * 0.75), 100 * 1024 * 1024)
    budget = int(vmem_limit * 0.45)
    TH, NS = _pick_strip(N, H, W, Wq, nb, cin3, chans, cb, im2col, budget)

    wargs = []
    for i, bp in enumerate(blocks):
        last = i == nb - 1
        w1 = _pack_w3(bp["w1"], center_first=(i == 0 and im2col))
        w2 = _pack_w3(bp["w2"])
        wid = bp["wid"].astype(jnp.bfloat16)
        bid = bp["bid"].astype(jnp.float32)
        if last:   # fuse the SkipBlocks shortcut into the identity 1x1 matmul
            wid = jnp.concatenate([wid, params["wsc"].astype(jnp.bfloat16)], 0)
            bid = bid + params["bsc"].astype(jnp.float32)
        wargs += [w1, bp["b1"].astype(jnp.float32),
                  w2, bp["b2"].astype(jnp.float32), wid, bid]

    out = _fused_skip_blocks_call(
        x_in, wargs, H=H, W=W, Wq=Wq, TH=TH, NS=NS, nb=nb, im2col=im2col,
        in_c=in_c, cb=cb, vmem_limit=vmem_limit)
    return jnp.transpose(out, (0, 3, 1, 2))            # NHWC -> NCHW


# ----------------------------------------------------------------------------
# Deterministic parameter init (matches the module's __init__ shapes)
# ----------------------------------------------------------------------------
def init_params(key, in_c, out_c, repeat_num=1, mid_c=MID_C):
    chans = [(in_c, mid_c)]
    chans += [(mid_c, mid_c)] * max(repeat_num - 2, 0)
    chans += [(mid_c, out_c)]

    keys = list(jax.random.split(key, len(chans) * 6 + 2))
    kit = iter(keys)

    def conv_w(k, kk, cin, cout):
        scale = 1.0 / jnp.sqrt(kk * kk * cin)
        shape = (kk * kk, cin, cout) if kk > 1 else (cin, cout)
        return (jax.random.normal(k, shape, jnp.float32) * scale)

    def bias(k, cout):
        return jax.random.normal(k, (1, cout), jnp.float32) * 0.01

    blocks = []
    for cin, cout in chans:
        blocks.append(dict(
            w1=conv_w(next(kit), 3, cin, cout), b1=bias(next(kit), cout),
            w2=conv_w(next(kit), 3, cout, cout), b2=bias(next(kit), cout),
            wid=conv_w(next(kit), 1, cin, cout), bid=bias(next(kit), cout),
        ))
    wsc = conv_w(next(kit), 1, in_c, out_c)
    bsc = bias(next(kit), out_c)
    return dict(blocks=blocks, wsc=wsc, bsc=bsc)


# ----------------------------------------------------------------------------
# Pure-JAX reference (for verification)
# ----------------------------------------------------------------------------
def _conv3_ref(x, w9, b):
    w = w9.reshape(3, 3, w9.shape[1], w9.shape[2])
    y = jax.lax.conv_general_dilated(
        x, w, (1, 1), ((1, 1), (1, 1)),
        dimension_numbers=("NHWC", "HWIO", "NHWC"))
    return y + b.reshape(1, 1, 1, -1)


def _block_ref(x, p):
    h = _leaky(_conv3_ref(x, p["w1"], p["b1"]))
    h = _leaky(_conv3_ref(h, p["w2"], p["b2"]))
    ident = jnp.einsum("nhwc,cd->nhwd", x, p["wid"]) + p["bid"].reshape(1, 1, 1, -1)
    return h + ident


def skip_blocks_ref(x_nchw, params):
    x = jnp.transpose(x_nchw, (0, 2, 3, 1))
    sc = jnp.einsum("nhwc,cd->nhwd", x, params["wsc"]) + params["bsc"].reshape(1, 1, 1, -1)
    h = x
    for bp in params["blocks"]:
        h = _block_ref(h, bp)
    return jnp.transpose(h + sc, (0, 3, 1, 2))


if __name__ == "__main__":
    key = jax.random.PRNGKey(0)
    kx, kp = jax.random.split(key)

    # Small shapes; the 128 mid channels are fixed by the module itself.
    N, Cin, Cout, H, W = 2, 8, 8, 16, 16
    x = jax.random.normal(kx, (N, Cin, H, W), jnp.float32)
    params = init_params(kp, Cin, Cout, repeat_num=1)

    fwd = jax.jit(skip_blocks_forward)
    out = jax.block_until_ready(fwd(x, params))
    assert out.shape == (N, Cout, H, W), out.shape

    # The kernel uses bf16 MXU operands with f32 accumulation; compare against
    # an equivalently quantized pure-JAX reference.
    q = lambda a: a.astype(jnp.bfloat16).astype(jnp.float32)
    params_q = jax.tree_util.tree_map(q, params)
    ref = skip_blocks_ref(q(x), params_q)
    err = float(jnp.max(jnp.abs(out - ref)))
    assert err < 5e-2, f"mismatch vs reference, max abs err = {err}"

    print("KERNEL_OK")
</pallas_src>

<mosaic_0001>
module attributes {stable_mosaic.version = 11 : i64} {
  func.func @kernel(%arg0: i32, %arg1: i32, %arg2: memref<1x16x16x24xbf16, #tpu.memory_space<vmem>>, %arg3: memref<3x24x128xbf16, #tpu.memory_space<vmem>>, %arg4: memref<1x128xf32, #tpu.memory_space<vmem>>, %arg5: memref<3x384x128xbf16, #tpu.memory_space<vmem>>, %arg6: memref<1x128xf32, #tpu.memory_space<vmem>>, %arg7: memref<8x128xbf16, #tpu.memory_space<vmem>>, %arg8: memref<1x128xf32, #tpu.memory_space<vmem>>, %arg9: memref<3x384x8xbf16, #tpu.memory_space<vmem>>, %arg10: memref<1x8xf32, #tpu.memory_space<vmem>>, %arg11: memref<3x24x8xbf16, #tpu.memory_space<vmem>>, %arg12: memref<1x8xf32, #tpu.memory_space<vmem>>, %arg13: memref<136x8xbf16, #tpu.memory_space<vmem>>, %arg14: memref<1x8xf32, #tpu.memory_space<vmem>>, %arg15: memref<1x16x16x8xf32, #tpu.memory_space<vmem>>) attributes {dimension_semantics = [#tpu.dimension_semantics<parallel>, #tpu.dimension_semantics<parallel>], iteration_bounds = array<i64: 2, 1>, scalar_prefetch = 0 : i64, scratch_operands = 0 : i64, tpu.core_type = #tpu.core_type<tc>, window_params = [{transform_indices = @transform_0, window_bounds = array<i64: 1, 16, 16, 24>}, {pipeline_mode = #tpu.pipeline_mode<synchronous>, transform_indices = @transform_1, window_bounds = array<i64: 3, 24, 128>}, {pipeline_mode = #tpu.pipeline_mode<synchronous>, transform_indices = @transform_2, window_bounds = array<i64: 1, 128>}, {pipeline_mode = #tpu.pipeline_mode<synchronous>, transform_indices = @transform_3, window_bounds = array<i64: 3, 384, 128>}, {pipeline_mode = #tpu.pipeline_mode<synchronous>, transform_indices = @transform_4, window_bounds = array<i64: 1, 128>}, {pipeline_mode = #tpu.pipeline_mode<synchronous>, transform_indices = @transform_5, window_bounds = array<i64: 8, 128>}, {pipeline_mode = #tpu.pipeline_mode<synchronous>, transform_indices = @transform_6, window_bounds = array<i64: 1, 128>}, {pipeline_mode = #tpu.pipeline_mode<synchronous>, transform_indices = @transform_7, window_bounds = array<i64: 3, 384, 8>}, {pipeline_mode = #tpu.pipeline_mode<synchronous>, transform_indices = @transform_8, window_bounds = array<i64: 1, 8>}, {pipeline_mode = #tpu.pipeline_mode<synchronous>, transform_indices = @transform_9, window_bounds = array<i64: 3, 24, 8>}, {pipeline_mode = #tpu.pipeline_mode<synchronous>, transform_indices = @transform_10, window_bounds = array<i64: 1, 8>}, {pipeline_mode = #tpu.pipeline_mode<synchronous>, transform_indices = @transform_11, window_bounds = array<i64: 136, 8>}, {pipeline_mode = #tpu.pipeline_mode<synchronous>, transform_indices = @transform_12, window_bounds = array<i64: 1, 8>}, {transform_indices = @transform_13, window_bounds = array<i64: 1, 16, 16, 8>}]} {
    %c16_i32 = arith.constant 16 : i32
    %0 = arith.muli %arg1, %c16_i32 : i32
    %c0 = arith.constant 0 : index
    %c0_0 = arith.constant 0 : index
    %c0_1 = arith.constant 0 : index
    %c0_2 = arith.constant 0 : index
    %1 = vector.load %arg2[%c0, %c0_0, %c0_1, %c0_2] : memref<1x16x16x24xbf16, #tpu.memory_space<vmem>>, vector<1x16x16x24xbf16>
    %2 = vector.shape_cast %1 : vector<1x16x16x24xbf16> to vector<16x16x24xbf16>
    %cst = arith.constant 0.000000e+00 : bf16
    %3 = vector.broadcast %cst : bf16 to vector<4x16x24xbf16>
    %cst_3 = arith.constant 0.000000e+00 : bf16
    %4 = vector.broadcast %cst_3 : bf16 to vector<4x16x24xbf16>
    %5 = tpu.concatenate %3, %2, %4 in 0 : vector<4x16x24xbf16>, vector<16x16x24xbf16>, vector<4x16x24xbf16> -> vector<24x16x24xbf16>
    %cst_4 = arith.constant 0.000000e+00 : bf16
    %6 = vector.broadcast %cst_4 : bf16 to vector<24x8x24xbf16>
    %7 = tpu.concatenate %5, %6 in 1 : vector<24x16x24xbf16>, vector<24x8x24xbf16> -> vector<24x24x24xbf16>
    %8 = vector.extract_strided_slice %7 {offsets = [0, 0, 0], sizes = [22, 24, 24], strides = [1, 1, 1]} : vector<24x24x24xbf16> to vector<22x24x24xbf16>
    %9 = vector.shape_cast %8 : vector<22x24x24xbf16> to vector<528x24xbf16>
    %c0_5 = arith.constant 0 : index
    %c0_6 = arith.constant 0 : index
    %c0_7 = arith.constant 0 : index
    %10 = vector.load %arg3[%c0_5, %c0_6, %c0_7] : memref<3x24x128xbf16, #tpu.memory_space<vmem>>, vector<1x24x128xbf16>
    %11 = vector.shape_cast %10 : vector<1x24x128xbf16> to vector<24x128xbf16>
    %cst_8 = arith.constant dense<0.000000e+00> : vector<528x128xf32>
    %12 = tpu.matmul %9, %11, %cst_8 {dimension_numbers = #tpu.dot_dimension_numbers<[1], [0], [0], [1], [0, 0, 1, 1], [], []>} : vector<528x24xbf16>, vector<24x128xbf16>, vector<528x128xf32> -> vector<528x128xf32>
    %13 = vector.extract_strided_slice %7 {offsets = [1, 0, 0], sizes = [22, 24, 24], strides = [1, 1, 1]} : vector<24x24x24xbf16> to vector<22x24x24xbf16>
    %14 = vector.shape_cast %13 : vector<22x24x24xbf16> to vector<528x24xbf16>
    %c1 = arith.constant 1 : index
    %c0_9 = arith.constant 0 : index
    %c0_10 = arith.constant 0 : index
    %15 = vector.load %arg3[%c1, %c0_9, %c0_10] : memref<3x24x128xbf16, #tpu.memory_space<vmem>>, vector<1x24x128xbf16>
    %16 = vector.shape_cast %15 : vector<1x24x128xbf16> to vector<24x128xbf16>
    %cst_11 = arith.constant dense<0.000000e+00> : vector<528x128xf32>
    %17 = tpu.matmul %14, %16, %cst_11 {dimension_numbers = #tpu.dot_dimension_numbers<[1], [0], [0], [1], [0, 0, 1, 1], [], []>} : vector<528x24xbf16>, vector<24x128xbf16>, vector<528x128xf32> -> vector<528x128xf32>
    %18 = arith.addf %12, %17 : vector<528x128xf32>
    %19 = vector.extract_strided_slice %7 {offsets = [2, 0, 0], sizes = [22, 24, 24], strides = [1, 1, 1]} : vector<24x24x24xbf16> to vector<22x24x24xbf16>
    %20 = vector.shape_cast %19 : vector<22x24x24xbf16> to vector<528x24xbf16>
    %c2 = arith.constant 2 : index
    %c0_12 = arith.constant 0 : index
    %c0_13 = arith.constant 0 : index
    %21 = vector.load %arg3[%c2, %c0_12, %c0_13] : memref<3x24x128xbf16, #tpu.memory_space<vmem>>, vector<1x24x128xbf16>
    %22 = vector.shape_cast %21 : vector<1x24x128xbf16> to vector<24x128xbf16>
    %cst_14 = arith.constant dense<0.000000e+00> : vector<528x128xf32>
    %23 = tpu.matmul %20, %22, %cst_14 {dimension_numbers = #tpu.dot_dimension_numbers<[1], [0], [0], [1], [0, 0, 1, 1], [], []>} : vector<528x24xbf16>, vector<24x128xbf16>, vector<528x128xf32> -> vector<528x128xf32>
    %24 = arith.addf %18, %23 : vector<528x128xf32>
    %c0_15 = arith.constant 0 : index
    %c0_16 = arith.constant 0 : index
    %25 = vector.load %arg4[%c0_15, %c0_16] : memref<1x128xf32, #tpu.memory_space<vmem>>, vector<1x128xf32>
    %26 = vector.broadcast %25 : vector<1x128xf32> to vector<528x128xf32>
    %27 = arith.addf %24, %26 : vector<528x128xf32>
    %28 = vector.shape_cast %27 : vector<528x128xf32> to vector<22x24x128xf32>
    %c3_i32 = arith.constant 3 : i32
    %29 = arith.subi %0, %c3_i32 : i32
    %30 = tpu.iota {dimensions = array<i32: 0>} : vector<22x24x1xi32>
    %31 = vector.broadcast %29 : i32 to vector<22x24x1xi32>
    %32 = arith.addi %31, %30 : vector<22x24x1xi32>
    %33 = tpu.iota {dimensions = array<i32: 1>} : vector<22x24x1xi32>
    %c0_i32 = arith.constant 0 : i32
    %34 = vector.broadcast %c0_i32 : i32 to vector<22x24x1xi32>
    %35 = arith.cmpi sge, %32, %34 : vector<22x24x1xi32>
    %c16_i32_17 = arith.constant 16 : i32
    %36 = vector.broadcast %c16_i32_17 : i32 to vector<22x24x1xi32>
    %37 = arith.cmpi slt, %32, %36 : vector<22x24x1xi32>
    %38 = arith.andi %35, %37 : vector<22x24x1xi1>
    %c16_i32_18 = arith.constant 16 : i32
    %39 = vector.broadcast %c16_i32_18 : i32 to vector<22x24x1xi32>
    %40 = arith.cmpi slt, %33, %39 : vector<22x24x1xi32>
    %41 = arith.andi %38, %40 : vector<22x24x1xi1>
    %cst_19 = arith.constant 0.000000e+00 : f32
    %42 = vector.broadcast %cst_19 : f32 to vector<22x24x128xf32>
    %43 = arith.cmpf oge, %28, %42 : vector<22x24x128xf32>
    %cst_20 = arith.constant 2.000000e-01 : f32
    %44 = vector.broadcast %cst_20 : f32 to vector<22x24x128xf32>
    %45 = arith.mulf %44, %28 : vector<22x24x128xf32>
    %46 = arith.select %43, %28, %45 : vector<22x24x128xi1>, vector<22x24x128xf32>
    %cst_21 = arith.constant 0.000000e+00 : f32
    %47 = vector.shape_cast %41 : vector<22x24x1xi1> to vector<22x24x1xi1>
    %48 = vector.broadcast %47 : vector<22x24x1xi1> to vector<22x24x128xi1>
    %49 = vector.broadcast %cst_21 : f32 to vector<22x24x128xf32>
    %50 = arith.select %48, %46, %49 : vector<22x24x128xi1>, vector<22x24x128xf32>
    %51 = arith.truncf %50 : vector<22x24x128xf32> to vector<22x24x128xbf16>
    %52 = vector.extract_strided_slice %51 {offsets = [0, 23, 0], sizes = [22, 1, 128], strides = [1, 1, 1]} : vector<22x24x128xbf16> to vector<22x1x128xbf16>
    %53 = vector.extract_strided_slice %51 {offsets = [0, 0, 0], sizes = [22, 23, 128], strides = [1, 1, 1]} : vector<22x24x128xbf16> to vector<22x23x128xbf16>
    %54 = tpu.concatenate %52, %53 in 1 : vector<22x1x128xbf16>, vector<22x23x128xbf16> -> vector<22x24x128xbf16>
    %55 = vector.extract_strided_slice %51 {offsets = [0, 1, 0], sizes = [22, 23, 128], strides = [1, 1, 1]} : vector<22x24x128xbf16> to vector<22x23x128xbf16>
    %56 = vector.extract_strided_slice %51 {offsets = [0, 0, 0], sizes = [22, 1, 128], strides = [1, 1, 1]} : vector<22x24x128xbf16> to vector<22x1x128xbf16>
    %57 = tpu.concatenate %55, %56 in 1 : vector<22x23x128xbf16>, vector<22x1x128xbf16> -> vector<22x24x128xbf16>
    %58 = tpu.concatenate %54, %51, %57 in 2 : vector<22x24x128xbf16>, vector<22x24x128xbf16>, vector<22x24x128xbf16> -> vector<22x24x384xbf16>
    %59 = vector.extract_strided_slice %58 {offsets = [0, 0, 0], sizes = [20, 24, 384], strides = [1, 1, 1]} : vector<22x24x384xbf16> to vector<20x24x384xbf16>
    %60 = vector.shape_cast %59 : vector<20x24x384xbf16> to vector<480x384xbf16>
    %c0_22 = arith.constant 0 : index
    %c0_23 = arith.constant 0 : index
    %c0_24 = arith.constant 0 : index
    %61 = vector.load %arg5[%c0_22, %c0_23, %c0_24] : memref<3x384x128xbf16, #tpu.memory_space<vmem>>, vector<1x384x128xbf16>
    %62 = vector.shape_cast %61 : vector<1x384x128xbf16> to vector<384x128xbf16>
    %cst_25 = arith.constant dense<0.000000e+00> : vector<480x128xf32>
    %63 = tpu.matmul %60, %62, %cst_25 {dimension_numbers = #tpu.dot_dimension_numbers<[1], [0], [0], [1], [0, 0, 1, 1], [], []>} : vector<480x384xbf16>, vector<384x128xbf16>, vector<480x128xf32> -> vector<480x128xf32>
    %64 = vector.extract_strided_slice %58 {offsets = [1, 0, 0], sizes = [20, 24, 384], strides = [1, 1, 1]} : vector<22x24x384xbf16> to vector<20x24x384xbf16>
    %65 = vector.shape_cast %64 : vector<20x24x384xbf16> to vector<480x384xbf16>
    %c1_26 = arith.constant 1 : index
    %c0_27 = arith.constant 0 : index
    %c0_28 = arith.constant 0 : index
    %66 = vector.load %arg5[%c1_26, %c0_27, %c0_28] : memref<3x384x128xbf16, #tpu.memory_space<vmem>>, vector<1x384x128xbf16>
    %67 = vector.shape_cast %66 : vector<1x384x128xbf16> to vector<384x128xbf16>
    %cst_29 = arith.constant dense<0.000000e+00> : vector<480x128xf32>
    %68 = tpu.matmul %65, %67, %cst_29 {dimension_numbers = #tpu.dot_dimension_numbers<[1], [0], [0], [1], [0, 0, 1, 1], [], []>} : vector<480x384xbf16>, vector<384x128xbf16>, vector<480x128xf32> -> vector<480x128xf32>
    %69 = arith.addf %63, %68 : vector<480x128xf32>
    %70 = vector.extract_strided_slice %58 {offsets = [2, 0, 0], sizes = [20, 24, 384], strides = [1, 1, 1]} : vector<22x24x384xbf16> to vector<20x24x384xbf16>
    %71 = vector.shape_cast %70 : vector<20x24x384xbf16> to vector<480x384xbf16>
    %c2_30 = arith.constant 2 : index
    %c0_31 = arith.constant 0 : index
    %c0_32 = arith.constant 0 : index
    %72 = vector.load %arg5[%c2_30, %c0_31, %c0_32] : memref<3x384x128xbf16, #tpu.memory_space<vmem>>, vector<1x384x128xbf16>
    %73 = vector.shape_cast %72 : vector<1x384x128xbf16> to vector<384x128xbf16>
    %cst_33 = arith.constant dense<0.000000e+00> : vector<480x128xf32>
    %74 = tpu.matmul %71, %73, %cst_33 {dimension_numbers = #tpu.dot_dimension_numbers<[1], [0], [0], [1], [0, 0, 1, 1], [], []>} : vector<480x384xbf16>, vector<384x128xbf16>, vector<480x128xf32> -> vector<480x128xf32>
    %75 = arith.addf %69, %74 : vector<480x128xf32>
    %c0_34 = arith.constant 0 : index
    %c0_35 = arith.constant 0 : index
    %76 = vector.load %arg6[%c0_34, %c0_35] : memref<1x128xf32, #tpu.memory_space<vmem>>, vector<1x128xf32>
    %77 = vector.broadcast %76 : vector<1x128xf32> to vector<480x128xf32>
    %78 = arith.addf %75, %77 : vector<480x128xf32>
    %79 = vector.shape_cast %78 : vector<480x128xf32> to vector<20x24x128xf32>
    %cst_36 = arith.constant 0.000000e+00 : f32
    %80 = vector.broadcast %cst_36 : f32 to vector<20x24x128xf32>
    %81 = arith.cmpf oge, %79, %80 : vector<20x24x128xf32>
    %cst_37 = arith.constant 2.000000e-01 : f32
    %82 = vector.broadcast %cst_37 : f32 to vector<20x24x128xf32>
    %83 = arith.mulf %82, %79 : vector<20x24x128xf32>
    %84 = arith.select %81, %79, %83 : vector<20x24x128xi1>, vector<20x24x128xf32>
    %85 = vector.extract_strided_slice %7 {offsets = [2, 0, 0], sizes = [20, 24, 8], strides = [1, 1, 1]} : vector<24x24x24xbf16> to vector<20x24x8xbf16>
    %86 = vector.shape_cast %85 : vector<20x24x8xbf16> to vector<480x8xbf16>
    %c0_38 = arith.constant 0 : index
    %c0_39 = arith.constant 0 : index
    %87 = vector.load %arg7[%c0_38, %c0_39] : memref<8x128xbf16, #tpu.memory_space<vmem>>, vector<8x128xbf16>
    %cst_40 = arith.constant dense<0.000000e+00> : vector<480x128xf32>
    %88 = tpu.matmul %86, %87, %cst_40 {dimension_numbers = #tpu.dot_dimension_numbers<[1], [0], [0], [1], [0, 0, 1, 1], [], []>} : vector<480x8xbf16>, vector<8x128xbf16>, vector<480x128xf32> -> vector<480x128xf32>
    %c0_41 = arith.constant 0 : index
    %c0_42 = arith.constant 0 : index
    %89 = vector.load %arg8[%c0_41, %c0_42] : memref<1x128xf32, #tpu.memory_space<vmem>>, vector<1x128xf32>
    %90 = vector.broadcast %89 : vector<1x128xf32> to vector<480x128xf32>
    %91 = arith.addf %88, %90 : vector<480x128xf32>
    %92 = vector.shape_cast %91 : vector<480x128xf32> to vector<20x24x128xf32>
    %93 = arith.addf %84, %92 : vector<20x24x128xf32>
    %c2_i32 = arith.constant 2 : i32
    %94 = arith.subi %0, %c2_i32 : i32
    %95 = tpu.iota {dimensions = array<i32: 0>} : vector<20x24x1xi32>
    %96 = vector.broadcast %94 : i32 to vector<20x24x1xi32>
    %97 = arith.addi %96, %95 : vector<20x24x1xi32>
    %98 = tpu.iota {dimensions = array<i32: 1>} : vector<20x24x1xi32>
    %c0_i32_43 = arith.constant 0 : i32
    %99 = vector.broadcast %c0_i32_43 : i32 to vector<20x24x1xi32>
    %100 = arith.cmpi sge, %97, %99 : vector<20x24x1xi32>
    %c16_i32_44 = arith.constant 16 : i32
    %101 = vector.broadcast %c16_i32_44 : i32 to vector<20x24x1xi32>
    %102 = arith.cmpi slt, %97, %101 : vector<20x24x1xi32>
    %103 = arith.andi %100, %102 : vector<20x24x1xi1>
    %c16_i32_45 = arith.constant 16 : i32
    %104 = vector.broadcast %c16_i32_45 : i32 to vector<20x24x1xi32>
    %105 = arith.cmpi slt, %98, %104 : vector<20x24x1xi32>
    %106 = arith.andi %103, %105 : vector<20x24x1xi1>
    %cst_46 = arith.constant 0.000000e+00 : f32
    %107 = vector.shape_cast %106 : vector<20x24x1xi1> to vector<20x24x1xi1>
    %108 = vector.broadcast %107 : vector<20x24x1xi1> to vector<20x24x128xi1>
    %109 = vector.broadcast %cst_46 : f32 to vector<20x24x128xf32>
    %110 = arith.select %108, %93, %109 : vector<20x24x128xi1>, vector<20x24x128xf32>
    %111 = arith.truncf %110 : vector<20x24x128xf32> to vector<20x24x128xbf16>
    %112 = vector.extract_strided_slice %111 {offsets = [0, 23, 0], sizes = [20, 1, 128], strides = [1, 1, 1]} : vector<20x24x128xbf16> to vector<20x1x128xbf16>
    %113 = vector.extract_strided_slice %111 {offsets = [0, 0, 0], sizes = [20, 23, 128], strides = [1, 1, 1]} : vector<20x24x128xbf16> to vector<20x23x128xbf16>
    %114 = tpu.concatenate %112, %113 in 1 : vector<20x1x128xbf16>, vector<20x23x128xbf16> -> vector<20x24x128xbf16>
    %115 = vector.extract_strided_slice %111 {offsets = [0, 1, 0], sizes = [20, 23, 128], strides = [1, 1, 1]} : vector<20x24x128xbf16> to vector<20x23x128xbf16>
    %116 = vector.extract_strided_slice %111 {offsets = [0, 0, 0], sizes = [20, 1, 128], strides = [1, 1, 1]} : vector<20x24x128xbf16> to vector<20x1x128xbf16>
    %117 = tpu.concatenate %115, %116 in 1 : vector<20x23x128xbf16>, vector<20x1x128xbf16> -> vector<20x24x128xbf16>
    %118 = tpu.concatenate %114, %111, %117 in 2 : vector<20x24x128xbf16>, vector<20x24x128xbf16>, vector<20x24x128xbf16> -> vector<20x24x384xbf16>
    %119 = vector.extract_strided_slice %118 {offsets = [0, 0, 0], sizes = [18, 24, 384], strides = [1, 1, 1]} : vector<20x24x384xbf16> to vector<18x24x384xbf16>
    %120 = vector.shape_cast %119 : vector<18x24x384xbf16> to vector<432x384xbf16>
    %c0_47 = arith.constant 0 : index
    %c0_48 = arith.constant 0 : index
    %c0_49 = arith.constant 0 : index
    %121 = vector.load %arg9[%c0_47, %c0_48, %c0_49] : memref<3x384x8xbf16, #tpu.memory_space<vmem>>, vector<1x384x8xbf16>
    %122 = vector.shape_cast %121 : vector<1x384x8xbf16> to vector<384x8xbf16>
    %cst_50 = arith.constant dense<0.000000e+00> : vector<432x8xf32>
    %123 = tpu.matmul %120, %122, %cst_50 {dimension_numbers = #tpu.dot_dimension_numbers<[1], [0], [0], [1], [0, 0, 1, 1], [], []>} : vector<432x384xbf16>, vector<384x8xbf16>, vector<432x8xf32> -> vector<432x8xf32>
    %124 = vector.extract_strided_slice %118 {offsets = [1, 0, 0], sizes = [18, 24, 384], strides = [1, 1, 1]} : vector<20x24x384xbf16> to vector<18x24x384xbf16>
    %125 = vector.shape_cast %124 : vector<18x24x384xbf16> to vector<432x384xbf16>
    %c1_51 = arith.constant 1 : index
    %c0_52 = arith.constant 0 : index
    %c0_53 = arith.constant 0 : index
    %126 = vector.load %arg9[%c1_51, %c0_52, %c0_53] : memref<3x384x8xbf16, #tpu.memory_space<vmem>>, vector<1x384x8xbf16>
    %127 = vector.shape_cast %126 : vector<1x384x8xbf16> to vector<384x8xbf16>
    %cst_54 = arith.constant dense<0.000000e+00> : vector<432x8xf32>
    %128 = tpu.matmul %125, %127, %cst_54 {dimension_numbers = #tpu.dot_dimension_numbers<[1], [0], [0], [1], [0, 0, 1, 1], [], []>} : vector<432x384xbf16>, vector<384x8xbf16>, vector<432x8xf32> -> vector<432x8xf32>
    %129 = arith.addf %123, %128 : vector<432x8xf32>
    %130 = vector.extract_strided_slice %118 {offsets = [2, 0, 0], sizes = [18, 24, 384], strides = [1, 1, 1]} : vector<20x24x384xbf16> to vector<18x24x384xbf16>
    %131 = vector.shape_cast %130 : vector<18x24x384xbf16> to vector<432x384xbf16>
    %c2_55 = arith.constant 2 : index
    %c0_56 = arith.constant 0 : index
    %c0_57 = arith.constant 0 : index
    %132 = vector.load %arg9[%c2_55, %c0_56, %c0_57] : memref<3x384x8xbf16, #tpu.memory_space<vmem>>, vector<1x384x8xbf16>
    %133 = vector.shape_cast %132 : vector<1x384x8xbf16> to vector<384x8xbf16>
    %cst_58 = arith.constant dense<0.000000e+00> : vector<432x8xf32>
    %134 = tpu.matmul %131, %133, %cst_58 {dimension_numbers = #tpu.dot_dimension_numbers<[1], [0], [0], [1], [0, 0, 1, 1], [], []>} : vector<432x384xbf16>, vector<384x8xbf16>, vector<432x8xf32> -> vector<432x8xf32>
    %135 = arith.addf %129, %134 : vector<432x8xf32>
    %c0_59 = arith.constant 0 : index
    %c0_60 = arith.constant 0 : index
    %136 = vector.load %arg10[%c0_59, %c0_60] : memref<1x8xf32, #tpu.memory_space<vmem>>, vector<1x8xf32>
    %137 = vector.broadcast %136 : vector<1x8xf32> to vector<432x8xf32>
    %138 = arith.addf %135, %137 : vector<432x8xf32>
    %139 = vector.shape_cast %138 : vector<432x8xf32> to vector<18x24x8xf32>
    %c1_i32 = arith.constant 1 : i32
    %140 = arith.subi %0, %c1_i32 : i32
    %141 = tpu.iota {dimensions = array<i32: 0>} : vector<18x24x1xi32>
    %142 = vector.broadcast %140 : i32 to vector<18x24x1xi32>
    %143 = arith.addi %142, %141 : vector<18x24x1xi32>
    %144 = tpu.iota {dimensions = array<i32: 1>} : vector<18x24x1xi32>
    %c0_i32_61 = arith.constant 0 : i32
    %145 = vector.broadcast %c0_i32_61 : i32 to vector<18x24x1xi32>
    %146 = arith.cmpi sge, %143, %145 : vector<18x24x1xi32>
    %c16_i32_62 = arith.constant 16 : i32
    %147 = vector.broadcast %c16_i32_62 : i32 to vector<18x24x1xi32>
    %148 = arith.cmpi slt, %143, %147 : vector<18x24x1xi32>
    %149 = arith.andi %146, %148 : vector<18x24x1xi1>
    %c16_i32_63 = arith.constant 16 : i32
    %150 = vector.broadcast %c16_i32_63 : i32 to vector<18x24x1xi32>
    %151 = arith.cmpi slt, %144, %150 : vector<18x24x1xi32>
    %152 = arith.andi %149, %151 : vector<18x24x1xi1>
    %cst_64 = arith.constant 0.000000e+00 : f32
    %153 = vector.broadcast %cst_64 : f32 to vector<18x24x8xf32>
    %154 = arith.cmpf oge, %139, %153 : vector<18x24x8xf32>
    %cst_65 = arith.constant 2.000000e-01 : f32
    %155 = vector.broadcast %cst_65 : f32 to vector<18x24x8xf32>
    %156 = arith.mulf %155, %139 : vector<18x24x8xf32>
    %157 = arith.select %154, %139, %156 : vector<18x24x8xi1>, vector<18x24x8xf32>
    %cst_66 = arith.constant 0.000000e+00 : f32
    %158 = vector.shape_cast %152 : vector<18x24x1xi1> to vector<18x24x1xi1>
    %159 = vector.broadcast %158 : vector<18x24x1xi1> to vector<18x24x8xi1>
    %160 = vector.broadcast %cst_66 : f32 to vector<18x24x8xf32>
    %161 = arith.select %159, %157, %160 : vector<18x24x8xi1>, vector<18x24x8xf32>
    %162 = arith.truncf %161 : vector<18x24x8xf32> to vector<18x24x8xbf16>
    %163 = vector.extract_strided_slice %162 {offsets = [0, 23, 0], sizes = [18, 1, 8], strides = [1, 1, 1]} : vector<18x24x8xbf16> to vector<18x1x8xbf16>
    %164 = vector.extract_strided_slice %162 {offsets = [0, 0, 0], sizes = [18, 23, 8], strides = [1, 1, 1]} : vector<18x24x8xbf16> to vector<18x23x8xbf16>
    %165 = tpu.concatenate %163, %164 in 1 : vector<18x1x8xbf16>, vector<18x23x8xbf16> -> vector<18x24x8xbf16>
    %166 = vector.extract_strided_slice %162 {offsets = [0, 1, 0], sizes = [18, 23, 8], strides = [1, 1, 1]} : vector<18x24x8xbf16> to vector<18x23x8xbf16>
    %167 = vector.extract_strided_slice %162 {offsets = [0, 0, 0], sizes = [18, 1, 8], strides = [1, 1, 1]} : vector<18x24x8xbf16> to vector<18x1x8xbf16>
    %168 = tpu.concatenate %166, %167 in 1 : vector<18x23x8xbf16>, vector<18x1x8xbf16> -> vector<18x24x8xbf16>
    %169 = tpu.concatenate %165, %162, %168 in 2 : vector<18x24x8xbf16>, vector<18x24x8xbf16>, vector<18x24x8xbf16> -> vector<18x24x24xbf16>
    %170 = vector.extract_strided_slice %169 {offsets = [0, 0, 0], sizes = [16, 24, 24], strides = [1, 1, 1]} : vector<18x24x24xbf16> to vector<16x24x24xbf16>
    %171 = vector.shape_cast %170 : vector<16x24x24xbf16> to vector<384x24xbf16>
    %c0_67 = arith.constant 0 : index
    %c0_68 = arith.constant 0 : index
    %c0_69 = arith.constant 0 : index
    %172 = vector.load %arg11[%c0_67, %c0_68, %c0_69] : memref<3x24x8xbf16, #tpu.memory_space<vmem>>, vector<1x24x8xbf16>
    %173 = vector.shape_cast %172 : vector<1x24x8xbf16> to vector<24x8xbf16>
    %cst_70 = arith.constant dense<0.000000e+00> : vector<384x8xf32>
    %174 = tpu.matmul %171, %173, %cst_70 {dimension_numbers = #tpu.dot_dimension_numbers<[1], [0], [0], [1], [0, 0, 1, 1], [], []>} : vector<384x24xbf16>, vector<24x8xbf16>, vector<384x8xf32> -> vector<384x8xf32>
    %175 = vector.extract_strided_slice %169 {offsets = [1, 0, 0], sizes = [16, 24, 24], strides = [1, 1, 1]} : vector<18x24x24xbf16> to vector<16x24x24xbf16>
    %176 = vector.shape_cast %175 : vector<16x24x24xbf16> to vector<384x24xbf16>
    %c1_71 = arith.constant 1 : index
    %c0_72 = arith.constant 0 : index
    %c0_73 = arith.constant 0 : index
    %177 = vector.load %arg11[%c1_71, %c0_72, %c0_73] : memref<3x24x8xbf16, #tpu.memory_space<vmem>>, vector<1x24x8xbf16>
    %178 = vector.shape_cast %177 : vector<1x24x8xbf16> to vector<24x8xbf16>
    %cst_74 = arith.constant dense<0.000000e+00> : vector<384x8xf32>
    %179 = tpu.matmul %176, %178, %cst_74 {dimension_numbers = #tpu.dot_dimension_numbers<[1], [0], [0], [1], [0, 0, 1, 1], [], []>} : vector<384x24xbf16>, vector<24x8xbf16>, vector<384x8xf32> -> vector<384x8xf32>
    %180 = arith.addf %174, %179 : vector<384x8xf32>
    %181 = vector.extract_strided_slice %169 {offsets = [2, 0, 0], sizes = [16, 24, 24], strides = [1, 1, 1]} : vector<18x24x24xbf16> to vector<16x24x24xbf16>
    %182 = vector.shape_cast %181 : vector<16x24x24xbf16> to vector<384x24xbf16>
    %c2_75 = arith.constant 2 : index
    %c0_76 = arith.constant 0 : index
    %c0_77 = arith.constant 0 : index
    %183 = vector.load %arg11[%c2_75, %c0_76, %c0_77] : memref<3x24x8xbf16, #tpu.memory_space<vmem>>, vector<1x24x8xbf16>
    %184 = vector.shape_cast %183 : vector<1x24x8xbf16> to vector<24x8xbf16>
    %cst_78 = arith.constant dense<0.000000e+00> : vector<384x8xf32>
    %185 = tpu.matmul %182, %184, %cst_78 {dimension_numbers = #tpu.dot_dimension_numbers<[1], [0], [0], [1], [0, 0, 1, 1], [], []>} : vector<384x24xbf16>, vector<24x8xbf16>, vector<384x8xf32> -> vector<384x8xf32>
    %186 = arith.addf %180, %185 : vector<384x8xf32>
    %c0_79 = arith.constant 0 : index
    %c0_80 = arith.constant 0 : index
    %187 = vector.load %arg12[%c0_79, %c0_80] : memref<1x8xf32, #tpu.memory_space<vmem>>, vector<1x8xf32>
    %188 = vector.broadcast %187 : vector<1x8xf32> to vector<384x8xf32>
    %189 = arith.addf %186, %188 : vector<384x8xf32>
    %190 = vector.shape_cast %189 : vector<384x8xf32> to vector<16x24x8xf32>
    %cst_81 = arith.constant 0.000000e+00 : f32
    %191 = vector.broadcast %cst_81 : f32 to vector<16x24x8xf32>
    %192 = arith.cmpf oge, %190, %191 : vector<16x24x8xf32>
    %cst_82 = arith.constant 2.000000e-01 : f32
    %193 = vector.broadcast %cst_82 : f32 to vector<16x24x8xf32>
    %194 = arith.mulf %193, %190 : vector<16x24x8xf32>
    %195 = arith.select %192, %190, %194 : vector<16x24x8xi1>, vector<16x24x8xf32>
    %196 = vector.extract_strided_slice %111 {offsets = [2, 0, 0], sizes = [16, 24, 128], strides = [1, 1, 1]} : vector<20x24x128xbf16> to vector<16x24x128xbf16>
    %197 = vector.extract_strided_slice %7 {offsets = [4, 0, 0], sizes = [16, 24, 8], strides = [1, 1, 1]} : vector<24x24x24xbf16> to vector<16x24x8xbf16>
    %198 = tpu.concatenate %196, %197 in 2 : vector<16x24x128xbf16>, vector<16x24x8xbf16> -> vector<16x24x136xbf16>
    %199 = vector.shape_cast %198 : vector<16x24x136xbf16> to vector<384x136xbf16>
    %c0_83 = arith.constant 0 : index
    %c0_84 = arith.constant 0 : index
    %200 = vector.load %arg13[%c0_83, %c0_84] : memref<136x8xbf16, #tpu.memory_space<vmem>>, vector<136x8xbf16>
    %cst_85 = arith.constant dense<0.000000e+00> : vector<384x8xf32>
    %201 = tpu.matmul %199, %200, %cst_85 {dimension_numbers = #tpu.dot_dimension_numbers<[1], [0], [0], [1], [0, 0, 1, 1], [], []>} : vector<384x136xbf16>, vector<136x8xbf16>, vector<384x8xf32> -> vector<384x8xf32>
    %c0_86 = arith.constant 0 : index
    %c0_87 = arith.constant 0 : index
    %202 = vector.load %arg14[%c0_86, %c0_87] : memref<1x8xf32, #tpu.memory_space<vmem>>, vector<1x8xf32>
    %203 = vector.broadcast %202 : vector<1x8xf32> to vector<384x8xf32>
    %204 = arith.addf %201, %203 : vector<384x8xf32>
    %205 = vector.shape_cast %204 : vector<384x8xf32> to vector<16x24x8xf32>
    %206 = arith.addf %195, %205 : vector<16x24x8xf32>
    %207 = vector.extract_strided_slice %206 {offsets = [0, 0, 0], sizes = [16, 16, 8], strides = [1, 1, 1]} : vector<16x24x8xf32> to vector<16x16x8xf32>
    %c0_88 = arith.constant 0 : index
    %c0_89 = arith.constant 0 : index
    %c0_90 = arith.constant 0 : index
    %c0_91 = arith.constant 0 : index
    %208 = vector.load %arg15[%c0_88, %c0_89, %c0_90, %c0_91] : memref<1x16x16x8xf32, #tpu.memory_space<vmem>>, vector<1x16x16x8xf32>
    %209 = vector.shape_cast %208 : vector<1x16x16x8xf32> to vector<16x16x8xf32>
    %210 = vector.shape_cast %207 : vector<16x16x8xf32> to vector<1x16x16x8xf32>
    tpu.vector_store %arg15[%c0_88, %c0_89, %c0_90, %c0_91], %210 {strides = array<i32>} : memref<1x16x16x8xf32, #tpu.memory_space<vmem>>, vector<1x16x16x8xf32>,
    return
  }
  func.func @transform_0(%arg0: i32, %arg1: i32) -> (i32, i32, i32, i32) {
    %c0_i32 = arith.constant 0 : i32
    %c0_i32_0 = arith.constant 0 : i32
    %c0_i32_1 = arith.constant 0 : i32
    return %arg0, %arg1, %c0_i32, %c0_i32_0 : i32, i32, i32, i32
  }
  func.func @transform_1(%arg0: i32, %arg1: i32) -> (i32, i32, i32) {
    %c0_i32 = arith.constant 0 : i32
    %c0_i32_0 = arith.constant 0 : i32
    %c0_i32_1 = arith.constant 0 : i32
    %c0_i32_2 = arith.constant 0 : i32
    return %c0_i32, %c0_i32_0, %c0_i32_1 : i32, i32, i32
  }
  func.func @transform_2(%arg0: i32, %arg1: i32) -> (i32, i32) {
    %c0_i32 = arith.constant 0 : i32
    %c0_i32_0 = arith.constant 0 : i32
    %c0_i32_1 = arith.constant 0 : i32
    return %c0_i32, %c0_i32_0 : i32, i32
  }
  func.func @transform_3(%arg0: i32, %arg1: i32) -> (i32, i32, i32) {
    %c0_i32 = arith.constant 0 : i32
    %c0_i32_0 = arith.constant 0 : i32
    %c0_i32_1 = arith.constant 0 : i32
    %c0_i32_2 = arith.constant 0 : i32
    return %c0_i32, %c0_i32_0, %c0_i32_1 : i32, i32, i32
  }
  func.func @transform_4(%arg0: i32, %arg1: i32) -> (i32, i32) {
    %c0_i32 = arith.constant 0 : i32
    %c0_i32_0 = arith.constant 0 : i32
    %c0_i32_1 = arith.constant 0 : i32
    return %c0_i32, %c0_i32_0 : i32, i32
  }
  func.func @transform_5(%arg0: i32, %arg1: i32) -> (i32, i32) {
    %c0_i32 = arith.constant 0 : i32
    %c0_i32_0 = arith.constant 0 : i32
    %c0_i32_1 = arith.constant 0 : i32
    return %c0_i32, %c0_i32_0 : i32, i32
  }
  func.func @transform_6(%arg0: i32, %arg1: i32) -> (i32, i32) {
    %c0_i32 = arith.constant 0 : i32
    %c0_i32_0 = arith.constant 0 : i32
    %c0_i32_1 = arith.constant 0 : i32
    return %c0_i32, %c0_i32_0 : i32, i32
  }
  func.func @transform_7(%arg0: i32, %arg1: i32) -> (i32, i32, i32) {
    %c0_i32 = arith.constant 0 : i32
    %c0_i32_0 = arith.constant 0 : i32
    %c0_i32_1 = arith.constant 0 : i32
    %c0_i32_2 = arith.constant 0 : i32
    return %c0_i32, %c0_i32_0, %c0_i32_1 : i32, i32, i32
  }
  func.func @transform_8(%arg0: i32, %arg1: i32) -> (i32, i32) {
    %c0_i32 = arith.constant 0 : i32
    %c0_i32_0 = arith.constant 0 : i32
    %c0_i32_1 = arith.constant 0 : i32
    return %c0_i32, %c0_i32_0 : i32, i32
  }
  func.func @transform_9(%arg0: i32, %arg1: i32) -> (i32, i32, i32) {
    %c0_i32 = arith.constant 0 : i32
    %c0_i32_0 = arith.constant 0 : i32
    %c0_i32_1 = arith.constant 0 : i32
    %c0_i32_2 = arith.constant 0 : i32
    return %c0_i32, %c0_i32_0, %c0_i32_1 : i32, i32, i32
  }
  func.func @transform_10(%arg0: i32, %arg1: i32) -> (i32, i32) {
    %c0_i32 = arith.constant 0 : i32
    %c0_i32_0 = arith.constant 0 : i32
    %c0_i32_1 = arith.constant 0 : i32
    return %c0_i32, %c0_i32_0 : i32, i32
  }
  func.func @transform_11(%arg0: i32, %arg1: i32) -> (i32, i32) {
    %c0_i32 = arith.constant 0 : i32
    %c0_i32_0 = arith.constant 0 : i32
    %c0_i32_1 = arith.constant 0 : i32
    return %c0_i32, %c0_i32_0 : i32, i32
  }
  func.func @transform_12(%arg0: i32, %arg1: i32) -> (i32, i32) {
    %c0_i32 = arith.constant 0 : i32
    %c0_i32_0 = arith.constant 0 : i32
    %c0_i32_1 = arith.constant 0 : i32
    return %c0_i32, %c0_i32_0 : i32, i32
  }
  func.func @transform_13(%arg0: i32, %arg1: i32) -> (i32, i32, i32, i32) {
    %c0_i32 = arith.constant 0 : i32
    %c0_i32_0 = arith.constant 0 : i32
    %c0_i32_1 = arith.constant 0 : i32
    return %arg0, %arg1, %c0_i32, %c0_i32_0 : i32, i32, i32, i32
  }
}

</mosaic_0001>

<llo_original>
// kernel: skip_blocks_forward.1
$region0: #{skip_blocks_forward.1}
  #allocation0 [shape = 'u32[]', space=smem, size = 0x4, offset = 0x4, fixed_abs, tag = 'smem constant byte address 0x4 - core index']
  #allocation1 [shape = 'u32[72,128]{1,0:T(1,128)}', space=vmem, size = 0x9000, scoped, tag = 'internal scratch']
  %s0 = inlined_call_operand.vmem [shape: bf16[2,16,16,24], index: 0, kind: input, shape index: {}]
  %s1 = inlined_call_operand.vmem [shape: bf16[3,24,128], index: 1, kind: input, shape index: {}]
  %s2 = inlined_call_operand.vmem [shape: f32[1,128], index: 2, kind: input, shape index: {}]
  %s3 = inlined_call_operand.vmem [shape: bf16[3,384,128], index: 3, kind: input, shape index: {}]
  %s4 = inlined_call_operand.vmem [shape: f32[1,128], index: 4, kind: input, shape index: {}]
  %s5 = inlined_call_operand.vmem [shape: bf16[8,128], index: 5, kind: input, shape index: {}]
  %s6 = inlined_call_operand.vmem [shape: f32[1,128], index: 6, kind: input, shape index: {}]
  %s7 = inlined_call_operand.vmem [shape: bf16[3,384,8], index: 7, kind: input, shape index: {}]
  %s8 = inlined_call_operand.vmem [shape: f32[1,8], index: 8, kind: input, shape index: {}]
  %s9 = inlined_call_operand.vmem [shape: bf16[3,24,8], index: 9, kind: input, shape index: {}]
  %s10 = inlined_call_operand.vmem [shape: f32[1,8], index: 10, kind: input, shape index: {}]
  %s11 = inlined_call_operand.vmem [shape: bf16[136,8], index: 11, kind: input, shape index: {}]
  %s12 = inlined_call_operand.vmem [shape: f32[1,8], index: 12, kind: input, shape index: {}]
  %s13 = inlined_call_operand.vmem [shape: f32[2,16,16,8], index: 13, kind: output, shape index: {}]
  %s14 = sld [smem:[#allocation0]]
  $region85: #{skip_blocks_forward.1} parent=0
    _
  %s16 = ssub.s32 1, %s14
  %s17 = scalar_select 0, %s16, %s14
  loop: start=0, step=1, limit=4
  $region2: #{skip_blocks_forward.1} parent=0 // loop_pre_header
    _
  $region3: #{skip_blocks_forward.1} parent=0 // loop_header
    %s19 = sphi 0, %s23
    %p20 = scmp.ge.s32.totalorder %s19, 4
    %s26 = sphi 0, %s38
    %s27 = sphi 0, %s34
    %s28 = sphi 0, %s26
    %s29 = sphi 0, %s27
    %s30 = sphi 0, %s28
    %s31 = sphi 0, %s29
    %s43 = sphi 0, %s45
    %s46 = sphi 0, %s43
    %s47 = sphi 0, %s46
    %s63 = sphi 0, %s47
    %s67 = sphi 0, %s67
    %s69 = sphi 0, %s67
    %s70 = sphi 0, %s69
    %s84 = sphi 0, %s70
    %s88 = sphi 0, %s88
    %s90 = sphi 0, %s88
    %s91 = sphi 0, %s90
    %s105 = sphi 0, %s91
    %s109 = sphi 0, %s109
    %s111 = sphi 0, %s109
    %s112 = sphi 0, %s111
    %s126 = sphi 0, %s112
    %s130 = sphi 0, %s130
    %s132 = sphi 0, %s130
    %s133 = sphi 0, %s132
    %s147 = sphi 0, %s133
    %s151 = sphi 0, %s151
    %s153 = sphi 0, %s151
    %s154 = sphi 0, %s153
    %s168 = sphi 0, %s154
    %s172 = sphi 0, %s172
    %s174 = sphi 0, %s172
    %s175 = sphi 0, %s174
    %s189 = sphi 0, %s175
    %s193 = sphi 0, %s193
    %s195 = sphi 0, %s193
    %s196 = sphi 0, %s195
    %s210 = sphi 0, %s196
    %s214 = sphi 0, %s214
    %s216 = sphi 0, %s214
    %s217 = sphi 0, %s216
    %s231 = sphi 0, %s217
    %s235 = sphi 0, %s235
    %s237 = sphi 0, %s235
    %s238 = sphi 0, %s237
    %s252 = sphi 0, %s238
    %s256 = sphi 0, %s256
    %s258 = sphi 0, %s256
    %s259 = sphi 0, %s258
    %s273 = sphi 0, %s259
    %s277 = sphi 0, %s277
    %s279 = sphi 0, %s277
    %s280 = sphi 0, %s279
    %s294 = sphi 0, %s280
    %s298 = sphi 0, %s298
    %s300 = sphi 0, %s298
    %s301 = sphi 0, %s300
    %s315 = sphi 0, %s301
    %s323 = sphi 0, %s325
    %s326 = sphi 0, %s323
    %s327 = sphi 0, %s326
    %s343 = sphi 0, %s327
  $region4: #{skip_blocks_forward.1} parent=0 // loop_header_branch
    %22 = sbr.rel (%p20) target = $region8
  $region5: #{skip_blocks_forward.1} parent=0 // loop_body
    %s24 = ssub.s32 %s19, 1
    %s25 = ssub.s32 %s19, 2
    %s32 = sadd.s32 1, %s27
    %p33 = scmp.ge.s32.totalorder %s32, 1
    %s34 = scalar_select %p33, 0, %s32
    %s35 = sadd.s32 1, %s26
    %s36 = scalar_select %p33, %s35, %s26
    %p37 = scmp.ge.s32.totalorder %s36, 2
    %s38 = scalar_select %p37, 0, %s36
    %s39 = ssub.s32 %s26, %s38
    %s40 = ssub.s32 %s27, %s34
    %s41 = sor.u32 %s39, %s40
    %p42 = scmp.eq.s32.totalorder %s41, 0
    %s44 = sadd.s32 %s43, 1
    %s45 = scalar_select %p42, %s43, %s44
    %p48 = pneg %p42
    %p49 = scmp.eq.s32.totalorder %s19, 1
    %p50 = por %p48, %p49
    %p51 = scmp.ne.s32.totalorder %s43, %s46
    %p52 = scmp.eq.s32.totalorder %s19, 0
    %p53 = por %p51, %p52
    %p54 = scmp.ne.s32.totalorder %s43, %s46
    %p55 = scmp.eq.s32.totalorder %s24, 1
    %p56 = por %p54, %p55
    %p57 = scmp.ne.s32.totalorder %s46, %s47
    %p58 = scmp.eq.s32.totalorder %s24, 0
    %p59 = por %p57, %p58
    %p60 = scmp.ne.s32.totalorder %s46, %s47
    %p61 = scmp.eq.s32.totalorder %s25, 1
    %p62 = por %p60, %p61
    %p64 = scmp.ne.s32.totalorder %s47, %s63
    %p65 = scmp.eq.s32.totalorder %s25, 0
    %p66 = por %p64, %p65
    %s68 = sadd.s32 %s67, 1
    %p71 = scmp.eq.s32.totalorder %s19, 1
    %p72 = scmp.ne.s32.totalorder %s67, %s69
    %p73 = scmp.eq.s32.totalorder %s19, 0
    %p74 = por %p72, %p73
    %p75 = scmp.ne.s32.totalorder %s67, %s69
    %p76 = scmp.eq.s32.totalorder %s24, 1
    %p77 = por %p75, %p76
    %p78 = scmp.ne.s32.totalorder %s69, %s70
    %p79 = scmp.eq.s32.totalorder %s24, 0
    %p80 = por %p78, %p79
    %p81 = scmp.ne.s32.totalorder %s69, %s70
    %p82 = scmp.eq.s32.totalorder %s25, 1
    %p83 = por %p81, %p82
    %p85 = scmp.ne.s32.totalorder %s70, %s84
    %p86 = scmp.eq.s32.totalorder %s25, 0
    %p87 = por %p85, %p86
    %s89 = sadd.s32 %s88, 1
    %p92 = scmp.eq.s32.totalorder %s19, 1
    %p93 = scmp.ne.s32.totalorder %s88, %s90
    %p94 = scmp.eq.s32.totalorder %s19, 0
    %p95 = por %p93, %p94
    %p96 = scmp.ne.s32.totalorder %s88, %s90
    %p97 = scmp.eq.s32.totalorder %s24, 1
    %p98 = por %p96, %p97
    %p99 = scmp.ne.s32.totalorder %s90, %s91
    %p100 = scmp.eq.s32.totalorder %s24, 0
    %p101 = por %p99, %p100
    %p102 = scmp.ne.s32.totalorder %s90, %s91
    %p103 = scmp.eq.s32.totalorder %s25, 1
    %p104 = por %p102, %p103
    %p106 = scmp.ne.s32.totalorder %s91, %s105
    %p107 = scmp.eq.s32.totalorder %s25, 0
    %p108 = por %p106, %p107
    %s110 = sadd.s32 %s109, 1
    %p113 = scmp.eq.s32.totalorder %s19, 1
    %p114 = scmp.ne.s32.totalorder %s109, %s111
    %p115 = scmp.eq.s32.totalorder %s19, 0
    %p116 = por %p114, %p115
    %p117 = scmp.ne.s32.totalorder %s109, %s111
    %p118 = scmp.eq.s32.totalorder %s24, 1
    %p119 = por %p117, %p118
    %p120 = scmp.ne.s32.totalorder %s111, %s112
    %p121 = scmp.eq.s32.totalorder %s24, 0
    %p122 = por %p120, %p121
    %p123 = scmp.ne.s32.totalorder %s111, %s112
    %p124 = scmp.eq.s32.totalorder %s25, 1
    %p125 = por %p123, %p124
    %p127 = scmp.ne.s32.totalorder %s112, %s126
    %p128 = scmp.eq.s32.totalorder %s25, 0
    %p129 = por %p127, %p128
    %s131 = sadd.s32 %s130, 1
    %p134 = scmp.eq.s32.totalorder %s19, 1
    %p135 = scmp.ne.s32.totalorder %s130, %s132
    %p136 = scmp.eq.s32.totalorder %s19, 0
    %p137 = por %p135, %p136
    %p138 = scmp.ne.s32.totalorder %s130, %s132
    %p139 = scmp.eq.s32.totalorder %s24, 1
    %p140 = por %p138, %p139
    %p141 = scmp.ne.s32.totalorder %s132, %s133
    %p142 = scmp.eq.s32.totalorder %s24, 0
    %p143 = por %p141, %p142
    %p144 = scmp.ne.s32.totalorder %s132, %s133
    %p145 = scmp.eq.s32.totalorder %s25, 1
    %p146 = por %p144, %p145
    %p148 = scmp.ne.s32.totalorder %s133, %s147
    %p149 = scmp.eq.s32.totalorder %s25, 0
    %p150 = por %p148, %p149
    %s152 = sadd.s32 %s151, 1
    %p155 = scmp.eq.s32.totalorder %s19, 1
    %p156 = scmp.ne.s32.totalorder %s151, %s153
    %p157 = scmp.eq.s32.totalorder %s19, 0
    %p158 = por %p156, %p157
    %p159 = scmp.ne.s32.totalorder %s151, %s153
    %p160 = scmp.eq.s32.totalorder %s24, 1
    %p161 = por %p159, %p160
    %p162 = scmp.ne.s32.totalorder %s153, %s154
    %p163 = scmp.eq.s32.totalorder %s24, 0
    %p164 = por %p162, %p163
    %p165 = scmp.ne.s32.totalorder %s153, %s154
    %p166 = scmp.eq.s32.totalorder %s25, 1
    %p167 = por %p165, %p166
    %p169 = scmp.ne.s32.totalorder %s154, %s168
    %p170 = scmp.eq.s32.totalorder %s25, 0
    %p171 = por %p169, %p170
    %s173 = sadd.s32 %s172, 1
    %p176 = scmp.eq.s32.totalorder %s19, 1
    %p177 = scmp.ne.s32.totalorder %s172, %s174
    %p178 = scmp.eq.s32.totalorder %s19, 0
    %p179 = por %p177, %p178
    %p180 = scmp.ne.s32.totalorder %s172, %s174
    %p181 = scmp.eq.s32.totalorder %s24, 1
    %p182 = por %p180, %p181
    %p183 = scmp.ne.s32.totalorder %s174, %s175
    %p184 = scmp.eq.s32.totalorder %s24, 0
    %p185 = por %p183, %p184
    %p186 = scmp.ne.s32.totalorder %s174, %s175
    %p187 = scmp.eq.s32.totalorder %s25, 1
    %p188 = por %p186, %p187
    %p190 = scmp.ne.s32.totalorder %s175, %s189
    %p191 = scmp.eq.s32.totalorder %s25, 0
    %p192 = por %p190, %p191
    %s194 = sadd.s32 %s193, 1
    %p197 = scmp.eq.s32.totalorder %s19, 1
    %p198 = scmp.ne.s32.totalorder %s193, %s195
    %p199 = scmp.eq.s32.totalorder %s19, 0
    %p200 = por %p198, %p199
    %p201 = scmp.ne.s32.totalorder %s193, %s195
    %p202 = scmp.eq.s32.totalorder %s24, 1
    %p203 = por %p201, %p202
    %p204 = scmp.ne.s32.totalorder %s195, %s196
    %p205 = scmp.eq.s32.totalorder %s24, 0
    %p206 = por %p204, %p205
    %p207 = scmp.ne.s32.totalorder %s195, %s196
    %p208 = scmp.eq.s32.totalorder %s25, 1
    %p209 = por %p207, %p208
    %p211 = scmp.ne.s32.totalorder %s196, %s210
    %p212 = scmp.eq.s32.totalorder %s25, 0
    %p213 = por %p211, %p212
    %s215 = sadd.s32 %s214, 1
    %p218 = scmp.eq.s32.totalorder %s19, 1
    %p219 = scmp.ne.s32.totalorder %s214, %s216
    %p220 = scmp.eq.s32.totalorder %s19, 0
    %p221 = por %p219, %p220
    %p222 = scmp.ne.s32.totalorder %s214, %s216
    %p223 = scmp.eq.s32.totalorder %s24, 1
    %p224 = por %p222, %p223
    %p225 = scmp.ne.s32.totalorder %s216, %s217
    %p226 = scmp.eq.s32.totalorder %s24, 0
    %p227 = por %p225, %p226
    %p228 = scmp.ne.s32.totalorder %s216, %s217
    %p229 = scmp.eq.s32.totalorder %s25, 1
    %p230 = por %p228, %p229
    %p232 = scmp.ne.s32.totalorder %s217, %s231
    %p233 = scmp.eq.s32.totalorder %s25, 0
    %p234 = por %p232, %p233
    %s236 = sadd.s32 %s235, 1
    %p239 = scmp.eq.s32.totalorder %s19, 1
    %p240 = scmp.ne.s32.totalorder %s235, %s237
    %p241 = scmp.eq.s32.totalorder %s19, 0
    %p242 = por %p240, %p241
    %p243 = scmp.ne.s32.totalorder %s235, %s237
    %p244 = scmp.eq.s32.totalorder %s24, 1
    %p245 = por %p243, %p244
    %p246 = scmp.ne.s32.totalorder %s237, %s238
    %p247 = scmp.eq.s32.totalorder %s24, 0
    %p248 = por %p246, %p247
    %p249 = scmp.ne.s32.totalorder %s237, %s238
    %p250 = scmp.eq.s32.totalorder %s25, 1
    %p251 = por %p249, %p250
    %p253 = scmp.ne.s32.totalorder %s238, %s252
    %p254 = scmp.eq.s32.totalorder %s25, 0
    %p255 = por %p253, %p254
    %s257 = sadd.s32 %s256, 1
    %p260 = scmp.eq.s32.totalorder %s19, 1
    %p261 = scmp.ne.s32.totalorder %s256, %s258
    %p262 = scmp.eq.s32.totalorder %s19, 0
    %p263 = por %p261, %p262
    %p264 = scmp.ne.s32.totalorder %s256, %s258
    %p265 = scmp.eq.s32.totalorder %s24, 1
    %p266 = por %p264, %p265
    %p267 = scmp.ne.s32.totalorder %s258, %s259
    %p268 = scmp.eq.s32.totalorder %s24, 0
    %p269 = por %p267, %p268
    %p270 = scmp.ne.s32.totalorder %s258, %s259
    %p271 = scmp.eq.s32.totalorder %s25, 1
    %p272 = por %p270, %p271
    %p274 = scmp.ne.s32.totalorder %s259, %s273
    %p275 = scmp.eq.s32.totalorder %s25, 0
    %p276 = por %p274, %p275
    %s278 = sadd.s32 %s277, 1
    %p281 = scmp.eq.s32.totalorder %s19, 1
    %p282 = scmp.ne.s32.totalorder %s277, %s279
    %p283 = scmp.eq.s32.totalorder %s19, 0
    %p284 = por %p282, %p283
    %p285 = scmp.ne.s32.totalorder %s277, %s279
    %p286 = scmp.eq.s32.totalorder %s24, 1
    %p287 = por %p285, %p286
    %p288 = scmp.ne.s32.totalorder %s279, %s280
    %p289 = scmp.eq.s32.totalorder %s24, 0
    %p290 = por %p288, %p289
    %p291 = scmp.ne.s32.totalorder %s279, %s280
    %p292 = scmp.eq.s32.totalorder %s25, 1
    %p293 = por %p291, %p292
    %p295 = scmp.ne.s32.totalorder %s280, %s294
    %p296 = scmp.eq.s32.totalorder %s25, 0
    %p297 = por %p295, %p296
    %s299 = sadd.s32 %s298, 1
    %p302 = scmp.eq.s32.totalorder %s19, 1
    %p303 = scmp.ne.s32.totalorder %s298, %s300
    %p304 = scmp.eq.s32.totalorder %s19, 0
    %p305 = por %p303, %p304
    %p306 = scmp.ne.s32.totalorder %s298, %s300
    %p307 = scmp.eq.s32.totalorder %s24, 1
    %p308 = por %p306, %p307
    %p309 = scmp.ne.s32.totalorder %s300, %s301
    %p310 = scmp.eq.s32.totalorder %s24, 0
    %p311 = por %p309, %p310
    %p312 = scmp.ne.s32.totalorder %s300, %s301
    %p313 = scmp.eq.s32.totalorder %s25, 1
    %p314 = por %p312, %p313
    %p316 = scmp.ne.s32.totalorder %s301, %s315
    %p317 = scmp.eq.s32.totalorder %s25, 0
    %p318 = por %p316, %p317
    %s319 = ssub.s32 %s26, %s38
    %s320 = ssub.s32 %s27, %s34
    %s321 = sor.u32 %s319, %s320
    %p322 = scmp.eq.s32.totalorder %s321, 0
    %s324 = sadd.s32 %s323, 1
    %s325 = scalar_select %p322, %s323, %s324
    %p328 = pneg %p322
    %p329 = scmp.eq.s32.totalorder %s19, 1
    %p330 = por %p328, %p329
    %p331 = scmp.ne.s32.totalorder %s323, %s326
    %p332 = scmp.eq.s32.totalorder %s19, 0
    %p333 = por %p331, %p332
    %p334 = scmp.ne.s32.totalorder %s323, %s326
    %p335 = scmp.eq.s32.totalorder %s24, 1
    %p336 = por %p334, %p335
    %p337 = scmp.ne.s32.totalorder %s326, %s327
    %p338 = scmp.eq.s32.totalorder %s24, 0
    %p339 = por %p337, %p338
    %p340 = scmp.ne.s32.totalorder %s326, %s327
    %p341 = scmp.eq.s32.totalorder %s25, 1
    %p342 = por %p340, %p341
    %p344 = scmp.ne.s32.totalorder %s327, %s343
    %p345 = scmp.eq.s32.totalorder %s25, 0
    %p346 = por %p344, %p345
    %p347 = scmp.le.s32.totalorder 1, %s19
    %p348 = scmp.lt.s32.totalorder %s19, 3
    %p349 = pnand %p347, %p348
    %p350 = pneg %p349
    // Predicated region
    $region9: #{skip_blocks_forward.1} parent=5 // pred_check
      _
    $region10: #{skip_blocks_forward.1} parent=5 // pred_check_branch
      %352 = sbr.rel (%p349) target = $region12
    $region11: #{skip_blocks_forward.1} parent=5 // pred_region
      %s353 = ssub.s32 %s19, 1
      // Predicated region
      $region13: #{skip_blocks_forward.1} parent=11 // pred_check
        %p354 = pneg %p80
      $region14: #{skip_blocks_forward.1} parent=11 // pred_check_branch
        %356 = sbr.rel (%p354) target = $region16
      $region15: #{skip_blocks_forward.1} parent=11 // pred_region
        _
      $region16: #{skip_blocks_forward.1} parent=11 // pred_fallthru
        _
      // Predicated region
      $region17: #{skip_blocks_forward.1} parent=11 // pred_check
        %p357 = pneg %p101
      $region18: #{skip_blocks_forward.1} parent=11 // pred_check_branch
        %359 = sbr.rel (%p357) target = $region20
      $region19: #{skip_blocks_forward.1} parent=11 // pred_region
        _
      $region20: #{skip_blocks_forward.1} parent=11 // pred_fallthru
        _
      // Predicated region
      $region21: #{skip_blocks_forward.1} parent=11 // pred_check
        %p360 = pneg %p122
      $region22: #{skip_blocks_forward.1} parent=11 // pred_check_branch
        %362 = sbr.rel (%p360) target = $region24
      $region23: #{skip_blocks_forward.1} parent=11 // pred_region
        _
      $region24: #{skip_blocks_forward.1} parent=11 // pred_fallthru
        _
      // Predicated region
      $region25: #{skip_blocks_forward.1} parent=11 // pred_check
        %p363 = pneg %p143
      $region26: #{skip_blocks_forward.1} parent=11 // pred_check_branch
        %365 = sbr.rel (%p363) target = $region28
      $region27: #{skip_blocks_forward.1} parent=11 // pred_region
        _
      $region28: #{skip_blocks_forward.1} parent=11 // pred_fallthru
        _
      // Predicated region
      $region29: #{skip_blocks_forward.1} parent=11 // pred_check
        %p366 = pneg %p164
      $region30: #{skip_blocks_forward.1} parent=11 // pred_check_branch
        %368 = sbr.rel (%p366) target = $region32
      $region31: #{skip_blocks_forward.1} parent=11 // pred_region
        _
      $region32: #{skip_blocks_forward.1} parent=11 // pred_fallthru
        _
      // Predicated region
      $region33: #{skip_blocks_forward.1} parent=11 // pred_check
        %p369 = pneg %p185
      $region34: #{skip_blocks_forward.1} parent=11 // pred_check_branch
        %371 = sbr.rel (%p369) target = $region36
      $region35: #{skip_blocks_forward.1} parent=11 // pred_region
        _
      $region36: #{skip_blocks_forward.1} parent=11 // pred_fallthru
        _
      // Predicated region
      $region37: #{skip_blocks_forward.1} parent=11 // pred_check
        %p372 = pneg %p206
      $region38: #{skip_blocks_forward.1} parent=11 // pred_check_branch
        %374 = sbr.rel (%p372) target = $region40
      $region39: #{skip_blocks_forward.1} parent=11 // pred_region
        _
      $region40: #{skip_blocks_forward.1} parent=11 // pred_fallthru
        _
      // Predicated region
      $region41: #{skip_blocks_forward.1} parent=11 // pred_check
        %p375 = pneg %p227
      $region42: #{skip_blocks_forward.1} parent=11 // pred_check_branch
        %377 = sbr.rel (%p375) target = $region44
      $region43: #{skip_blocks_forward.1} parent=11 // pred_region
        _
      $region44: #{skip_blocks_forward.1} parent=11 // pred_fallthru
        _
      // Predicated region
      $region45: #{skip_blocks_forward.1} parent=11 // pred_check
        %p378 = pneg %p248
      $region46: #{skip_blocks_forward.1} parent=11 // pred_check_branch
        %380 = sbr.rel (%p378) target = $region48
      $region47: #{skip_blocks_forward.1} parent=11 // pred_region
        _
      $region48: #{skip_blocks_forward.1} parent=11 // pred_fallthru
        _
      // Predicated region
      $region49: #{skip_blocks_forward.1} parent=11 // pred_check
        %p381 = pneg %p269
      $region50: #{skip_blocks_forward.1} parent=11 // pred_check_branch
        %383 = sbr.rel (%p381) target = $region52
      $region51: #{skip_blocks_forward.1} parent=11 // pred_region
        _
      $region52: #{skip_blocks_forward.1} parent=11 // pred_fallthru
        _
      // Predicated region
      $region53: #{skip_blocks_forward.1} parent=11 // pred_check
        %p384 = pneg %p290
      $region54: #{skip_blocks_forward.1} parent=11 // pred_check_branch
        %386 = sbr.rel (%p384) target = $region56
      $region55: #{skip_blocks_forward.1} parent=11 // pred_region
        _
      $region56: #{skip_blocks_forward.1} parent=11 // pred_fallthru
        _
      // Predicated region
      $region57: #{skip_blocks_forward.1} parent=11 // pred_check
        %p387 = pneg %p311
      $region58: #{skip_blocks_forward.1} parent=11 // pred_check_branch
        %389 = sbr.rel (%p387) target = $region60
      $region59: #{skip_blocks_forward.1} parent=11 // pred_region
        _
      $region60: #{skip_blocks_forward.1} parent=11 // pred_fallthru
        _
    $region12: #{skip_blocks_forward.1} parent=5 // pred_fallthru
      _
    %p390 = scmp.lt.s32.totalorder %s19, 2
    // Predicated region
    $region61: #{skip_blocks_forward.1} parent=5 // pred_check
      %p391 = pneg %p390
    $region62: #{skip_blocks_forward.1} parent=5 // pred_check_branch
      %393 = sbr.rel (%p391) target = $region64
    $region63: #{skip_blocks_forward.1} parent=5 // pred_region
      // Predicated region
      $region65: #{skip_blocks_forward.1} parent=63 // pred_check
        %p394 = pneg %p53
      $region66: #{skip_blocks_forward.1} parent=63 // pred_check_branch
        %396 = sbr.rel (%p394) target = $region68
      $region67: #{skip_blocks_forward.1} parent=63 // pred_region
        %s397 = smul.u32 16, %s27
        %p398 = scmp.lt.s32.totalorder %s26, 1
        %s399 = scalar_select %p398, %s26, 1
        %p400 = scmp.lt.s32.totalorder %s397, 15
        %s401 = scalar_select %p400, %s397, 15
        %s402 = smul.addr %s401, 2
        %s403 = smul.addr %s399, 32
        %s404 = sadd.s32 %s402, %s403
        %s405 = smul.addr %s404, 4
        %s406 = scalar_lea.vmem %s0, %s405
        %s407 = smul.u32 16, %s27
      $region68: #{skip_blocks_forward.1} parent=63 // pred_fallthru
        _
    $region64: #{skip_blocks_forward.1} parent=5 // pred_fallthru
      _
    %p408 = scmp.le.s32.totalorder 1, %s19
    %p409 = scmp.lt.s32.totalorder %s19, 3
    %p410 = pnand %p408, %p409
    %p411 = pneg %p410
    // Predicated region
    $region69: #{skip_blocks_forward.1} parent=5 // pred_check
      _
    $region70: #{skip_blocks_forward.1} parent=5 // pred_check_branch
      %413 = sbr.rel (%p410) target = $region72
    $region71: #{skip_blocks_forward.1} parent=5 // pred_region
      %s414 = ssub.s32 %s19, 1
      %s415 = smul.u32 16, %s29
      %p416 = scmp.lt.s32.totalorder %s28, 1
      %s417 = scalar_select %p416, %s28, 1
      %p418 = scmp.lt.s32.totalorder %s415, 15
      %s419 = scalar_select %p418, %s415, 15
      %s420 = smul.addr %s419, 2
      %s421 = smul.addr %s417, 32
      %s422 = sadd.s32 %s420, %s421
      %s423 = smul.addr %s422, 4
      %s424 = scalar_lea.vmem %s0, %s423
      %p425 = pneg %p59
      %p426 = pneg %p56
      %p427 = pneg %p80
      %p428 = pneg %p77
      %p429 = pneg %p101
      %p430 = pneg %p98
      %p431 = pneg %p122
      %p432 = pneg %p119
      %p433 = pneg %p143
      %p434 = pneg %p140
      %p435 = pneg %p164
      %p436 = pneg %p161
      %p437 = pneg %p185
      %p438 = pneg %p182
      %p439 = pneg %p206
      %p440 = pneg %p203
      %p441 = pneg %p227
      %p442 = pneg %p224
      %p443 = pneg %p248
      %p444 = pneg %p245
      %p445 = pneg %p269
      %p446 = pneg %p266
      %p447 = pneg %p290
      %p448 = pneg %p287
      %p449 = pneg %p311
      %p450 = pneg %p308
      %p451 = pneg %p339
      %p452 = pneg %p336
      %s453 = smul.u32 16, %s29
      %p454 = scmp.lt.s32.totalorder %s28, 1
      %s455 = scalar_select %p454, %s28, 1
      %p456 = scmp.lt.s32.totalorder %s453, 15
      %s457 = scalar_select %p456, %s453, 15
      %s458 = smul.addr %s457, 2
      %s459 = smul.addr %s455, 32
      %s460 = sadd.s32 %s458, %s459
      %s461 = smul.addr %s460, 8
      %s462 = scalar_lea.vmem %s13, %s461
      %s463 = smul.u32 16, %s29
      %p464 = scmp.lt.s32.totalorder %s28, 1
      %s465 = scalar_select %p464, %s28, 1
      %p466 = scmp.lt.s32.totalorder %s463, 15
      %s467 = scalar_select %p466, %s463, 15
      %s468 = smul.addr %s467, 2
      %s469 = smul.addr %s465, 32
      %s470 = sadd.s32 %s468, %s469
      %s471 = smul.addr %s470, 4
      %s472 = scalar_lea.vmem %s0, %s471
      %s473 = smul.u32 16, %s29
      %s474 = smul.u32 16, %s29
      %p475 = scmp.lt.s32.totalorder %s28, 1
      %s476 = scalar_select %p475, %s28, 1
      %p477 = scmp.lt.s32.totalorder %s474, 15
      %s478 = scalar_select %p477, %s474, 15
      %s479 = smul.addr %s478, 2
      %s480 = smul.addr %s476, 32
      %s481 = sadd.s32 %s479, %s480
      %s482 = smul.addr %s481, 8
      %s483 = scalar_lea.vmem %s13, %s482
      %s484 = smul.u32 16, %s29
      %s486 = smul.u32 %s29, 16
      %v487 = vld [vmem:[%s472] sm:$0xf]
      %v488 = vld [vmem:[%s472 + $0x4] sm:$0xf]
      %v489 = vld [vmem:[%s472 + $0x8] sm:$0xf]
      %v490 = vld [vmem:[%s472 + $0xc] sm:$0xf]
      %v491 = vld [vmem:[%s472 + $0x10] sm:$0xf]
      %v492 = vld [vmem:[%s472 + $0x14] sm:$0xf]
      %v493 = vld [vmem:[%s472 + $0x18] sm:$0xf]
      %v494 = vld [vmem:[%s472 + $0x1c] sm:$0xf]
      %v495 = vld [vmem:[%s472 + $0x20] sm:$0xf]
      %v496 = vld [vmem:[%s472 + $0x24] sm:$0xf]
      %v497 = vld [vmem:[%s472 + $0x28] sm:$0xf]
      %v498 = vld [vmem:[%s472 + $0x2c] sm:$0xf]
      %v499 = vld [vmem:[%s472 + $0x30] sm:$0xf]
      %v500 = vld [vmem:[%s472 + $0x34] sm:$0xf]
      %v501 = vld [vmem:[%s472 + $0x38] sm:$0xf]
      %v502 = vld [vmem:[%s472 + $0x3c] sm:$0xf]
      %v503 = vld [vmem:[%s472 + $0x40] sm:$0xf]
      %v504 = vld [vmem:[%s472 + $0x44] sm:$0xf]
      %v505 = vld [vmem:[%s472 + $0x48] sm:$0xf]
      %v506 = vld [vmem:[%s472 + $0x4c] sm:$0xf]
      %v507 = vld [vmem:[%s472 + $0x50] sm:$0xf]
      %v508 = vld [vmem:[%s472 + $0x54] sm:$0xf]
      %v509 = vld [vmem:[%s472 + $0x58] sm:$0xf]
      %v510 = vld [vmem:[%s472 + $0x5c] sm:$0xf]
      %v511 = vld [vmem:[%s472 + $0x60] sm:$0xf]
      %v512 = vld [vmem:[%s472 + $0x64] sm:$0xf]
      %v513 = vld [vmem:[%s472 + $0x68] sm:$0xf]
      %v514 = vld [vmem:[%s472 + $0x6c] sm:$0xf]
      %v515 = vld [vmem:[%s472 + $0x70] sm:$0xf]
      %v516 = vld [vmem:[%s472 + $0x74] sm:$0xf]
      %v517 = vld [vmem:[%s472 + $0x78] sm:$0xf]
      %v518 = vld [vmem:[%s472 + $0x7c] sm:$0xf]
      %v551 = vunpack.c.l.b16 %v487
      %v552 = vunpack.c.l.b16 %v488
      %v553 = vunpack.c.l.b16 %v489
      %v554 = vunpack.c.l.b16 %v490
      %v555 = vunpack.c.l.b16 %v491
      %v556 = vunpack.c.l.b16 %v492
      %v557 = vunpack.c.l.b16 %v493
      %v558 = vunpack.c.l.b16 %v494
      %v559 = vunpack.c.l.b16 %v495
      %v560 = vunpack.c.l.b16 %v496
      %v561 = vunpack.c.l.b16 %v497
      %v562 = vunpack.c.l.b16 %v498
      %v563 = vunpack.c.l.b16 %v499
      %v564 = vunpack.c.l.b16 %v500
      %v565 = vunpack.c.l.b16 %v501
      %v566 = vunpack.c.l.b16 %v502
      %v567 = vunpack.c.l.b16 %v503
      %v568 = vunpack.c.l.b16 %v504
      %v569 = vunpack.c.l.b16 %v505
      %v570 = vunpack.c.l.b16 %v506
      %v571 = vunpack.c.l.b16 %v507
      %v572 = vunpack.c.l.b16 %v508
      %v573 = vunpack.c.l.b16 %v509
      %v574 = vunpack.c.l.b16 %v510
      %v575 = vunpack.c.l.b16 %v511
      %v576 = vunpack.c.l.b16 %v512
      %v577 = vunpack.c.l.b16 %v513
      %v578 = vunpack.c.l.b16 %v514
      %v579 = vunpack.c.l.b16 %v515
      %v580 = vunpack.c.l.b16 %v516
      %v581 = vunpack.c.l.b16 %v517
      %v582 = vunpack.c.l.b16 %v518
      %v584 = vunpack.c.l.b16 0
      %v585 = vunpack.c.h.b16 0
      %v586 = vld [vmem:[%s1] sm:$0xf]
      %v587 = vld [vmem:[%s1 + $0x4] sm:$0xf]
      %v588 = vld [vmem:[%s1 + $0x8] sm:$0xf]
      %s589 = scalar_lea.vmem %s1, 12
      %v590 = vld [vmem:[%s589] sm:$0xf]
      %v591 = vld [vmem:[%s589 + $0x4] sm:$0xf]
      %v592 = vld [vmem:[%s589 + $0x8] sm:$0xf]
      %v593 = vpack.c.b16 %v585, %v584
      %v594 = vpack.c.b16 %v584, %v584
      %v595 = vpack.c.b16 %v584, %v585
      %v596 = vpack.c.b16 %v551, %v584
      %v597 = vpack.c.b16 %v584, %v552
      %v598 = vpack.c.b16 %v554, %v553
      %v599 = vpack.c.b16 %v555, %v584
      %v600 = vpack.c.b16 %v584, %v556
      %v601 = vpack.c.b16 %v558, %v557
      %v602 = vpack.c.b16 %v559, %v584
      %v603 = vpack.c.b16 %v584, %v560
      %v604 = vpack.c.b16 %v562, %v561
      %v605 = vpack.c.b16 %v563, %v584
      %v606 = vpack.c.b16 %v584, %v564
      %v607 = vpack.c.b16 %v566, %v565
      %v608 = vpack.c.b16 %v567, %v584
      %v609 = vpack.c.b16 %v584, %v568
      %v610 = vpack.c.b16 %v570, %v569
      %v611 = vpack.c.b16 %v571, %v584
      %v612 = vpack.c.b16 %v584, %v572
      %v613 = vpack.c.b16 %v574, %v573
      %v614 = vpack.c.b16 %v575, %v584
      %v615 = vpack.c.b16 %v584, %v576
      %v616 = vpack.c.b16 %v578, %v577
      %v617 = vpack.c.b16 %v579, %v584
      %v618 = vpack.c.b16 %v584, %v580
      %v619 = vpack.c.b16 %v582, %v581
      %v623 = vunpack.c.l.b16 %v590
      %v624 = vunpack.c.l.b16 %v591
      %v625 = vunpack.c.l.b16 %v592
      %v626 = vpack.c.b16 %v624, %v623
      %v627 = vpack.c.b16 %v625, %v625
      %vm629 = vcmask 195584
      %v631 = vsel %vm629, %v593, 0
      %v634 = vsel %vm629, %v594, 0
      %v637 = vsel %vm629, %v595, 0
      %v640 = vsel %vm629, %v596, 0
      %v643 = vsel %vm629, %v597, 0
      %v646 = vsel %vm629, %v598, 0
      %v649 = vsel %vm629, %v599, 0
      %v652 = vsel %vm629, %v600, 0
      %v655 = vsel %vm629, %v601, 0
      %v658 = vsel %vm629, %v602, 0
      %v661 = vsel %vm629, %v603, 0
      %v664 = vsel %vm629, %v604, 0
      %v667 = vsel %vm629, %v605, 0
      %v670 = vsel %vm629, %v606, 0
      %v673 = vsel %vm629, %v607, 0
      %v676 = vsel %vm629, %v608, 0
      %v679 = vsel %vm629, %v609, 0
      %v682 = vsel %vm629, %v610, 0
      %v685 = vsel %vm629, %v611, 0
      %v688 = vsel %vm629, %v612, 0
      %v691 = vsel %vm629, %v613, 0
      %v694 = vsel %vm629, %v614, 0
      %v697 = vsel %vm629, %v615, 0
      %v700 = vsel %vm629, %v616, 0
      %v703 = vsel %vm629, %v617, 0
      %v706 = vsel %vm629, %v618, 0
      %v709 = vsel %vm629, %v619, 0
      %vm711 = vcmask 1043456
      %v713 = vsel %vm711, %v627, 0
      %715 = vmatpush.bf16.msra.mxu0 0
      %716 = vmatpush.bf16.msra.mxu0 0
      %717 = vmatpush.bf16.msra.mxu0 0
      %718 = vmatpush.bf16.msra.mxu0 0
      %719 = vmatpush.bf16.msra.mxu0 0
      %720 = vmatpush.bf16.msra.mxu0 0
      %721 = vmatpush.bf16.msra.mxu0 %v713
      %722 = vmatpush.bf16.msra.mxu0 %v626
      %723 = vmatmul.bf16.gmra.mxu0 %v631
      %v724 = vpop.f32.mrf.mxu0
      %v725 = vadd.f32 0.0, %v724
      %v726 = vpop.f32.mrf.mxu0
      %v727 = vadd.f32 0.0, %v726
      %728 = vmatmul.bf16.gmra.mxu0 %v634
      %v729 = vpop.f32.mrf.mxu0
      %v730 = vadd.f32 0.0, %v729
      %v731 = vpop.f32.mrf.mxu0
      %v732 = vadd.f32 0.0, %v731
      %733 = vmatmul.bf16.gmra.mxu0 %v637
      %v734 = vpop.f32.mrf.mxu0
      %v735 = vadd.f32 0.0, %v734
      %v736 = vpop.f32.mrf.mxu0
      %v737 = vadd.f32 0.0, %v736
      %738 = vmatmul.bf16.gmra.mxu0 %v631
      %v739 = vpop.f32.mrf.mxu0
      %v740 = vadd.f32 0.0, %v739
      %v741 = vpop.f32.mrf.mxu0
      %v742 = vadd.f32 0.0, %v741
      %743 = vmatmul.bf16.gmra.mxu0 %v640
      %v744 = vpop.f32.mrf.mxu0
      %v745 = vadd.f32 0.0, %v744
      %v746 = vpop.f32.mrf.mxu0
      %v747 = vadd.f32 0.0, %v746
      %748 = vmatmul.bf16.gmra.mxu0 %v643
      %v749 = vpop.f32.mrf.mxu0
      %v750 = vadd.f32 0.0, %v749
      %v751 = vpop.f32.mrf.mxu0
      %v752 = vadd.f32 0.0, %v751
      %753 = vmatmul.bf16.gmra.mxu0 %v646
      %v754 = vpop.f32.mrf.mxu0
      %v755 = vadd.f32 0.0, %v754
      %v756 = vpop.f32.mrf.mxu0
      %v757 = vadd.f32 0.0, %v756
      %758 = vmatmul.bf16.gmra.mxu0 %v649
      %v759 = vpop.f32.mrf.mxu0
      %v760 = vadd.f32 0.0, %v759
      %v761 = vpop.f32.mrf.mxu0
      %v762 = vadd.f32 0.0, %v761
      %763 = vmatmul.bf16.gmra.mxu0 %v652
      %v764 = vpop.f32.mrf.mxu0
      %v765 = vadd.f32 0.0, %v764
      %v766 = vpop.f32.mrf.mxu0
      %v767 = vadd.f32 0.0, %v766
      %768 = vmatmul.bf16.gmra.mxu0 %v655
      %v769 = vpop.f32.mrf.mxu0
      %v770 = vadd.f32 0.0, %v769
      %v771 = vpop.f32.mrf.mxu0
      %v772 = vadd.f32 0.0, %v771
      %773 = vmatmul.bf16.gmra.mxu0 %v658
      %v774 = vpop.f32.mrf.mxu0
      %v775 = vadd.f32 0.0, %v774
      %v776 = vpop.f32.mrf.mxu0
      %v777 = vadd.f32 0.0, %v776
      %778 = vmatmul.bf16.gmra.mxu0 %v661
      %v779 = vpop.f32.mrf.mxu0
      %v780 = vadd.f32 0.0, %v779
      %v781 = vpop.f32.mrf.mxu0
      %v782 = vadd.f32 0.0, %v781
      %783 = vmatmul.bf16.gmra.mxu0 %v664
      %v784 = vpop.f32.mrf.mxu0
      %v785 = vadd.f32 0.0, %v784
      %v786 = vpop.f32.mrf.mxu0
      %v787 = vadd.f32 0.0, %v786
      %788 = vmatmul.bf16.gmra.mxu0 %v667
      %v789 = vpop.f32.mrf.mxu0
      %v790 = vadd.f32 0.0, %v789
      %v791 = vpop.f32.mrf.mxu0
      %v792 = vadd.f32 0.0, %v791
      %793 = vmatmul.bf16.gmra.mxu0 %v670
      %v794 = vpop.f32.mrf.mxu0
      %v795 = vadd.f32 0.0, %v794
      %v796 = vpop.f32.mrf.mxu0
      %v797 = vadd.f32 0.0, %v796
      %798 = vmatmul.bf16.gmra.mxu0 %v673
      %v799 = vpop.f32.mrf.mxu0
      %v800 = vadd.f32 0.0, %v799
      %v801 = vpop.f32.mrf.mxu0
      %v802 = vadd.f32 0.0, %v801
      %803 = vmatmul.bf16.gmra.mxu0 %v676
      %v804 = vpop.f32.mrf.mxu0
      %v805 = vadd.f32 0.0, %v804
      %v806 = vpop.f32.mrf.mxu0
      %v807 = vadd.f32 0.0, %v806
      %808 = vmatmul.bf16.gmra.mxu0 %v679
      %v809 = vpop.f32.mrf.mxu0
      %v810 = vadd.f32 0.0, %v809
      %v811 = vpop.f32.mrf.mxu0
      %v812 = vadd.f32 0.0, %v811
      %813 = vmatmul.bf16.gmra.mxu0 %v682
      %v814 = vpop.f32.mrf.mxu0
      %v815 = vadd.f32 0.0, %v814
      %v816 = vpop.f32.mrf.mxu0
      %v817 = vadd.f32 0.0, %v816
      %818 = vmatmul.bf16.gmra.mxu0 %v685
      %v819 = vpop.f32.mrf.mxu0
      %v820 = vadd.f32 0.0, %v819
      %v821 = vpop.f32.mrf.mxu0
      %v822 = vadd.f32 0.0, %v821
      %823 = vmatmul.bf16.gmra.mxu0 %v688
      %v824 = vpop.f32.mrf.mxu0
      %v825 = vadd.f32 0.0, %v824
      %v826 = vpop.f32.mrf.mxu0
      %v827 = vadd.f32 0.0, %v826
      %828 = vmatmul.bf16.gmra.mxu0 %v691
      %v829 = vpop.f32.mrf.mxu0
      %v830 = vadd.f32 0.0, %v829
      %v831 = vpop.f32.mrf.mxu0
      %v832 = vadd.f32 0.0, %v831
      %833 = vmatmul.bf16.gmra.mxu0 %v694
      %v834 = vpop.f32.mrf.mxu0
      %v835 = vadd.f32 0.0, %v834
      %v836 = vpop.f32.mrf.mxu0
      %v837 = vadd.f32 0.0, %v836
      %838 = vmatmul.bf16.gmra.mxu0 %v697
      %v839 = vpop.f32.mrf.mxu0
      %v840 = vadd.f32 0.0, %v839
      %v841 = vpop.f32.mrf.mxu0
      %v842 = vadd.f32 0.0, %v841
      %843 = vmatmul.bf16.gmra.mxu0 %v700
      %v844 = vpop.f32.mrf.mxu0
      %v845 = vadd.f32 0.0, %v844
      %v846 = vpop.f32.mrf.mxu0
      %v847 = vadd.f32 0.0, %v846
      %848 = vmatmul.bf16.gmra.mxu0 %v703
      %v849 = vpop.f32.mrf.mxu0
      %v850 = vadd.f32 0.0, %v849
      %v851 = vpop.f32.mrf.mxu0
      %v852 = vadd.f32 0.0, %v851
      %853 = vmatmul.bf16.gmra.mxu0 %v706
      %v854 = vpop.f32.mrf.mxu0
      %v855 = vadd.f32 0.0, %v854
      %v856 = vpop.f32.mrf.mxu0
      %v857 = vadd.f32 0.0, %v856
      %858 = vmatmul.bf16.gmra.mxu0 %v709
      %v859 = vpop.f32.mrf.mxu0
      %v860 = vadd.f32 0.0, %v859
      %v861 = vpop.f32.mrf.mxu0
      %v862 = vadd.f32 0.0, %v861
      %863 = vmatmul.bf16.gmra.mxu0 %v634
      %v864 = vpop.f32.mrf.mxu0
      %v865 = vadd.f32 0.0, %v864
      %v866 = vpop.f32.mrf.mxu0
      %v867 = vadd.f32 0.0, %v866
      %868 = vmatmul.bf16.gmra.mxu0 %v637
      %v869 = vpop.f32.mrf.mxu0
      %v870 = vadd.f32 0.0, %v869
      %v871 = vpop.f32.mrf.mxu0
      %v872 = vadd.f32 0.0, %v871
      %873 = vmatmul.bf16.gmra.mxu0 %v631
      %v874 = vpop.f32.mrf.mxu0
      %v875 = vadd.f32 0.0, %v874
      %v876 = vpop.f32.mrf.mxu0
      %v877 = vadd.f32 0.0, %v876
      %878 = vmatmul.bf16.gmra.mxu0 %v634
      %v879 = vpop.f32.mrf.mxu0
      %v880 = vadd.f32 0.0, %v879
      %v881 = vpop.f32.mrf.mxu0
      %v882 = vadd.f32 0.0, %v881
      %883 = vmatmul.bf16.gmra.mxu0 %v637
      %v884 = vpop.f32.mrf.mxu0
      %v885 = vadd.f32 0.0, %v884
      %v886 = vpop.f32.mrf.mxu0
      %v887 = vadd.f32 0.0, %v886
      %888 = vdwg.mxu0
      %v889 = vpack.c.b16 %v552, %v551
      %v890 = vpack.c.b16 %v553, %v584
      %v891 = vpack.c.b16 %v584, %v554
      %v892 = vpack.c.b16 %v556, %v555
      %v893 = vpack.c.b16 %v557, %v584
      %v894 = vpack.c.b16 %v584, %v558
      %v895 = vpack.c.b16 %v560, %v559
      %v896 = vpack.c.b16 %v561, %v584
      %v897 = vpack.c.b16 %v584, %v562
      %v898 = vpack.c.b16 %v564, %v563
      %v899 = vpack.c.b16 %v565, %v584
      %v900 = vpack.c.b16 %v584, %v566
      %v901 = vpack.c.b16 %v568, %v567
      %v902 = vpack.c.b16 %v569, %v584
      %v903 = vpack.c.b16 %v584, %v570
      %v904 = vpack.c.b16 %v572, %v571
      %v905 = vpack.c.b16 %v573, %v584
      %v906 = vpack.c.b16 %v584, %v574
      %v907 = vpack.c.b16 %v576, %v575
      %v908 = vpack.c.b16 %v577, %v584
      %v909 = vpack.c.b16 %v584, %v578
      %v910 = vpack.c.b16 %v580, %v579
      %v911 = vpack.c.b16 %v581, %v584
      %v912 = vpack.c.b16 %v584, %v582
      %v916 = vunpack.c.l.b16 %v586
      %v917 = vunpack.c.l.b16 %v587
      %v918 = vunpack.c.l.b16 %v588
      %v919 = vpack.c.b16 %v917, %v916
      %v920 = vpack.c.b16 %v918, %v918
      %v923 = vsel %vm629, %v889, 0
      %v926 = vsel %vm629, %v890, 0
      %v929 = vsel %vm629, %v891, 0
      %v932 = vsel %vm629, %v892, 0
      %v935 = vsel %vm629, %v893, 0
      %v938 = vsel %vm629, %v894, 0
      %v941 = vsel %vm629, %v895, 0
      %v944 = vsel %vm629, %v896, 0
      %v947 = vsel %vm629, %v897, 0
      %v950 = vsel %vm629, %v898, 0
      %v953 = vsel %vm629, %v899, 0
      %v956 = vsel %vm629, %v900, 0
      %v959 = vsel %vm629, %v901, 0
      %v962 = vsel %vm629, %v902, 0
      %v965 = vsel %vm629, %v903, 0
      %v968 = vsel %vm629, %v904, 0
      %v971 = vsel %vm629, %v905, 0
      %v974 = vsel %vm629, %v906, 0
      %v977 = vsel %vm629, %v907, 0
      %v980 = vsel %vm629, %v908, 0
      %v983 = vsel %vm629, %v909, 0
      %v986 = vsel %vm629, %v910, 0
      %v989 = vsel %vm629, %v911, 0
      %v992 = vsel %vm629, %v912, 0
      %v995 = vsel %vm711, %v920, 0
      %997 = vmatpush.bf16.msra.mxu0 0
      %998 = vmatpush.bf16.msra.mxu0 0
      %999 = vmatpush.bf16.msra.mxu0 0
      %1000 = vmatpush.bf16.msra.mxu0 0
      %1001 = vmatpush.bf16.msra.mxu0 0
      %1002 = vmatpush.bf16.msra.mxu0 0
      %1003 = vmatpush.bf16.msra.mxu0 %v995
      %1004 = vmatpush.bf16.msra.mxu0 %v919
      %1005 = vmatmul.bf16.gmra.mxu0 %v631
      %v1006 = vpop.f32.mrf.mxu0
      %v1007 = vadd.f32 %v725, %v1006
      %v1008 = vpop.f32.mrf.mxu0
      %v1009 = vadd.f32 %v727, %v1008
      %1010 = vmatmul.bf16.gmra.mxu0 %v634
      %v1011 = vpop.f32.mrf.mxu0
      %v1012 = vadd.f32 %v730, %v1011
      %v1013 = vpop.f32.mrf.mxu0
      %v1014 = vadd.f32 %v732, %v1013
      %1015 = vmatmul.bf16.gmra.mxu0 %v637
      %v1016 = vpop.f32.mrf.mxu0
      %v1017 = vadd.f32 %v735, %v1016
      %v1018 = vpop.f32.mrf.mxu0
      %v1019 = vadd.f32 %v737, %v1018
      %1020 = vmatmul.bf16.gmra.mxu0 %v631
      %v1021 = vpop.f32.mrf.mxu0
      %v1022 = vadd.f32 %v740, %v1021
      %v1023 = vpop.f32.mrf.mxu0
      %v1024 = vadd.f32 %v742, %v1023
      %1025 = vmatmul.bf16.gmra.mxu0 %v634
      %v1026 = vpop.f32.mrf.mxu0
      %v1027 = vadd.f32 %v745, %v1026
      %v1028 = vpop.f32.mrf.mxu0
      %v1029 = vadd.f32 %v747, %v1028
      %1030 = vmatmul.bf16.gmra.mxu0 %v637
      %v1031 = vpop.f32.mrf.mxu0
      %v1032 = vadd.f32 %v750, %v1031
      %v1033 = vpop.f32.mrf.mxu0
      %v1034 = vadd.f32 %v752, %v1033
      %1035 = vmatmul.bf16.gmra.mxu0 %v923
      %v1036 = vpop.f32.mrf.mxu0
      %v1037 = vadd.f32 %v755, %v1036
      %v1038 = vpop.f32.mrf.mxu0
      %v1039 = vadd.f32 %v757, %v1038
      %1040 = vmatmul.bf16.gmra.mxu0 %v926
      %v1041 = vpop.f32.mrf.mxu0
      %v1042 = vadd.f32 %v760, %v1041
      %v1043 = vpop.f32.mrf.mxu0
      %v1044 = vadd.f32 %v762, %v1043
      %1045 = vmatmul.bf16.gmra.mxu0 %v929
      %v1046 = vpop.f32.mrf.mxu0
      %v1047 = vadd.f32 %v765, %v1046
      %v1048 = vpop.f32.mrf.mxu0
      %v1049 = vadd.f32 %v767, %v1048
      %1050 = vmatmul.bf16.gmra.mxu0 %v932
      %v1051 = vpop.f32.mrf.mxu0
      %v1052 = vadd.f32 %v770, %v1051
      %v1053 = vpop.f32.mrf.mxu0
      %v1054 = vadd.f32 %v772, %v1053
      %1055 = vmatmul.bf16.gmra.mxu0 %v935
      %v1056 = vpop.f32.mrf.mxu0
      %v1057 = vadd.f32 %v775, %v1056
      %v1058 = vpop.f32.mrf.mxu0
      %v1059 = vadd.f32 %v777, %v1058
      %1060 = vmatmul.bf16.gmra.mxu0 %v938
      %v1061 = vpop.f32.mrf.mxu0
      %v1062 = vadd.f32 %v780, %v1061
      %v1063 = vpop.f32.mrf.mxu0
      %v1064 = vadd.f32 %v782, %v1063
      %1065 = vmatmul.bf16.gmra.mxu0 %v941
      %v1066 = vpop.f32.mrf.mxu0
      %v1067 = vadd.f32 %v785, %v1066
      %v1068 = vpop.f32.mrf.mxu0
      %v1069 = vadd.f32 %v787, %v1068
      %1070 = vmatmul.bf16.gmra.mxu0 %v944
      %v1071 = vpop.f32.mrf.mxu0
      %v1072 = vadd.f32 %v790, %v1071
      %v1073 = vpop.f32.mrf.mxu0
      %v1074 = vadd.f32 %v792, %v1073
      %1075 = vmatmul.bf16.gmra.mxu0 %v947
      %v1076 = vpop.f32.mrf.mxu0
      %v1077 = vadd.f32 %v795, %v1076
      %v1078 = vpop.f32.mrf.mxu0
      %v1079 = vadd.f32 %v797, %v1078
      %1080 = vmatmul.bf16.gmra.mxu0 %v950
      %v1081 = vpop.f32.mrf.mxu0
      %v1082 = vadd.f32 %v800, %v1081
      %v1083 = vpop.f32.mrf.mxu0
      %v1084 = vadd.f32 %v802, %v1083
      %1085 = vmatmul.bf16.gmra.mxu0 %v953
      %v1086 = vpop.f32.mrf.mxu0
      %v1087 = vadd.f32 %v805, %v1086
      %v1088 = vpop.f32.mrf.mxu0
      %v1089 = vadd.f32 %v807, %v1088
      %1090 = vmatmul.bf16.gmra.mxu0 %v956
      %v1091 = vpop.f32.mrf.mxu0
      %v1092 = vadd.f32 %v810, %v1091
      %v1093 = vpop.f32.mrf.mxu0
      %v1094 = vadd.f32 %v812, %v1093
      %1095 = vmatmul.bf16.gmra.mxu0 %v959
      %v1096 = vpop.f32.mrf.mxu0
      %v1097 = vadd.f32 %v815, %v1096
      %v1098 = vpop.f32.mrf.mxu0
      %v1099 = vadd.f32 %v817, %v1098
      %1100 = vmatmul.bf16.gmra.mxu0 %v962
      %v1101 = vpop.f32.mrf.mxu0
      %v1102 = vadd.f32 %v820, %v1101
      %v1103 = vpop.f32.mrf.mxu0
      %v1104 = vadd.f32 %v822, %v1103
      %1105 = vmatmul.bf16.gmra.mxu0 %v965
      %v1106 = vpop.f32.mrf.mxu0
      %v1107 = vadd.f32 %v825, %v1106
      %v1108 = vpop.f32.mrf.mxu0
      %v1109 = vadd.f32 %v827, %v1108
      %1110 = vmatmul.bf16.gmra.mxu0 %v968
      %v1111 = vpop.f32.mrf.mxu0
      %v1112 = vadd.f32 %v830, %v1111
      %v1113 = vpop.f32.mrf.mxu0
      %v1114 = vadd.f32 %v832, %v1113
      %1115 = vmatmul.bf16.gmra.mxu0 %v971
      %v1116 = vpop.f32.mrf.mxu0
      %v1117 = vadd.f32 %v835, %v1116
      %v1118 = vpop.f32.mrf.mxu0
      %v1119 = vadd.f32 %v837, %v1118
      %1120 = vmatmul.bf16.gmra.mxu0 %v974
      %v1121 = vpop.f32.mrf.mxu0
      %v1122 = vadd.f32 %v840, %v1121
      %v1123 = vpop.f32.mrf.mxu0
      %v1124 = vadd.f32 %v842, %v1123
      %1125 = vmatmul.bf16.gmra.mxu0 %v977
      %v1126 = vpop.f32.mrf.mxu0
      %v1127 = vadd.f32 %v845, %v1126
      %v1128 = vpop.f32.mrf.mxu0
      %v1129 = vadd.f32 %v847, %v1128
      %1130 = vmatmul.bf16.gmra.mxu0 %v980
      %v1131 = vpop.f32.mrf.mxu0
      %v1132 = vadd.f32 %v850, %v1131
      %v1133 = vpop.f32.mrf.mxu0
      %v1134 = vadd.f32 %v852, %v1133
      %1135 = vmatmul.bf16.gmra.mxu0 %v983
      %v1136 = vpop.f32.mrf.mxu0
      %v1137 = vadd.f32 %v855, %v1136
      %v1138 = vpop.f32.mrf.mxu0
      %v1139 = vadd.f32 %v857, %v1138
      %1140 = vmatmul.bf16.gmra.mxu0 %v986
      %v1141 = vpop.f32.mrf.mxu0
      %v1142 = vadd.f32 %v860, %v1141
      %v1143 = vpop.f32.mrf.mxu0
      %v1144 = vadd.f32 %v862, %v1143
      %1145 = vmatmul.bf16.gmra.mxu0 %v989
      %v1146 = vpop.f32.mrf.mxu0
      %v1147 = vadd.f32 %v865, %v1146
      %v1148 = vpop.f32.mrf.mxu0
      %v1149 = vadd.f32 %v867, %v1148
      %1150 = vmatmul.bf16.gmra.mxu0 %v992
      %v1151 = vpop.f32.mrf.mxu0
      %v1152 = vadd.f32 %v870, %v1151
      %v1153 = vpop.f32.mrf.mxu0
      %v1154 = vadd.f32 %v872, %v1153
      %1155 = vmatmul.bf16.gmra.mxu0 %v631
      %v1156 = vpop.f32.mrf.mxu0
      %v1157 = vadd.f32 %v875, %v1156
      %v1158 = vpop.f32.mrf.mxu0
      %v1159 = vadd.f32 %v877, %v1158
      %1160 = vmatmul.bf16.gmra.mxu0 %v634
      %v1161 = vpop.f32.mrf.mxu0
      %v1162 = vadd.f32 %v880, %v1161
      %v1163 = vpop.f32.mrf.mxu0
      %v1164 = vadd.f32 %v882, %v1163
      %1165 = vmatmul.bf16.gmra.mxu0 %v637
      %v1166 = vpop.f32.mrf.mxu0
      %v1167 = vadd.f32 %v885, %v1166
      %v1168 = vpop.f32.mrf.mxu0
      %v1169 = vadd.f32 %v887, %v1168
      %1170 = vdwg.mxu0
      %s1171 = scalar_lea.vmem %s1, 24
      %v1172 = vld [vmem:[%s1171] sm:$0xf]
      %v1173 = vld [vmem:[%s1171 + $0x4] sm:$0xf]
      %v1174 = vld [vmem:[%s1171 + $0x8] sm:$0xf]
      %v1178 = vunpack.c.l.b16 %v1172
      %v1179 = vunpack.c.l.b16 %v1173
      %v1180 = vunpack.c.l.b16 %v1174
      %v1181 = vpack.c.b16 %v1179, %v1178
      %v1182 = vpack.c.b16 %v1180, %v1180
      %v1185 = vsel %vm711, %v1182, 0
      %1187 = vmatpush.bf16.msra.mxu0 0
      %1188 = vmatpush.bf16.msra.mxu0 0
      %1189 = vmatpush.bf16.msra.mxu0 0
      %1190 = vmatpush.bf16.msra.mxu0 0
      %1191 = vmatpush.bf16.msra.mxu0 0
      %1192 = vmatpush.bf16.msra.mxu0 0
      %1193 = vmatpush.bf16.msra.mxu0 %v1185
      %1194 = vmatpush.bf16.msra.mxu0 %v1181
      %1195 = vmatmul.bf16.gmra.mxu0 %v631
      %v1196 = vpop.f32.mrf.mxu0
      %v1197 = vadd.f32 0.0, %v1196
      %v1198 = vpop.f32.mrf.mxu0
      %v1199 = vadd.f32 0.0, %v1198
      %1200 = vmatmul.bf16.gmra.mxu0 %v634
      %v1201 = vpop.f32.mrf.mxu0
      %v1202 = vadd.f32 0.0, %v1201
      %v1203 = vpop.f32.mrf.mxu0
      %v1204 = vadd.f32 0.0, %v1203
      %1205 = vmatmul.bf16.gmra.mxu0 %v637
      %v1206 = vpop.f32.mrf.mxu0
      %v1207 = vadd.f32 0.0, %v1206
      %v1208 = vpop.f32.mrf.mxu0
      %v1209 = vadd.f32 0.0, %v1208
      %1210 = vmatmul.bf16.gmra.mxu0 %v923
      %v1211 = vpop.f32.mrf.mxu0
      %v1212 = vadd.f32 0.0, %v1211
      %v1213 = vpop.f32.mrf.mxu0
      %v1214 = vadd.f32 0.0, %v1213
      %1215 = vmatmul.bf16.gmra.mxu0 %v926
      %v1216 = vpop.f32.mrf.mxu0
      %v1217 = vadd.f32 0.0, %v1216
      %v1218 = vpop.f32.mrf.mxu0
      %v1219 = vadd.f32 0.0, %v1218
      %1220 = vmatmul.bf16.gmra.mxu0 %v929
      %v1221 = vpop.f32.mrf.mxu0
      %v1222 = vadd.f32 0.0, %v1221
      %v1223 = vpop.f32.mrf.mxu0
      %v1224 = vadd.f32 0.0, %v1223
      %1225 = vmatmul.bf16.gmra.mxu0 %v932
      %v1226 = vpop.f32.mrf.mxu0
      %v1227 = vadd.f32 0.0, %v1226
      %v1228 = vpop.f32.mrf.mxu0
      %v1229 = vadd.f32 0.0, %v1228
      %1230 = vmatmul.bf16.gmra.mxu0 %v935
      %v1231 = vpop.f32.mrf.mxu0
      %v1232 = vadd.f32 0.0, %v1231
      %v1233 = vpop.f32.mrf.mxu0
      %v1234 = vadd.f32 0.0, %v1233
      %1235 = vmatmul.bf16.gmra.mxu0 %v938
      %v1236 = vpop.f32.mrf.mxu0
      %v1237 = vadd.f32 0.0, %v1236
      %v1238 = vpop.f32.mrf.mxu0
      %v1239 = vadd.f32 0.0, %v1238
      %1240 = vmatmul.bf16.gmra.mxu0 %v941
      %v1241 = vpop.f32.mrf.mxu0
      %v1242 = vadd.f32 0.0, %v1241
      %v1243 = vpop.f32.mrf.mxu0
      %v1244 = vadd.f32 0.0, %v1243
      %1245 = vmatmul.bf16.gmra.mxu0 %v944
      %v1246 = vpop.f32.mrf.mxu0
      %v1247 = vadd.f32 0.0, %v1246
      %v1248 = vpop.f32.mrf.mxu0
      %v1249 = vadd.f32 0.0, %v1248
      %1250 = vmatmul.bf16.gmra.mxu0 %v947
      %v1251 = vpop.f32.mrf.mxu0
      %v1252 = vadd.f32 0.0, %v1251
      %v1253 = vpop.f32.mrf.mxu0
      %v1254 = vadd.f32 0.0, %v1253
      %1255 = vmatmul.bf16.gmra.mxu0 %v950
      %v1256 = vpop.f32.mrf.mxu0
      %v1257 = vadd.f32 0.0, %v1256
      %v1258 = vpop.f32.mrf.mxu0
      %v1259 = vadd.f32 0.0, %v1258
      %1260 = vmatmul.bf16.gmra.mxu0 %v953
      %v1261 = vpop.f32.mrf.mxu0
      %v1262 = vadd.f32 0.0, %v1261
      %v1263 = vpop.f32.mrf.mxu0
      %v1264 = vadd.f32 0.0, %v1263
      %1265 = vmatmul.bf16.gmra.mxu0 %v956
      %v1266 = vpop.f32.mrf.mxu0
      %v1267 = vadd.f32 0.0, %v1266
      %v1268 = vpop.f32.mrf.mxu0
      %v1269 = vadd.f32 0.0, %v1268
      %1270 = vmatmul.bf16.gmra.mxu0 %v959
      %v1271 = vpop.f32.mrf.mxu0
      %v1272 = vadd.f32 0.0, %v1271
      %v1273 = vpop.f32.mrf.mxu0
      %v1274 = vadd.f32 0.0, %v1273
      %1275 = vmatmul.bf16.gmra.mxu0 %v962
      %v1276 = vpop.f32.mrf.mxu0
      %v1277 = vadd.f32 0.0, %v1276
      %v1278 = vpop.f32.mrf.mxu0
      %v1279 = vadd.f32 0.0, %v1278
      %1280 = vmatmul.bf16.gmra.mxu0 %v965
      %v1281 = vpop.f32.mrf.mxu0
      %v1282 = vadd.f32 0.0, %v1281
      %v1283 = vpop.f32.mrf.mxu0
      %v1284 = vadd.f32 0.0, %v1283
      %1285 = vmatmul.bf16.gmra.mxu0 %v968
      %v1286 = vpop.f32.mrf.mxu0
      %v1287 = vadd.f32 0.0, %v1286
      %v1288 = vpop.f32.mrf.mxu0
      %v1289 = vadd.f32 0.0, %v1288
      %1290 = vmatmul.bf16.gmra.mxu0 %v971
      %v1291 = vpop.f32.mrf.mxu0
      %v1292 = vadd.f32 0.0, %v1291
      %v1293 = vpop.f32.mrf.mxu0
      %v1294 = vadd.f32 0.0, %v1293
      %1295 = vmatmul.bf16.gmra.mxu0 %v974
      %v1296 = vpop.f32.mrf.mxu0
      %v1297 = vadd.f32 0.0, %v1296
      %v1298 = vpop.f32.mrf.mxu0
      %v1299 = vadd.f32 0.0, %v1298
      %1300 = vmatmul.bf16.gmra.mxu0 %v977
      %v1301 = vpop.f32.mrf.mxu0
      %v1302 = vadd.f32 0.0, %v1301
      %v1303 = vpop.f32.mrf.mxu0
      %v1304 = vadd.f32 0.0, %v1303
      %1305 = vmatmul.bf16.gmra.mxu0 %v980
      %v1306 = vpop.f32.mrf.mxu0
      %v1307 = vadd.f32 0.0, %v1306
      %v1308 = vpop.f32.mrf.mxu0
      %v1309 = vadd.f32 0.0, %v1308
      %1310 = vmatmul.bf16.gmra.mxu0 %v983
      %v1311 = vpop.f32.mrf.mxu0
      %v1312 = vadd.f32 0.0, %v1311
      %v1313 = vpop.f32.mrf.mxu0
      %v1314 = vadd.f32 0.0, %v1313
      %1315 = vmatmul.bf16.gmra.mxu0 %v986
      %v1316 = vpop.f32.mrf.mxu0
      %v1317 = vadd.f32 0.0, %v1316
      %v1318 = vpop.f32.mrf.mxu0
      %v1319 = vadd.f32 0.0, %v1318
      %1320 = vmatmul.bf16.gmra.mxu0 %v989
      %v1321 = vpop.f32.mrf.mxu0
      %v1322 = vadd.f32 0.0, %v1321
      %v1323 = vpop.f32.mrf.mxu0
      %v1324 = vadd.f32 0.0, %v1323
      %1325 = vmatmul.bf16.gmra.mxu0 %v992
      %v1326 = vpop.f32.mrf.mxu0
      %v1327 = vadd.f32 0.0, %v1326
      %v1328 = vpop.f32.mrf.mxu0
      %v1329 = vadd.f32 0.0, %v1328
      %1330 = vmatmul.bf16.gmra.mxu0 %v631
      %v1331 = vpop.f32.mrf.mxu0
      %v1332 = vadd.f32 0.0, %v1331
      %v1333 = vpop.f32.mrf.mxu0
      %v1334 = vadd.f32 0.0, %v1333
      %1335 = vmatmul.bf16.gmra.mxu0 %v634
      %v1336 = vpop.f32.mrf.mxu0
      %v1337 = vadd.f32 0.0, %v1336
      %v1338 = vpop.f32.mrf.mxu0
      %v1339 = vadd.f32 0.0, %v1338
      %1340 = vmatmul.bf16.gmra.mxu0 %v637
      %v1341 = vpop.f32.mrf.mxu0
      %v1342 = vadd.f32 0.0, %v1341
      %v1343 = vpop.f32.mrf.mxu0
      %v1344 = vadd.f32 0.0, %v1343
      %1345 = vmatmul.bf16.gmra.mxu0 %v631
      %v1346 = vpop.f32.mrf.mxu0
      %v1347 = vadd.f32 0.0, %v1346
      %v1348 = vpop.f32.mrf.mxu0
      %v1349 = vadd.f32 0.0, %v1348
      %1350 = vmatmul.bf16.gmra.mxu0 %v634
      %v1351 = vpop.f32.mrf.mxu0
      %v1352 = vadd.f32 0.0, %v1351
      %v1353 = vpop.f32.mrf.mxu0
      %v1354 = vadd.f32 0.0, %v1353
      %1355 = vmatmul.bf16.gmra.mxu0 %v637
      %v1356 = vpop.f32.mrf.mxu0
      %v1357 = vadd.f32 0.0, %v1356
      %v1358 = vpop.f32.mrf.mxu0
      %v1359 = vadd.f32 0.0, %v1358
      %1360 = vdwg.mxu0
      %v1361 = vadd.f32 %v1007, %v1197
      %v1362 = vadd.f32 %v1009, %v1199
      %v1363 = vadd.f32 %v1012, %v1202
      %v1364 = vadd.f32 %v1014, %v1204
      %v1365 = vadd.f32 %v1017, %v1207
      %v1366 = vadd.f32 %v1019, %v1209
      %v1367 = vadd.f32 %v1022, %v1212
      %v1368 = vadd.f32 %v1024, %v1214
      %v1369 = vadd.f32 %v1027, %v1217
      %v1370 = vadd.f32 %v1029, %v1219
      %v1371 = vadd.f32 %v1032, %v1222
      %v1372 = vadd.f32 %v1034, %v1224
      %v1373 = vadd.f32 %v1037, %v1227
      %v1374 = vadd.f32 %v1039, %v1229
      %v1375 = vadd.f32 %v1042, %v1232
      %v1376 = vadd.f32 %v1044, %v1234
      %v1377 = vadd.f32 %v1047, %v1237
      %v1378 = vadd.f32 %v1049, %v1239
      %v1379 = vadd.f32 %v1052, %v1242
      %v1380 = vadd.f32 %v1054, %v1244
      %v1381 = vadd.f32 %v1057, %v1247
      %v1382 = vadd.f32 %v1059, %v1249
      %v1383 = vadd.f32 %v1062, %v1252
      %v1384 = vadd.f32 %v1064, %v1254
      %v1385 = vadd.f32 %v1067, %v1257
      %v1386 = vadd.f32 %v1069, %v1259
      %v1387 = vadd.f32 %v1072, %v1262
      %v1388 = vadd.f32 %v1074, %v1264
      %v1389 = vadd.f32 %v1077, %v1267
      %v1390 = vadd.f32 %v1079, %v1269
      %v1391 = vadd.f32 %v1082, %v1272
      %v1392 = vadd.f32 %v1084, %v1274
      %v1393 = vadd.f32 %v1087, %v1277
      %v1394 = vadd.f32 %v1089, %v1279
      %v1395 = vadd.f32 %v1092, %v1282
      %v1396 = vadd.f32 %v1094, %v1284
      %v1397 = vadd.f32 %v1097, %v1287
      %v1398 = vadd.f32 %v1099, %v1289
      %v1399 = vadd.f32 %v1102, %v1292
      %v1400 = vadd.f32 %v1104, %v1294
      %v1401 = vadd.f32 %v1107, %v1297
      %v1402 = vadd.f32 %v1109, %v1299
      %v1403 = vadd.f32 %v1112, %v1302
      %v1404 = vadd.f32 %v1114, %v1304
      %v1405 = vadd.f32 %v1117, %v1307
      %v1406 = vadd.f32 %v1119, %v1309
      %v1407 = vadd.f32 %v1122, %v1312
      %v1408 = vadd.f32 %v1124, %v1314
      %v1409 = vadd.f32 %v1127, %v1317
      %v1410 = vadd.f32 %v1129, %v1319
      %v1411 = vadd.f32 %v1132, %v1322
      %v1412 = vadd.f32 %v1134, %v1324
      %v1413 = vadd.f32 %v1137, %v1327
      %v1414 = vadd.f32 %v1139, %v1329
      %v1415 = vadd.f32 %v1142, %v1332
      %v1416 = vadd.f32 %v1144, %v1334
      %v1417 = vadd.f32 %v1147, %v1337
      %v1418 = vadd.f32 %v1149, %v1339
      %v1419 = vadd.f32 %v1152, %v1342
      %v1420 = vadd.f32 %v1154, %v1344
      %v1421 = vadd.f32 %v1157, %v1347
      %v1422 = vadd.f32 %v1159, %v1349
      %v1423 = vadd.f32 %v1162, %v1352
      %v1424 = vadd.f32 %v1164, %v1354
      %v1425 = vadd.f32 %v1167, %v1357
      %v1426 = vadd.f32 %v1169, %v1359
      %v1427 = vld [vmem:[%s2] sm:$0x1]
      %v1429 = vperm.slane %v1427, 0
      %v1431 = vadd.f32 %v1361, %v1429
      %v1432 = vadd.f32 %v1362, %v1429
      %v1433 = vadd.f32 %v1363, %v1429
      %v1434 = vadd.f32 %v1364, %v1429
      %v1435 = vadd.f32 %v1365, %v1429
      %v1436 = vadd.f32 %v1366, %v1429
      %v1437 = vadd.f32 %v1367, %v1429
      %v1438 = vadd.f32 %v1368, %v1429
      %v1439 = vadd.f32 %v1369, %v1429
      %v1440 = vadd.f32 %v1370, %v1429
      %v1441 = vadd.f32 %v1371, %v1429
      %v1442 = vadd.f32 %v1372, %v1429
      %v1443 = vadd.f32 %v1373, %v1429
      %v1444 = vadd.f32 %v1374, %v1429
      %v1445 = vadd.f32 %v1375, %v1429
      %v1446 = vadd.f32 %v1376, %v1429
      %v1447 = vadd.f32 %v1377, %v1429
      %v1448 = vadd.f32 %v1378, %v1429
      %v1449 = vadd.f32 %v1379, %v1429
      %v1450 = vadd.f32 %v1380, %v1429
      %v1451 = vadd.f32 %v1381, %v1429
      %v1452 = vadd.f32 %v1382, %v1429
      %v1453 = vadd.f32 %v1383, %v1429
      %v1454 = vadd.f32 %v1384, %v1429
      %v1455 = vadd.f32 %v1385, %v1429
      %v1456 = vadd.f32 %v1386, %v1429
      %v1457 = vadd.f32 %v1387, %v1429
      %v1458 = vadd.f32 %v1388, %v1429
      %v1459 = vadd.f32 %v1389, %v1429
      %v1460 = vadd.f32 %v1390, %v1429
      %v1461 = vadd.f32 %v1391, %v1429
      %v1462 = vadd.f32 %v1392, %v1429
      %v1463 = vadd.f32 %v1393, %v1429
      %v1464 = vadd.f32 %v1394, %v1429
      %v1465 = vadd.f32 %v1395, %v1429
      %v1466 = vadd.f32 %v1396, %v1429
      %v1467 = vadd.f32 %v1397, %v1429
      %v1468 = vadd.f32 %v1398, %v1429
      %v1469 = vadd.f32 %v1399, %v1429
      %v1470 = vadd.f32 %v1400, %v1429
      %v1471 = vadd.f32 %v1401, %v1429
      %v1472 = vadd.f32 %v1402, %v1429
      %v1473 = vadd.f32 %v1403, %v1429
      %v1474 = vadd.f32 %v1404, %v1429
      %v1475 = vadd.f32 %v1405, %v1429
      %v1476 = vadd.f32 %v1406, %v1429
      %v1477 = vadd.f32 %v1407, %v1429
      %v1478 = vadd.f32 %v1408, %v1429
      %v1479 = vadd.f32 %v1409, %v1429
      %v1480 = vadd.f32 %v1410, %v1429
      %v1481 = vadd.f32 %v1411, %v1429
      %v1482 = vadd.f32 %v1412, %v1429
      %v1483 = vadd.f32 %v1413, %v1429
      %v1484 = vadd.f32 %v1414, %v1429
      %v1485 = vadd.f32 %v1415, %v1429
      %v1486 = vadd.f32 %v1416, %v1429
      %v1487 = vadd.f32 %v1417, %v1429
      %v1488 = vadd.f32 %v1418, %v1429
      %v1489 = vadd.f32 %v1419, %v1429
      %v1490 = vadd.f32 %v1420, %v1429
      %v1491 = vadd.f32 %v1421, %v1429
      %v1492 = vadd.f32 %v1422, %v1429
      %v1493 = vadd.f32 %v1423, %v1429
      %v1494 = vadd.f32 %v1424, %v1429
      %v1495 = vadd.f32 %v1425, %v1429
      %v1496 = vadd.f32 %v1426, %v1429
      %s1497 = ssub.s32 %s486, 3
      %v1498 = vstv %s1497
      %v1499 = vadd.s32 %v1498, 1
      %v1500 = vadd.s32 %v1498, 2
      %v1501 = vadd.s32 %v1498, 3
      %v1502 = vadd.s32 %v1498, 4
      %v1503 = vadd.s32 %v1498, 5
      %v1504 = vadd.s32 %v1498, 6
      %v1505 = vadd.s32 %v1498, 7
      %v1506 = vadd.s32 %v1498, 8
      %v1507 = vadd.s32 %v1498, 9
      %v1508 = vadd.s32 %v1498, 10
      %v1509 = vadd.s32 %v1498, 11
      %v1510 = vadd.s32 %v1498, 12
      %v1511 = vadd.s32 %v1498, 13
      %v1512 = vadd.s32 %v1498, 14
      %v1513 = vadd.s32 %v1498, 15
      %v1514 = vadd.s32 %v1498, 16
      %v1515 = vadd.s32 %v1498, 17
      %v1516 = vadd.s32 %v1498, 18
      %v1517 = vadd.s32 %v1498, 19
      %v1518 = vadd.s32 %v1498, 20
      %v1519 = vadd.s32 %v1498, 21
      %v1520 = vlaneseq
      %v1521 = vshrl.u32 %v1520, 7
      %v1522 = vadd.s32 %v1521, 8
      %v1523 = vadd.s32 %v1521, 16
      %vm1524 = vcmp.ge.s32.totalorder %v1498, 0
      %vm1525 = vcmp.ge.s32.totalorder %v1499, 0
      %vm1526 = vcmp.ge.s32.totalorder %v1500, 0
      %vm1527 = vcmp.ge.s32.totalorder %v1501, 0
      %vm1528 = vcmp.ge.s32.totalorder %v1502, 0
      %vm1529 = vcmp.ge.s32.totalorder %v1503, 0
      %vm1530 = vcmp.ge.s32.totalorder %v1504, 0
      %vm1531 = vcmp.ge.s32.totalorder %v1505, 0
      %vm1532 = vcmp.ge.s32.totalorder %v1506, 0
      %vm1533 = vcmp.ge.s32.totalorder %v1507, 0
      %vm1534 = vcmp.ge.s32.totalorder %v1508, 0
      %vm1535 = vcmp.ge.s32.totalorder %v1509, 0
      %vm1536 = vcmp.ge.s32.totalorder %v1510, 0
      %vm1537 = vcmp.ge.s32.totalorder %v1511, 0
      %vm1538 = vcmp.ge.s32.totalorder %v1512, 0
      %vm1539 = vcmp.ge.s32.totalorder %v1513, 0
      %vm1540 = vcmp.ge.s32.totalorder %v1514, 0
      %vm1541 = vcmp.ge.s32.totalorder %v1515, 0
      %vm1542 = vcmp.ge.s32.totalorder %v1516, 0
      %vm1543 = vcmp.ge.s32.totalorder %v1517, 0
      %vm1544 = vcmp.ge.s32.totalorder %v1518, 0
      %vm1545 = vcmp.ge.s32.totalorder %v1519, 0
      %vm1546 = vcmp.lt.s32.totalorder %v1498, 16
      %vm1547 = vcmp.lt.s32.totalorder %v1499, 16
      %vm1548 = vcmp.lt.s32.totalorder %v1500, 16
      %vm1549 = vcmp.lt.s32.totalorder %v1501, 16
      %vm1550 = vcmp.lt.s32.totalorder %v1502, 16
      %vm1551 = vcmp.lt.s32.totalorder %v1503, 16
      %vm1552 = vcmp.lt.s32.totalorder %v1504, 16
      %vm1553 = vcmp.lt.s32.totalorder %v1505, 16
      %vm1554 = vcmp.lt.s32.totalorder %v1506, 16
      %vm1555 = vcmp.lt.s32.totalorder %v1507, 16
      %vm1556 = vcmp.lt.s32.totalorder %v1508, 16
      %vm1557 = vcmp.lt.s32.totalorder %v1509, 16
      %vm1558 = vcmp.lt.s32.totalorder %v1510, 16
      %vm1559 = vcmp.lt.s32.totalorder %v1511, 16
      %vm1560 = vcmp.lt.s32.totalorder %v1512, 16
      %vm1561 = vcmp.lt.s32.totalorder %v1513, 16
      %vm1562 = vcmp.lt.s32.totalorder %v1514, 16
      %vm1563 = vcmp.lt.s32.totalorder %v1515, 16
      %vm1564 = vcmp.lt.s32.totalorder %v1516, 16
      %vm1565 = vcmp.lt.s32.totalorder %v1517, 16
      %vm1566 = vcmp.lt.s32.totalorder %v1518, 16
      %vm1567 = vcmp.lt.s32.totalorder %v1519, 16
      %vm1568 = vmand %vm1524, %vm1546
      %vm1569 = vmand %vm1525, %vm1547
      %vm1570 = vmand %vm1526, %vm1548
      %vm1571 = vmand %vm1527, %vm1549
      %vm1572 = vmand %vm1528, %vm1550
      %vm1573 = vmand %vm1529, %vm1551
      %vm1574 = vmand %vm1530, %vm1552
      %vm1575 = vmand %vm1531, %vm1553
      %vm1576 = vmand %vm1532, %vm1554
      %vm1577 = vmand %vm1533, %vm1555
      %vm1578 = vmand %vm1534, %vm1556
      %vm1579 = vmand %vm1535, %vm1557
      %vm1580 = vmand %vm1536, %vm1558
      %vm1581 = vmand %vm1537, %vm1559
      %vm1582 = vmand %vm1538, %vm1560
      %vm1583 = vmand %vm1539, %vm1561
      %vm1584 = vmand %vm1540, %vm1562
      %vm1585 = vmand %vm1541, %vm1563
      %vm1586 = vmand %vm1542, %vm1564
      %vm1587 = vmand %vm1543, %vm1565
      %vm1588 = vmand %vm1544, %vm1566
      %vm1589 = vmand %vm1545, %vm1567
      %vm1590 = vcmp.lt.s32.totalorder %v1521, 16
      %vm1591 = vcmp.lt.s32.totalorder %v1522, 16
      %vm1592 = vcmp.lt.s32.totalorder %v1523, 16
      %vm1593 = vmand %vm1568, %vm1590
      %vm1594 = vmand %vm1568, %vm1591
      %vm1595 = vmand %vm1568, %vm1592
      %vm1596 = vmand %vm1569, %vm1590
      %vm1597 = vmand %vm1569, %vm1591
      %vm1598 = vmand %vm1569, %vm1592
      %vm1599 = vmand %vm1570, %vm1590
      %vm1600 = vmand %vm1570, %vm1591
      %vm1601 = vmand %vm1570, %vm1592
      %vm1602 = vmand %vm1571, %vm1590
      %vm1603 = vmand %vm1571, %vm1591
      %vm1604 = vmand %vm1571, %vm1592
      %vm1605 = vmand %vm1572, %vm1590
      %vm1606 = vmand %vm1572, %vm1591
      %vm1607 = vmand %vm1572, %vm1592
      %vm1608 = vmand %vm1573, %vm1590
      %vm1609 = vmand %vm1573, %vm1591
      %vm1610 = vmand %vm1573, %vm1592
      %vm1611 = vmand %vm1574, %vm1590
      %vm1612 = vmand %vm1574, %vm1591
      %vm1613 = vmand %vm1574, %vm1592
      %vm1614 = vmand %vm1575, %vm1590
      %vm1615 = vmand %vm1575, %vm1591
      %vm1616 = vmand %vm1575, %vm1592
      %vm1617 = vmand %vm1576, %vm1590
      %vm1618 = vmand %vm1576, %vm1591
      %vm1619 = vmand %vm1576, %vm1592
      %vm1620 = vmand %vm1577, %vm1590
      %vm1621 = vmand %vm1577, %vm1591
      %vm1622 = vmand %vm1577, %vm1592
      %vm1623 = vmand %vm1578, %vm1590
      %vm1624 = vmand %vm1578, %vm1591
      %vm1625 = vmand %vm1578, %vm1592
      %vm1626 = vmand %vm1579, %vm1590
      %vm1627 = vmand %vm1579, %vm1591
      %vm1628 = vmand %vm1579, %vm1592
      %vm1629 = vmand %vm1580, %vm1590
      %vm1630 = vmand %vm1580, %vm1591
      %vm1631 = vmand %vm1580, %vm1592
      %vm1632 = vmand %vm1581, %vm1590
      %vm1633 = vmand %vm1581, %vm1591
      %vm1634 = vmand %vm1581, %vm1592
      %vm1635 = vmand %vm1582, %vm1590
      %vm1636 = vmand %vm1582, %vm1591
      %vm1637 = vmand %vm1582, %vm1592
      %vm1638 = vmand %vm1583, %vm1590
      %vm1639 = vmand %vm1583, %vm1591
      %vm1640 = vmand %vm1583, %vm1592
      %vm1641 = vmand %vm1584, %vm1590
      %vm1642 = vmand %vm1584, %vm1591
      %vm1643 = vmand %vm1584, %vm1592
      %vm1644 = vmand %vm1585, %vm1590
      %vm1645 = vmand %vm1585, %vm1591
      %vm1646 = vmand %vm1585, %vm1592
      %vm1647 = vmand %vm1586, %vm1590
      %vm1648 = vmand %vm1586, %vm1591
      %vm1649 = vmand %vm1586, %vm1592
      %vm1650 = vmand %vm1587, %vm1590
      %vm1651 = vmand %vm1587, %vm1591
      %vm1652 = vmand %vm1587, %vm1592
      %vm1653 = vmand %vm1588, %vm1590
      %vm1654 = vmand %vm1588, %vm1591
      %vm1655 = vmand %vm1588, %vm1592
      %vm1656 = vmand %vm1589, %vm1590
      %vm1657 = vmand %vm1589, %vm1591
      %vm1658 = vmand %vm1589, %vm1592
      %vm1659 = vcmp.ge.f32.partialorder %v1431, 0.0
      %vm1660 = vcmp.ge.f32.partialorder %v1432, 0.0
      %vm1661 = vcmp.ge.f32.partialorder %v1433, 0.0
      %vm1662 = vcmp.ge.f32.partialorder %v1434, 0.0
      %vm1663 = vcmp.ge.f32.partialorder %v1435, 0.0
      %vm1664 = vcmp.ge.f32.partialorder %v1436, 0.0
      %vm1665 = vcmp.ge.f32.partialorder %v1437, 0.0
      %vm1666 = vcmp.ge.f32.partialorder %v1438, 0.0
      %vm1667 = vcmp.ge.f32.partialorder %v1439, 0.0
      %vm1668 = vcmp.ge.f32.partialorder %v1440, 0.0
      %vm1669 = vcmp.ge.f32.partialorder %v1441, 0.0
      %vm1670 = vcmp.ge.f32.partialorder %v1442, 0.0
      %vm1671 = vcmp.ge.f32.partialorder %v1443, 0.0
      %vm1672 = vcmp.ge.f32.partialorder %v1444, 0.0
      %vm1673 = vcmp.ge.f32.partialorder %v1445, 0.0
      %vm1674 = vcmp.ge.f32.partialorder %v1446, 0.0
      %vm1675 = vcmp.ge.f32.partialorder %v1447, 0.0
      %vm1676 = vcmp.ge.f32.partialorder %v1448, 0.0
      %vm1677 = vcmp.ge.f32.partialorder %v1449, 0.0
      %vm1678 = vcmp.ge.f32.partialorder %v1450, 0.0
      %vm1679 = vcmp.ge.f32.partialorder %v1451, 0.0
      %vm1680 = vcmp.ge.f32.partialorder %v1452, 0.0
      %vm1681 = vcmp.ge.f32.partialorder %v1453, 0.0
      %vm1682 = vcmp.ge.f32.partialorder %v1454, 0.0
      %vm1683 = vcmp.ge.f32.partialorder %v1455, 0.0
      %vm1684 = vcmp.ge.f32.partialorder %v1456, 0.0
      %vm1685 = vcmp.ge.f32.partialorder %v1457, 0.0
      %vm1686 = vcmp.ge.f32.partialorder %v1458, 0.0
      %vm1687 = vcmp.ge.f32.partialorder %v1459, 0.0
      %vm1688 = vcmp.ge.f32.partialorder %v1460, 0.0
      %vm1689 = vcmp.ge.f32.partialorder %v1461, 0.0
      %vm1690 = vcmp.ge.f32.partialorder %v1462, 0.0
      %vm1691 = vcmp.ge.f32.partialorder %v1463, 0.0
      %vm1692 = vcmp.ge.f32.partialorder %v1464, 0.0
      %vm1693 = vcmp.ge.f32.partialorder %v1465, 0.0
      %vm1694 = vcmp.ge.f32.partialorder %v1466, 0.0
      %vm1695 = vcmp.ge.f32.partialorder %v1467, 0.0
      %vm1696 = vcmp.ge.f32.partialorder %v1468, 0.0
      %vm1697 = vcmp.ge.f32.partialorder %v1469, 0.0
      %vm1698 = vcmp.ge.f32.partialorder %v1470, 0.0
      %vm1699 = vcmp.ge.f32.partialorder %v1471, 0.0
      %vm1700 = vcmp.ge.f32.partialorder %v1472, 0.0
      %vm1701 = vcmp.ge.f32.partialorder %v1473, 0.0
      %vm1702 = vcmp.ge.f32.partialorder %v1474, 0.0
      %vm1703 = vcmp.ge.f32.partialorder %v1475, 0.0
      %vm1704 = vcmp.ge.f32.partialorder %v1476, 0.0
      %vm1705 = vcmp.ge.f32.partialorder %v1477, 0.0
      %vm1706 = vcmp.ge.f32.partialorder %v1478, 0.0
      %vm1707 = vcmp.ge.f32.partialorder %v1479, 0.0
      %vm1708 = vcmp.ge.f32.partialorder %v1480, 0.0
      %vm1709 = vcmp.ge.f32.partialorder %v1481, 0.0
      %vm1710 = vcmp.ge.f32.partialorder %v1482, 0.0
      %vm1711 = vcmp.ge.f32.partialorder %v1483, 0.0
      %vm1712 = vcmp.ge.f32.partialorder %v1484, 0.0
      %vm1713 = vcmp.ge.f32.partialorder %v1485, 0.0
      %vm1714 = vcmp.ge.f32.partialorder %v1486, 0.0
      %vm1715 = vcmp.ge.f32.partialorder %v1487, 0.0
      %vm1716 = vcmp.ge.f32.partialorder %v1488, 0.0
      %vm1717 = vcmp.ge.f32.partialorder %v1489, 0.0
      %vm1718 = vcmp.ge.f32.partialorder %v1490, 0.0
      %vm1719 = vcmp.ge.f32.partialorder %v1491, 0.0
      %vm1720 = vcmp.ge.f32.partialorder %v1492, 0.0
      %vm1721 = vcmp.ge.f32.partialorder %v1493, 0.0
      %vm1722 = vcmp.ge.f32.partialorder %v1494, 0.0
      %vm1723 = vcmp.ge.f32.partialorder %v1495, 0.0
      %vm1724 = vcmp.ge.f32.partialorder %v1496, 0.0
      %v1725 = vmul.f32 %v1431, 0.2
      %v1726 = vmul.f32 %v1432, 0.2
      %v1727 = vmul.f32 %v1433, 0.2
      %v1728 = vmul.f32 %v1434, 0.2
      %v1729 = vmul.f32 %v1435, 0.2
      %v1730 = vmul.f32 %v1436, 0.2
      %v1731 = vmul.f32 %v1437, 0.2
      %v1732 = vmul.f32 %v1438, 0.2
      %v1733 = vmul.f32 %v1439, 0.2
      %v1734 = vmul.f32 %v1440, 0.2
      %v1735 = vmul.f32 %v1441, 0.2
      %v1736 = vmul.f32 %v1442, 0.2
      %v1737 = vmul.f32 %v1443, 0.2
      %v1738 = vmul.f32 %v1444, 0.2
      %v1739 = vmul.f32 %v1445, 0.2
      %v1740 = vmul.f32 %v1446, 0.2
      %v1741 = vmul.f32 %v1447, 0.2
      %v1742 = vmul.f32 %v1448, 0.2
      %v1743 = vmul.f32 %v1449, 0.2
      %v1744 = vmul.f32 %v1450, 0.2
      %v1745 = vmul.f32 %v1451, 0.2
      %v1746 = vmul.f32 %v1452, 0.2
      %v1747 = vmul.f32 %v1453, 0.2
      %v1748 = vmul.f32 %v1454, 0.2
      %v1749 = vmul.f32 %v1455, 0.2
      %v1750 = vmul.f32 %v1456, 0.2
      %v1751 = vmul.f32 %v1457, 0.2
      %v1752 = vmul.f32 %v1458, 0.2
      %v1753 = vmul.f32 %v1459, 0.2
      %v1754 = vmul.f32 %v1460, 0.2
      %v1755 = vmul.f32 %v1461, 0.2
      %v1756 = vmul.f32 %v1462, 0.2
      %v1757 = vmul.f32 %v1463, 0.2
      %v1758 = vmul.f32 %v1464, 0.2
      %v1759 = vmul.f32 %v1465, 0.2
      %v1760 = vmul.f32 %v1466, 0.2
      %v1761 = vmul.f32 %v1467, 0.2
      %v1762 = vmul.f32 %v1468, 0.2
      %v1763 = vmul.f32 %v1469, 0.2
      %v1764 = vmul.f32 %v1470, 0.2
      %v1765 = vmul.f32 %v1471, 0.2
      %v1766 = vmul.f32 %v1472, 0.2
      %v1767 = vmul.f32 %v1473, 0.2
      %v1768 = vmul.f32 %v1474, 0.2
      %v1769 = vmul.f32 %v1475, 0.2
      %v1770 = vmul.f32 %v1476, 0.2
      %v1771 = vmul.f32 %v1477, 0.2
      %v1772 = vmul.f32 %v1478, 0.2
      %v1773 = vmul.f32 %v1479, 0.2
      %v1774 = vmul.f32 %v1480, 0.2
      %v1775 = vmul.f32 %v1481, 0.2
      %v1776 = vmul.f32 %v1482, 0.2
      %v1777 = vmul.f32 %v1483, 0.2
      %v1778 = vmul.f32 %v1484, 0.2
      %v1779 = vmul.f32 %v1485, 0.2
      %v1780 = vmul.f32 %v1486, 0.2
      %v1781 = vmul.f32 %v1487, 0.2
      %v1782 = vmul.f32 %v1488, 0.2
      %v1783 = vmul.f32 %v1489, 0.2
      %v1784 = vmul.f32 %v1490, 0.2
      %v1785 = vmul.f32 %v1491, 0.2
      %v1786 = vmul.f32 %v1492, 0.2
      %v1787 = vmul.f32 %v1493, 0.2
      %v1788 = vmul.f32 %v1494, 0.2
      %v1789 = vmul.f32 %v1495, 0.2
      %v1790 = vmul.f32 %v1496, 0.2
      %v1791 = vsel %vm1659, %v1431, %v1725
      %v1792 = vsel %vm1660, %v1432, %v1726
      %v1793 = vsel %vm1661, %v1433, %v1727
      %v1794 = vsel %vm1662, %v1434, %v1728
      %v1795 = vsel %vm1663, %v1435, %v1729
      %v1796 = vsel %vm1664, %v1436, %v1730
      %v1797 = vsel %vm1665, %v1437, %v1731
      %v1798 = vsel %vm1666, %v1438, %v1732
      %v1799 = vsel %vm1667, %v1439, %v1733
      %v1800 = vsel %vm1668, %v1440, %v1734
      %v1801 = vsel %vm1669, %v1441, %v1735
      %v1802 = vsel %vm1670, %v1442, %v1736
      %v1803 = vsel %vm1671, %v1443, %v1737
      %v1804 = vsel %vm1672, %v1444, %v1738
      %v1805 = vsel %vm1673, %v1445, %v1739
      %v1806 = vsel %vm1674, %v1446, %v1740
      %v1807 = vsel %vm1675, %v1447, %v1741
      %v1808 = vsel %vm1676, %v1448, %v1742
      %v1809 = vsel %vm1677, %v1449, %v1743
      %v1810 = vsel %vm1678, %v1450, %v1744
      %v1811 = vsel %vm1679, %v1451, %v1745
      %v1812 = vsel %vm1680, %v1452, %v1746
      %v1813 = vsel %vm1681, %v1453, %v1747
      %v1814 = vsel %vm1682, %v1454, %v1748
      %v1815 = vsel %vm1683, %v1455, %v1749
      %v1816 = vsel %vm1684, %v1456, %v1750
      %v1817 = vsel %vm1685, %v1457, %v1751
      %v1818 = vsel %vm1686, %v1458, %v1752
      %v1819 = vsel %vm1687, %v1459, %v1753
      %v1820 = vsel %vm1688, %v1460, %v1754
      %v1821 = vsel %vm1689, %v1461, %v1755
      %v1822 = vsel %vm1690, %v1462, %v1756
      %v1823 = vsel %vm1691, %v1463, %v1757
      %v1824 = vsel %vm1692, %v1464, %v1758
      %v1825 = vsel %vm1693, %v1465, %v1759
      %v1826 = vsel %vm1694, %v1466, %v1760
      %v1827 = vsel %vm1695, %v1467, %v1761
      %v1828 = vsel %vm1696, %v1468, %v1762
      %v1829 = vsel %vm1697, %v1469, %v1763
      %v1830 = vsel %vm1698, %v1470, %v1764
      %v1831 = vsel %vm1699, %v1471, %v1765
      %v1832 = vsel %vm1700, %v1472, %v1766
      %v1833 = vsel %vm1701, %v1473, %v1767
      %v1834 = vsel %vm1702, %v1474, %v1768
      %v1835 = vsel %vm1703, %v1475, %v1769
      %v1836 = vsel %vm1704, %v1476, %v1770
      %v1837 = vsel %vm1705, %v1477, %v1771
      %v1838 = vsel %vm1706, %v1478, %v1772
      %v1839 = vsel %vm1707, %v1479, %v1773
      %v1840 = vsel %vm1708, %v1480, %v1774
      %v1841 = vsel %vm1709, %v1481, %v1775
      %v1842 = vsel %vm1710, %v1482, %v1776
      %v1843 = vsel %vm1711, %v1483, %v1777
      %v1844 = vsel %vm1712, %v1484, %v1778
      %v1845 = vsel %vm1713, %v1485, %v1779
      %v1846 = vsel %vm1714, %v1486, %v1780
      %v1847 = vsel %vm1715, %v1487, %v1781
      %v1848 = vsel %vm1716, %v1488, %v1782
      %v1849 = vsel %vm1717, %v1489, %v1783
      %v1850 = vsel %vm1718, %v1490, %v1784
      %v1851 = vsel %vm1719, %v1491, %v1785
      %v1852 = vsel %vm1720, %v1492, %v1786
      %v1853 = vsel %vm1721, %v1493, %v1787
      %v1854 = vsel %vm1722, %v1494, %v1788
      %v1855 = vsel %vm1723, %v1495, %v1789
      %v1856 = vsel %vm1724, %v1496, %v1790
      %v1857 = vsel %vm1593, 1, 0
      %v1858 = vsel %vm1594, 1, 0
      %v1859 = vsel %vm1595, 1, 0
      %v1860 = vsel %vm1596, 1, 0
      %v1861 = vsel %vm1597, 1, 0
      %v1862 = vsel %vm1598, 1, 0
      %v1863 = vsel %vm1599, 1, 0
      %v1864 = vsel %vm1600, 1, 0
      %v1865 = vsel %vm1601, 1, 0
      %v1866 = vsel %vm1602, 1, 0
      %v1867 = vsel %vm1603, 1, 0
      %v1868 = vsel %vm1604, 1, 0
      %v1869 = vsel %vm1605, 1, 0
      %v1870 = vsel %vm1606, 1, 0
      %v1871 = vsel %vm1607, 1, 0
      %v1872 = vsel %vm1608, 1, 0
      %v1873 = vsel %vm1609, 1, 0
      %v1874 = vsel %vm1610, 1, 0
      %v1875 = vsel %vm1611, 1, 0
      %v1876 = vsel %vm1612, 1, 0
      %v1877 = vsel %vm1613, 1, 0
      %v1878 = vsel %vm1614, 1, 0
      %v1879 = vsel %vm1615, 1, 0
      %v1880 = vsel %vm1616, 1, 0
      %v1881 = vsel %vm1617, 1, 0
      %v1882 = vsel %vm1618, 1, 0
      %v1883 = vsel %vm1619, 1, 0
      %v1884 = vsel %vm1620, 1, 0
      %v1885 = vsel %vm1621, 1, 0
      %v1886 = vsel %vm1622, 1, 0
      %v1887 = vsel %vm1623, 1, 0
      %v1888 = vsel %vm1624, 1, 0
      %v1889 = vsel %vm1625, 1, 0
      %v1890 = vsel %vm1626, 1, 0
      %v1891 = vsel %vm1627, 1, 0
      %v1892 = vsel %vm1628, 1, 0
      %v1893 = vsel %vm1629, 1, 0
      %v1894 = vsel %vm1630, 1, 0
      %v1895 = vsel %vm1631, 1, 0
      %v1896 = vsel %vm1632, 1, 0
      %v1897 = vsel %vm1633, 1, 0
      %v1898 = vsel %vm1634, 1, 0
      %v1899 = vsel %vm1635, 1, 0
      %v1900 = vsel %vm1636, 1, 0
      %v1901 = vsel %vm1637, 1, 0
      %v1902 = vsel %vm1638, 1, 0
      %v1903 = vsel %vm1639, 1, 0
      %v1904 = vsel %vm1640, 1, 0
      %v1905 = vsel %vm1641, 1, 0
      %v1906 = vsel %vm1642, 1, 0
      %v1907 = vsel %vm1643, 1, 0
      %v1908 = vsel %vm1644, 1, 0
      %v1909 = vsel %vm1645, 1, 0
      %v1910 = vsel %vm1646, 1, 0
      %v1911 = vsel %vm1647, 1, 0
      %v1912 = vsel %vm1648, 1, 0
      %v1913 = vsel %vm1649, 1, 0
      %v1914 = vsel %vm1650, 1, 0
      %v1915 = vsel %vm1651, 1, 0
      %v1916 = vsel %vm1652, 1, 0
      %v1917 = vsel %vm1653, 1, 0
      %v1918 = vsel %vm1654, 1, 0
      %v1919 = vsel %vm1655, 1, 0
      %v1920 = vsel %vm1656, 1, 0
      %v1921 = vsel %vm1657, 1, 0
      %v1922 = vsel %vm1658, 1, 0
      %vm1923 = vcmp.eq.s32.totalorder %v1857, 1
      %vm1924 = vcmp.eq.s32.totalorder %v1858, 1
      %vm1925 = vcmp.eq.s32.totalorder %v1859, 1
      %vm1926 = vcmp.eq.s32.totalorder %v1860, 1
      %vm1927 = vcmp.eq.s32.totalorder %v1861, 1
      %vm1928 = vcmp.eq.s32.totalorder %v1862, 1
      %vm1929 = vcmp.eq.s32.totalorder %v1863, 1
      %vm1930 = vcmp.eq.s32.totalorder %v1864, 1
      %vm1931 = vcmp.eq.s32.totalorder %v1865, 1
      %vm1932 = vcmp.eq.s32.totalorder %v1866, 1
      %vm1933 = vcmp.eq.s32.totalorder %v1867, 1
      %vm1934 = vcmp.eq.s32.totalorder %v1868, 1
      %vm1935 = vcmp.eq.s32.totalorder %v1869, 1
      %vm1936 = vcmp.eq.s32.totalorder %v1870, 1
      %vm1937 = vcmp.eq.s32.totalorder %v1871, 1
      %vm1938 = vcmp.eq.s32.totalorder %v1872, 1
      %vm1939 = vcmp.eq.s32.totalorder %v1873, 1
      %vm1940 = vcmp.eq.s32.totalorder %v1874, 1
      %vm1941 = vcmp.eq.s32.totalorder %v1875, 1
      %vm1942 = vcmp.eq.s32.totalorder %v1876, 1
      %vm1943 = vcmp.eq.s32.totalorder %v1877, 1
      %vm1944 = vcmp.eq.s32.totalorder %v1878, 1
      %vm1945 = vcmp.eq.s32.totalorder %v1879, 1
      %vm1946 = vcmp.eq.s32.totalorder %v1880, 1
      %vm1947 = vcmp.eq.s32.totalorder %v1881, 1
      %vm1948 = vcmp.eq.s32.totalorder %v1882, 1
      %vm1949 = vcmp.eq.s32.totalorder %v1883, 1
      %vm1950 = vcmp.eq.s32.totalorder %v1884, 1
      %vm1951 = vcmp.eq.s32.totalorder %v1885, 1
      %vm1952 = vcmp.eq.s32.totalorder %v1886, 1
      %vm1953 = vcmp.eq.s32.totalorder %v1887, 1
      %vm1954 = vcmp.eq.s32.totalorder %v1888, 1
      %vm1955 = vcmp.eq.s32.totalorder %v1889, 1
      %vm1956 = vcmp.eq.s32.totalorder %v1890, 1
      %vm1957 = vcmp.eq.s32.totalorder %v1891, 1
      %vm1958 = vcmp.eq.s32.totalorder %v1892, 1
      %vm1959 = vcmp.eq.s32.totalorder %v1893, 1
      %vm1960 = vcmp.eq.s32.totalorder %v1894, 1
      %vm1961 = vcmp.eq.s32.totalorder %v1895, 1
      %vm1962 = vcmp.eq.s32.totalorder %v1896, 1
      %vm1963 = vcmp.eq.s32.totalorder %v1897, 1
      %vm1964 = vcmp.eq.s32.totalorder %v1898, 1
      %vm1965 = vcmp.eq.s32.totalorder %v1899, 1
      %vm1966 = vcmp.eq.s32.totalorder %v1900, 1
      %vm1967 = vcmp.eq.s32.totalorder %v1901, 1
      %vm1968 = vcmp.eq.s32.totalorder %v1902, 1
      %vm1969 = vcmp.eq.s32.totalorder %v1903, 1
      %vm1970 = vcmp.eq.s32.totalorder %v1904, 1
      %vm1971 = vcmp.eq.s32.totalorder %v1905, 1
      %vm1972 = vcmp.eq.s32.totalorder %v1906, 1
      %vm1973 = vcmp.eq.s32.totalorder %v1907, 1
      %vm1974 = vcmp.eq.s32.totalorder %v1908, 1
      %vm1975 = vcmp.eq.s32.totalorder %v1909, 1
      %vm1976 = vcmp.eq.s32.totalorder %v1910, 1
      %vm1977 = vcmp.eq.s32.totalorder %v1911, 1
      %vm1978 = vcmp.eq.s32.totalorder %v1912, 1
      %vm1979 = vcmp.eq.s32.totalorder %v1913, 1
      %vm1980 = vcmp.eq.s32.totalorder %v1914, 1
      %vm1981 = vcmp.eq.s32.totalorder %v1915, 1
      %vm1982 = vcmp.eq.s32.totalorder %v1916, 1
      %vm1983 = vcmp.eq.s32.totalorder %v1917, 1
      %vm1984 = vcmp.eq.s32.totalorder %v1918, 1
      %vm1985 = vcmp.eq.s32.totalorder %v1919, 1
      %vm1986 = vcmp.eq.s32.totalorder %v1920, 1
      %vm1987 = vcmp.eq.s32.totalorder %v1921, 1
      %vm1988 = vcmp.eq.s32.totalorder %v1922, 1
      %v1989 = vsel %vm1923, %v1791, 0.0
      %v1990 = vsel %vm1924, %v1792, 0.0
      %v1991 = vsel %vm1925, %v1793, 0.0
      %v1992 = vsel %vm1926, %v1794, 0.0
      %v1993 = vsel %vm1927, %v1795, 0.0
      %v1994 = vsel %vm1928, %v1796, 0.0
      %v1995 = vsel %vm1929, %v1797, 0.0
      %v1996 = vsel %vm1930, %v1798, 0.0
      %v1997 = vsel %vm1931, %v1799, 0.0
      %v1998 = vsel %vm1932, %v1800, 0.0
      %v1999 = vsel %vm1933, %v1801, 0.0
      %v2000 = vsel %vm1934, %v1802, 0.0
      %v2001 = vsel %vm1935, %v1803, 0.0
      %v2002 = vsel %vm1936, %v1804, 0.0
      %v2003 = vsel %vm1937, %v1805, 0.0
      %v2004 = vsel %vm1938, %v1806, 0.0
      %v2005 = vsel %vm1939, %v1807, 0.0
      %v2006 = vsel %vm1940, %v1808, 0.0
      %v2007 = vsel %vm1941, %v1809, 0.0
      %v2008 = vsel %vm1942, %v1810, 0.0
      %v2009 = vsel %vm1943, %v1811, 0.0
      %v2010 = vsel %vm1944, %v1812, 0.0
      %v2011 = vsel %vm1945, %v1813, 0.0
      %v2012 = vsel %vm1946, %v1814, 0.0
      %v2013 = vsel %vm1947, %v1815, 0.0
      %v2014 = vsel %vm1948, %v1816, 0.0
      %v2015 = vsel %vm1949, %v1817, 0.0
      %v2016 = vsel %vm1950, %v1818, 0.0
      %v2017 = vsel %vm1951, %v1819, 0.0
      %v2018 = vsel %vm1952, %v1820, 0.0
      %v2019 = vsel %vm1953, %v1821, 0.0
      %v2020 = vsel %vm1954, %v1822, 0.0
      %v2021 = vsel %vm1955, %v1823, 0.0
      %v2022 = vsel %vm1956, %v1824, 0.0
      %v2023 = vsel %vm1957, %v1825, 0.0
      %v2024 = vsel %vm1958, %v1826, 0.0
      %v2025 = vsel %vm1959, %v1827, 0.0
      %v2026 = vsel %vm1960, %v1828, 0.0
      %v2027 = vsel %vm1961, %v1829, 0.0
      %v2028 = vsel %vm1962, %v1830, 0.0
      %v2029 = vsel %vm1963, %v1831, 0.0
      %v2030 = vsel %vm1964, %v1832, 0.0
      %v2031 = vsel %vm1965, %v1833, 0.0
      %v2032 = vsel %vm1966, %v1834, 0.0
      %v2033 = vsel %vm1967, %v1835, 0.0
      %v2034 = vsel %vm1968, %v1836, 0.0
      %v2035 = vsel %vm1969, %v1837, 0.0
      %v2036 = vsel %vm1970, %v1838, 0.0
      %v2037 = vsel %vm1971, %v1839, 0.0
      %v2038 = vsel %vm1972, %v1840, 0.0
      %v2039 = vsel %vm1973, %v1841, 0.0
      %v2040 = vsel %vm1974, %v1842, 0.0
      %v2041 = vsel %vm1975, %v1843, 0.0
      %v2042 = vsel %vm1976, %v1844, 0.0
      %v2043 = vsel %vm1977, %v1845, 0.0
      %v2044 = vsel %vm1978, %v1846, 0.0
      %v2045 = vsel %vm1979, %v1847, 0.0
      %v2046 = vsel %vm1980, %v1848, 0.0
      %v2047 = vsel %vm1981, %v1849, 0.0
      %v2048 = vsel %vm1982, %v1850, 0.0
      %v2049 = vsel %vm1983, %v1851, 0.0
      %v2050 = vsel %vm1984, %v1852, 0.0
      %v2051 = vsel %vm1985, %v1853, 0.0
      %v2052 = vsel %vm1986, %v1854, 0.0
      %v2053 = vsel %vm1987, %v1855, 0.0
      %v2054 = vsel %vm1988, %v1856, 0.0
      %v2055 = vpack.c.bf16 %v1989, %v1989
      %v2056 = vpack.c.bf16 %v1990, %v1990
      %v2057 = vpack.c.bf16 %v1991, %v1991
      %v2058 = vpack.c.bf16 %v1992, %v1992
      %v2059 = vpack.c.bf16 %v1993, %v1993
      %v2060 = vpack.c.bf16 %v1994, %v1994
      %v2061 = vpack.c.bf16 %v1995, %v1995
      %v2062 = vpack.c.bf16 %v1996, %v1996
      %v2063 = vpack.c.bf16 %v1997, %v1997
      %v2064 = vpack.c.bf16 %v1998, %v1998
      %v2065 = vpack.c.bf16 %v1999, %v1999
      %v2066 = vpack.c.bf16 %v2000, %v2000
      %v2067 = vpack.c.bf16 %v2001, %v2001
      %v2068 = vpack.c.bf16 %v2002, %v2002
      %v2069 = vpack.c.bf16 %v2003, %v2003
      %v2070 = vpack.c.bf16 %v2004, %v2004
      %v2071 = vpack.c.bf16 %v2005, %v2005
      %v2072 = vpack.c.bf16 %v2006, %v2006
      %v2073 = vpack.c.bf16 %v2007, %v2007
      %v2074 = vpack.c.bf16 %v2008, %v2008
      %v2075 = vpack.c.bf16 %v2009, %v2009
      %v2076 = vpack.c.bf16 %v2010, %v2010
      %v2077 = vpack.c.bf16 %v2011, %v2011
      %v2078 = vpack.c.bf16 %v2012, %v2012
      %v2079 = vpack.c.bf16 %v2013, %v2013
      %v2080 = vpack.c.bf16 %v2014, %v2014
      %v2081 = vpack.c.bf16 %v2015, %v2015
      %v2082 = vpack.c.bf16 %v2016, %v2016
      %v2083 = vpack.c.bf16 %v2017, %v2017
      %v2084 = vpack.c.bf16 %v2018, %v2018
      %v2085 = vpack.c.bf16 %v2019, %v2019
      %v2086 = vpack.c.bf16 %v2020, %v2020
      %v2087 = vpack.c.bf16 %v2021, %v2021
      %v2088 = vpack.c.bf16 %v2022, %v2022
      %v2089 = vpack.c.bf16 %v2023, %v2023
      %v2090 = vpack.c.bf16 %v2024, %v2024
      %v2091 = vpack.c.bf16 %v2025, %v2025
      %v2092 = vpack.c.bf16 %v2026, %v2026
      %v2093 = vpack.c.bf16 %v2027, %v2027
      %v2094 = vpack.c.bf16 %v2028, %v2028
      %v2095 = vpack.c.bf16 %v2029, %v2029
      %v2096 = vpack.c.bf16 %v2030, %v2030
      %v2097 = vpack.c.bf16 %v2031, %v2031
      %v2098 = vpack.c.bf16 %v2032, %v2032
      %v2099 = vpack.c.bf16 %v2033, %v2033
      %v2100 = vpack.c.bf16 %v2034, %v2034
      %v2101 = vpack.c.bf16 %v2035, %v2035
      %v2102 = vpack.c.bf16 %v2036, %v2036
      %v2103 = vpack.c.bf16 %v2037, %v2037
      %v2104 = vpack.c.bf16 %v2038, %v2038
      %v2105 = vpack.c.bf16 %v2039, %v2039
      %v2106 = vpack.c.bf16 %v2040, %v2040
      %v2107 = vpack.c.bf16 %v2041, %v2041
      %v2108 = vpack.c.bf16 %v2042, %v2042
      %v2109 = vpack.c.bf16 %v2043, %v2043
      %v2110 = vpack.c.bf16 %v2044, %v2044
      %v2111 = vpack.c.bf16 %v2045, %v2045
      %v2112 = vpack.c.bf16 %v2046, %v2046
      %v2113 = vpack.c.bf16 %v2047, %v2047
      %v2114 = vpack.c.bf16 %v2048, %v2048
      %v2115 = vpack.c.bf16 %v2049, %v2049
      %v2116 = vpack.c.bf16 %v2050, %v2050
      %v2117 = vpack.c.bf16 %v2051, %v2051
      %v2118 = vpack.c.bf16 %v2052, %v2052
      %v2119 = vpack.c.bf16 %v2053, %v2053
      %v2120 = vpack.c.bf16 %v2054, %v2054
      %v2143 = vunpack.c.l.b16 %v2057
      %v2144 = vunpack.c.l.b16 %v2060
      %v2145 = vunpack.c.l.b16 %v2063
      %v2146 = vunpack.c.l.b16 %v2066
      %v2147 = vunpack.c.l.b16 %v2069
      %v2148 = vunpack.c.l.b16 %v2072
      %v2149 = vunpack.c.l.b16 %v2075
      %v2150 = vunpack.c.l.b16 %v2078
      %v2151 = vunpack.c.l.b16 %v2081
      %v2152 = vunpack.c.l.b16 %v2084
      %v2153 = vunpack.c.l.b16 %v2087
      %v2154 = vunpack.c.l.b16 %v2090
      %v2155 = vunpack.c.l.b16 %v2093
      %v2156 = vunpack.c.l.b16 %v2096
      %v2157 = vunpack.c.l.b16 %v2099
      %v2158 = vunpack.c.l.b16 %v2102
      %v2159 = vunpack.c.l.b16 %v2105
      %v2160 = vunpack.c.l.b16 %v2108
      %v2161 = vunpack.c.l.b16 %v2111
      %v2162 = vunpack.c.l.b16 %v2114
      %v2163 = vunpack.c.l.b16 %v2117
      %v2164 = vunpack.c.l.b16 %v2120
      %v2165 = vpack.c.b16 %v2143, %v2143
      %v2166 = vpack.c.b16 %v2144, %v2144
      %v2167 = vpack.c.b16 %v2145, %v2145
      %v2168 = vpack.c.b16 %v2146, %v2146
      %v2169 = vpack.c.b16 %v2147, %v2147
      %v2170 = vpack.c.b16 %v2148, %v2148
      %v2171 = vpack.c.b16 %v2149, %v2149
      %v2172 = vpack.c.b16 %v2150, %v2150
      %v2173 = vpack.c.b16 %v2151, %v2151
      %v2174 = vpack.c.b16 %v2152, %v2152
      %v2175 = vpack.c.b16 %v2153, %v2153
      %v2176 = vpack.c.b16 %v2154, %v2154
      %v2177 = vpack.c.b16 %v2155, %v2155
      %v2178 = vpack.c.b16 %v2156, %v2156
      %v2179 = vpack.c.b16 %v2157, %v2157
      %v2180 = vpack.c.b16 %v2158, %v2158
      %v2181 = vpack.c.b16 %v2159, %v2159
      %v2182 = vpack.c.b16 %v2160, %v2160
      %v2183 = vpack.c.b16 %v2161, %v2161
      %v2184 = vpack.c.b16 %v2162, %v2162
      %v2185 = vpack.c.b16 %v2163, %v2163
      %v2186 = vpack.c.b16 %v2164, %v2164
      %v2188 = vshrl.u32 %v2165, 16
      %v2190 = vrot.slane %v2188, 3
      %v2192 = vshrl.u32 %v2166, 16
      %v2194 = vrot.slane %v2192, 3
      %v2196 = vshrl.u32 %v2167, 16
      %v2198 = vrot.slane %v2196, 3
      %v2200 = vshrl.u32 %v2168, 16
      %v2202 = vrot.slane %v2200, 3
      %v2204 = vshrl.u32 %v2169, 16
      %v2206 = vrot.slane %v2204, 3
      %v2208 = vshrl.u32 %v2170, 16
      %v2210 = vrot.slane %v2208, 3
      %v2212 = vshrl.u32 %v2171, 16
      %v2214 = vrot.slane %v2212, 3
      %v2216 = vshrl.u32 %v2172, 16
      %v2218 = vrot.slane %v2216, 3
      %v2220 = vshrl.u32 %v2173, 16
      %v2222 = vrot.slane %v2220, 3
      %v2224 = vshrl.u32 %v2174, 16
      %v2226 = vrot.slane %v2224, 3
      %v2228 = vshrl.u32 %v2175, 16
      %v2230 = vrot.slane %v2228, 3
      %v2232 = vshrl.u32 %v2176, 16
      %v2234 = vrot.slane %v2232, 3
      %v2236 = vshrl.u32 %v2177, 16
      %v2238 = vrot.slane %v2236, 3
      %v2240 = vshrl.u32 %v2178, 16
      %v2242 = vrot.slane %v2240, 3
      %v2244 = vshrl.u32 %v2179, 16
      %v2246 = vrot.slane %v2244, 3
      %v2248 = vshrl.u32 %v2180, 16
      %v2250 = vrot.slane %v2248, 3
      %v2252 = vshrl.u32 %v2181, 16
      %v2254 = vrot.slane %v2252, 3
      %v2256 = vshrl.u32 %v2182, 16
      %v2258 = vrot.slane %v2256, 3
      %v2260 = vshrl.u32 %v2183, 16
      %v2262 = vrot.slane %v2260, 3
      %v2264 = vshrl.u32 %v2184, 16
      %v2266 = vrot.slane %v2264, 3
      %v2268 = vshrl.u32 %v2185, 16
      %v2270 = vrot.slane %v2268, 3
      %v2272 = vshrl.u32 %v2186, 16
      %v2274 = vrot.slane %v2272, 3
      %v2341 = vunpack.c.l.b16 %v2055
      %v2342 = vunpack.c.l.b16 %v2056
      %v2343 = vunpack.c.l.b16 %v2058
      %v2344 = vunpack.c.l.b16 %v2059
      %v2345 = vunpack.c.l.b16 %v2061
      %v2346 = vunpack.c.l.b16 %v2062
      %v2347 = vunpack.c.l.b16 %v2064
      %v2348 = vunpack.c.l.b16 %v2065
      %v2349 = vunpack.c.l.b16 %v2067
      %v2350 = vunpack.c.l.b16 %v2068
      %v2351 = vunpack.c.l.b16 %v2070
      %v2352 = vunpack.c.l.b16 %v2071
      %v2353 = vunpack.c.l.b16 %v2073
      %v2354 = vunpack.c.l.b16 %v2074
      %v2355 = vunpack.c.l.b16 %v2076
      %v2356 = vunpack.c.l.b16 %v2077
      %v2357 = vunpack.c.l.b16 %v2079
      %v2358 = vunpack.c.l.b16 %v2080
      %v2359 = vunpack.c.l.b16 %v2082
      %v2360 = vunpack.c.l.b16 %v2083
      %v2361 = vunpack.c.l.b16 %v2085
      %v2362 = vunpack.c.l.b16 %v2086
      %v2363 = vunpack.c.l.b16 %v2088
      %v2364 = vunpack.c.l.b16 %v2089
      %v2365 = vunpack.c.l.b16 %v2091
      %v2366 = vunpack.c.l.b16 %v2092
      %v2367 = vunpack.c.l.b16 %v2094
      %v2368 = vunpack.c.l.b16 %v2095
      %v2369 = vunpack.c.l.b16 %v2097
      %v2370 = vunpack.c.l.b16 %v2098
      %v2371 = vunpack.c.l.b16 %v2100
      %v2372 = vunpack.c.l.b16 %v2101
      %v2373 = vunpack.c.l.b16 %v2103
      %v2374 = vunpack.c.l.b16 %v2104
      %v2375 = vunpack.c.l.b16 %v2106
      %v2376 = vunpack.c.l.b16 %v2107
      %v2377 = vunpack.c.l.b16 %v2109
      %v2378 = vunpack.c.l.b16 %v2110
      %v2379 = vunpack.c.l.b16 %v2112
      %v2380 = vunpack.c.l.b16 %v2113
      %v2381 = vunpack.c.l.b16 %v2115
      %v2382 = vunpack.c.l.b16 %v2116
      %v2383 = vunpack.c.l.b16 %v2118
      %v2384 = vunpack.c.l.b16 %v2119
      %v2385 = vpack.c.b16 %v2342, %v2341
      %v2386 = vpack.c.b16 %v2344, %v2343
      %v2387 = vpack.c.b16 %v2346, %v2345
      %v2388 = vpack.c.b16 %v2348, %v2347
      %v2389 = vpack.c.b16 %v2350, %v2349
      %v2390 = vpack.c.b16 %v2352, %v2351
      %v2391 = vpack.c.b16 %v2354, %v2353
      %v2392 = vpack.c.b16 %v2356, %v2355
      %v2393 = vpack.c.b16 %v2358, %v2357
      %v2394 = vpack.c.b16 %v2360, %v2359
      %v2395 = vpack.c.b16 %v2362, %v2361
      %v2396 = vpack.c.b16 %v2364, %v2363
      %v2397 = vpack.c.b16 %v2366, %v2365
      %v2398 = vpack.c.b16 %v2368, %v2367
      %v2399 = vpack.c.b16 %v2370, %v2369
      %v2400 = vpack.c.b16 %v2372, %v2371
      %v2401 = vpack.c.b16 %v2374, %v2373
      %v2402 = vpack.c.b16 %v2376, %v2375
      %v2403 = vpack.c.b16 %v2378, %v2377
      %v2404 = vpack.c.b16 %v2380, %v2379
      %v2405 = vpack.c.b16 %v2382, %v2381
      %v2406 = vpack.c.b16 %v2384, %v2383
      %vm2407 = vsmask.f32 256
      %v2409 = vshrl.u32 %v2385, 16
      %v2411 = vrot.slane %v2409, 7
      %v2412 = vshll.u32 %v2385, 16
      %v2414 = vor.u32 %v2411, %v2412
      %v2415 = vrot.slane %v2188, 7
      %v2416 = vshll.u32 %v2165, 16
      %v2418 = vor.u32 %v2415, %v2416
      %v2419 = vsel %vm2407, %v2411, %v2418
      %v2421 = vshrl.u32 %v2386, 16
      %v2423 = vrot.slane %v2421, 7
      %v2424 = vshll.u32 %v2386, 16
      %v2426 = vor.u32 %v2423, %v2424
      %v2427 = vrot.slane %v2192, 7
      %v2428 = vshll.u32 %v2166, 16
      %v2430 = vor.u32 %v2427, %v2428
      %v2431 = vsel %vm2407, %v2423, %v2430
      %v2433 = vshrl.u32 %v2387, 16
      %v2435 = vrot.slane %v2433, 7
      %v2436 = vshll.u32 %v2387, 16
      %v2438 = vor.u32 %v2435, %v2436
      %v2439 = vrot.slane %v2196, 7
      %v2440 = vshll.u32 %v2167, 16
      %v2442 = vor.u32 %v2439, %v2440
      %v2443 = vsel %vm2407, %v2435, %v2442
      %v2445 = vshrl.u32 %v2388, 16
      %v2447 = vrot.slane %v2445, 7
      %v2448 = vshll.u32 %v2388, 16
      %v2450 = vor.u32 %v2447, %v2448
      %v2451 = vrot.slane %v2200, 7
      %v2452 = vshll.u32 %v2168, 16
      %v2454 = vor.u32 %v2451, %v2452
      %v2455 = vsel %vm2407, %v2447, %v2454
      %v2457 = vshrl.u32 %v2389, 16
      %v2459 = vrot.slane %v2457, 7
      %v2460 = vshll.u32 %v2389, 16
      %v2462 = vor.u32 %v2459, %v2460
      %v2463 = vrot.slane %v2204, 7
      %v2464 = vshll.u32 %v2169, 16
      %v2466 = vor.u32 %v2463, %v2464
      %v2467 = vsel %vm2407, %v2459, %v2466
      %v2469 = vshrl.u32 %v2390, 16
      %v2471 = vrot.slane %v2469, 7
      %v2472 = vshll.u32 %v2390, 16
      %v2474 = vor.u32 %v2471, %v2472
      %v2475 = vrot.slane %v2208, 7
      %v2476 = vshll.u32 %v2170, 16
      %v2478 = vor.u32 %v2475, %v2476
      %v2479 = vsel %vm2407, %v2471, %v2478
      %v2481 = vshrl.u32 %v2391, 16
      %v2483 = vrot.slane %v2481, 7
      %v2484 = vshll.u32 %v2391, 16
      %v2486 = vor.u32 %v2483, %v2484
      %v2487 = vrot.slane %v2212, 7
      %v2488 = vshll.u32 %v2171, 16
      %v2490 = vor.u32 %v2487, %v2488
      %v2491 = vsel %vm2407, %v2483, %v2490
      %v2493 = vshrl.u32 %v2392, 16
      %v2495 = vrot.slane %v2493, 7
      %v2496 = vshll.u32 %v2392, 16
      %v2498 = vor.u32 %v2495, %v2496
      %v2499 = vrot.slane %v2216, 7
      %v2500 = vshll.u32 %v2172, 16
      %v2502 = vor.u32 %v2499, %v2500
      %v2503 = vsel %vm2407, %v2495, %v2502
      %v2505 = vshrl.u32 %v2393, 16
      %v2507 = vrot.slane %v2505, 7
      %v2508 = vshll.u32 %v2393, 16
      %v2510 = vor.u32 %v2507, %v2508
      %v2511 = vrot.slane %v2220, 7
      %v2512 = vshll.u32 %v2173, 16
      %v2514 = vor.u32 %v2511, %v2512
      %v2515 = vsel %vm2407, %v2507, %v2514
      %v2517 = vshrl.u32 %v2394, 16
      %v2519 = vrot.slane %v2517, 7
      %v2520 = vshll.u32 %v2394, 16
      %v2522 = vor.u32 %v2519, %v2520
      %v2523 = vrot.slane %v2224, 7
      %v2524 = vshll.u32 %v2174, 16
      %v2526 = vor.u32 %v2523, %v2524
      %v2527 = vsel %vm2407, %v2519, %v2526
      %v2529 = vshrl.u32 %v2395, 16
      %v2531 = vrot.slane %v2529, 7
      %v2532 = vshll.u32 %v2395, 16
      %v2534 = vor.u32 %v2531, %v2532
      %v2535 = vrot.slane %v2228, 7
      %v2536 = vshll.u32 %v2175, 16
      %v2538 = vor.u32 %v2535, %v2536
      %v2539 = vsel %vm2407, %v2531, %v2538
      %v2541 = vshrl.u32 %v2396, 16
      %v2543 = vrot.slane %v2541, 7
      %v2544 = vshll.u32 %v2396, 16
      %v2546 = vor.u32 %v2543, %v2544
      %v2547 = vrot.slane %v2232, 7
      %v2548 = vshll.u32 %v2176, 16
      %v2550 = vor.u32 %v2547, %v2548
      %v2551 = vsel %vm2407, %v2543, %v2550
      %v2553 = vshrl.u32 %v2397, 16
      %v2555 = vrot.slane %v2553, 7
      %v2556 = vshll.u32 %v2397, 16
      %v2558 = vor.u32 %v2555, %v2556
      %v2559 = vrot.slane %v2236, 7
      %v2560 = vshll.u32 %v2177, 16
      %v2562 = vor.u32 %v2559, %v2560
      %v2563 = vsel %vm2407, %v2555, %v2562
      %v2565 = vshrl.u32 %v2398, 16
      %v2567 = vrot.slane %v2565, 7
      %v2568 = vshll.u32 %v2398, 16
      %v2570 = vor.u32 %v2567, %v2568
      %v2571 = vrot.slane %v2240, 7
      %v2572 = vshll.u32 %v2178, 16
      %v2574 = vor.u32 %v2571, %v2572
      %v2575 = vsel %vm2407, %v2567, %v2574
      %v2577 = vshrl.u32 %v2399, 16
      %v2579 = vrot.slane %v2577, 7
      %v2580 = vshll.u32 %v2399, 16
      %v2582 = vor.u32 %v2579, %v2580
      %v2583 = vrot.slane %v2244, 7
      %v2584 = vshll.u32 %v2179, 16
      %v2586 = vor.u32 %v2583, %v2584
      %v2587 = vsel %vm2407, %v2579, %v2586
      %v2589 = vshrl.u32 %v2400, 16
      %v2591 = vrot.slane %v2589, 7
      %v2592 = vshll.u32 %v2400, 16
      %v2594 = vor.u32 %v2591, %v2592
      %v2595 = vrot.slane %v2248, 7
      %v2596 = vshll.u32 %v2180, 16
      %v2598 = vor.u32 %v2595, %v2596
      %v2599 = vsel %vm2407, %v2591, %v2598
      %v2601 = vshrl.u32 %v2401, 16
      %v2603 = vrot.slane %v2601, 7
      %v2604 = vshll.u32 %v2401, 16
      %v2606 = vor.u32 %v2603, %v2604
      %v2607 = vrot.slane %v2252, 7
      %v2608 = vshll.u32 %v2181, 16
      %v2610 = vor.u32 %v2607, %v2608
      %v2611 = vsel %vm2407, %v2603, %v2610
      %v2613 = vshrl.u32 %v2402, 16
      %v2615 = vrot.slane %v2613, 7
      %v2616 = vshll.u32 %v2402, 16
      %v2618 = vor.u32 %v2615, %v2616
      %v2619 = vrot.slane %v2256, 7
      %v2620 = vshll.u32 %v2182, 16
      %v2622 = vor.u32 %v2619, %v2620
      %v2623 = vsel %vm2407, %v2615, %v2622
      %v2625 = vshrl.u32 %v2403, 16
      %v2627 = vrot.slane %v2625, 7
      %v2628 = vshll.u32 %v2403, 16
      %v2630 = vor.u32 %v2627, %v2628
      %v2631 = vrot.slane %v2260, 7
      %v2632 = vshll.u32 %v2183, 16
      %v2634 = vor.u32 %v2631, %v2632
      %v2635 = vsel %vm2407, %v2627, %v2634
      %v2637 = vshrl.u32 %v2404, 16
      %v2639 = vrot.slane %v2637, 7
      %v2640 = vshll.u32 %v2404, 16
      %v2642 = vor.u32 %v2639, %v2640
      %v2643 = vrot.slane %v2264, 7
      %v2644 = vshll.u32 %v2184, 16
      %v2646 = vor.u32 %v2643, %v2644
      %v2647 = vsel %vm2407, %v2639, %v2646
      %v2649 = vshrl.u32 %v2405, 16
      %v2651 = vrot.slane %v2649, 7
      %v2652 = vshll.u32 %v2405, 16
      %v2654 = vor.u32 %v2651, %v2652
      %v2655 = vrot.slane %v2268, 7
      %v2656 = vshll.u32 %v2185, 16
      %v2658 = vor.u32 %v2655, %v2656
      %v2659 = vsel %vm2407, %v2651, %v2658
      %v2661 = vshrl.u32 %v2406, 16
      %v2663 = vrot.slane %v2661, 7
      %v2664 = vshll.u32 %v2406, 16
      %v2666 = vor.u32 %v2663, %v2664
      %v2667 = vrot.slane %v2272, 7
      %v2668 = vshll.u32 %v2186, 16
      %v2670 = vor.u32 %v2667, %v2668
      %v2671 = vsel %vm2407, %v2663, %v2670
      %vm2694 = vcmask 1040384
      %vm2695 = vmand %vm2694, %vm2407
      %v2696 = vsel %vm2695, %v2190, %v2414
      %v2697 = vsel %vm2695, %v2194, %v2426
      %v2698 = vsel %vm2695, %v2198, %v2438
      %v2699 = vsel %vm2695, %v2202, %v2450
      %v2700 = vsel %vm2695, %v2206, %v2462
      %v2701 = vsel %vm2695, %v2210, %v2474
      %v2702 = vsel %vm2695, %v2214, %v2486
      %v2703 = vsel %vm2695, %v2218, %v2498
      %v2704 = vsel %vm2695, %v2222, %v2510
      %v2705 = vsel %vm2695, %v2226, %v2522
      %v2706 = vsel %vm2695, %v2230, %v2534
      %v2707 = vsel %vm2695, %v2234, %v2546
      %v2708 = vsel %vm2695, %v2238, %v2558
      %v2709 = vsel %vm2695, %v2242, %v2570
      %v2710 = vsel %vm2695, %v2246, %v2582
      %v2711 = vsel %vm2695, %v2250, %v2594
      %v2712 = vsel %vm2695, %v2254, %v2606
      %v2713 = vsel %vm2695, %v2258, %v2618
      %v2714 = vsel %vm2695, %v2262, %v2630
      %v2715 = vsel %vm2695, %v2266, %v2642
      %v2716 = vsel %vm2695, %v2270, %v2654
      %v2717 = vsel %vm2695, %v2274, %v2666
      %vm2718 = vsmask.f32 7424
      %v2719 = vrot.slane %v2412, 1
      %v2720 = vor.u32 %v2409, %v2719
      %v2721 = vrot.slane %v2416, 1
      %v2722 = vsel %vm2718, %v2720, %v2721
      %v2723 = vor.u32 %v2188, %v2721
      %v2724 = vrot.slane %v2424, 1
      %v2725 = vor.u32 %v2421, %v2724
      %v2726 = vrot.slane %v2428, 1
      %v2727 = vsel %vm2718, %v2725, %v2726
      %v2728 = vor.u32 %v2192, %v2726
      %v2729 = vrot.slane %v2436, 1
      %v2730 = vor.u32 %v2433, %v2729
      %v2731 = vrot.slane %v2440, 1
      %v2732 = vsel %vm2718, %v2730, %v2731
      %v2733 = vor.u32 %v2196, %v2731
      %v2734 = vrot.slane %v2448, 1
      %v2735 = vor.u32 %v2445, %v2734
      %v2736 = vrot.slane %v2452, 1
      %v2737 = vsel %vm2718, %v2735, %v2736
      %v2738 = vor.u32 %v2200, %v2736
      %v2739 = vrot.slane %v2460, 1
      %v2740 = vor.u32 %v2457, %v2739
      %v2741 = vrot.slane %v2464, 1
      %v2742 = vsel %vm2718, %v2740, %v2741
      %v2743 = vor.u32 %v2204, %v2741
      %v2744 = vrot.slane %v2472, 1
      %v2745 = vor.u32 %v2469, %v2744
      %v2746 = vrot.slane %v2476, 1
      %v2747 = vsel %vm2718, %v2745, %v2746
      %v2748 = vor.u32 %v2208, %v2746
      %v2749 = vrot.slane %v2484, 1
      %v2750 = vor.u32 %v2481, %v2749
      %v2751 = vrot.slane %v2488, 1
      %v2752 = vsel %vm2718, %v2750, %v2751
      %v2753 = vor.u32 %v2212, %v2751
      %v2754 = vrot.slane %v2496, 1
      %v2755 = vor.u32 %v2493, %v2754
      %v2756 = vrot.slane %v2500, 1
      %v2757 = vsel %vm2718, %v2755, %v2756
      %v2758 = vor.u32 %v2216, %v2756
      %v2759 = vrot.slane %v2508, 1
      %v2760 = vor.u32 %v2505, %v2759
      %v2761 = vrot.slane %v2512, 1
      %v2762 = vsel %vm2718, %v2760, %v2761
      %v2763 = vor.u32 %v2220, %v2761
      %v2764 = vrot.slane %v2520, 1
      %v2765 = vor.u32 %v2517, %v2764
      %v2766 = vrot.slane %v2524, 1
      %v2767 = vsel %vm2718, %v2765, %v2766
      %v2768 = vor.u32 %v2224, %v2766
      %v2769 = vrot.slane %v2532, 1
      %v2770 = vor.u32 %v2529, %v2769
      %v2771 = vrot.slane %v2536, 1
      %v2772 = vsel %vm2718, %v2770, %v2771
      %v2773 = vor.u32 %v2228, %v2771
      %v2774 = vrot.slane %v2544, 1
      %v2775 = vor.u32 %v2541, %v2774
      %v2776 = vrot.slane %v2548, 1
      %v2777 = vsel %vm2718, %v2775, %v2776
      %v2778 = vor.u32 %v2232, %v2776
      %v2779 = vrot.slane %v2556, 1
      %v2780 = vor.u32 %v2553, %v2779
      %v2781 = vrot.slane %v2560, 1
      %v2782 = vsel %vm2718, %v2780, %v2781
      %v2783 = vor.u32 %v2236, %v2781
      %v2784 = vrot.slane %v2568, 1
      %v2785 = vor.u32 %v2565, %v2784
      %v2786 = vrot.slane %v2572, 1
      %v2787 = vsel %vm2718, %v2785, %v2786
      %v2788 = vor.u32 %v2240, %v2786
      %v2789 = vrot.slane %v2580, 1
      %v2790 = vor.u32 %v2577, %v2789
      %v2791 = vrot.slane %v2584, 1
      %v2792 = vsel %vm2718, %v2790, %v2791
      %v2793 = vor.u32 %v2244, %v2791
      %v2794 = vrot.slane %v2592, 1
      %v2795 = vor.u32 %v2589, %v2794
      %v2796 = vrot.slane %v2596, 1
      %v2797 = vsel %vm2718, %v2795, %v2796
      %v2798 = vor.u32 %v2248, %v2796
      %v2799 = vrot.slane %v2604, 1
      %v2800 = vor.u32 %v2601, %v2799
      %v2801 = vrot.slane %v2608, 1
      %v2802 = vsel %vm2718, %v2800, %v2801
      %v2803 = vor.u32 %v2252, %v2801
      %v2804 = vrot.slane %v2616, 1
      %v2805 = vor.u32 %v2613, %v2804
      %v2806 = vrot.slane %v2620, 1
      %v2807 = vsel %vm2718, %v2805, %v2806
      %v2808 = vor.u32 %v2256, %v2806
      %v2809 = vrot.slane %v2628, 1
      %v2810 = vor.u32 %v2625, %v2809
      %v2811 = vrot.slane %v2632, 1
      %v2812 = vsel %vm2718, %v2810, %v2811
      %v2813 = vor.u32 %v2260, %v2811
      %v2814 = vrot.slane %v2640, 1
      %v2815 = vor.u32 %v2637, %v2814
      %v2816 = vrot.slane %v2644, 1
      %v2817 = vsel %vm2718, %v2815, %v2816
      %v2818 = vor.u32 %v2264, %v2816
      %v2819 = vrot.slane %v2652, 1
      %v2820 = vor.u32 %v2649, %v2819
      %v2821 = vrot.slane %v2656, 1
      %v2822 = vsel %vm2718, %v2820, %v2821
      %v2823 = vor.u32 %v2268, %v2821
      %v2824 = vrot.slane %v2664, 1
      %v2825 = vor.u32 %v2661, %v2824
      %v2826 = vrot.slane %v2668, 1
      %v2827 = vsel %vm2718, %v2825, %v2826
      %v2828 = vor.u32 %v2272, %v2826
      %v2851 = vpack.c.b16 %v2341, %v2341
      %v2852 = vpack.c.b16 %v2343, %v2343
      %v2853 = vpack.c.b16 %v2345, %v2345
      %v2854 = vpack.c.b16 %v2347, %v2347
      %v2855 = vpack.c.b16 %v2349, %v2349
      %v2856 = vpack.c.b16 %v2351, %v2351
      %v2857 = vpack.c.b16 %v2353, %v2353
      %v2858 = vpack.c.b16 %v2355, %v2355
      %v2859 = vpack.c.b16 %v2357, %v2357
      %v2860 = vpack.c.b16 %v2359, %v2359
      %v2861 = vpack.c.b16 %v2361, %v2361
      %v2862 = vpack.c.b16 %v2363, %v2363
      %v2863 = vpack.c.b16 %v2365, %v2365
      %v2864 = vpack.c.b16 %v2367, %v2367
      %v2865 = vpack.c.b16 %v2369, %v2369
      %v2866 = vpack.c.b16 %v2371, %v2371
      %v2867 = vpack.c.b16 %v2373, %v2373
      %v2868 = vpack.c.b16 %v2375, %v2375
      %v2869 = vpack.c.b16 %v2377, %v2377
      %v2870 = vpack.c.b16 %v2379, %v2379
      %v2871 = vpack.c.b16 %v2381, %v2381
      %v2872 = vpack.c.b16 %v2383, %v2383
      %v2874 = vshll.u32 %v2851, 16
      %v2876 = vrot.slane %v2874, 5
      %v2878 = vshll.u32 %v2852, 16
      %v2880 = vrot.slane %v2878, 5
      %v2882 = vshll.u32 %v2853, 16
      %v2884 = vrot.slane %v2882, 5
      %v2886 = vshll.u32 %v2854, 16
      %v2888 = vrot.slane %v2886, 5
      %v2890 = vshll.u32 %v2855, 16
      %v2892 = vrot.slane %v2890, 5
      %v2894 = vshll.u32 %v2856, 16
      %v2896 = vrot.slane %v2894, 5
      %v2898 = vshll.u32 %v2857, 16
      %v2900 = vrot.slane %v2898, 5
      %v2902 = vshll.u32 %v2858, 16
      %v2904 = vrot.slane %v2902, 5
      %v2906 = vshll.u32 %v2859, 16
      %v2908 = vrot.slane %v2906, 5
      %v2910 = vshll.u32 %v2860, 16
      %v2912 = vrot.slane %v2910, 5
      %v2914 = vshll.u32 %v2861, 16
      %v2916 = vrot.slane %v2914, 5
      %v2918 = vshll.u32 %v2862, 16
      %v2920 = vrot.slane %v2918, 5
      %v2922 = vshll.u32 %v2863, 16
      %v2924 = vrot.slane %v2922, 5
      %v2926 = vshll.u32 %v2864, 16
      %v2928 = vrot.slane %v2926, 5
      %v2930 = vshll.u32 %v2865, 16
      %v2932 = vrot.slane %v2930, 5
      %v2934 = vshll.u32 %v2866, 16
      %v2936 = vrot.slane %v2934, 5
      %v2938 = vshll.u32 %v2867, 16
      %v2940 = vrot.slane %v2938, 5
      %v2942 = vshll.u32 %v2868, 16
      %v2944 = vrot.slane %v2942, 5
      %v2946 = vshll.u32 %v2869, 16
      %v2948 = vrot.slane %v2946, 5
      %v2950 = vshll.u32 %v2870, 16
      %v2952 = vrot.slane %v2950, 5
      %v2954 = vshll.u32 %v2871, 16
      %v2956 = vrot.slane %v2954, 5
      %v2958 = vshll.u32 %v2872, 16
      %v2960 = vrot.slane %v2958, 5
      %vm2983 = vcmask 1043456
      %vm2984 = vsmask.f32 3328
      %vm2985 = vmand %vm2983, %vm2984
      %v2986 = vsel %vm2985, %v2723, %v2876
      %v2987 = vsel %vm2985, %v2728, %v2880
      %v2988 = vsel %vm2985, %v2733, %v2884
      %v2989 = vsel %vm2985, %v2738, %v2888
      %v2990 = vsel %vm2985, %v2743, %v2892
      %v2991 = vsel %vm2985, %v2748, %v2896
      %v2992 = vsel %vm2985, %v2753, %v2900
      %v2993 = vsel %vm2985, %v2758, %v2904
      %v2994 = vsel %vm2985, %v2763, %v2908
      %v2995 = vsel %vm2985, %v2768, %v2912
      %v2996 = vsel %vm2985, %v2773, %v2916
      %v2997 = vsel %vm2985, %v2778, %v2920
      %v2998 = vsel %vm2985, %v2783, %v2924
      %v2999 = vsel %vm2985, %v2788, %v2928
      %v3000 = vsel %vm2985, %v2793, %v2932
      %v3001 = vsel %vm2985, %v2798, %v2936
      %v3002 = vsel %vm2985, %v2803, %v2940
      %v3003 = vsel %vm2985, %v2808, %v2944
      %v3004 = vsel %vm2985, %v2813, %v2948
      %v3005 = vsel %vm2985, %v2818, %v2952
      %v3006 = vsel %vm2985, %v2823, %v2956
      %v3007 = vsel %vm2985, %v2828, %v2960
      %v3048 = vunpack.c.l.b16 %v2696
      %v3049 = vunpack.c.l.b16 %v2722
      %v3050 = vunpack.c.h.b16 %v2696
      %v3051 = vunpack.c.h.b16 %v2722
      %v3052 = vunpack.c.l.b16 %v2419
      %v3053 = vunpack.c.l.b16 %v2986
      %v3054 = vunpack.c.l.b16 %v2697
      %v3055 = vunpack.c.l.b16 %v2727
      %v3056 = vunpack.c.h.b16 %v2697
      %v3057 = vunpack.c.h.b16 %v2727
      %v3058 = vunpack.c.l.b16 %v2431
      %v3059 = vunpack.c.l.b16 %v2987
      %v3060 = vunpack.c.l.b16 %v2698
      %v3061 = vunpack.c.l.b16 %v2732
      %v3062 = vunpack.c.h.b16 %v2698
      %v3063 = vunpack.c.h.b16 %v2732
      %v3064 = vunpack.c.l.b16 %v2443
      %v3065 = vunpack.c.l.b16 %v2988
      %v3066 = vunpack.c.l.b16 %v2699
      %v3067 = vunpack.c.l.b16 %v2737
      %v3068 = vunpack.c.h.b16 %v2699
      %v3069 = vunpack.c.h.b16 %v2737
      %v3070 = vunpack.c.l.b16 %v2455
      %v3071 = vunpack.c.l.b16 %v2989
      %v3072 = vunpack.c.l.b16 %v2700
      %v3073 = vunpack.c.l.b16 %v2742
      %v3074 = vunpack.c.h.b16 %v2700
      %v3075 = vunpack.c.h.b16 %v2742
      %v3076 = vunpack.c.l.b16 %v2467
      %v3077 = vunpack.c.l.b16 %v2990
      %v3078 = vunpack.c.l.b16 %v2701
      %v3079 = vunpack.c.l.b16 %v2747
      %v3080 = vunpack.c.h.b16 %v2701
      %v3081 = vunpack.c.h.b16 %v2747
      %v3082 = vunpack.c.l.b16 %v2479
      %v3083 = vunpack.c.l.b16 %v2991
      %v3084 = vunpack.c.l.b16 %v2702
      %v3085 = vunpack.c.l.b16 %v2752
      %v3086 = vunpack.c.h.b16 %v2702
      %v3087 = vunpack.c.h.b16 %v2752
      %v3088 = vunpack.c.l.b16 %v2491
      %v3089 = vunpack.c.l.b16 %v2992
      %v3090 = vunpack.c.l.b16 %v2703
      %v3091 = vunpack.c.l.b16 %v2757
      %v3092 = vunpack.c.h.b16 %v2703
      %v3093 = vunpack.c.h.b16 %v2757
      %v3094 = vunpack.c.l.b16 %v2503
      %v3095 = vunpack.c.l.b16 %v2993
      %v3096 = vunpack.c.l.b16 %v2704
      %v3097 = vunpack.c.l.b16 %v2762
      %v3098 = vunpack.c.h.b16 %v2704
      %v3099 = vunpack.c.h.b16 %v2762
      %v3100 = vunpack.c.l.b16 %v2515
      %v3101 = vunpack.c.l.b16 %v2994
      %v3102 = vunpack.c.l.b16 %v2705
      %v3103 = vunpack.c.l.b16 %v2767
      %v3104 = vunpack.c.h.b16 %v2705
      %v3105 = vunpack.c.h.b16 %v2767
      %v3106 = vunpack.c.l.b16 %v2527
      %v3107 = vunpack.c.l.b16 %v2995
      %v3108 = vunpack.c.l.b16 %v2706
      %v3109 = vunpack.c.l.b16 %v2772
      %v3110 = vunpack.c.h.b16 %v2706
      %v3111 = vunpack.c.h.b16 %v2772
      %v3112 = vunpack.c.l.b16 %v2539
      %v3113 = vunpack.c.l.b16 %v2996
      %v3114 = vunpack.c.l.b16 %v2707
      %v3115 = vunpack.c.l.b16 %v2777
      %v3116 = vunpack.c.h.b16 %v2707
      %v3117 = vunpack.c.h.b16 %v2777
      %v3118 = vunpack.c.l.b16 %v2551
      %v3119 = vunpack.c.l.b16 %v2997
      %v3120 = vunpack.c.l.b16 %v2708
      %v3121 = vunpack.c.l.b16 %v2782
      %v3122 = vunpack.c.h.b16 %v2708
      %v3123 = vunpack.c.h.b16 %v2782
      %v3124 = vunpack.c.l.b16 %v2563
      %v3125 = vunpack.c.l.b16 %v2998
      %v3126 = vunpack.c.l.b16 %v2709
      %v3127 = vunpack.c.l.b16 %v2787
      %v3128 = vunpack.c.h.b16 %v2709
      %v3129 = vunpack.c.h.b16 %v2787
      %v3130 = vunpack.c.l.b16 %v2575
      %v3131 = vunpack.c.l.b16 %v2999
      %v3132 = vunpack.c.l.b16 %v2710
      %v3133 = vunpack.c.l.b16 %v2792
      %v3134 = vunpack.c.h.b16 %v2710
      %v3135 = vunpack.c.h.b16 %v2792
      %v3136 = vunpack.c.l.b16 %v2587
      %v3137 = vunpack.c.l.b16 %v3000
      %v3138 = vunpack.c.l.b16 %v2711
      %v3139 = vunpack.c.l.b16 %v2797
      %v3140 = vunpack.c.h.b16 %v2711
      %v3141 = vunpack.c.h.b16 %v2797
      %v3142 = vunpack.c.l.b16 %v2599
      %v3143 = vunpack.c.l.b16 %v3001
      %v3144 = vunpack.c.l.b16 %v2712
      %v3145 = vunpack.c.l.b16 %v2802
      %v3146 = vunpack.c.h.b16 %v2712
      %v3147 = vunpack.c.h.b16 %v2802
      %v3148 = vunpack.c.l.b16 %v2611
      %v3149 = vunpack.c.l.b16 %v3002
      %v3150 = vunpack.c.l.b16 %v2713
      %v3151 = vunpack.c.l.b16 %v2807
      %v3152 = vunpack.c.h.b16 %v2713
      %v3153 = vunpack.c.h.b16 %v2807
      %v3154 = vunpack.c.l.b16 %v2623
      %v3155 = vunpack.c.l.b16 %v3003
      %v3156 = vunpack.c.l.b16 %v2714
      %v3157 = vunpack.c.l.b16 %v2812
      %v3158 = vunpack.c.h.b16 %v2714
      %v3159 = vunpack.c.h.b16 %v2812
      %v3160 = vunpack.c.l.b16 %v2635
      %v3161 = vunpack.c.l.b16 %v3004
      %v3162 = vunpack.c.l.b16 %v2715
      %v3163 = vunpack.c.l.b16 %v2817
      %v3164 = vunpack.c.h.b16 %v2715
      %v3165 = vunpack.c.h.b16 %v2817
      %v3166 = vunpack.c.l.b16 %v2647
      %v3167 = vunpack.c.l.b16 %v3005
      %v3168 = vld [vmem:[%s3] sm:$0xf]
      %v3169 = vld [vmem:[%s3 + $0x4] sm:$0xf]
      %v3170 = vld [vmem:[%s3 + $0x8] sm:$0xf]
      %v3171 = vld [vmem:[%s3 + $0xc] sm:$0xf]
      %v3172 = vld [vmem:[%s3 + $0x10] sm:$0xf]
      %v3173 = vld [vmem:[%s3 + $0x14] sm:$0xf]
      %v3174 = vld [vmem:[%s3 + $0x18] sm:$0xf]
      %v3175 = vld [vmem:[%s3 + $0x1c] sm:$0xf]
      %v3176 = vld [vmem:[%s3 + $0x20] sm:$0xf]
      %v3177 = vld [vmem:[%s3 + $0x24] sm:$0xf]
      %v3178 = vld [vmem:[%s3 + $0x28] sm:$0xf]
      %v3179 = vld [vmem:[%s3 + $0x2c] sm:$0xf]
      %v3180 = vld [vmem:[%s3 + $0x30] sm:$0xf]
      %v3181 = vld [vmem:[%s3 + $0x34] sm:$0xf]
      %v3182 = vld [vmem:[%s3 + $0x38] sm:$0xf]
      %v3183 = vld [vmem:[%s3 + $0x3c] sm:$0xf]
      %v3184 = vld [vmem:[%s3 + $0x40] sm:$0xf]
      %v3185 = vld [vmem:[%s3 + $0x44] sm:$0xf]
      %v3186 = vld [vmem:[%s3 + $0x48] sm:$0xf]
      %v3187 = vld [vmem:[%s3 + $0x4c] sm:$0xf]
      %v3188 = vld [vmem:[%s3 + $0x50] sm:$0xf]
      %v3189 = vld [vmem:[%s3 + $0x54] sm:$0xf]
      %v3190 = vld [vmem:[%s3 + $0x58] sm:$0xf]
      %v3191 = vld [vmem:[%s3 + $0x5c] sm:$0xf]
      %v3192 = vld [vmem:[%s3 + $0x60] sm:$0xf]
      %v3193 = vld [vmem:[%s3 + $0x64] sm:$0xf]
      %v3194 = vld [vmem:[%s3 + $0x68] sm:$0xf]
      %v3195 = vld [vmem:[%s3 + $0x6c] sm:$0xf]
      %v3196 = vld [vmem:[%s3 + $0x70] sm:$0xf]
      %v3197 = vld [vmem:[%s3 + $0x74] sm:$0xf]
      %v3198 = vld [vmem:[%s3 + $0x78] sm:$0xf]
      %v3199 = vld [vmem:[%s3 + $0x7c] sm:$0xf]
      %v3200 = vld [vmem:[%s3 + $0x80] sm:$0xf]
      %v3201 = vld [vmem:[%s3 + $0x84] sm:$0xf]
      %v3202 = vld [vmem:[%s3 + $0x88] sm:$0xf]
      %v3203 = vld [vmem:[%s3 + $0x8c] sm:$0xf]
      %v3204 = vld [vmem:[%s3 + $0x90] sm:$0xf]
      %v3205 = vld [vmem:[%s3 + $0x94] sm:$0xf]
      %v3206 = vld [vmem:[%s3 + $0x98] sm:$0xf]
      %v3207 = vld [vmem:[%s3 + $0x9c] sm:$0xf]
      %v3208 = vld [vmem:[%s3 + $0xa0] sm:$0xf]
      %v3209 = vld [vmem:[%s3 + $0xa4] sm:$0xf]
      %v3210 = vld [vmem:[%s3 + $0xa8] sm:$0xf]
      %v3211 = vld [vmem:[%s3 + $0xac] sm:$0xf]
      %v3212 = vld [vmem:[%s3 + $0xb0] sm:$0xf]
      %v3213 = vld [vmem:[%s3 + $0xb4] sm:$0xf]
      %v3214 = vld [vmem:[%s3 + $0xb8] sm:$0xf]
      %v3215 = vld [vmem:[%s3 + $0xbc] sm:$0xf]
      %v3218 = vunpack.c.l.b16 %v2716
      %v3219 = vunpack.c.l.b16 %v2822
      %v3220 = vunpack.c.h.b16 %v2716
      %v3221 = vunpack.c.h.b16 %v2822
      %v3222 = vunpack.c.l.b16 %v2659
      %v3223 = vunpack.c.l.b16 %v3006
      %s3224 = scalar_lea.vmem %s3, 192
      %v3225 = vld [vmem:[%s3224] sm:$0xf]
      %v3226 = vld [vmem:[%s3224 + $0x4] sm:$0xf]
      %v3227 = vld [vmem:[%s3224 + $0x8] sm:$0xf]
      %v3228 = vld [vmem:[%s3224 + $0xc] sm:$0xf]
      %v3229 = vld [vmem:[%s3224 + $0x10] sm:$0xf]
      %v3230 = vld [vmem:[%s3224 + $0x14] sm:$0xf]
      %v3231 = vld [vmem:[%s3224 + $0x18] sm:$0xf]
      %v3232 = vld [vmem:[%s3224 + $0x1c] sm:$0xf]
      %v3233 = vld [vmem:[%s3224 + $0x20] sm:$0xf]
      %v3234 = vld [vmem:[%s3224 + $0x24] sm:$0xf]
      %v3235 = vld [vmem:[%s3224 + $0x28] sm:$0xf]
      %v3236 = vld [vmem:[%s3224 + $0x2c] sm:$0xf]
      %v3237 = vld [vmem:[%s3224 + $0x30] sm:$0xf]
      %v3238 = vld [vmem:[%s3224 + $0x34] sm:$0xf]
      %v3239 = vld [vmem:[%s3224 + $0x38] sm:$0xf]
      %v3240 = vld [vmem:[%s3224 + $0x3c] sm:$0xf]
      %v3241 = vld [vmem:[%s3224 + $0x40] sm:$0xf]
      %v3242 = vld [vmem:[%s3224 + $0x44] sm:$0xf]
      %v3243 = vld [vmem:[%s3224 + $0x48] sm:$0xf]
      %v3244 = vld [vmem:[%s3224 + $0x4c] sm:$0xf]
      %v3245 = vld [vmem:[%s3224 + $0x50] sm:$0xf]
      %v3246 = vld [vmem:[%s3224 + $0x54] sm:$0xf]
      %v3247 = vld [vmem:[%s3224 + $0x58] sm:$0xf]
      %v3248 = vld [vmem:[%s3224 + $0x5c] sm:$0xf]
      %v3249 = vld [vmem:[%s3224 + $0x60] sm:$0xf]
      %v3250 = vld [vmem:[%s3224 + $0x64] sm:$0xf]
      %v3251 = vld [vmem:[%s3224 + $0x68] sm:$0xf]
      %v3252 = vld [vmem:[%s3224 + $0x6c] sm:$0xf]
      %v3253 = vld [vmem:[%s3224 + $0x70] sm:$0xf]
      %v3254 = vld [vmem:[%s3224 + $0x74] sm:$0xf]
      %v3255 = vld [vmem:[%s3224 + $0x78] sm:$0xf]
      %v3256 = vld [vmem:[%s3224 + $0x7c] sm:$0xf]
      %v3257 = vld [vmem:[%s3224 + $0x80] sm:$0xf]
      %v3258 = vld [vmem:[%s3224 + $0x84] sm:$0xf]
      %v3259 = vld [vmem:[%s3224 + $0x88] sm:$0xf]
      %v3260 = vld [vmem:[%s3224 + $0x8c] sm:$0xf]
      %v3261 = vld [vmem:[%s3224 + $0x90] sm:$0xf]
      %v3262 = vld [vmem:[%s3224 + $0x94] sm:$0xf]
      %v3263 = vld [vmem:[%s3224 + $0x98] sm:$0xf]
      %v3264 = vld [vmem:[%s3224 + $0x9c] sm:$0xf]
      %v3265 = vld [vmem:[%s3224 + $0xa0] sm:$0xf]
      %v3266 = vld [vmem:[%s3224 + $0xa4] sm:$0xf]
      %v3267 = vld [vmem:[%s3224 + $0xa8] sm:$0xf]
      %v3268 = vld [vmem:[%s3224 + $0xac] sm:$0xf]
      %v3269 = vld [vmem:[%s3224 + $0xb0] sm:$0xf]
      %v3270 = vld [vmem:[%s3224 + $0xb4] sm:$0xf]
      %v3271 = vld [vmem:[%s3224 + $0xb8] sm:$0xf]
      %v3272 = vld [vmem:[%s3224 + $0xbc] sm:$0xf]
      %v3273 = vpack.c.b16 %v3056, %v3054
      %v3274 = vpack.c.b16 %v3057, %v3055
      %v3275 = vpack.c.b16 %v3060, %v3058
      %v3276 = vpack.c.b16 %v2345, %v2144
      %v3277 = vpack.c.b16 %v3061, %v3059
      %v3278 = vpack.c.b16 %v3064, %v3062
      %v3279 = vpack.c.b16 %v2145, %v2346
      %v3280 = vpack.c.b16 %v3065, %v3063
      %v3281 = vpack.c.b16 %v3068, %v3066
      %v3282 = vpack.c.b16 %v3069, %v3067
      %v3283 = vpack.c.b16 %v3072, %v3070
      %v3284 = vpack.c.b16 %v2349, %v2146
      %v3285 = vpack.c.b16 %v3073, %v3071
      %v3286 = vpack.c.b16 %v3076, %v3074
      %v3287 = vpack.c.b16 %v2147, %v2350
      %v3288 = vpack.c.b16 %v3077, %v3075
      %v3289 = vpack.c.b16 %v3080, %v3078
      %v3290 = vpack.c.b16 %v3081, %v3079
      %v3291 = vpack.c.b16 %v3084, %v3082
      %v3292 = vpack.c.b16 %v2353, %v2148
      %v3293 = vpack.c.b16 %v3085, %v3083
      %v3294 = vpack.c.b16 %v3088, %v3086
      %v3295 = vpack.c.b16 %v2149, %v2354
      %v3296 = vpack.c.b16 %v3089, %v3087
      %v3297 = vpack.c.b16 %v3092, %v3090
      %v3298 = vpack.c.b16 %v3093, %v3091
      %v3299 = vpack.c.b16 %v3096, %v3094
      %v3300 = vpack.c.b16 %v2357, %v2150
      %v3301 = vpack.c.b16 %v3097, %v3095
      %v3302 = vpack.c.b16 %v3100, %v3098
      %v3303 = vpack.c.b16 %v2151, %v2358
      %v3304 = vpack.c.b16 %v3101, %v3099
      %v3305 = vpack.c.b16 %v3104, %v3102
      %v3306 = vpack.c.b16 %v3105, %v3103
      %v3307 = vpack.c.b16 %v3108, %v3106
      %v3308 = vpack.c.b16 %v2361, %v2152
      %v3309 = vpack.c.b16 %v3109, %v3107
      %v3310 = vpack.c.b16 %v3112, %v3110
      %v3311 = vpack.c.b16 %v2153, %v2362
      %v3312 = vpack.c.b16 %v3113, %v3111
      %v3313 = vpack.c.b16 %v3116, %v3114
      %v3314 = vpack.c.b16 %v3117, %v3115
      %v3315 = vpack.c.b16 %v3120, %v3118
      %v3316 = vpack.c.b16 %v2365, %v2154
      %v3317 = vpack.c.b16 %v3121, %v3119
      %v3318 = vpack.c.b16 %v3124, %v3122
      %v3319 = vpack.c.b16 %v2155, %v2366
      %v3320 = vpack.c.b16 %v3125, %v3123
      %v3321 = vpack.c.b16 %v3128, %v3126
      %v3322 = vpack.c.b16 %v3129, %v3127
      %v3323 = vpack.c.b16 %v3132, %v3130
      %v3324 = vpack.c.b16 %v2369, %v2156
      %v3325 = vpack.c.b16 %v3133, %v3131
      %v3326 = vpack.c.b16 %v3136, %v3134
      %v3327 = vpack.c.b16 %v2157, %v2370
      %v3328 = vpack.c.b16 %v3137, %v3135
      %v3329 = vpack.c.b16 %v3140, %v3138
      %v3330 = vpack.c.b16 %v3141, %v3139
      %v3331 = vpack.c.b16 %v3144, %v3142
      %v3332 = vpack.c.b16 %v2373, %v2158
      %v3333 = vpack.c.b16 %v3145, %v3143
      %v3334 = vpack.c.b16 %v3148, %v3146
      %v3335 = vpack.c.b16 %v2159, %v2374
      %v3336 = vpack.c.b16 %v3149, %v3147
      %v3337 = vpack.c.b16 %v3152, %v3150
      %v3338 = vpack.c.b16 %v3153, %v3151
      %v3339 = vpack.c.b16 %v3156, %v3154
      %v3340 = vpack.c.b16 %v2377, %v2160
      %v3341 = vpack.c.b16 %v3157, %v3155
      %v3342 = vpack.c.b16 %v3160, %v3158
      %v3343 = vpack.c.b16 %v2161, %v2378
      %v3344 = vpack.c.b16 %v3161, %v3159
      %v3345 = vpack.c.b16 %v3164, %v3162
      %v3346 = vpack.c.b16 %v3165, %v3163
      %v3347 = vpack.c.b16 %v3218, %v3166
      %v3348 = vpack.c.b16 %v2381, %v2162
      %v3349 = vpack.c.b16 %v3219, %v3167
      %v3350 = vpack.c.b16 %v3222, %v3220
      %v3351 = vpack.c.b16 %v2163, %v2382
      %v3352 = vpack.c.b16 %v3223, %v3221
      %v3491 = vunpack.c.l.b16 %v3225
      %v3492 = vunpack.c.l.b16 %v3226
      %v3493 = vunpack.c.l.b16 %v3227
      %v3494 = vunpack.c.l.b16 %v3228
      %v3495 = vunpack.c.l.b16 %v3229
      %v3496 = vunpack.c.l.b16 %v3230
      %v3497 = vunpack.c.l.b16 %v3231
      %v3498 = vunpack.c.l.b16 %v3232
      %v3499 = vunpack.c.l.b16 %v3233
      %v3500 = vunpack.c.l.b16 %v3234
      %v3501 = vunpack.c.l.b16 %v3235
      %v3502 = vunpack.c.l.b16 %v3236
      %v3503 = vunpack.c.l.b16 %v3237
      %v3504 = vunpack.c.l.b16 %v3238
      %v3505 = vunpack.c.l.b16 %v3239
      %v3506 = vunpack.c.l.b16 %v3240
      %v3507 = vunpack.c.l.b16 %v3241
      %v3508 = vunpack.c.l.b16 %v3242
      %v3509 = vunpack.c.l.b16 %v3243
      %v3510 = vunpack.c.l.b16 %v3244
      %v3511 = vunpack.c.l.b16 %v3245
      %v3512 = vunpack.c.l.b16 %v3246
      %v3513 = vunpack.c.l.b16 %v3247
      %v3514 = vunpack.c.l.b16 %v3248
      %v3515 = vunpack.c.l.b16 %v3249
      %v3516 = vunpack.c.l.b16 %v3250
      %v3517 = vunpack.c.l.b16 %v3251
      %v3518 = vunpack.c.l.b16 %v3252
      %v3519 = vunpack.c.l.b16 %v3253
      %v3520 = vunpack.c.l.b16 %v3254
      %v3521 = vunpack.c.l.b16 %v3255
      %v3522 = vunpack.c.l.b16 %v3256
      %v3523 = vunpack.c.l.b16 %v3257
      %v3524 = vunpack.c.l.b16 %v3258
      %v3525 = vunpack.c.l.b16 %v3259
      %v3526 = vunpack.c.l.b16 %v3260
      %v3527 = vunpack.c.l.b16 %v3261
      %v3528 = vunpack.c.l.b16 %v3262
      %v3529 = vunpack.c.l.b16 %v3263
      %v3530 = vunpack.c.l.b16 %v3264
      %v3531 = vunpack.c.l.b16 %v3265
      %v3532 = vunpack.c.l.b16 %v3266
      %v3533 = vunpack.c.l.b16 %v3267
      %v3534 = vunpack.c.l.b16 %v3268
      %v3535 = vunpack.c.l.b16 %v3269
      %v3536 = vunpack.c.l.b16 %v3270
      %v3537 = vunpack.c.l.b16 %v3271
      %v3538 = vunpack.c.l.b16 %v3272
      %v3539 = vpack.c.b16 %v3492, %v3491
      %v3540 = vpack.c.b16 %v3494, %v3493
      %v3541 = vpack.c.b16 %v3496, %v3495
      %v3542 = vpack.c.b16 %v3498, %v3497
      %v3543 = vpack.c.b16 %v3500, %v3499
      %v3544 = vpack.c.b16 %v3502, %v3501
      %v3545 = vpack.c.b16 %v3504, %v3503
      %v3546 = vpack.c.b16 %v3506, %v3505
      %v3547 = vpack.c.b16 %v3508, %v3507
      %v3548 = vpack.c.b16 %v3510, %v3509
      %v3549 = vpack.c.b16 %v3512, %v3511
      %v3550 = vpack.c.b16 %v3514, %v3513
      %v3551 = vpack.c.b16 %v3516, %v3515
      %v3552 = vpack.c.b16 %v3518, %v3517
      %v3553 = vpack.c.b16 %v3520, %v3519
      %v3554 = vpack.c.b16 %v3522, %v3521
      %v3555 = vpack.c.b16 %v3524, %v3523
      %v3556 = vpack.c.b16 %v3526, %v3525
      %v3557 = vpack.c.b16 %v3528, %v3527
      %v3558 = vpack.c.b16 %v3530, %v3529
      %v3559 = vpack.c.b16 %v3532, %v3531
      %v3560 = vpack.c.b16 %v3534, %v3533
      %v3561 = vpack.c.b16 %v3536, %v3535
      %v3562 = vpack.c.b16 %v3538, %v3537
      %3587 = vmatpush.bf16.msra.mxu0 %v3546
      %3588 = vmatpush.bf16.msra.mxu0 %v3545
      %3589 = vmatpush.bf16.msra.mxu0 %v3544
      %3590 = vmatpush.bf16.msra.mxu0 %v3543
      %3591 = vmatpush.bf16.msra.mxu0 %v3542
      %3592 = vmatpush.bf16.msra.mxu0 %v3541
      %3593 = vmatpush.bf16.msra.mxu0 %v3540
      %3594 = vmatpush.bf16.msra.mxu0 %v3539
      %3595 = vmatmul.bf16.gmra.mxu0 %v3273
      %v3596 = vpop.f32.mrf.mxu0
      %v3597 = vadd.f32 0.0, %v3596
      %v3598 = vpop.f32.mrf.mxu0
      %v3599 = vadd.f32 0.0, %v3598
      %3600 = vmatmul.bf16.gmra.mxu0 %v3275
      %v3601 = vpop.f32.mrf.mxu0
      %v3602 = vadd.f32 0.0, %v3601
      %v3603 = vpop.f32.mrf.mxu0
      %v3604 = vadd.f32 0.0, %v3603
      %3605 = vmatmul.bf16.gmra.mxu0 %v3278
      %v3606 = vpop.f32.mrf.mxu0
      %v3607 = vadd.f32 0.0, %v3606
      %v3608 = vpop.f32.mrf.mxu0
      %v3609 = vadd.f32 0.0, %v3608
      %3610 = vmatmul.bf16.gmra.mxu0 %v3281
      %v3611 = vpop.f32.mrf.mxu0
      %v3612 = vadd.f32 0.0, %v3611
      %v3613 = vpop.f32.mrf.mxu0
      %v3614 = vadd.f32 0.0, %v3613
      %3615 = vmatmul.bf16.gmra.mxu0 %v3283
      %v3616 = vpop.f32.mrf.mxu0
      %v3617 = vadd.f32 0.0, %v3616
      %v3618 = vpop.f32.mrf.mxu0
      %v3619 = vadd.f32 0.0, %v3618
      %3620 = vmatmul.bf16.gmra.mxu0 %v3286
      %v3621 = vpop.f32.mrf.mxu0
      %v3622 = vadd.f32 0.0, %v3621
      %v3623 = vpop.f32.mrf.mxu0
      %v3624 = vadd.f32 0.0, %v3623
      %3625 = vmatmul.bf16.gmra.mxu0 %v3289
      %v3626 = vpop.f32.mrf.mxu0
      %v3627 = vadd.f32 0.0, %v3626
      %v3628 = vpop.f32.mrf.mxu0
      %v3629 = vadd.f32 0.0, %v3628
      %3630 = vmatmul.bf16.gmra.mxu0 %v3291
      %v3631 = vpop.f32.mrf.mxu0
      %v3632 = vadd.f32 0.0, %v3631
      %v3633 = vpop.f32.mrf.mxu0
      %v3634 = vadd.f32 0.0, %v3633
      %3635 = vmatmul.bf16.gmra.mxu0 %v3294
      %v3636 = vpop.f32.mrf.mxu0
      %v3637 = vadd.f32 0.0, %v3636
      %v3638 = vpop.f32.mrf.mxu0
      %v3639 = vadd.f32 0.0, %v3638
      %3640 = vmatmul.bf16.gmra.mxu0 %v3297
      %v3641 = vpop.f32.mrf.mxu0
      %v3642 = vadd.f32 0.0, %v3641
      %v3643 = vpop.f32.mrf.mxu0
      %v3644 = vadd.f32 0.0, %v3643
      %3645 = vmatmul.bf16.gmra.mxu0 %v3299
      %v3646 = vpop.f32.mrf.mxu0
      %v3647 = vadd.f32 0.0, %v3646
      %v3648 = vpop.f32.mrf.mxu0
      %v3649 = vadd.f32 0.0, %v3648
      %3650 = vmatmul.bf16.gmra.mxu0 %v3302
      %v3651 = vpop.f32.mrf.mxu0
      %v3652 = vadd.f32 0.0, %v3651
      %v3653 = vpop.f32.mrf.mxu0
      %v3654 = vadd.f32 0.0, %v3653
      %3655 = vmatmul.bf16.gmra.mxu0 %v3305
      %v3656 = vpop.f32.mrf.mxu0
      %v3657 = vadd.f32 0.0, %v3656
      %v3658 = vpop.f32.mrf.mxu0
      %v3659 = vadd.f32 0.0, %v3658
      %3660 = vmatmul.bf16.gmra.mxu0 %v3307
      %v3661 = vpop.f32.mrf.mxu0
      %v3662 = vadd.f32 0.0, %v3661
      %v3663 = vpop.f32.mrf.mxu0
      %v3664 = vadd.f32 0.0, %v3663
      %3665 = vmatmul.bf16.gmra.mxu0 %v3310
      %v3666 = vpop.f32.mrf.mxu0
      %v3667 = vadd.f32 0.0, %v3666
      %v3668 = vpop.f32.mrf.mxu0
      %v3669 = vadd.f32 0.0, %v3668
      %3670 = vmatmul.bf16.gmra.mxu0 %v3313
      %v3671 = vpop.f32.mrf.mxu0
      %v3672 = vadd.f32 0.0, %v3671
      %v3673 = vpop.f32.mrf.mxu0
      %v3674 = vadd.f32 0.0, %v3673
      %3675 = vmatmul.bf16.gmra.mxu0 %v3315
      %v3676 = vpop.f32.mrf.mxu0
      %v3677 = vadd.f32 0.0, %v3676
      %v3678 = vpop.f32.mrf.mxu0
      %v3679 = vadd.f32 0.0, %v3678
      %3680 = vmatmul.bf16.gmra.mxu0 %v3318
      %v3681 = vpop.f32.mrf.mxu0
      %v3682 = vadd.f32 0.0, %v3681
      %v3683 = vpop.f32.mrf.mxu0
      %v3684 = vadd.f32 0.0, %v3683
      %3685 = vmatmul.bf16.gmra.mxu0 %v3321
      %v3686 = vpop.f32.mrf.mxu0
      %v3687 = vadd.f32 0.0, %v3686
      %v3688 = vpop.f32.mrf.mxu0
      %v3689 = vadd.f32 0.0, %v3688
      %3690 = vmatmul.bf16.gmra.mxu0 %v3323
      %v3691 = vpop.f32.mrf.mxu0
      %v3692 = vadd.f32 0.0, %v3691
      %v3693 = vpop.f32.mrf.mxu0
      %v3694 = vadd.f32 0.0, %v3693
      %3695 = vmatmul.bf16.gmra.mxu0 %v3326
      %v3696 = vpop.f32.mrf.mxu0
      %v3697 = vadd.f32 0.0, %v3696
      %v3698 = vpop.f32.mrf.mxu0
      %v3699 = vadd.f32 0.0, %v3698
      %3700 = vmatmul.bf16.gmra.mxu0 %v3329
      %v3701 = vpop.f32.mrf.mxu0
      %v3702 = vadd.f32 0.0, %v3701
      %v3703 = vpop.f32.mrf.mxu0
      %v3704 = vadd.f32 0.0, %v3703
      %3705 = vmatmul.bf16.gmra.mxu0 %v3331
      %v3706 = vpop.f32.mrf.mxu0
      %v3707 = vadd.f32 0.0, %v3706
      %v3708 = vpop.f32.mrf.mxu0
      %v3709 = vadd.f32 0.0, %v3708
      %3710 = vmatmul.bf16.gmra.mxu0 %v3334
      %v3711 = vpop.f32.mrf.mxu0
      %v3712 = vadd.f32 0.0, %v3711
      %v3713 = vpop.f32.mrf.mxu0
      %v3714 = vadd.f32 0.0, %v3713
      %3715 = vmatmul.bf16.gmra.mxu0 %v3337
      %v3716 = vpop.f32.mrf.mxu0
      %v3717 = vadd.f32 0.0, %v3716
      %v3718 = vpop.f32.mrf.mxu0
      %v3719 = vadd.f32 0.0, %v3718
      %3720 = vmatmul.bf16.gmra.mxu0 %v3339
      %v3721 = vpop.f32.mrf.mxu0
      %v3722 = vadd.f32 0.0, %v3721
      %v3723 = vpop.f32.mrf.mxu0
      %v3724 = vadd.f32 0.0, %v3723
      %3725 = vmatmul.bf16.gmra.mxu0 %v3342
      %v3726 = vpop.f32.mrf.mxu0
      %v3727 = vadd.f32 0.0, %v3726
      %v3728 = vpop.f32.mrf.mxu0
      %v3729 = vadd.f32 0.0, %v3728
      %3730 = vmatmul.bf16.gmra.mxu0 %v3345
      %v3731 = vpop.f32.mrf.mxu0
      %v3732 = vadd.f32 0.0, %v3731
      %v3733 = vpop.f32.mrf.mxu0
      %v3734 = vadd.f32 0.0, %v3733
      %3735 = vmatmul.bf16.gmra.mxu0 %v3347
      %v3736 = vpop.f32.mrf.mxu0
      %v3737 = vadd.f32 0.0, %v3736
      %v3738 = vpop.f32.mrf.mxu0
      %v3739 = vadd.f32 0.0, %v3738
      %3740 = vmatmul.bf16.gmra.mxu0 %v3350
      %v3741 = vpop.f32.mrf.mxu0
      %v3742 = vadd.f32 0.0, %v3741
      %v3743 = vpop.f32.mrf.mxu0
      %v3744 = vadd.f32 0.0, %v3743
      %3745 = vdwg.mxu0
      %3746 = vmatpush.bf16.msra.mxu0 %v3554
      %3747 = vmatpush.bf16.msra.mxu0 %v3553
      %3748 = vmatpush.bf16.msra.mxu0 %v3552
      %3749 = vmatpush.bf16.msra.mxu0 %v3551
      %3750 = vmatpush.bf16.msra.mxu0 %v3550
      %3751 = vmatpush.bf16.msra.mxu0 %v3549
      %3752 = vmatpush.bf16.msra.mxu0 %v3548
      %3753 = vmatpush.bf16.msra.mxu0 %v3547
      %3754 = vmatmul.bf16.gmra.mxu0 %v2386
      %v3755 = vpop.f32.mrf.mxu0
      %v3756 = vadd.f32 %v3597, %v3755
      %v3757 = vpop.f32.mrf.mxu0
      %v3758 = vadd.f32 %v3599, %v3757
      %3759 = vmatmul.bf16.gmra.mxu0 %v3276
      %v3760 = vpop.f32.mrf.mxu0
      %v3761 = vadd.f32 %v3602, %v3760
      %v3762 = vpop.f32.mrf.mxu0
      %v3763 = vadd.f32 %v3604, %v3762
      %3764 = vmatmul.bf16.gmra.mxu0 %v3279
      %v3765 = vpop.f32.mrf.mxu0
      %v3766 = vadd.f32 %v3607, %v3765
      %v3767 = vpop.f32.mrf.mxu0
      %v3768 = vadd.f32 %v3609, %v3767
      %3769 = vmatmul.bf16.gmra.mxu0 %v2388
      %v3770 = vpop.f32.mrf.mxu0
      %v3771 = vadd.f32 %v3612, %v3770
      %v3772 = vpop.f32.mrf.mxu0
      %v3773 = vadd.f32 %v3614, %v3772
      %3774 = vmatmul.bf16.gmra.mxu0 %v3284
      %v3775 = vpop.f32.mrf.mxu0
      %v3776 = vadd.f32 %v3617, %v3775
      %v3777 = vpop.f32.mrf.mxu0
      %v3778 = vadd.f32 %v3619, %v3777
      %3779 = vmatmul.bf16.gmra.mxu0 %v3287
      %v3780 = vpop.f32.mrf.mxu0
      %v3781 = vadd.f32 %v3622, %v3780
      %v3782 = vpop.f32.mrf.mxu0
      %v3783 = vadd.f32 %v3624, %v3782
      %3784 = vmatmul.bf16.gmra.mxu0 %v2390
      %v3785 = vpop.f32.mrf.mxu0
      %v3786 = vadd.f32 %v3627, %v3785
      %v3787 = vpop.f32.mrf.mxu0
      %v3788 = vadd.f32 %v3629, %v3787
      %3789 = vmatmul.bf16.gmra.mxu0 %v3292
      %v3790 = vpop.f32.mrf.mxu0
      %v3791 = vadd.f32 %v3632, %v3790
      %v3792 = vpop.f32.mrf.mxu0
      %v3793 = vadd.f32 %v3634, %v3792
      %3794 = vmatmul.bf16.gmra.mxu0 %v3295
      %v3795 = vpop.f32.mrf.mxu0
      %v3796 = vadd.f32 %v3637, %v3795
      %v3797 = vpop.f32.mrf.mxu0
      %v3798 = vadd.f32 %v3639, %v3797
      %3799 = vmatmul.bf16.gmra.mxu0 %v2392
      %v3800 = vpop.f32.mrf.mxu0
      %v3801 = vadd.f32 %v3642, %v3800
      %v3802 = vpop.f32.mrf.mxu0
      %v3803 = vadd.f32 %v3644, %v3802
      %3804 = vmatmul.bf16.gmra.mxu0 %v3300
      %v3805 = vpop.f32.mrf.mxu0
      %v3806 = vadd.f32 %v3647, %v3805
      %v3807 = vpop.f32.mrf.mxu0
      %v3808 = vadd.f32 %v3649, %v3807
      %3809 = vmatmul.bf16.gmra.mxu0 %v3303
      %v3810 = vpop.f32.mrf.mxu0
      %v3811 = vadd.f32 %v3652, %v3810
      %v3812 = vpop.f32.mrf.mxu0
      %v3813 = vadd.f32 %v3654, %v3812
      %3814 = vmatmul.bf16.gmra.mxu0 %v2394
      %v3815 = vpop.f32.mrf.mxu0
      %v3816 = vadd.f32 %v3657, %v3815
      %v3817 = vpop.f32.mrf.mxu0
      %v3818 = vadd.f32 %v3659, %v3817
      %3819 = vmatmul.bf16.gmra.mxu0 %v3308
      %v3820 = vpop.f32.mrf.mxu0
      %v3821 = vadd.f32 %v3662, %v3820
      %v3822 = vpop.f32.mrf.mxu0
      %v3823 = vadd.f32 %v3664, %v3822
      %3824 = vmatmul.bf16.gmra.mxu0 %v3311
      %v3825 = vpop.f32.mrf.mxu0
      %v3826 = vadd.f32 %v3667, %v3825
      %v3827 = vpop.f32.mrf.mxu0
      %v3828 = vadd.f32 %v3669, %v3827
      %3829 = vmatmul.bf16.gmra.mxu0 %v2396
      %v3830 = vpop.f32.mrf.mxu0
      %v3831 = vadd.f32 %v3672, %v3830
      %v3832 = vpop.f32.mrf.mxu0
      %v3833 = vadd.f32 %v3674, %v3832
      %3834 = vmatmul.bf16.gmra.mxu0 %v3316
      %v3835 = vpop.f32.mrf.mxu0
      %v3836 = vadd.f32 %v3677, %v3835
      %v3837 = vpop.f32.mrf.mxu0
      %v3838 = vadd.f32 %v3679, %v3837
      %3839 = vmatmul.bf16.gmra.mxu0 %v3319
      %v3840 = vpop.f32.mrf.mxu0
      %v3841 = vadd.f32 %v3682, %v3840
      %v3842 = vpop.f32.mrf.mxu0
      %v3843 = vadd.f32 %v3684, %v3842
      %3844 = vmatmul.bf16.gmra.mxu0 %v2398
      %v3845 = vpop.f32.mrf.mxu0
      %v3846 = vadd.f32 %v3687, %v3845
      %v3847 = vpop.f32.mrf.mxu0
      %v3848 = vadd.f32 %v3689, %v3847
      %3849 = vmatmul.bf16.gmra.mxu0 %v3324
      %v3850 = vpop.f32.mrf.mxu0
      %v3851 = vadd.f32 %v3692, %v3850
      %v3852 = vpop.f32.mrf.mxu0
      %v3853 = vadd.f32 %v3694, %v3852
      %3854 = vmatmul.bf16.gmra.mxu0 %v3327
      %v3855 = vpop.f32.mrf.mxu0
      %v3856 = vadd.f32 %v3697, %v3855
      %v3857 = vpop.f32.mrf.mxu0
      %v3858 = vadd.f32 %v3699, %v3857
      %3859 = vmatmul.bf16.gmra.mxu0 %v2400
      %v3860 = vpop.f32.mrf.mxu0
      %v3861 = vadd.f32 %v3702, %v3860
      %v3862 = vpop.f32.mrf.mxu0
      %v3863 = vadd.f32 %v3704, %v3862
      %3864 = vmatmul.bf16.gmra.mxu0 %v3332
      %v3865 = vpop.f32.mrf.mxu0
      %v3866 = vadd.f32 %v3707, %v3865
      %v3867 = vpop.f32.mrf.mxu0
      %v3868 = vadd.f32 %v3709, %v3867
      %3869 = vmatmul.bf16.gmra.mxu0 %v3335
      %v3870 = vpop.f32.mrf.mxu0
      %v3871 = vadd.f32 %v3712, %v3870
      %v3872 = vpop.f32.mrf.mxu0
      %v3873 = vadd.f32 %v3714, %v3872
      %3874 = vmatmul.bf16.gmra.mxu0 %v2402
      %v3875 = vpop.f32.mrf.mxu0
      %v3876 = vadd.f32 %v3717, %v3875
      %v3877 = vpop.f32.mrf.mxu0
      %v3878 = vadd.f32 %v3719, %v3877
      %3879 = vmatmul.bf16.gmra.mxu0 %v3340
      %v3880 = vpop.f32.mrf.mxu0
      %v3881 = vadd.f32 %v3722, %v3880
      %v3882 = vpop.f32.mrf.mxu0
      %v3883 = vadd.f32 %v3724, %v3882
      %3884 = vmatmul.bf16.gmra.mxu0 %v3343
      %v3885 = vpop.f32.mrf.mxu0
      %v3886 = vadd.f32 %v3727, %v3885
      %v3887 = vpop.f32.mrf.mxu0
      %v3888 = vadd.f32 %v3729, %v3887
      %3889 = vmatmul.bf16.gmra.mxu0 %v2404
      %v3890 = vpop.f32.mrf.mxu0
      %v3891 = vadd.f32 %v3732, %v3890
      %v3892 = vpop.f32.mrf.mxu0
      %v3893 = vadd.f32 %v3734, %v3892
      %3894 = vmatmul.bf16.gmra.mxu0 %v3348
      %v3895 = vpop.f32.mrf.mxu0
      %v3896 = vadd.f32 %v3737, %v3895
      %v3897 = vpop.f32.mrf.mxu0
      %v3898 = vadd.f32 %v3739, %v3897
      %3899 = vmatmul.bf16.gmra.mxu0 %v3351
      %v3900 = vpop.f32.mrf.mxu0
      %v3901 = vadd.f32 %v3742, %v3900
      %v3902 = vpop.f32.mrf.mxu0
      %v3903 = vadd.f32 %v3744, %v3902
      %3904 = vdwg.mxu0
      %3905 = vmatpush.bf16.msra.mxu0 %v3562
      %3906 = vmatpush.bf16.msra.mxu0 %v3561
      %3907 = vmatpush.bf16.msra.mxu0 %v3560
      %3908 = vmatpush.bf16.msra.mxu0 %v3559
      %3909 = vmatpush.bf16.msra.mxu0 %v3558
      %3910 = vmatpush.bf16.msra.mxu0 %v3557
      %3911 = vmatpush.bf16.msra.mxu0 %v3556
      %3912 = vmatpush.bf16.msra.mxu0 %v3555
      %3913 = vmatmul.bf16.gmra.mxu0 %v3274
      %v3914 = vpop.f32.mrf.mxu0
      %v3915 = vadd.f32 %v3756, %v3914
      %v3916 = vpop.f32.mrf.mxu0
      %v3917 = vadd.f32 %v3758, %v3916
      %3918 = vmatmul.bf16.gmra.mxu0 %v3277
      %v3919 = vpop.f32.mrf.mxu0
      %v3920 = vadd.f32 %v3761, %v3919
      %v3921 = vpop.f32.mrf.mxu0
      %v3922 = vadd.f32 %v3763, %v3921
      %3923 = vmatmul.bf16.gmra.mxu0 %v3280
      %v3924 = vpop.f32.mrf.mxu0
      %v3925 = vadd.f32 %v3766, %v3924
      %v3926 = vpop.f32.mrf.mxu0
      %v3927 = vadd.f32 %v3768, %v3926
      %3928 = vmatmul.bf16.gmra.mxu0 %v3282
      %v3929 = vpop.f32.mrf.mxu0
      %v3930 = vadd.f32 %v3771, %v3929
      %v3931 = vpop.f32.mrf.mxu0
      %v3932 = vadd.f32 %v3773, %v3931
      %3933 = vmatmul.bf16.gmra.mxu0 %v3285
      %v3934 = vpop.f32.mrf.mxu0
      %v3935 = vadd.f32 %v3776, %v3934
      %v3936 = vpop.f32.mrf.mxu0
      %v3937 = vadd.f32 %v3778, %v3936
      %3938 = vmatmul.bf16.gmra.mxu0 %v3288
      %v3939 = vpop.f32.mrf.mxu0
      %v3940 = vadd.f32 %v3781, %v3939
      %v3941 = vpop.f32.mrf.mxu0
      %v3942 = vadd.f32 %v3783, %v3941
      %3943 = vmatmul.bf16.gmra.mxu0 %v3290
      %v3944 = vpop.f32.mrf.mxu0
      %v3945 = vadd.f32 %v3786, %v3944
      %v3946 = vpop.f32.mrf.mxu0
      %v3947 = vadd.f32 %v3788, %v3946
      %3948 = vmatmul.bf16.gmra.mxu0 %v3293
      %v3949 = vpop.f32.mrf.mxu0
      %v3950 = vadd.f32 %v3791, %v3949
      %v3951 = vpop.f32.mrf.mxu0
      %v3952 = vadd.f32 %v3793, %v3951
      %3953 = vmatmul.bf16.gmra.mxu0 %v3296
      %v3954 = vpop.f32.mrf.mxu0
      %v3955 = vadd.f32 %v3796, %v3954
      %v3956 = vpop.f32.mrf.mxu0
      %v3957 = vadd.f32 %v3798, %v3956
      %3958 = vmatmul.bf16.gmra.mxu0 %v3298
      %v3959 = vpop.f32.mrf.mxu0
      %v3960 = vadd.f32 %v3801, %v3959
      %v3961 = vpop.f32.mrf.mxu0
      %v3962 = vadd.f32 %v3803, %v3961
      %3963 = vmatmul.bf16.gmra.mxu0 %v3301
      %v3964 = vpop.f32.mrf.mxu0
      %v3965 = vadd.f32 %v3806, %v3964
      %v3966 = vpop.f32.mrf.mxu0
      %v3967 = vadd.f32 %v3808, %v3966
      %3968 = vmatmul.bf16.gmra.mxu0 %v3304
      %v3969 = vpop.f32.mrf.mxu0
      %v3970 = vadd.f32 %v3811, %v3969
      %v3971 = vpop.f32.mrf.mxu0
      %v3972 = vadd.f32 %v3813, %v3971
      %3973 = vmatmul.bf16.gmra.mxu0 %v3306
      %v3974 = vpop.f32.mrf.mxu0
      %v3975 = vadd.f32 %v3816, %v3974
      %v3976 = vpop.f32.mrf.mxu0
      %v3977 = vadd.f32 %v3818, %v3976
      %3978 = vmatmul.bf16.gmra.mxu0 %v3309
      %v3979 = vpop.f32.mrf.mxu0
      %v3980 = vadd.f32 %v3821, %v3979
      %v3981 = vpop.f32.mrf.mxu0
      %v3982 = vadd.f32 %v3823, %v3981
      %3983 = vmatmul.bf16.gmra.mxu0 %v3312
      %v3984 = vpop.f32.mrf.mxu0
      %v3985 = vadd.f32 %v3826, %v3984
      %v3986 = vpop.f32.mrf.mxu0
      %v3987 = vadd.f32 %v3828, %v3986
      %3988 = vmatmul.bf16.gmra.mxu0 %v3314
      %v3989 = vpop.f32.mrf.mxu0
      %v3990 = vadd.f32 %v3831, %v3989
      %v3991 = vpop.f32.mrf.mxu0
      %v3992 = vadd.f32 %v3833, %v3991
      %3993 = vmatmul.bf16.gmra.mxu0 %v3317
      %v3994 = vpop.f32.mrf.mxu0
      %v3995 = vadd.f32 %v3836, %v3994
      %v3996 = vpop.f32.mrf.mxu0
      %v3997 = vadd.f32 %v3838, %v3996
      %3998 = vmatmul.bf16.gmra.mxu0 %v3320
      %v3999 = vpop.f32.mrf.mxu0
      %v4000 = vadd.f32 %v3841, %v3999
      %v4001 = vpop.f32.mrf.mxu0
      %v4002 = vadd.f32 %v3843, %v4001
      %4003 = vmatmul.bf16.gmra.mxu0 %v3322
      %v4004 = vpop.f32.mrf.mxu0
      %v4005 = vadd.f32 %v3846, %v4004
      %v4006 = vpop.f32.mrf.mxu0
      %v4007 = vadd.f32 %v3848, %v4006
      %4008 = vmatmul.bf16.gmra.mxu0 %v3325
      %v4009 = vpop.f32.mrf.mxu0
      %v4010 = vadd.f32 %v3851, %v4009
      %v4011 = vpop.f32.mrf.mxu0
      %v4012 = vadd.f32 %v3853, %v4011
      %4013 = vmatmul.bf16.gmra.mxu0 %v3328
      %v4014 = vpop.f32.mrf.mxu0
      %v4015 = vadd.f32 %v3856, %v4014
      %v4016 = vpop.f32.mrf.mxu0
      %v4017 = vadd.f32 %v3858, %v4016
      %4018 = vmatmul.bf16.gmra.mxu0 %v3330
      %v4019 = vpop.f32.mrf.mxu0
      %v4020 = vadd.f32 %v3861, %v4019
      %v4021 = vpop.f32.mrf.mxu0
      %v4022 = vadd.f32 %v3863, %v4021
      %4023 = vmatmul.bf16.gmra.mxu0 %v3333
      %v4024 = vpop.f32.mrf.mxu0
      %v4025 = vadd.f32 %v3866, %v4024
      %v4026 = vpop.f32.mrf.mxu0
      %v4027 = vadd.f32 %v3868, %v4026
      %4028 = vmatmul.bf16.gmra.mxu0 %v3336
      %v4029 = vpop.f32.mrf.mxu0
      %v4030 = vadd.f32 %v3871, %v4029
      %v4031 = vpop.f32.mrf.mxu0
      %v4032 = vadd.f32 %v3873, %v4031
      %4033 = vmatmul.bf16.gmra.mxu0 %v3338
      %v4034 = vpop.f32.mrf.mxu0
      %v4035 = vadd.f32 %v3876, %v4034
      %v4036 = vpop.f32.mrf.mxu0
      %v4037 = vadd.f32 %v3878, %v4036
      %4038 = vmatmul.bf16.gmra.mxu0 %v3341
      %v4039 = vpop.f32.mrf.mxu0
      %v4040 = vadd.f32 %v3881, %v4039
      %v4041 = vpop.f32.mrf.mxu0
      %v4042 = vadd.f32 %v3883, %v4041
      %4043 = vmatmul.bf16.gmra.mxu0 %v3344
      %v4044 = vpop.f32.mrf.mxu0
      %v4045 = vadd.f32 %v3886, %v4044
      %v4046 = vpop.f32.mrf.mxu0
      %v4047 = vadd.f32 %v3888, %v4046
      %4048 = vmatmul.bf16.gmra.mxu0 %v3346
      %v4049 = vpop.f32.mrf.mxu0
      %v4050 = vadd.f32 %v3891, %v4049
      %v4051 = vpop.f32.mrf.mxu0
      %v4052 = vadd.f32 %v3893, %v4051
      %4053 = vmatmul.bf16.gmra.mxu0 %v3349
      %v4054 = vpop.f32.mrf.mxu0
      %v4055 = vadd.f32 %v3896, %v4054
      %v4056 = vpop.f32.mrf.mxu0
      %v4057 = vadd.f32 %v3898, %v4056
      %4058 = vmatmul.bf16.gmra.mxu0 %v3352
      %v4059 = vpop.f32.mrf.mxu0
      %v4060 = vadd.f32 %v3901, %v4059
      %v4061 = vpop.f32.mrf.mxu0
      %v4062 = vadd.f32 %v3903, %v4061
      %4063 = vdwg.mxu0
      %v4064 = vpack.c.b16 %v3050, %v3048
      %v4065 = vpack.c.b16 %v3051, %v3049
      %v4066 = vpack.c.b16 %v3054, %v3052
      %v4067 = vpack.c.b16 %v2343, %v2143
      %v4068 = vpack.c.b16 %v3055, %v3053
      %v4069 = vpack.c.b16 %v3058, %v3056
      %v4070 = vpack.c.b16 %v2144, %v2344
      %v4071 = vpack.c.b16 %v3059, %v3057
      %v4072 = vpack.c.b16 %v3062, %v3060
      %v4073 = vpack.c.b16 %v3063, %v3061
      %v4074 = vpack.c.b16 %v3066, %v3064
      %v4075 = vpack.c.b16 %v2347, %v2145
      %v4076 = vpack.c.b16 %v3067, %v3065
      %v4077 = vpack.c.b16 %v3070, %v3068
      %v4078 = vpack.c.b16 %v2146, %v2348
      %v4079 = vpack.c.b16 %v3071, %v3069
      %v4080 = vpack.c.b16 %v3074, %v3072
      %v4081 = vpack.c.b16 %v3075, %v3073
      %v4082 = vpack.c.b16 %v3078, %v3076
      %v4083 = vpack.c.b16 %v2351, %v2147
      %v4084 = vpack.c.b16 %v3079, %v3077
      %v4085 = vpack.c.b16 %v3082, %v3080
      %v4086 = vpack.c.b16 %v2148, %v2352
      %v4087 = vpack.c.b16 %v3083, %v3081
      %v4088 = vpack.c.b16 %v3086, %v3084
      %v4089 = vpack.c.b16 %v3087, %v3085
      %v4090 = vpack.c.b16 %v3090, %v3088
      %v4091 = vpack.c.b16 %v2355, %v2149
      %v4092 = vpack.c.b16 %v3091, %v3089
      %v4093 = vpack.c.b16 %v3094, %v3092
      %v4094 = vpack.c.b16 %v2150, %v2356
      %v4095 = vpack.c.b16 %v3095, %v3093
      %v4096 = vpack.c.b16 %v3098, %v3096
      %v4097 = vpack.c.b16 %v3099, %v3097
      %v4098 = vpack.c.b16 %v3102, %v3100
      %v4099 = vpack.c.b16 %v2359, %v2151
      %v4100 = vpack.c.b16 %v3103, %v3101
      %v4101 = vpack.c.b16 %v3106, %v3104
      %v4102 = vpack.c.b16 %v2152, %v2360
      %v4103 = vpack.c.b16 %v3107, %v3105
      %v4104 = vpack.c.b16 %v3110, %v3108
      %v4105 = vpack.c.b16 %v3111, %v3109
      %v4106 = vpack.c.b16 %v3114, %v3112
      %v4107 = vpack.c.b16 %v2363, %v2153
      %v4108 = vpack.c.b16 %v3115, %v3113
      %v4109 = vpack.c.b16 %v3118, %v3116
      %v4110 = vpack.c.b16 %v2154, %v2364
      %v4111 = vpack.c.b16 %v3119, %v3117
      %v4112 = vpack.c.b16 %v3122, %v3120
      %v4113 = vpack.c.b16 %v3123, %v3121
      %v4114 = vpack.c.b16 %v3126, %v3124
      %v4115 = vpack.c.b16 %v2367, %v2155
      %v4116 = vpack.c.b16 %v3127, %v3125
      %v4117 = vpack.c.b16 %v3130, %v3128
      %v4118 = vpack.c.b16 %v2156, %v2368
      %v4119 = vpack.c.b16 %v3131, %v3129
      %v4120 = vpack.c.b16 %v3134, %v3132
      %v4121 = vpack.c.b16 %v3135, %v3133
      %v4122 = vpack.c.b16 %v3138, %v3136
      %v4123 = vpack.c.b16 %v2371, %v2157
      %v4124 = vpack.c.b16 %v3139, %v3137
      %v4125 = vpack.c.b16 %v3142, %v3140
      %v4126 = vpack.c.b16 %v2158, %v2372
      %v4127 = vpack.c.b16 %v3143, %v3141
      %v4128 = vpack.c.b16 %v3146, %v3144
      %v4129 = vpack.c.b16 %v3147, %v3145
      %v4130 = vpack.c.b16 %v3150, %v3148
      %v4131 = vpack.c.b16 %v2375, %v2159
      %v4132 = vpack.c.b16 %v3151, %v3149
      %v4133 = vpack.c.b16 %v3154, %v3152
      %v4134 = vpack.c.b16 %v2160, %v2376
      %v4135 = vpack.c.b16 %v3155, %v3153
      %v4136 = vpack.c.b16 %v3158, %v3156
      %v4137 = vpack.c.b16 %v3159, %v3157
      %v4138 = vpack.c.b16 %v3162, %v3160
      %v4139 = vpack.c.b16 %v2379, %v2161
      %v4140 = vpack.c.b16 %v3163, %v3161
      %v4141 = vpack.c.b16 %v3166, %v3164
      %v4142 = vpack.c.b16 %v2162, %v2380
      %v4143 = vpack.c.b16 %v3167, %v3165
      %v4282 = vunpack.c.l.b16 %v3168
      %v4283 = vunpack.c.l.b16 %v3169
      %v4284 = vunpack.c.l.b16 %v3170
      %v4285 = vunpack.c.l.b16 %v3171
      %v4286 = vunpack.c.l.b16 %v3172
      %v4287 = vunpack.c.l.b16 %v3173
      %v4288 = vunpack.c.l.b16 %v3174
      %v4289 = vunpack.c.l.b16 %v3175
      %v4290 = vunpack.c.l.b16 %v3176
      %v4291 = vunpack.c.l.b16 %v3177
      %v4292 = vunpack.c.l.b16 %v3178
      %v4293 = vunpack.c.l.b16 %v3179
      %v4294 = vunpack.c.l.b16 %v3180
      %v4295 = vunpack.c.l.b16 %v3181
      %v4296 = vunpack.c.l.b16 %v3182
      %v4297 = vunpack.c.l.b16 %v3183
      %v4298 = vunpack.c.l.b16 %v3184
      %v4299 = vunpack.c.l.b16 %v3185
      %v4300 = vunpack.c.l.b16 %v3186
      %v4301 = vunpack.c.l.b16 %v3187
      %v4302 = vunpack.c.l.b16 %v3188
      %v4303 = vunpack.c.l.b16 %v3189
      %v4304 = vunpack.c.l.b16 %v3190
      %v4305 = vunpack.c.l.b16 %v3191
      %v4306 = vunpack.c.l.b16 %v3192
      %v4307 = vunpack.c.l.b16 %v3193
      %v4308 = vunpack.c.l.b16 %v3194
      %v4309 = vunpack.c.l.b16 %v3195
      %v4310 = vunpack.c.l.b16 %v3196
      %v4311 = vunpack.c.l.b16 %v3197
      %v4312 = vunpack.c.l.b16 %v3198
      %v4313 = vunpack.c.l.b16 %v3199
      %v4314 = vunpack.c.l.b16 %v3200
      %v4315 = vunpack.c.l.b16 %v3201
      %v4316 = vunpack.c.l.b16 %v3202
      %v4317 = vunpack.c.l.b16 %v3203
      %v4318 = vunpack.c.l.b16 %v3204
      %v4319 = vunpack.c.l.b16 %v3205
      %v4320 = vunpack.c.l.b16 %v3206
      %v4321 = vunpack.c.l.b16 %v3207
      %v4322 = vunpack.c.l.b16 %v3208
      %v4323 = vunpack.c.l.b16 %v3209
      %v4324 = vunpack.c.l.b16 %v3210
      %v4325 = vunpack.c.l.b16 %v3211
      %v4326 = vunpack.c.l.b16 %v3212
      %v4327 = vunpack.c.l.b16 %v3213
      %v4328 = vunpack.c.l.b16 %v3214
      %v4329 = vunpack.c.l.b16 %v3215
      %v4330 = vpack.c.b16 %v4283, %v4282
      %v4331 = vpack.c.b16 %v4285, %v4284
      %v4332 = vpack.c.b16 %v4287, %v4286
      %v4333 = vpack.c.b16 %v4289, %v4288
      %v4334 = vpack.c.b16 %v4291, %v4290
      %v4335 = vpack.c.b16 %v4293, %v4292
      %v4336 = vpack.c.b16 %v4295, %v4294
      %v4337 = vpack.c.b16 %v4297, %v4296
      %v4338 = vpack.c.b16 %v4299, %v4298
      %v4339 = vpack.c.b16 %v4301, %v4300
      %v4340 = vpack.c.b16 %v4303, %v4302
      %v4341 = vpack.c.b16 %v4305, %v4304
      %v4342 = vpack.c.b16 %v4307, %v4306
      %v4343 = vpack.c.b16 %v4309, %v4308
      %v4344 = vpack.c.b16 %v4311, %v4310
      %v4345 = vpack.c.b16 %v4313, %v4312
      %v4346 = vpack.c.b16 %v4315, %v4314
      %v4347 = vpack.c.b16 %v4317, %v4316
      %v4348 = vpack.c.b16 %v4319, %v4318
      %v4349 = vpack.c.b16 %v4321, %v4320
      %v4350 = vpack.c.b16 %v4323, %v4322
      %v4351 = vpack.c.b16 %v4325, %v4324
      %v4352 = vpack.c.b16 %v4327, %v4326
      %v4353 = vpack.c.b16 %v4329, %v4328
      %4378 = vmatpush.bf16.msra.mxu0 %v4337
      %4379 = vmatpush.bf16.msra.mxu0 %v4336
      %4380 = vmatpush.bf16.msra.mxu0 %v4335
      %4381 = vmatpush.bf16.msra.mxu0 %v4334
      %4382 = vmatpush.bf16.msra.mxu0 %v4333
      %4383 = vmatpush.bf16.msra.mxu0 %v4332
      %4384 = vmatpush.bf16.msra.mxu0 %v4331
      %4385 = vmatpush.bf16.msra.mxu0 %v4330
      %4386 = vmatmul.bf16.gmra.mxu0 %v4064
      %v4387 = vpop.f32.mrf.mxu0
      %v4388 = vadd.f32 %v3915, %v4387
      %v4389 = vpop.f32.mrf.mxu0
      %v4390 = vadd.f32 %v3917, %v4389
      %4391 = vmatmul.bf16.gmra.mxu0 %v4066
      %v4392 = vpop.f32.mrf.mxu0
      %v4393 = vadd.f32 %v3920, %v4392
      %v4394 = vpop.f32.mrf.mxu0
      %v4395 = vadd.f32 %v3922, %v4394
      %4396 = vmatmul.bf16.gmra.mxu0 %v4069
      %v4397 = vpop.f32.mrf.mxu0
      %v4398 = vadd.f32 %v3925, %v4397
      %v4399 = vpop.f32.mrf.mxu0
      %v4400 = vadd.f32 %v3927, %v4399
      %4401 = vmatmul.bf16.gmra.mxu0 %v4072
      %v4402 = vpop.f32.mrf.mxu0
      %v4403 = vadd.f32 %v3930, %v4402
      %v4404 = vpop.f32.mrf.mxu0
      %v4405 = vadd.f32 %v3932, %v4404
      %4406 = vmatmul.bf16.gmra.mxu0 %v4074
      %v4407 = vpop.f32.mrf.mxu0
      %v4408 = vadd.f32 %v3935, %v4407
      %v4409 = vpop.f32.mrf.mxu0
      %v4410 = vadd.f32 %v3937, %v4409
      %4411 = vmatmul.bf16.gmra.mxu0 %v4077
      %v4412 = vpop.f32.mrf.mxu0
      %v4413 = vadd.f32 %v3940, %v4412
      %v4414 = vpop.f32.mrf.mxu0
      %v4415 = vadd.f32 %v3942, %v4414
      %4416 = vmatmul.bf16.gmra.mxu0 %v4080
      %v4417 = vpop.f32.mrf.mxu0
      %v4418 = vadd.f32 %v3945, %v4417
      %v4419 = vpop.f32.mrf.mxu0
      %v4420 = vadd.f32 %v3947, %v4419
      %4421 = vmatmul.bf16.gmra.mxu0 %v4082
      %v4422 = vpop.f32.mrf.mxu0
      %v4423 = vadd.f32 %v3950, %v4422
      %v4424 = vpop.f32.mrf.mxu0
      %v4425 = vadd.f32 %v3952, %v4424
      %4426 = vmatmul.bf16.gmra.mxu0 %v4085
      %v4427 = vpop.f32.mrf.mxu0
      %v4428 = vadd.f32 %v3955, %v4427
      %v4429 = vpop.f32.mrf.mxu0
      %v4430 = vadd.f32 %v3957, %v4429
      %4431 = vmatmul.bf16.gmra.mxu0 %v4088
      %v4432 = vpop.f32.mrf.mxu0
      %v4433 = vadd.f32 %v3960, %v4432
      %v4434 = vpop.f32.mrf.mxu0
      %v4435 = vadd.f32 %v3962, %v4434
      %4436 = vmatmul.bf16.gmra.mxu0 %v4090
      %v4437 = vpop.f32.mrf.mxu0
      %v4438 = vadd.f32 %v3965, %v4437
      %v4439 = vpop.f32.mrf.mxu0
      %v4440 = vadd.f32 %v3967, %v4439
      %4441 = vmatmul.bf16.gmra.mxu0 %v4093
      %v4442 = vpop.f32.mrf.mxu0
      %v4443 = vadd.f32 %v3970, %v4442
      %v4444 = vpop.f32.mrf.mxu0
      %v4445 = vadd.f32 %v3972, %v4444
      %4446 = vmatmul.bf16.gmra.mxu0 %v4096
      %v4447 = vpop.f32.mrf.mxu0
      %v4448 = vadd.f32 %v3975, %v4447
      %v4449 = vpop.f32.mrf.mxu0
      %v4450 = vadd.f32 %v3977, %v4449
      %4451 = vmatmul.bf16.gmra.mxu0 %v4098
      %v4452 = vpop.f32.mrf.mxu0
      %v4453 = vadd.f32 %v3980, %v4452
      %v4454 = vpop.f32.mrf.mxu0
      %v4455 = vadd.f32 %v3982, %v4454
      %4456 = vmatmul.bf16.gmra.mxu0 %v4101
      %v4457 = vpop.f32.mrf.mxu0
      %v4458 = vadd.f32 %v3985, %v4457
      %v4459 = vpop.f32.mrf.mxu0
      %v4460 = vadd.f32 %v3987, %v4459
      %4461 = vmatmul.bf16.gmra.mxu0 %v4104
      %v4462 = vpop.f32.mrf.mxu0
      %v4463 = vadd.f32 %v3990, %v4462
      %v4464 = vpop.f32.mrf.mxu0
      %v4465 = vadd.f32 %v3992, %v4464
      %4466 = vmatmul.bf16.gmra.mxu0 %v4106
      %v4467 = vpop.f32.mrf.mxu0
      %v4468 = vadd.f32 %v3995, %v4467
      %v4469 = vpop.f32.mrf.mxu0
      %v4470 = vadd.f32 %v3997, %v4469
      %4471 = vmatmul.bf16.gmra.mxu0 %v4109
      %v4472 = vpop.f32.mrf.mxu0
      %v4473 = vadd.f32 %v4000, %v4472
      %v4474 = vpop.f32.mrf.mxu0
      %v4475 = vadd.f32 %v4002, %v4474
      %4476 = vmatmul.bf16.gmra.mxu0 %v4112
      %v4477 = vpop.f32.mrf.mxu0
      %v4478 = vadd.f32 %v4005, %v4477
      %v4479 = vpop.f32.mrf.mxu0
      %v4480 = vadd.f32 %v4007, %v4479
      %4481 = vmatmul.bf16.gmra.mxu0 %v4114
      %v4482 = vpop.f32.mrf.mxu0
      %v4483 = vadd.f32 %v4010, %v4482
      %v4484 = vpop.f32.mrf.mxu0
      %v4485 = vadd.f32 %v4012, %v4484
      %4486 = vmatmul.bf16.gmra.mxu0 %v4117
      %v4487 = vpop.f32.mrf.mxu0
      %v4488 = vadd.f32 %v4015, %v4487
      %v4489 = vpop.f32.mrf.mxu0
      %v4490 = vadd.f32 %v4017, %v4489
      %4491 = vmatmul.bf16.gmra.mxu0 %v4120
      %v4492 = vpop.f32.mrf.mxu0
      %v4493 = vadd.f32 %v4020, %v4492
      %v4494 = vpop.f32.mrf.mxu0
      %v4495 = vadd.f32 %v4022, %v4494
      %4496 = vmatmul.bf16.gmra.mxu0 %v4122
      %v4497 = vpop.f32.mrf.mxu0
      %v4498 = vadd.f32 %v4025, %v4497
      %v4499 = vpop.f32.mrf.mxu0
      %v4500 = vadd.f32 %v4027, %v4499
      %4501 = vmatmul.bf16.gmra.mxu0 %v4125
      %v4502 = vpop.f32.mrf.mxu0
      %v4503 = vadd.f32 %v4030, %v4502
      %v4504 = vpop.f32.mrf.mxu0
      %v4505 = vadd.f32 %v4032, %v4504
      %4506 = vmatmul.bf16.gmra.mxu0 %v4128
      %v4507 = vpop.f32.mrf.mxu0
      %v4508 = vadd.f32 %v4035, %v4507
      %v4509 = vpop.f32.mrf.mxu0
      %v4510 = vadd.f32 %v4037, %v4509
      %4511 = vmatmul.bf16.gmra.mxu0 %v4130
      %v4512 = vpop.f32.mrf.mxu0
      %v4513 = vadd.f32 %v4040, %v4512
      %v4514 = vpop.f32.mrf.mxu0
      %v4515 = vadd.f32 %v4042, %v4514
      %4516 = vmatmul.bf16.gmra.mxu0 %v4133
      %v4517 = vpop.f32.mrf.mxu0
      %v4518 = vadd.f32 %v4045, %v4517
      %v4519 = vpop.f32.mrf.mxu0
      %v4520 = vadd.f32 %v4047, %v4519
      %4521 = vmatmul.bf16.gmra.mxu0 %v4136
      %v4522 = vpop.f32.mrf.mxu0
      %v4523 = vadd.f32 %v4050, %v4522
      %v4524 = vpop.f32.mrf.mxu0
      %v4525 = vadd.f32 %v4052, %v4524
      %4526 = vmatmul.bf16.gmra.mxu0 %v4138
      %v4527 = vpop.f32.mrf.mxu0
      %v4528 = vadd.f32 %v4055, %v4527
      %v4529 = vpop.f32.mrf.mxu0
      %v4530 = vadd.f32 %v4057, %v4529
      %4531 = vmatmul.bf16.gmra.mxu0 %v4141
      %v4532 = vpop.f32.mrf.mxu0
      %v4533 = vadd.f32 %v4060, %v4532
      %v4534 = vpop.f32.mrf.mxu0
      %v4535 = vadd.f32 %v4062, %v4534
      %4536 = vdwg.mxu0
      %4537 = vmatpush.bf16.msra.mxu0 %v4345
      %4538 = vmatpush.bf16.msra.mxu0 %v4344
      %4539 = vmatpush.bf16.msra.mxu0 %v4343
      %4540 = vmatpush.bf16.msra.mxu0 %v4342
      %4541 = vmatpush.bf16.msra.mxu0 %v4341
      %4542 = vmatpush.bf16.msra.mxu0 %v4340
      %4543 = vmatpush.bf16.msra.mxu0 %v4339
      %4544 = vmatpush.bf16.msra.mxu0 %v4338
      %4545 = vmatmul.bf16.gmra.mxu0 %v2385
      %v4546 = vpop.f32.mrf.mxu0
      %v4547 = vadd.f32 %v4388, %v4546
      %v4548 = vpop.f32.mrf.mxu0
      %v4549 = vadd.f32 %v4390, %v4548
      %4550 = vmatmul.bf16.gmra.mxu0 %v4067
      %v4551 = vpop.f32.mrf.mxu0
      %v4552 = vadd.f32 %v4393, %v4551
      %v4553 = vpop.f32.mrf.mxu0
      %v4554 = vadd.f32 %v4395, %v4553
      %4555 = vmatmul.bf16.gmra.mxu0 %v4070
      %v4556 = vpop.f32.mrf.mxu0
      %v4557 = vadd.f32 %v4398, %v4556
      %v4558 = vpop.f32.mrf.mxu0
      %v4559 = vadd.f32 %v4400, %v4558
      %4560 = vmatmul.bf16.gmra.mxu0 %v2387
      %v4561 = vpop.f32.mrf.mxu0
      %v4562 = vadd.f32 %v4403, %v4561
      %v4563 = vpop.f32.mrf.mxu0
      %v4564 = vadd.f32 %v4405, %v4563
      %4565 = vmatmul.bf16.gmra.mxu0 %v4075
      %v4566 = vpop.f32.mrf.mxu0
      %v4567 = vadd.f32 %v4408, %v4566
      %v4568 = vpop.f32.mrf.mxu0
      %v4569 = vadd.f32 %v4410, %v4568
      %4570 = vmatmul.bf16.gmra.mxu0 %v4078
      %v4571 = vpop.f32.mrf.mxu0
      %v4572 = vadd.f32 %v4413, %v4571
      %v4573 = vpop.f32.mrf.mxu0
      %v4574 = vadd.f32 %v4415, %v4573
      %4575 = vmatmul.bf16.gmra.mxu0 %v2389
      %v4576 = vpop.f32.mrf.mxu0
      %v4577 = vadd.f32 %v4418, %v4576
      %v4578 = vpop.f32.mrf.mxu0
      %v4579 = vadd.f32 %v4420, %v4578
      %4580 = vmatmul.bf16.gmra.mxu0 %v4083
      %v4581 = vpop.f32.mrf.mxu0
      %v4582 = vadd.f32 %v4423, %v4581
      %v4583 = vpop.f32.mrf.mxu0
      %v4584 = vadd.f32 %v4425, %v4583
      %4585 = vmatmul.bf16.gmra.mxu0 %v4086
      %v4586 = vpop.f32.mrf.mxu0
      %v4587 = vadd.f32 %v4428, %v4586
      %v4588 = vpop.f32.mrf.mxu0
      %v4589 = vadd.f32 %v4430, %v4588
      %4590 = vmatmul.bf16.gmra.mxu0 %v2391
      %v4591 = vpop.f32.mrf.mxu0
      %v4592 = vadd.f32 %v4433, %v4591
      %v4593 = vpop.f32.mrf.mxu0
      %v4594 = vadd.f32 %v4435, %v4593
      %4595 = vmatmul.bf16.gmra.mxu0 %v4091
      %v4596 = vpop.f32.mrf.mxu0
      %v4597 = vadd.f32 %v4438, %v4596
      %v4598 = vpop.f32.mrf.mxu0
      %v4599 = vadd.f32 %v4440, %v4598
      %4600 = vmatmul.bf16.gmra.mxu0 %v4094
      %v4601 = vpop.f32.mrf.mxu0
      %v4602 = vadd.f32 %v4443, %v4601
      %v4603 = vpop.f32.mrf.mxu0
      %v4604 = vadd.f32 %v4445, %v4603
      %4605 = vmatmul.bf16.gmra.mxu0 %v2393
      %v4606 = vpop.f32.mrf.mxu0
      %v4607 = vadd.f32 %v4448, %v4606
      %v4608 = vpop.f32.mrf.mxu0
      %v4609 = vadd.f32 %v4450, %v4608
      %4610 = vmatmul.bf16.gmra.mxu0 %v4099
      %v4611 = vpop.f32.mrf.mxu0
      %v4612 = vadd.f32 %v4453, %v4611
      %v4613 = vpop.f32.mrf.mxu0
      %v4614 = vadd.f32 %v4455, %v4613
      %4615 = vmatmul.bf16.gmra.mxu0 %v4102
      %v4616 = vpop.f32.mrf.mxu0
      %v4617 = vadd.f32 %v4458, %v4616
      %v4618 = vpop.f32.mrf.mxu0
      %v4619 = vadd.f32 %v4460, %v4618
      %4620 = vmatmul.bf16.gmra.mxu0 %v2395
      %v4621 = vpop.f32.mrf.mxu0
      %v4622 = vadd.f32 %v4463, %v4621
      %v4623 = vpop.f32.mrf.mxu0
      %v4624 = vadd.f32 %v4465, %v4623
      %4625 = vmatmul.bf16.gmra.mxu0 %v4107
      %v4626 = vpop.f32.mrf.mxu0
      %v4627 = vadd.f32 %v4468, %v4626
      %v4628 = vpop.f32.mrf.mxu0
      %v4629 = vadd.f32 %v4470, %v4628
      %4630 = vmatmul.bf16.gmra.mxu0 %v4110
      %v4631 = vpop.f32.mrf.mxu0
      %v4632 = vadd.f32 %v4473, %v4631
      %v4633 = vpop.f32.mrf.mxu0
      %v4634 = vadd.f32 %v4475, %v4633
      %4635 = vmatmul.bf16.gmra.mxu0 %v2397
      %v4636 = vpop.f32.mrf.mxu0
      %v4637 = vadd.f32 %v4478, %v4636
      %v4638 = vpop.f32.mrf.mxu0
      %v4639 = vadd.f32 %v4480, %v4638
      %4640 = vmatmul.bf16.gmra.mxu0 %v4115
      %v4641 = vpop.f32.mrf.mxu0
      %v4642 = vadd.f32 %v4483, %v4641
      %v4643 = vpop.f32.mrf.mxu0
      %v4644 = vadd.f32 %v4485, %v4643
      %4645 = vmatmul.bf16.gmra.mxu0 %v4118
      %v4646 = vpop.f32.mrf.mxu0
      %v4647 = vadd.f32 %v4488, %v4646
      %v4648 = vpop.f32.mrf.mxu0
      %v4649 = vadd.f32 %v4490, %v4648
      %4650 = vmatmul.bf16.gmra.mxu0 %v2399
      %v4651 = vpop.f32.mrf.mxu0
      %v4652 = vadd.f32 %v4493, %v4651
      %v4653 = vpop.f32.mrf.mxu0
      %v4654 = vadd.f32 %v4495, %v4653
      %4655 = vmatmul.bf16.gmra.mxu0 %v4123
      %v4656 = vpop.f32.mrf.mxu0
      %v4657 = vadd.f32 %v4498, %v4656
      %v4658 = vpop.f32.mrf.mxu0
      %v4659 = vadd.f32 %v4500, %v4658
      %4660 = vmatmul.bf16.gmra.mxu0 %v4126
      %v4661 = vpop.f32.mrf.mxu0
      %v4662 = vadd.f32 %v4503, %v4661
      %v4663 = vpop.f32.mrf.mxu0
      %v4664 = vadd.f32 %v4505, %v4663
      %4665 = vmatmul.bf16.gmra.mxu0 %v2401
      %v4666 = vpop.f32.mrf.mxu0
      %v4667 = vadd.f32 %v4508, %v4666
      %v4668 = vpop.f32.mrf.mxu0
      %v4669 = vadd.f32 %v4510, %v4668
      %4670 = vmatmul.bf16.gmra.mxu0 %v4131
      %v4671 = vpop.f32.mrf.mxu0
      %v4672 = vadd.f32 %v4513, %v4671
      %v4673 = vpop.f32.mrf.mxu0
      %v4674 = vadd.f32 %v4515, %v4673
      %4675 = vmatmul.bf16.gmra.mxu0 %v4134
      %v4676 = vpop.f32.mrf.mxu0
      %v4677 = vadd.f32 %v4518, %v4676
      %v4678 = vpop.f32.mrf.mxu0
      %v4679 = vadd.f32 %v4520, %v4678
      %4680 = vmatmul.bf16.gmra.mxu0 %v2403
      %v4681 = vpop.f32.mrf.mxu0
      %v4682 = vadd.f32 %v4523, %v4681
      %v4683 = vpop.f32.mrf.mxu0
      %v4684 = vadd.f32 %v4525, %v4683
      %4685 = vmatmul.bf16.gmra.mxu0 %v4139
      %v4686 = vpop.f32.mrf.mxu0
      %v4687 = vadd.f32 %v4528, %v4686
      %v4688 = vpop.f32.mrf.mxu0
      %v4689 = vadd.f32 %v4530, %v4688
      %4690 = vmatmul.bf16.gmra.mxu0 %v4142
      %v4691 = vpop.f32.mrf.mxu0
      %v4692 = vadd.f32 %v4533, %v4691
      %v4693 = vpop.f32.mrf.mxu0
      %v4694 = vadd.f32 %v4535, %v4693
      %4695 = vdwg.mxu0
      %4696 = vmatpush.bf16.msra.mxu0 %v4353
      %4697 = vmatpush.bf16.msra.mxu0 %v4352
      %4698 = vmatpush.bf16.msra.mxu0 %v4351
      %4699 = vmatpush.bf16.msra.mxu0 %v4350
      %4700 = vmatpush.bf16.msra.mxu0 %v4349
      %4701 = vmatpush.bf16.msra.mxu0 %v4348
      %4702 = vmatpush.bf16.msra.mxu0 %v4347
      %4703 = vmatpush.bf16.msra.mxu0 %v4346
      %4704 = vmatmul.bf16.gmra.mxu0 %v4065
      %v4705 = vpop.f32.mrf.mxu0
      %v4706 = vadd.f32 %v4547, %v4705
      %v4707 = vpop.f32.mrf.mxu0
      %v4708 = vadd.f32 %v4549, %v4707
      %4709 = vmatmul.bf16.gmra.mxu0 %v4068
      %v4710 = vpop.f32.mrf.mxu0
      %v4711 = vadd.f32 %v4552, %v4710
      %v4712 = vpop.f32.mrf.mxu0
      %v4713 = vadd.f32 %v4554, %v4712
      %4714 = vmatmul.bf16.gmra.mxu0 %v4071
      %v4715 = vpop.f32.mrf.mxu0
      %v4716 = vadd.f32 %v4557, %v4715
      %v4717 = vpop.f32.mrf.mxu0
      %v4718 = vadd.f32 %v4559, %v4717
      %4719 = vmatmul.bf16.gmra.mxu0 %v4073
      %v4720 = vpop.f32.mrf.mxu0
      %v4721 = vadd.f32 %v4562, %v4720
      %v4722 = vpop.f32.mrf.mxu0
      %v4723 = vadd.f32 %v4564, %v4722
      %4724 = vmatmul.bf16.gmra.mxu0 %v4076
      %v4725 = vpop.f32.mrf.mxu0
      %v4726 = vadd.f32 %v4567, %v4725
      %v4727 = vpop.f32.mrf.mxu0
      %v4728 = vadd.f32 %v4569, %v4727
      %4729 = vmatmul.bf16.gmra.mxu0 %v4079
      %v4730 = vpop.f32.mrf.mxu0
      %v4731 = vadd.f32 %v4572, %v4730
      %v4732 = vpop.f32.mrf.mxu0
      %v4733 = vadd.f32 %v4574, %v4732
      %4734 = vmatmul.bf16.gmra.mxu0 %v4081
      %v4735 = vpop.f32.mrf.mxu0
      %v4736 = vadd.f32 %v4577, %v4735
      %v4737 = vpop.f32.mrf.mxu0
      %v4738 = vadd.f32 %v4579, %v4737
      %4739 = vmatmul.bf16.gmra.mxu0 %v4084
      %v4740 = vpop.f32.mrf.mxu0
      %v4741 = vadd.f32 %v4582, %v4740
      %v4742 = vpop.f32.mrf.mxu0
      %v4743 = vadd.f32 %v4584, %v4742
      %4744 = vmatmul.bf16.gmra.mxu0 %v4087
      %v4745 = vpop.f32.mrf.mxu0
      %v4746 = vadd.f32 %v4587, %v4745
      %v4747 = vpop.f32.mrf.mxu0
      %v4748 = vadd.f32 %v4589, %v4747
      %4749 = vmatmul.bf16.gmra.mxu0 %v4089
      %v4750 = vpop.f32.mrf.mxu0
      %v4751 = vadd.f32 %v4592, %v4750
      %v4752 = vpop.f32.mrf.mxu0
      %v4753 = vadd.f32 %v4594, %v4752
      %4754 = vmatmul.bf16.gmra.mxu0 %v4092
      %v4755 = vpop.f32.mrf.mxu0
      %v4756 = vadd.f32 %v4597, %v4755
      %v4757 = vpop.f32.mrf.mxu0
      %v4758 = vadd.f32 %v4599, %v4757
      %4759 = vmatmul.bf16.gmra.mxu0 %v4095
      %v4760 = vpop.f32.mrf.mxu0
      %v4761 = vadd.f32 %v4602, %v4760
      %v4762 = vpop.f32.mrf.mxu0
      %v4763 = vadd.f32 %v4604, %v4762
      %4764 = vmatmul.bf16.gmra.mxu0 %v4097
      %v4765 = vpop.f32.mrf.mxu0
      %v4766 = vadd.f32 %v4607, %v4765
      %v4767 = vpop.f32.mrf.mxu0
      %v4768 = vadd.f32 %v4609, %v4767
      %4769 = vmatmul.bf16.gmra.mxu0 %v4100
      %v4770 = vpop.f32.mrf.mxu0
      %v4771 = vadd.f32 %v4612, %v4770
      %v4772 = vpop.f32.mrf.mxu0
      %v4773 = vadd.f32 %v4614, %v4772
      %4774 = vmatmul.bf16.gmra.mxu0 %v4103
      %v4775 = vpop.f32.mrf.mxu0
      %v4776 = vadd.f32 %v4617, %v4775
      %v4777 = vpop.f32.mrf.mxu0
      %v4778 = vadd.f32 %v4619, %v4777
      %4779 = vmatmul.bf16.gmra.mxu0 %v4105
      %v4780 = vpop.f32.mrf.mxu0
      %v4781 = vadd.f32 %v4622, %v4780
      %v4782 = vpop.f32.mrf.mxu0
      %v4783 = vadd.f32 %v4624, %v4782
      %4784 = vmatmul.bf16.gmra.mxu0 %v4108
      %v4785 = vpop.f32.mrf.mxu0
      %v4786 = vadd.f32 %v4627, %v4785
      %v4787 = vpop.f32.mrf.mxu0
      %v4788 = vadd.f32 %v4629, %v4787
      %4789 = vmatmul.bf16.gmra.mxu0 %v4111
      %v4790 = vpop.f32.mrf.mxu0
      %v4791 = vadd.f32 %v4632, %v4790
      %v4792 = vpop.f32.mrf.mxu0
      %v4793 = vadd.f32 %v4634, %v4792
      %4794 = vmatmul.bf16.gmra.mxu0 %v4113
      %v4795 = vpop.f32.mrf.mxu0
      %v4796 = vadd.f32 %v4637, %v4795
      %v4797 = vpop.f32.mrf.mxu0
      %v4798 = vadd.f32 %v4639, %v4797
      %4799 = vmatmul.bf16.gmra.mxu0 %v4116
      %v4800 = vpop.f32.mrf.mxu0
      %v4801 = vadd.f32 %v4642, %v4800
      %v4802 = vpop.f32.mrf.mxu0
      %v4803 = vadd.f32 %v4644, %v4802
      %4804 = vmatmul.bf16.gmra.mxu0 %v4119
      %v4805 = vpop.f32.mrf.mxu0
      %v4806 = vadd.f32 %v4647, %v4805
      %v4807 = vpop.f32.mrf.mxu0
      %v4808 = vadd.f32 %v4649, %v4807
      %4809 = vmatmul.bf16.gmra.mxu0 %v4121
      %v4810 = vpop.f32.mrf.mxu0
      %v4811 = vadd.f32 %v4652, %v4810
      %v4812 = vpop.f32.mrf.mxu0
      %v4813 = vadd.f32 %v4654, %v4812
      %4814 = vmatmul.bf16.gmra.mxu0 %v4124
      %v4815 = vpop.f32.mrf.mxu0
      %v4816 = vadd.f32 %v4657, %v4815
      %v4817 = vpop.f32.mrf.mxu0
      %v4818 = vadd.f32 %v4659, %v4817
      %4819 = vmatmul.bf16.gmra.mxu0 %v4127
      %v4820 = vpop.f32.mrf.mxu0
      %v4821 = vadd.f32 %v4662, %v4820
      %v4822 = vpop.f32.mrf.mxu0
      %v4823 = vadd.f32 %v4664, %v4822
      %4824 = vmatmul.bf16.gmra.mxu0 %v4129
      %v4825 = vpop.f32.mrf.mxu0
      %v4826 = vadd.f32 %v4667, %v4825
      %v4827 = vpop.f32.mrf.mxu0
      %v4828 = vadd.f32 %v4669, %v4827
      %4829 = vmatmul.bf16.gmra.mxu0 %v4132
      %v4830 = vpop.f32.mrf.mxu0
      %v4831 = vadd.f32 %v4672, %v4830
      %v4832 = vpop.f32.mrf.mxu0
      %v4833 = vadd.f32 %v4674, %v4832
      %4834 = vmatmul.bf16.gmra.mxu0 %v4135
      %v4835 = vpop.f32.mrf.mxu0
      %v4836 = vadd.f32 %v4677, %v4835
      %v4837 = vpop.f32.mrf.mxu0
      %v4838 = vadd.f32 %v4679, %v4837
      %4839 = vmatmul.bf16.gmra.mxu0 %v4137
      %v4840 = vpop.f32.mrf.mxu0
      %v4841 = vadd.f32 %v4682, %v4840
      %v4842 = vpop.f32.mrf.mxu0
      %v4843 = vadd.f32 %v4684, %v4842
      %4844 = vmatmul.bf16.gmra.mxu0 %v4140
      %v4845 = vpop.f32.mrf.mxu0
      %v4846 = vadd.f32 %v4687, %v4845
      %v4847 = vpop.f32.mrf.mxu0
      %v4848 = vadd.f32 %v4689, %v4847
      %4849 = vmatmul.bf16.gmra.mxu0 %v4143
      %v4850 = vpop.f32.mrf.mxu0
      %v4851 = vadd.f32 %v4692, %v4850
      %v4852 = vpop.f32.mrf.mxu0
      %v4853 = vadd.f32 %v4694, %v4852
      %4854 = vdwg.mxu0
      %v4857 = vunpack.c.l.b16 %v2717
      %v4858 = vunpack.c.l.b16 %v2827
      %v4859 = vunpack.c.h.b16 %v2717
      %v4860 = vunpack.c.h.b16 %v2827
      %v4861 = vunpack.c.l.b16 %v2671
      %v4862 = vunpack.c.l.b16 %v3007
      %s4863 = scalar_lea.vmem %s3, 384
      %v4864 = vld [vmem:[%s4863] sm:$0xf]
      %v4865 = vld [vmem:[%s4863 + $0x4] sm:$0xf]
      %v4866 = vld [vmem:[%s4863 + $0x8] sm:$0xf]
      %v4867 = vld [vmem:[%s4863 + $0xc] sm:$0xf]
      %v4868 = vld [vmem:[%s4863 + $0x10] sm:$0xf]
      %v4869 = vld [vmem:[%s4863 + $0x14] sm:$0xf]
      %v4870 = vld [vmem:[%s4863 + $0x18] sm:$0xf]
      %v4871 = vld [vmem:[%s4863 + $0x1c] sm:$0xf]
      %v4872 = vld [vmem:[%s4863 + $0x20] sm:$0xf]
      %v4873 = vld [vmem:[%s4863 + $0x24] sm:$0xf]
      %v4874 = vld [vmem:[%s4863 + $0x28] sm:$0xf]
      %v4875 = vld [vmem:[%s4863 + $0x2c] sm:$0xf]
      %v4876 = vld [vmem:[%s4863 + $0x30] sm:$0xf]
      %v4877 = vld [vmem:[%s4863 + $0x34] sm:$0xf]
      %v4878 = vld [vmem:[%s4863 + $0x38] sm:$0xf]
      %v4879 = vld [vmem:[%s4863 + $0x3c] sm:$0xf]
      %v4880 = vld [vmem:[%s4863 + $0x40] sm:$0xf]
      %v4881 = vld [vmem:[%s4863 + $0x44] sm:$0xf]
      %v4882 = vld [vmem:[%s4863 + $0x48] sm:$0xf]
      %v4883 = vld [vmem:[%s4863 + $0x4c] sm:$0xf]
      %v4884 = vld [vmem:[%s4863 + $0x50] sm:$0xf]
      %v4885 = vld [vmem:[%s4863 + $0x54] sm:$0xf]
      %v4886 = vld [vmem:[%s4863 + $0x58] sm:$0xf]
      %v4887 = vld [vmem:[%s4863 + $0x5c] sm:$0xf]
      %v4888 = vld [vmem:[%s4863 + $0x60] sm:$0xf]
      %v4889 = vld [vmem:[%s4863 + $0x64] sm:$0xf]
      %v4890 = vld [vmem:[%s4863 + $0x68] sm:$0xf]
      %v4891 = vld [vmem:[%s4863 + $0x6c] sm:$0xf]
      %v4892 = vld [vmem:[%s4863 + $0x70] sm:$0xf]
      %v4893 = vld [vmem:[%s4863 + $0x74] sm:$0xf]
      %v4894 = vld [vmem:[%s4863 + $0x78] sm:$0xf]
      %v4895 = vld [vmem:[%s4863 + $0x7c] sm:$0xf]
      %v4896 = vld [vmem:[%s4863 + $0x80] sm:$0xf]
      %v4897 = vld [vmem:[%s4863 + $0x84] sm:$0xf]
      %v4898 = vld [vmem:[%s4863 + $0x88] sm:$0xf]
      %v4899 = vld [vmem:[%s4863 + $0x8c] sm:$0xf]
      %v4900 = vld [vmem:[%s4863 + $0x90] sm:$0xf]
      %v4901 = vld [vmem:[%s4863 + $0x94] sm:$0xf]
      %v4902 = vld [vmem:[%s4863 + $0x98] sm:$0xf]
      %v4903 = vld [vmem:[%s4863 + $0x9c] sm:$0xf]
      %v4904 = vld [vmem:[%s4863 + $0xa0] sm:$0xf]
      %v4905 = vld [vmem:[%s4863 + $0xa4] sm:$0xf]
      %v4906 = vld [vmem:[%s4863 + $0xa8] sm:$0xf]
      %v4907 = vld [vmem:[%s4863 + $0xac] sm:$0xf]
      %v4908 = vld [vmem:[%s4863 + $0xb0] sm:$0xf]
      %v4909 = vld [vmem:[%s4863 + $0xb4] sm:$0xf]
      %v4910 = vld [vmem:[%s4863 + $0xb8] sm:$0xf]
      %v4911 = vld [vmem:[%s4863 + $0xbc] sm:$0xf]
      %v4912 = vpack.c.b16 %v3220, %v3218
      %v4913 = vpack.c.b16 %v3221, %v3219
      %v4914 = vpack.c.b16 %v4857, %v3222
      %v4915 = vpack.c.b16 %v2383, %v2163
      %v4916 = vpack.c.b16 %v4858, %v3223
      %v4917 = vpack.c.b16 %v4861, %v4859
      %v4918 = vpack.c.b16 %v2164, %v2384
      %v4919 = vpack.c.b16 %v4862, %v4860
      %v4977 = vunpack.c.l.b16 %v4864
      %v4978 = vunpack.c.l.b16 %v4865
      %v4979 = vunpack.c.l.b16 %v4866
      %v4980 = vunpack.c.l.b16 %v4867
      %v4981 = vunpack.c.l.b16 %v4868
      %v4982 = vunpack.c.l.b16 %v4869
      %v4983 = vunpack.c.l.b16 %v4870
      %v4984 = vunpack.c.l.b16 %v4871
      %v4985 = vunpack.c.l.b16 %v4872
      %v4986 = vunpack.c.l.b16 %v4873
      %v4987 = vunpack.c.l.b16 %v4874
      %v4988 = vunpack.c.l.b16 %v4875
      %v4989 = vunpack.c.l.b16 %v4876
      %v4990 = vunpack.c.l.b16 %v4877
      %v4991 = vunpack.c.l.b16 %v4878
      %v4992 = vunpack.c.l.b16 %v4879
      %v4993 = vunpack.c.l.b16 %v4880
      %v4994 = vunpack.c.l.b16 %v4881
      %v4995 = vunpack.c.l.b16 %v4882
      %v4996 = vunpack.c.l.b16 %v4883
      %v4997 = vunpack.c.l.b16 %v4884
      %v4998 = vunpack.c.l.b16 %v4885
      %v4999 = vunpack.c.l.b16 %v4886
      %v5000 = vunpack.c.l.b16 %v4887
      %v5001 = vunpack.c.l.b16 %v4888
      %v5002 = vunpack.c.l.b16 %v4889
      %v5003 = vunpack.c.l.b16 %v4890
      %v5004 = vunpack.c.l.b16 %v4891
      %v5005 = vunpack.c.l.b16 %v4892
      %v5006 = vunpack.c.l.b16 %v4893
      %v5007 = vunpack.c.l.b16 %v4894
      %v5008 = vunpack.c.l.b16 %v4895
      %v5009 = vunpack.c.l.b16 %v4896
      %v5010 = vunpack.c.l.b16 %v4897
      %v5011 = vunpack.c.l.b16 %v4898
      %v5012 = vunpack.c.l.b16 %v4899
      %v5013 = vunpack.c.l.b16 %v4900
      %v5014 = vunpack.c.l.b16 %v4901
      %v5015 = vunpack.c.l.b16 %v4902
      %v5016 = vunpack.c.l.b16 %v4903
      %v5017 = vunpack.c.l.b16 %v4904
      %v5018 = vunpack.c.l.b16 %v4905
      %v5019 = vunpack.c.l.b16 %v4906
      %v5020 = vunpack.c.l.b16 %v4907
      %v5021 = vunpack.c.l.b16 %v4908
      %v5022 = vunpack.c.l.b16 %v4909
      %v5023 = vunpack.c.l.b16 %v4910
      %v5024 = vunpack.c.l.b16 %v4911
      %v5025 = vpack.c.b16 %v4978, %v4977
      %v5026 = vpack.c.b16 %v4980, %v4979
      %v5027 = vpack.c.b16 %v4982, %v4981
      %v5028 = vpack.c.b16 %v4984, %v4983
      %v5029 = vpack.c.b16 %v4986, %v4985
      %v5030 = vpack.c.b16 %v4988, %v4987
      %v5031 = vpack.c.b16 %v4990, %v4989
      %v5032 = vpack.c.b16 %v4992, %v4991
      %v5033 = vpack.c.b16 %v4994, %v4993
      %v5034 = vpack.c.b16 %v4996, %v4995
      %v5035 = vpack.c.b16 %v4998, %v4997
      %v5036 = vpack.c.b16 %v5000, %v4999
      %v5037 = vpack.c.b16 %v5002, %v5001
      %v5038 = vpack.c.b16 %v5004, %v5003
      %v5039 = vpack.c.b16 %v5006, %v5005
      %v5040 = vpack.c.b16 %v5008, %v5007
      %v5041 = vpack.c.b16 %v5010, %v5009
      %v5042 = vpack.c.b16 %v5012, %v5011
      %v5043 = vpack.c.b16 %v5014, %v5013
      %v5044 = vpack.c.b16 %v5016, %v5015
      %v5045 = vpack.c.b16 %v5018, %v5017
      %v5046 = vpack.c.b16 %v5020, %v5019
      %v5047 = vpack.c.b16 %v5022, %v5021
      %v5048 = vpack.c.b16 %v5024, %v5023
      %5073 = vmatpush.bf16.msra.mxu0 %v5032
      %5074 = vmatpush.bf16.msra.mxu0 %v5031
      %5075 = vmatpush.bf16.msra.mxu0 %v5030
      %5076 = vmatpush.bf16.msra.mxu0 %v5029
      %5077 = vmatpush.bf16.msra.mxu0 %v5028
      %5078 = vmatpush.bf16.msra.mxu0 %v5027
      %5079 = vmatpush.bf16.msra.mxu0 %v5026
      %5080 = vmatpush.bf16.msra.mxu0 %v5025
      %5081 = vmatmul.bf16.gmra.mxu0 %v4072
      %v5082 = vpop.f32.mrf.mxu0
      %v5083 = vadd.f32 0.0, %v5082
      %v5084 = vpop.f32.mrf.mxu0
      %v5085 = vadd.f32 0.0, %v5084
      %5086 = vmatmul.bf16.gmra.mxu0 %v4074
      %v5087 = vpop.f32.mrf.mxu0
      %v5088 = vadd.f32 0.0, %v5087
      %v5089 = vpop.f32.mrf.mxu0
      %v5090 = vadd.f32 0.0, %v5089
      %5091 = vmatmul.bf16.gmra.mxu0 %v4077
      %v5092 = vpop.f32.mrf.mxu0
      %v5093 = vadd.f32 0.0, %v5092
      %v5094 = vpop.f32.mrf.mxu0
      %v5095 = vadd.f32 0.0, %v5094
      %5096 = vmatmul.bf16.gmra.mxu0 %v4080
      %v5097 = vpop.f32.mrf.mxu0
      %v5098 = vadd.f32 0.0, %v5097
      %v5099 = vpop.f32.mrf.mxu0
      %v5100 = vadd.f32 0.0, %v5099
      %5101 = vmatmul.bf16.gmra.mxu0 %v4082
      %v5102 = vpop.f32.mrf.mxu0
      %v5103 = vadd.f32 0.0, %v5102
      %v5104 = vpop.f32.mrf.mxu0
      %v5105 = vadd.f32 0.0, %v5104
      %5106 = vmatmul.bf16.gmra.mxu0 %v4085
      %v5107 = vpop.f32.mrf.mxu0
      %v5108 = vadd.f32 0.0, %v5107
      %v5109 = vpop.f32.mrf.mxu0
      %v5110 = vadd.f32 0.0, %v5109
      %5111 = vmatmul.bf16.gmra.mxu0 %v4088
      %v5112 = vpop.f32.mrf.mxu0
      %v5113 = vadd.f32 0.0, %v5112
      %v5114 = vpop.f32.mrf.mxu0
      %v5115 = vadd.f32 0.0, %v5114
      %5116 = vmatmul.bf16.gmra.mxu0 %v4090
      %v5117 = vpop.f32.mrf.mxu0
      %v5118 = vadd.f32 0.0, %v5117
      %v5119 = vpop.f32.mrf.mxu0
      %v5120 = vadd.f32 0.0, %v5119
      %5121 = vmatmul.bf16.gmra.mxu0 %v4093
      %v5122 = vpop.f32.mrf.mxu0
      %v5123 = vadd.f32 0.0, %v5122
      %v5124 = vpop.f32.mrf.mxu0
      %v5125 = vadd.f32 0.0, %v5124
      %5126 = vmatmul.bf16.gmra.mxu0 %v4096
      %v5127 = vpop.f32.mrf.mxu0
      %v5128 = vadd.f32 0.0, %v5127
      %v5129 = vpop.f32.mrf.mxu0
      %v5130 = vadd.f32 0.0, %v5129
      %5131 = vmatmul.bf16.gmra.mxu0 %v4098
      %v5132 = vpop.f32.mrf.mxu0
      %v5133 = vadd.f32 0.0, %v5132
      %v5134 = vpop.f32.mrf.mxu0
      %v5135 = vadd.f32 0.0, %v5134
      %5136 = vmatmul.bf16.gmra.mxu0 %v4101
      %v5137 = vpop.f32.mrf.mxu0
      %v5138 = vadd.f32 0.0, %v5137
      %v5139 = vpop.f32.mrf.mxu0
      %v5140 = vadd.f32 0.0, %v5139
      %5141 = vmatmul.bf16.gmra.mxu0 %v4104
      %v5142 = vpop.f32.mrf.mxu0
      %v5143 = vadd.f32 0.0, %v5142
      %v5144 = vpop.f32.mrf.mxu0
      %v5145 = vadd.f32 0.0, %v5144
      %5146 = vmatmul.bf16.gmra.mxu0 %v4106
      %v5147 = vpop.f32.mrf.mxu0
      %v5148 = vadd.f32 0.0, %v5147
      %v5149 = vpop.f32.mrf.mxu0
      %v5150 = vadd.f32 0.0, %v5149
      %5151 = vmatmul.bf16.gmra.mxu0 %v4109
      %v5152 = vpop.f32.mrf.mxu0
      %v5153 = vadd.f32 0.0, %v5152
      %v5154 = vpop.f32.mrf.mxu0
      %v5155 = vadd.f32 0.0, %v5154
      %5156 = vmatmul.bf16.gmra.mxu0 %v4112
      %v5157 = vpop.f32.mrf.mxu0
      %v5158 = vadd.f32 0.0, %v5157
      %v5159 = vpop.f32.mrf.mxu0
      %v5160 = vadd.f32 0.0, %v5159
      %5161 = vmatmul.bf16.gmra.mxu0 %v4114
      %v5162 = vpop.f32.mrf.mxu0
      %v5163 = vadd.f32 0.0, %v5162
      %v5164 = vpop.f32.mrf.mxu0
      %v5165 = vadd.f32 0.0, %v5164
      %5166 = vmatmul.bf16.gmra.mxu0 %v4117
      %v5167 = vpop.f32.mrf.mxu0
      %v5168 = vadd.f32 0.0, %v5167
      %v5169 = vpop.f32.mrf.mxu0
      %v5170 = vadd.f32 0.0, %v5169
      %5171 = vmatmul.bf16.gmra.mxu0 %v4120
      %v5172 = vpop.f32.mrf.mxu0
      %v5173 = vadd.f32 0.0, %v5172
      %v5174 = vpop.f32.mrf.mxu0
      %v5175 = vadd.f32 0.0, %v5174
      %5176 = vmatmul.bf16.gmra.mxu0 %v4122
      %v5177 = vpop.f32.mrf.mxu0
      %v5178 = vadd.f32 0.0, %v5177
      %v5179 = vpop.f32.mrf.mxu0
      %v5180 = vadd.f32 0.0, %v5179
      %5181 = vmatmul.bf16.gmra.mxu0 %v4125
      %v5182 = vpop.f32.mrf.mxu0
      %v5183 = vadd.f32 0.0, %v5182
      %v5184 = vpop.f32.mrf.mxu0
      %v5185 = vadd.f32 0.0, %v5184
      %5186 = vmatmul.bf16.gmra.mxu0 %v4128
      %v5187 = vpop.f32.mrf.mxu0
      %v5188 = vadd.f32 0.0, %v5187
      %v5189 = vpop.f32.mrf.mxu0
      %v5190 = vadd.f32 0.0, %v5189
      %5191 = vmatmul.bf16.gmra.mxu0 %v4130
      %v5192 = vpop.f32.mrf.mxu0
      %v5193 = vadd.f32 0.0, %v5192
      %v5194 = vpop.f32.mrf.mxu0
      %v5195 = vadd.f32 0.0, %v5194
      %5196 = vmatmul.bf16.gmra.mxu0 %v4133
      %v5197 = vpop.f32.mrf.mxu0
      %v5198 = vadd.f32 0.0, %v5197
      %v5199 = vpop.f32.mrf.mxu0
      %v5200 = vadd.f32 0.0, %v5199
      %5201 = vmatmul.bf16.gmra.mxu0 %v4136
      %v5202 = vpop.f32.mrf.mxu0
      %v5203 = vadd.f32 0.0, %v5202
      %v5204 = vpop.f32.mrf.mxu0
      %v5205 = vadd.f32 0.0, %v5204
      %5206 = vmatmul.bf16.gmra.mxu0 %v4138
      %v5207 = vpop.f32.mrf.mxu0
      %v5208 = vadd.f32 0.0, %v5207
      %v5209 = vpop.f32.mrf.mxu0
      %v5210 = vadd.f32 0.0, %v5209
      %5211 = vmatmul.bf16.gmra.mxu0 %v4141
      %v5212 = vpop.f32.mrf.mxu0
      %v5213 = vadd.f32 0.0, %v5212
      %v5214 = vpop.f32.mrf.mxu0
      %v5215 = vadd.f32 0.0, %v5214
      %5216 = vmatmul.bf16.gmra.mxu0 %v4912
      %v5217 = vpop.f32.mrf.mxu0
      %v5218 = vadd.f32 0.0, %v5217
      %v5219 = vpop.f32.mrf.mxu0
      %v5220 = vadd.f32 0.0, %v5219
      %5221 = vmatmul.bf16.gmra.mxu0 %v4914
      %v5222 = vpop.f32.mrf.mxu0
      %v5223 = vadd.f32 0.0, %v5222
      %v5224 = vpop.f32.mrf.mxu0
      %v5225 = vadd.f32 0.0, %v5224
      %5226 = vmatmul.bf16.gmra.mxu0 %v4917
      %v5227 = vpop.f32.mrf.mxu0
      %v5228 = vadd.f32 0.0, %v5227
      %v5229 = vpop.f32.mrf.mxu0
      %v5230 = vadd.f32 0.0, %v5229
      %5231 = vdwg.mxu0
      %5232 = vmatpush.bf16.msra.mxu0 %v5040
      %5233 = vmatpush.bf16.msra.mxu0 %v5039
      %5234 = vmatpush.bf16.msra.mxu0 %v5038
      %5235 = vmatpush.bf16.msra.mxu0 %v5037
      %5236 = vmatpush.bf16.msra.mxu0 %v5036
      %5237 = vmatpush.bf16.msra.mxu0 %v5035
      %5238 = vmatpush.bf16.msra.mxu0 %v5034
      %5239 = vmatpush.bf16.msra.mxu0 %v5033
      %5240 = vmatmul.bf16.gmra.mxu0 %v2387
      %v5241 = vpop.f32.mrf.mxu0
      %v5242 = vadd.f32 %v5083, %v5241
      %v5243 = vpop.f32.mrf.mxu0
      %v5244 = vadd.f32 %v5085, %v5243
      %5245 = vmatmul.bf16.gmra.mxu0 %v4075
      %v5246 = vpop.f32.mrf.mxu0
      %v5247 = vadd.f32 %v5088, %v5246
      %v5248 = vpop.f32.mrf.mxu0
      %v5249 = vadd.f32 %v5090, %v5248
      %5250 = vmatmul.bf16.gmra.mxu0 %v4078
      %v5251 = vpop.f32.mrf.mxu0
      %v5252 = vadd.f32 %v5093, %v5251
      %v5253 = vpop.f32.mrf.mxu0
      %v5254 = vadd.f32 %v5095, %v5253
      %5255 = vmatmul.bf16.gmra.mxu0 %v2389
      %v5256 = vpop.f32.mrf.mxu0
      %v5257 = vadd.f32 %v5098, %v5256
      %v5258 = vpop.f32.mrf.mxu0
      %v5259 = vadd.f32 %v5100, %v5258
      %5260 = vmatmul.bf16.gmra.mxu0 %v4083
      %v5261 = vpop.f32.mrf.mxu0
      %v5262 = vadd.f32 %v5103, %v5261
      %v5263 = vpop.f32.mrf.mxu0
      %v5264 = vadd.f32 %v5105, %v5263
      %5265 = vmatmul.bf16.gmra.mxu0 %v4086
      %v5266 = vpop.f32.mrf.mxu0
      %v5267 = vadd.f32 %v5108, %v5266
      %v5268 = vpop.f32.mrf.mxu0
      %v5269 = vadd.f32 %v5110, %v5268
      %5270 = vmatmul.bf16.gmra.mxu0 %v2391
      %v5271 = vpop.f32.mrf.mxu0
      %v5272 = vadd.f32 %v5113, %v5271
      %v5273 = vpop.f32.mrf.mxu0
      %v5274 = vadd.f32 %v5115, %v5273
      %5275 = vmatmul.bf16.gmra.mxu0 %v4091
      %v5276 = vpop.f32.mrf.mxu0
      %v5277 = vadd.f32 %v5118, %v5276
      %v5278 = vpop.f32.mrf.mxu0
      %v5279 = vadd.f32 %v5120, %v5278
      %5280 = vmatmul.bf16.gmra.mxu0 %v4094
      %v5281 = vpop.f32.mrf.mxu0
      %v5282 = vadd.f32 %v5123, %v5281
      %v5283 = vpop.f32.mrf.mxu0
      %v5284 = vadd.f32 %v5125, %v5283
      %5285 = vmatmul.bf16.gmra.mxu0 %v2393
      %v5286 = vpop.f32.mrf.mxu0
      %v5287 = vadd.f32 %v5128, %v5286
      %v5288 = vpop.f32.mrf.mxu0
      %v5289 = vadd.f32 %v5130, %v5288
      %5290 = vmatmul.bf16.gmra.mxu0 %v4099
      %v5291 = vpop.f32.mrf.mxu0
      %v5292 = vadd.f32 %v5133, %v5291
      %v5293 = vpop.f32.mrf.mxu0
      %v5294 = vadd.f32 %v5135, %v5293
      %5295 = vmatmul.bf16.gmra.mxu0 %v4102
      %v5296 = vpop.f32.mrf.mxu0
      %v5297 = vadd.f32 %v5138, %v5296
      %v5298 = vpop.f32.mrf.mxu0
      %v5299 = vadd.f32 %v5140, %v5298
      %5300 = vmatmul.bf16.gmra.mxu0 %v2395
      %v5301 = vpop.f32.mrf.mxu0
      %v5302 = vadd.f32 %v5143, %v5301
      %v5303 = vpop.f32.mrf.mxu0
      %v5304 = vadd.f32 %v5145, %v5303
      %5305 = vmatmul.bf16.gmra.mxu0 %v4107
      %v5306 = vpop.f32.mrf.mxu0
      %v5307 = vadd.f32 %v5148, %v5306
      %v5308 = vpop.f32.mrf.mxu0
      %v5309 = vadd.f32 %v5150, %v5308
      %5310 = vmatmul.bf16.gmra.mxu0 %v4110
      %v5311 = vpop.f32.mrf.mxu0
      %v5312 = vadd.f32 %v5153, %v5311
      %v5313 = vpop.f32.mrf.mxu0
      %v5314 = vadd.f32 %v5155, %v5313
      %5315 = vmatmul.bf16.gmra.mxu0 %v2397
      %v5316 = vpop.f32.mrf.mxu0
      %v5317 = vadd.f32 %v5158, %v5316
      %v5318 = vpop.f32.mrf.mxu0
      %v5319 = vadd.f32 %v5160, %v5318
      %5320 = vmatmul.bf16.gmra.mxu0 %v4115
      %v5321 = vpop.f32.mrf.mxu0
      %v5322 = vadd.f32 %v5163, %v5321
      %v5323 = vpop.f32.mrf.mxu0
      %v5324 = vadd.f32 %v5165, %v5323
      %5325 = vmatmul.bf16.gmra.mxu0 %v4118
      %v5326 = vpop.f32.mrf.mxu0
      %v5327 = vadd.f32 %v5168, %v5326
      %v5328 = vpop.f32.mrf.mxu0
      %v5329 = vadd.f32 %v5170, %v5328
      %5330 = vmatmul.bf16.gmra.mxu0 %v2399
      %v5331 = vpop.f32.mrf.mxu0
      %v5332 = vadd.f32 %v5173, %v5331
      %v5333 = vpop.f32.mrf.mxu0
      %v5334 = vadd.f32 %v5175, %v5333
      %5335 = vmatmul.bf16.gmra.mxu0 %v4123
      %v5336 = vpop.f32.mrf.mxu0
      %v5337 = vadd.f32 %v5178, %v5336
      %v5338 = vpop.f32.mrf.mxu0
      %v5339 = vadd.f32 %v5180, %v5338
      %5340 = vmatmul.bf16.gmra.mxu0 %v4126
      %v5341 = vpop.f32.mrf.mxu0
      %v5342 = vadd.f32 %v5183, %v5341
      %v5343 = vpop.f32.mrf.mxu0
      %v5344 = vadd.f32 %v5185, %v5343
      %5345 = vmatmul.bf16.gmra.mxu0 %v2401
      %v5346 = vpop.f32.mrf.mxu0
      %v5347 = vadd.f32 %v5188, %v5346
      %v5348 = vpop.f32.mrf.mxu0
      %v5349 = vadd.f32 %v5190, %v5348
      %5350 = vmatmul.bf16.gmra.mxu0 %v4131
      %v5351 = vpop.f32.mrf.mxu0
      %v5352 = vadd.f32 %v5193, %v5351
      %v5353 = vpop.f32.mrf.mxu0
      %v5354 = vadd.f32 %v5195, %v5353
      %5355 = vmatmul.bf16.gmra.mxu0 %v4134
      %v5356 = vpop.f32.mrf.mxu0
      %v5357 = vadd.f32 %v5198, %v5356
      %v5358 = vpop.f32.mrf.mxu0
      %v5359 = vadd.f32 %v5200, %v5358
      %5360 = vmatmul.bf16.gmra.mxu0 %v2403
      %v5361 = vpop.f32.mrf.mxu0
      %v5362 = vadd.f32 %v5203, %v5361
      %v5363 = vpop.f32.mrf.mxu0
      %v5364 = vadd.f32 %v5205, %v5363
      %5365 = vmatmul.bf16.gmra.mxu0 %v4139
      %v5366 = vpop.f32.mrf.mxu0
      %v5367 = vadd.f32 %v5208, %v5366
      %v5368 = vpop.f32.mrf.mxu0
      %v5369 = vadd.f32 %v5210, %v5368
      %5370 = vmatmul.bf16.gmra.mxu0 %v4142
      %v5371 = vpop.f32.mrf.mxu0
      %v5372 = vadd.f32 %v5213, %v5371
      %v5373 = vpop.f32.mrf.mxu0
      %v5374 = vadd.f32 %v5215, %v5373
      %5375 = vmatmul.bf16.gmra.mxu0 %v2405
      %v5376 = vpop.f32.mrf.mxu0
      %v5377 = vadd.f32 %v5218, %v5376
      %v5378 = vpop.f32.mrf.mxu0
      %v5379 = vadd.f32 %v5220, %v5378
      %5380 = vmatmul.bf16.gmra.mxu0 %v4915
      %v5381 = vpop.f32.mrf.mxu0
      %v5382 = vadd.f32 %v5223, %v5381
      %v5383 = vpop.f32.mrf.mxu0
      %v5384 = vadd.f32 %v5225, %v5383
      %5385 = vmatmul.bf16.gmra.mxu0 %v4918
      %v5386 = vpop.f32.mrf.mxu0
      %v5387 = vadd.f32 %v5228, %v5386
      %v5388 = vpop.f32.mrf.mxu0
      %v5389 = vadd.f32 %v5230, %v5388
      %5390 = vdwg.mxu0
      %5391 = vmatpush.bf16.msra.mxu0 %v5048
      %5392 = vmatpush.bf16.msra.mxu0 %v5047
      %5393 = vmatpush.bf16.msra.mxu0 %v5046
      %5394 = vmatpush.bf16.msra.mxu0 %v5045
      %5395 = vmatpush.bf16.msra.mxu0 %v5044
      %5396 = vmatpush.bf16.msra.mxu0 %v5043
      %5397 = vmatpush.bf16.msra.mxu0 %v5042
      %5398 = vmatpush.bf16.msra.mxu0 %v5041
      %5399 = vmatmul.bf16.gmra.mxu0 %v4073
      %v5400 = vpop.f32.mrf.mxu0
      %v5401 = vadd.f32 %v5242, %v5400
      %v5402 = vpop.f32.mrf.mxu0
      %v5403 = vadd.f32 %v5244, %v5402
      %5404 = vmatmul.bf16.gmra.mxu0 %v4076
      %v5405 = vpop.f32.mrf.mxu0
      %v5406 = vadd.f32 %v5247, %v5405
      %v5407 = vpop.f32.mrf.mxu0
      %v5408 = vadd.f32 %v5249, %v5407
      %5409 = vmatmul.bf16.gmra.mxu0 %v4079
      %v5410 = vpop.f32.mrf.mxu0
      %v5411 = vadd.f32 %v5252, %v5410
      %v5412 = vpop.f32.mrf.mxu0
      %v5413 = vadd.f32 %v5254, %v5412
      %5414 = vmatmul.bf16.gmra.mxu0 %v4081
      %v5415 = vpop.f32.mrf.mxu0
      %v5416 = vadd.f32 %v5257, %v5415
      %v5417 = vpop.f32.mrf.mxu0
      %v5418 = vadd.f32 %v5259, %v5417
      %5419 = vmatmul.bf16.gmra.mxu0 %v4084
      %v5420 = vpop.f32.mrf.mxu0
      %v5421 = vadd.f32 %v5262, %v5420
      %v5422 = vpop.f32.mrf.mxu0
      %v5423 = vadd.f32 %v5264, %v5422
      %5424 = vmatmul.bf16.gmra.mxu0 %v4087
      %v5425 = vpop.f32.mrf.mxu0
      %v5426 = vadd.f32 %v5267, %v5425
      %v5427 = vpop.f32.mrf.mxu0
      %v5428 = vadd.f32 %v5269, %v5427
      %5429 = vmatmul.bf16.gmra.mxu0 %v4089
      %v5430 = vpop.f32.mrf.mxu0
      %v5431 = vadd.f32 %v5272, %v5430
      %v5432 = vpop.f32.mrf.mxu0
      %v5433 = vadd.f32 %v5274, %v5432
      %5434 = vmatmul.bf16.gmra.mxu0 %v4092
      %v5435 = vpop.f32.mrf.mxu0
      %v5436 = vadd.f32 %v5277, %v5435
      %v5437 = vpop.f32.mrf.mxu0
      %v5438 = vadd.f32 %v5279, %v5437
      %5439 = vmatmul.bf16.gmra.mxu0 %v4095
      %v5440 = vpop.f32.mrf.mxu0
      %v5441 = vadd.f32 %v5282, %v5440
      %v5442 = vpop.f32.mrf.mxu0
      %v5443 = vadd.f32 %v5284, %v5442
      %5444 = vmatmul.bf16.gmra.mxu0 %v4097
      %v5445 = vpop.f32.mrf.mxu0
      %v5446 = vadd.f32 %v5287, %v5445
      %v5447 = vpop.f32.mrf.mxu0
      %v5448 = vadd.f32 %v5289, %v5447
      %5449 = vmatmul.bf16.gmra.mxu0 %v4100
      %v5450 = vpop.f32.mrf.mxu0
      %v5451 = vadd.f32 %v5292, %v5450
      %v5452 = vpop.f32.mrf.mxu0
      %v5453 = vadd.f32 %v5294, %v5452
      %5454 = vmatmul.bf16.gmra.mxu0 %v4103
      %v5455 = vpop.f32.mrf.mxu0
      %v5456 = vadd.f32 %v5297, %v5455
      %v5457 = vpop.f32.mrf.mxu0
      %v5458 = vadd.f32 %v5299, %v5457
      %5459 = vmatmul.bf16.gmra.mxu0 %v4105
      %v5460 = vpop.f32.mrf.mxu0
      %v5461 = vadd.f32 %v5302, %v5460
      %v5462 = vpop.f32.mrf.mxu0
      %v5463 = vadd.f32 %v5304, %v5462
      %5464 = vmatmul.bf16.gmra.mxu0 %v4108
      %v5465 = vpop.f32.mrf.mxu0
      %v5466 = vadd.f32 %v5307, %v5465
      %v5467 = vpop.f32.mrf.mxu0
      %v5468 = vadd.f32 %v5309, %v5467
      %5469 = vmatmul.bf16.gmra.mxu0 %v4111
      %v5470 = vpop.f32.mrf.mxu0
      %v5471 = vadd.f32 %v5312, %v5470
      %v5472 = vpop.f32.mrf.mxu0
      %v5473 = vadd.f32 %v5314, %v5472
      %5474 = vmatmul.bf16.gmra.mxu0 %v4113
      %v5475 = vpop.f32.mrf.mxu0
      %v5476 = vadd.f32 %v5317, %v5475
      %v5477 = vpop.f32.mrf.mxu0
      %v5478 = vadd.f32 %v5319, %v5477
      %5479 = vmatmul.bf16.gmra.mxu0 %v4116
      %v5480 = vpop.f32.mrf.mxu0
      %v5481 = vadd.f32 %v5322, %v5480
      %v5482 = vpop.f32.mrf.mxu0
      %v5483 = vadd.f32 %v5324, %v5482
      %5484 = vmatmul.bf16.gmra.mxu0 %v4119
      %v5485 = vpop.f32.mrf.mxu0
      %v5486 = vadd.f32 %v5327, %v5485
      %v5487 = vpop.f32.mrf.mxu0
      %v5488 = vadd.f32 %v5329, %v5487
      %5489 = vmatmul.bf16.gmra.mxu0 %v4121
      %v5490 = vpop.f32.mrf.mxu0
      %v5491 = vadd.f32 %v5332, %v5490
      %v5492 = vpop.f32.mrf.mxu0
      %v5493 = vadd.f32 %v5334, %v5492
      %5494 = vmatmul.bf16.gmra.mxu0 %v4124
      %v5495 = vpop.f32.mrf.mxu0
      %v5496 = vadd.f32 %v5337, %v5495
      %v5497 = vpop.f32.mrf.mxu0
      %v5498 = vadd.f32 %v5339, %v5497
      %5499 = vmatmul.bf16.gmra.mxu0 %v4127
      %v5500 = vpop.f32.mrf.mxu0
      %v5501 = vadd.f32 %v5342, %v5500
      %v5502 = vpop.f32.mrf.mxu0
      %v5503 = vadd.f32 %v5344, %v5502
      %5504 = vmatmul.bf16.gmra.mxu0 %v4129
      %v5505 = vpop.f32.mrf.mxu0
      %v5506 = vadd.f32 %v5347, %v5505
      %v5507 = vpop.f32.mrf.mxu0
      %v5508 = vadd.f32 %v5349, %v5507
      %5509 = vmatmul.bf16.gmra.mxu0 %v4132
      %v5510 = vpop.f32.mrf.mxu0
      %v5511 = vadd.f32 %v5352, %v5510
      %v5512 = vpop.f32.mrf.mxu0
      %v5513 = vadd.f32 %v5354, %v5512
      %5514 = vmatmul.bf16.gmra.mxu0 %v4135
      %v5515 = vpop.f32.mrf.mxu0
      %v5516 = vadd.f32 %v5357, %v5515
      %v5517 = vpop.f32.mrf.mxu0
      %v5518 = vadd.f32 %v5359, %v5517
      %5519 = vmatmul.bf16.gmra.mxu0 %v4137
      %v5520 = vpop.f32.mrf.mxu0
      %v5521 = vadd.f32 %v5362, %v5520
      %v5522 = vpop.f32.mrf.mxu0
      %v5523 = vadd.f32 %v5364, %v5522
      %5524 = vmatmul.bf16.gmra.mxu0 %v4140
      %v5525 = vpop.f32.mrf.mxu0
      %v5526 = vadd.f32 %v5367, %v5525
      %v5527 = vpop.f32.mrf.mxu0
      %v5528 = vadd.f32 %v5369, %v5527
      %5529 = vmatmul.bf16.gmra.mxu0 %v4143
      %v5530 = vpop.f32.mrf.mxu0
      %v5531 = vadd.f32 %v5372, %v5530
      %v5532 = vpop.f32.mrf.mxu0
      %v5533 = vadd.f32 %v5374, %v5532
      %5534 = vmatmul.bf16.gmra.mxu0 %v4913
      %v5535 = vpop.f32.mrf.mxu0
      %v5536 = vadd.f32 %v5377, %v5535
      %v5537 = vpop.f32.mrf.mxu0
      %v5538 = vadd.f32 %v5379, %v5537
      %5539 = vmatmul.bf16.gmra.mxu0 %v4916
      %v5540 = vpop.f32.mrf.mxu0
      %v5541 = vadd.f32 %v5382, %v5540
      %v5542 = vpop.f32.mrf.mxu0
      %v5543 = vadd.f32 %v5384, %v5542
      %5544 = vmatmul.bf16.gmra.mxu0 %v4919
      %v5545 = vpop.f32.mrf.mxu0
      %v5546 = vadd.f32 %v5387, %v5545
      %v5547 = vpop.f32.mrf.mxu0
      %v5548 = vadd.f32 %v5389, %v5547
      %5549 = vdwg.mxu0
      %v5550 = vadd.f32 %v4706, %v5401
      %v5551 = vadd.f32 %v4708, %v5403
      %v5552 = vadd.f32 %v4711, %v5406
      %v5553 = vadd.f32 %v4713, %v5408
      %v5554 = vadd.f32 %v4716, %v5411
      %v5555 = vadd.f32 %v4718, %v5413
      %v5556 = vadd.f32 %v4721, %v5416
      %v5557 = vadd.f32 %v4723, %v5418
      %v5558 = vadd.f32 %v4726, %v5421
      %v5559 = vadd.f32 %v4728, %v5423
      %v5560 = vadd.f32 %v4731, %v5426
      %v5561 = vadd.f32 %v4733, %v5428
      %v5562 = vadd.f32 %v4736, %v5431
      %v5563 = vadd.f32 %v4738, %v5433
      %v5564 = vadd.f32 %v4741, %v5436
      %v5565 = vadd.f32 %v4743, %v5438
      %v5566 = vadd.f32 %v4746, %v5441
      %v5567 = vadd.f32 %v4748, %v5443
      %v5568 = vadd.f32 %v4751, %v5446
      %v5569 = vadd.f32 %v4753, %v5448
      %v5570 = vadd.f32 %v4756, %v5451
      %v5571 = vadd.f32 %v4758, %v5453
      %v5572 = vadd.f32 %v4761, %v5456
      %v5573 = vadd.f32 %v4763, %v5458
      %v5574 = vadd.f32 %v4766, %v5461
      %v5575 = vadd.f32 %v4768, %v5463
      %v5576 = vadd.f32 %v4771, %v5466
      %v5577 = vadd.f32 %v4773, %v5468
      %v5578 = vadd.f32 %v4776, %v5471
      %v5579 = vadd.f32 %v4778, %v5473
      %v5580 = vadd.f32 %v4781, %v5476
      %v5581 = vadd.f32 %v4783, %v5478
      %v5582 = vadd.f32 %v4786, %v5481
      %v5583 = vadd.f32 %v4788, %v5483
      %v5584 = vadd.f32 %v4791, %v5486
      %v5585 = vadd.f32 %v4793, %v5488
      %v5586 = vadd.f32 %v4796, %v5491
      %v5587 = vadd.f32 %v4798, %v5493
      %v5588 = vadd.f32 %v4801, %v5496
      %v5589 = vadd.f32 %v4803, %v5498
      %v5590 = vadd.f32 %v4806, %v5501
      %v5591 = vadd.f32 %v4808, %v5503
      %v5592 = vadd.f32 %v4811, %v5506
      %v5593 = vadd.f32 %v4813, %v5508
      %v5594 = vadd.f32 %v4816, %v5511
      %v5595 = vadd.f32 %v4818, %v5513
      %v5596 = vadd.f32 %v4821, %v5516
      %v5597 = vadd.f32 %v4823, %v5518
      %v5598 = vadd.f32 %v4826, %v5521
      %v5599 = vadd.f32 %v4828, %v5523
      %v5600 = vadd.f32 %v4831, %v5526
      %v5601 = vadd.f32 %v4833, %v5528
      %v5602 = vadd.f32 %v4836, %v5531
      %v5603 = vadd.f32 %v4838, %v5533
      %v5604 = vadd.f32 %v4841, %v5536
      %v5605 = vadd.f32 %v4843, %v5538
      %v5606 = vadd.f32 %v4846, %v5541
      %v5607 = vadd.f32 %v4848, %v5543
      %v5608 = vadd.f32 %v4851, %v5546
      %v5609 = vadd.f32 %v4853, %v5548
      %v5610 = vld [vmem:[%s4] sm:$0x1]
      %v5612 = vperm.slane %v5610, 0
      %v5614 = vadd.f32 %v5550, %v5612
      %v5615 = vadd.f32 %v5551, %v5612
      %v5616 = vadd.f32 %v5552, %v5612
      %v5617 = vadd.f32 %v5553, %v5612
      %v5618 = vadd.f32 %v5554, %v5612
      %v5619 = vadd.f32 %v5555, %v5612
      %v5620 = vadd.f32 %v5556, %v5612
      %v5621 = vadd.f32 %v5557, %v5612
      %v5622 = vadd.f32 %v5558, %v5612
      %v5623 = vadd.f32 %v5559, %v5612
      %v5624 = vadd.f32 %v5560, %v5612
      %v5625 = vadd.f32 %v5561, %v5612
      %v5626 = vadd.f32 %v5562, %v5612
      %v5627 = vadd.f32 %v5563, %v5612
      %v5628 = vadd.f32 %v5564, %v5612
      %v5629 = vadd.f32 %v5565, %v5612
      %v5630 = vadd.f32 %v5566, %v5612
      %v5631 = vadd.f32 %v5567, %v5612
      %v5632 = vadd.f32 %v5568, %v5612
      %v5633 = vadd.f32 %v5569, %v5612
      %v5634 = vadd.f32 %v5570, %v5612
      %v5635 = vadd.f32 %v5571, %v5612
      %v5636 = vadd.f32 %v5572, %v5612
      %v5637 = vadd.f32 %v5573, %v5612
      %v5638 = vadd.f32 %v5574, %v5612
      %v5639 = vadd.f32 %v5575, %v5612
      %v5640 = vadd.f32 %v5576, %v5612
      %v5641 = vadd.f32 %v5577, %v5612
      %v5642 = vadd.f32 %v5578, %v5612
      %v5643 = vadd.f32 %v5579, %v5612
      %v5644 = vadd.f32 %v5580, %v5612
      %v5645 = vadd.f32 %v5581, %v5612
      %v5646 = vadd.f32 %v5582, %v5612
      %v5647 = vadd.f32 %v5583, %v5612
      %v5648 = vadd.f32 %v5584, %v5612
      %v5649 = vadd.f32 %v5585, %v5612
      %v5650 = vadd.f32 %v5586, %v5612
      %v5651 = vadd.f32 %v5587, %v5612
      %v5652 = vadd.f32 %v5588, %v5612
      %v5653 = vadd.f32 %v5589, %v5612
      %v5654 = vadd.f32 %v5590, %v5612
      %v5655 = vadd.f32 %v5591, %v5612
      %v5656 = vadd.f32 %v5592, %v5612
      %v5657 = vadd.f32 %v5593, %v5612
      %v5658 = vadd.f32 %v5594, %v5612
      %v5659 = vadd.f32 %v5595, %v5612
      %v5660 = vadd.f32 %v5596, %v5612
      %v5661 = vadd.f32 %v5597, %v5612
      %v5662 = vadd.f32 %v5598, %v5612
      %v5663 = vadd.f32 %v5599, %v5612
      %v5664 = vadd.f32 %v5600, %v5612
      %v5665 = vadd.f32 %v5601, %v5612
      %v5666 = vadd.f32 %v5602, %v5612
      %v5667 = vadd.f32 %v5603, %v5612
      %v5668 = vadd.f32 %v5604, %v5612
      %v5669 = vadd.f32 %v5605, %v5612
      %v5670 = vadd.f32 %v5606, %v5612
      %v5671 = vadd.f32 %v5607, %v5612
      %v5672 = vadd.f32 %v5608, %v5612
      %v5673 = vadd.f32 %v5609, %v5612
      %vm5674 = vcmp.ge.f32.partialorder %v5614, 0.0
      %vm5675 = vcmp.ge.f32.partialorder %v5615, 0.0
      %vm5676 = vcmp.ge.f32.partialorder %v5616, 0.0
      %vm5677 = vcmp.ge.f32.partialorder %v5617, 0.0
      %vm5678 = vcmp.ge.f32.partialorder %v5618, 0.0
      %vm5679 = vcmp.ge.f32.partialorder %v5619, 0.0
      %vm5680 = vcmp.ge.f32.partialorder %v5620, 0.0
      %vm5681 = vcmp.ge.f32.partialorder %v5621, 0.0
      %vm5682 = vcmp.ge.f32.partialorder %v5622, 0.0
      %vm5683 = vcmp.ge.f32.partialorder %v5623, 0.0
      %vm5684 = vcmp.ge.f32.partialorder %v5624, 0.0
      %vm5685 = vcmp.ge.f32.partialorder %v5625, 0.0
      %vm5686 = vcmp.ge.f32.partialorder %v5626, 0.0
      %vm5687 = vcmp.ge.f32.partialorder %v5627, 0.0
      %vm5688 = vcmp.ge.f32.partialorder %v5628, 0.0
      %vm5689 = vcmp.ge.f32.partialorder %v5629, 0.0
      %vm5690 = vcmp.ge.f32.partialorder %v5630, 0.0
      %vm5691 = vcmp.ge.f32.partialorder %v5631, 0.0
      %vm5692 = vcmp.ge.f32.partialorder %v5632, 0.0
      %vm5693 = vcmp.ge.f32.partialorder %v5633, 0.0
      %vm5694 = vcmp.ge.f32.partialorder %v5634, 0.0
      %vm5695 = vcmp.ge.f32.partialorder %v5635, 0.0
      %vm5696 = vcmp.ge.f32.partialorder %v5636, 0.0
      %vm5697 = vcmp.ge.f32.partialorder %v5637, 0.0
      %vm5698 = vcmp.ge.f32.partialorder %v5638, 0.0
      %vm5699 = vcmp.ge.f32.partialorder %v5639, 0.0
      %vm5700 = vcmp.ge.f32.partialorder %v5640, 0.0
      %vm5701 = vcmp.ge.f32.partialorder %v5641, 0.0
      %vm5702 = vcmp.ge.f32.partialorder %v5642, 0.0
      %vm5703 = vcmp.ge.f32.partialorder %v5643, 0.0
      %vm5704 = vcmp.ge.f32.partialorder %v5644, 0.0
      %vm5705 = vcmp.ge.f32.partialorder %v5645, 0.0
      %vm5706 = vcmp.ge.f32.partialorder %v5646, 0.0
      %vm5707 = vcmp.ge.f32.partialorder %v5647, 0.0
      %vm5708 = vcmp.ge.f32.partialorder %v5648, 0.0
      %vm5709 = vcmp.ge.f32.partialorder %v5649, 0.0
      %vm5710 = vcmp.ge.f32.partialorder %v5650, 0.0
      %vm5711 = vcmp.ge.f32.partialorder %v5651, 0.0
      %vm5712 = vcmp.ge.f32.partialorder %v5652, 0.0
      %vm5713 = vcmp.ge.f32.partialorder %v5653, 0.0
      %vm5714 = vcmp.ge.f32.partialorder %v5654, 0.0
      %vm5715 = vcmp.ge.f32.partialorder %v5655, 0.0
      %vm5716 = vcmp.ge.f32.partialorder %v5656, 0.0
      %vm5717 = vcmp.ge.f32.partialorder %v5657, 0.0
      %vm5718 = vcmp.ge.f32.partialorder %v5658, 0.0
      %vm5719 = vcmp.ge.f32.partialorder %v5659, 0.0
      %vm5720 = vcmp.ge.f32.partialorder %v5660, 0.0
      %vm5721 = vcmp.ge.f32.partialorder %v5661, 0.0
      %vm5722 = vcmp.ge.f32.partialorder %v5662, 0.0
      %vm5723 = vcmp.ge.f32.partialorder %v5663, 0.0
      %vm5724 = vcmp.ge.f32.partialorder %v5664, 0.0
      %vm5725 = vcmp.ge.f32.partialorder %v5665, 0.0
      %vm5726 = vcmp.ge.f32.partialorder %v5666, 0.0
      %vm5727 = vcmp.ge.f32.partialorder %v5667, 0.0
      %vm5728 = vcmp.ge.f32.partialorder %v5668, 0.0
      %vm5729 = vcmp.ge.f32.partialorder %v5669, 0.0
      %vm5730 = vcmp.ge.f32.partialorder %v5670, 0.0
      %vm5731 = vcmp.ge.f32.partialorder %v5671, 0.0
      %vm5732 = vcmp.ge.f32.partialorder %v5672, 0.0
      %vm5733 = vcmp.ge.f32.partialorder %v5673, 0.0
      %v5734 = vmul.f32 %v5614, 0.2
      %v5735 = vmul.f32 %v5615, 0.2
      %v5736 = vmul.f32 %v5616, 0.2
      %v5737 = vmul.f32 %v5617, 0.2
      %v5738 = vmul.f32 %v5618, 0.2
      %v5739 = vmul.f32 %v5619, 0.2
      %v5740 = vmul.f32 %v5620, 0.2
      %v5741 = vmul.f32 %v5621, 0.2
      %v5742 = vmul.f32 %v5622, 0.2
      %v5743 = vmul.f32 %v5623, 0.2
      %v5744 = vmul.f32 %v5624, 0.2
      %v5745 = vmul.f32 %v5625, 0.2
      %v5746 = vmul.f32 %v5626, 0.2
      %v5747 = vmul.f32 %v5627, 0.2
      %v5748 = vmul.f32 %v5628, 0.2
      %v5749 = vmul.f32 %v5629, 0.2
      %v5750 = vmul.f32 %v5630, 0.2
      %v5751 = vmul.f32 %v5631, 0.2
      %v5752 = vmul.f32 %v5632, 0.2
      %v5753 = vmul.f32 %v5633, 0.2
      %v5754 = vmul.f32 %v5634, 0.2
      %v5755 = vmul.f32 %v5635, 0.2
      %v5756 = vmul.f32 %v5636, 0.2
      %v5757 = vmul.f32 %v5637, 0.2
      %v5758 = vmul.f32 %v5638, 0.2
      %v5759 = vmul.f32 %v5639, 0.2
      %v5760 = vmul.f32 %v5640, 0.2
      %v5761 = vmul.f32 %v5641, 0.2
      %v5762 = vmul.f32 %v5642, 0.2
      %v5763 = vmul.f32 %v5643, 0.2
      %v5764 = vmul.f32 %v5644, 0.2
      %v5765 = vmul.f32 %v5645, 0.2
      %v5766 = vmul.f32 %v5646, 0.2
      %v5767 = vmul.f32 %v5647, 0.2
      %v5768 = vmul.f32 %v5648, 0.2
      %v5769 = vmul.f32 %v5649, 0.2
      %v5770 = vmul.f32 %v5650, 0.2
      %v5771 = vmul.f32 %v5651, 0.2
      %v5772 = vmul.f32 %v5652, 0.2
      %v5773 = vmul.f32 %v5653, 0.2
      %v5774 = vmul.f32 %v5654, 0.2
      %v5775 = vmul.f32 %v5655, 0.2
      %v5776 = vmul.f32 %v5656, 0.2
      %v5777 = vmul.f32 %v5657, 0.2
      %v5778 = vmul.f32 %v5658, 0.2
      %v5779 = vmul.f32 %v5659, 0.2
      %v5780 = vmul.f32 %v5660, 0.2
      %v5781 = vmul.f32 %v5661, 0.2
      %v5782 = vmul.f32 %v5662, 0.2
      %v5783 = vmul.f32 %v5663, 0.2
      %v5784 = vmul.f32 %v5664, 0.2
      %v5785 = vmul.f32 %v5665, 0.2
      %v5786 = vmul.f32 %v5666, 0.2
      %v5787 = vmul.f32 %v5667, 0.2
      %v5788 = vmul.f32 %v5668, 0.2
      %v5789 = vmul.f32 %v5669, 0.2
      %v5790 = vmul.f32 %v5670, 0.2
      %v5791 = vmul.f32 %v5671, 0.2
      %v5792 = vmul.f32 %v5672, 0.2
      %v5793 = vmul.f32 %v5673, 0.2
      %v5794 = vsel %vm5674, %v5614, %v5734
      %v5795 = vsel %vm5675, %v5615, %v5735
      %v5796 = vsel %vm5676, %v5616, %v5736
      %v5797 = vsel %vm5677, %v5617, %v5737
      %v5798 = vsel %vm5678, %v5618, %v5738
      %v5799 = vsel %vm5679, %v5619, %v5739
      %v5800 = vsel %vm5680, %v5620, %v5740
      %v5801 = vsel %vm5681, %v5621, %v5741
      %v5802 = vsel %vm5682, %v5622, %v5742
      %v5803 = vsel %vm5683, %v5623, %v5743
      %v5804 = vsel %vm5684, %v5624, %v5744
      %v5805 = vsel %vm5685, %v5625, %v5745
      %v5806 = vsel %vm5686, %v5626, %v5746
      %v5807 = vsel %vm5687, %v5627, %v5747
      %v5808 = vsel %vm5688, %v5628, %v5748
      %v5809 = vsel %vm5689, %v5629, %v5749
      %v5810 = vsel %vm5690, %v5630, %v5750
      %v5811 = vsel %vm5691, %v5631, %v5751
      %v5812 = vsel %vm5692, %v5632, %v5752
      %v5813 = vsel %vm5693, %v5633, %v5753
      %v5814 = vsel %vm5694, %v5634, %v5754
      %v5815 = vsel %vm5695, %v5635, %v5755
      %v5816 = vsel %vm5696, %v5636, %v5756
      %v5817 = vsel %vm5697, %v5637, %v5757
      %v5818 = vsel %vm5698, %v5638, %v5758
      %v5819 = vsel %vm5699, %v5639, %v5759
      %v5820 = vsel %vm5700, %v5640, %v5760
      %v5821 = vsel %vm5701, %v5641, %v5761
      %v5822 = vsel %vm5702, %v5642, %v5762
      %v5823 = vsel %vm5703, %v5643, %v5763
      %v5824 = vsel %vm5704, %v5644, %v5764
      %v5825 = vsel %vm5705, %v5645, %v5765
      %v5826 = vsel %vm5706, %v5646, %v5766
      %v5827 = vsel %vm5707, %v5647, %v5767
      %v5828 = vsel %vm5708, %v5648, %v5768
      %v5829 = vsel %vm5709, %v5649, %v5769
      %v5830 = vsel %vm5710, %v5650, %v5770
      %v5831 = vsel %vm5711, %v5651, %v5771
      %v5832 = vsel %vm5712, %v5652, %v5772
      %v5833 = vsel %vm5713, %v5653, %v5773
      %v5834 = vsel %vm5714, %v5654, %v5774
      %v5835 = vsel %vm5715, %v5655, %v5775
      %v5836 = vsel %vm5716, %v5656, %v5776
      %v5837 = vsel %vm5717, %v5657, %v5777
      %v5838 = vsel %vm5718, %v5658, %v5778
      %v5839 = vsel %vm5719, %v5659, %v5779
      %v5840 = vsel %vm5720, %v5660, %v5780
      %v5841 = vsel %vm5721, %v5661, %v5781
      %v5842 = vsel %vm5722, %v5662, %v5782
      %v5843 = vsel %vm5723, %v5663, %v5783
      %v5844 = vsel %vm5724, %v5664, %v5784
      %v5845 = vsel %vm5725, %v5665, %v5785
      %v5846 = vsel %vm5726, %v5666, %v5786
      %v5847 = vsel %vm5727, %v5667, %v5787
      %v5848 = vsel %vm5728, %v5668, %v5788
      %v5849 = vsel %vm5729, %v5669, %v5789
      %v5850 = vsel %vm5730, %v5670, %v5790
      %v5851 = vsel %vm5731, %v5671, %v5791
      %v5852 = vsel %vm5732, %v5672, %v5792
      %v5853 = vsel %vm5733, %v5673, %v5793
      %v5854 = vld [vmem:[%s5] sm:$0xf]
      %v5855 = vld [vmem:[%s6] sm:$0x1]
      %v5857 = vperm.slane %v5855, 0
      %vm5859 = vcmask 64512
      %v5860 = vsel %vm5859, %v593, 0
      %v5862 = vsel %vm5859, %v594, 0
      %v5864 = vsel %vm5859, %v595, 0
      %v5866 = vsel %vm5859, %v889, 0
      %v5868 = vsel %vm5859, %v890, 0
      %v5870 = vsel %vm5859, %v891, 0
      %v5872 = vsel %vm5859, %v892, 0
      %v5874 = vsel %vm5859, %v893, 0
      %v5876 = vsel %vm5859, %v894, 0
      %v5878 = vsel %vm5859, %v895, 0
      %v5880 = vsel %vm5859, %v896, 0
      %v5882 = vsel %vm5859, %v897, 0
      %v5884 = vsel %vm5859, %v898, 0
      %v5886 = vsel %vm5859, %v899, 0
      %v5888 = vsel %vm5859, %v900, 0
      %v5890 = vsel %vm5859, %v901, 0
      %v5892 = vsel %vm5859, %v902, 0
      %v5894 = vsel %vm5859, %v903, 0
      %v5896 = vsel %vm5859, %v904, 0
      %v5898 = vsel %vm5859, %v905, 0
      %v5900 = vsel %vm5859, %v906, 0
      %v5902 = vsel %vm5859, %v907, 0
      %v5904 = vsel %vm5859, %v908, 0
      %v5906 = vsel %vm5859, %v909, 0
      %v5908 = vsel %vm5859, %v910, 0
      %v5910 = vsel %vm5859, %v911, 0
      %v5912 = vsel %vm5859, %v912, 0
      %v5915 = vsel %vm711, %v5854, 0
      %5917 = vmatpush.bf16.msra.mxu0 0
      %5918 = vmatpush.bf16.msra.mxu0 0
      %5919 = vmatpush.bf16.msra.mxu0 0
      %5920 = vmatpush.bf16.msra.mxu0 0
      %5921 = vmatpush.bf16.msra.mxu0 0
      %5922 = vmatpush.bf16.msra.mxu0 0
      %5923 = vmatpush.bf16.msra.mxu0 0
      %5924 = vmatpush.bf16.msra.mxu0 %v5915
      %5925 = vmatmul.bf16.gmra.mxu0 %v5860
      %v5926 = vpop.f32.mrf.mxu0
      %v5927 = vadd.f32 %v5857, %v5926
      %v5928 = vpop.f32.mrf.mxu0
      %v5929 = vadd.f32 %v5857, %v5928
      %5930 = vmatmul.bf16.gmra.mxu0 %v5862
      %v5931 = vpop.f32.mrf.mxu0
      %v5932 = vadd.f32 %v5857, %v5931
      %v5933 = vpop.f32.mrf.mxu0
      %v5934 = vadd.f32 %v5857, %v5933
      %5935 = vmatmul.bf16.gmra.mxu0 %v5864
      %v5936 = vpop.f32.mrf.mxu0
      %v5937 = vadd.f32 %v5857, %v5936
      %v5938 = vpop.f32.mrf.mxu0
      %v5939 = vadd.f32 %v5857, %v5938
      %5940 = vmatmul.bf16.gmra.mxu0 %v5866
      %v5941 = vpop.f32.mrf.mxu0
      %v5942 = vadd.f32 %v5857, %v5941
      %v5943 = vpop.f32.mrf.mxu0
      %v5944 = vadd.f32 %v5857, %v5943
      %5945 = vmatmul.bf16.gmra.mxu0 %v5868
      %v5946 = vpop.f32.mrf.mxu0
      %v5947 = vadd.f32 %v5857, %v5946
      %v5948 = vpop.f32.mrf.mxu0
      %v5949 = vadd.f32 %v5857, %v5948
      %5950 = vmatmul.bf16.gmra.mxu0 %v5870
      %v5951 = vpop.f32.mrf.mxu0
      %v5952 = vadd.f32 %v5857, %v5951
      %v5953 = vpop.f32.mrf.mxu0
      %v5954 = vadd.f32 %v5857, %v5953
      %5955 = vmatmul.bf16.gmra.mxu0 %v5872
      %v5956 = vpop.f32.mrf.mxu0
      %v5957 = vadd.f32 %v5857, %v5956
      %v5958 = vpop.f32.mrf.mxu0
      %v5959 = vadd.f32 %v5857, %v5958
      %5960 = vmatmul.bf16.gmra.mxu0 %v5874
      %v5961 = vpop.f32.mrf.mxu0
      %v5962 = vadd.f32 %v5857, %v5961
      %v5963 = vpop.f32.mrf.mxu0
      %v5964 = vadd.f32 %v5857, %v5963
      %5965 = vmatmul.bf16.gmra.mxu0 %v5876
      %v5966 = vpop.f32.mrf.mxu0
      %v5967 = vadd.f32 %v5857, %v5966
      %v5968 = vpop.f32.mrf.mxu0
      %v5969 = vadd.f32 %v5857, %v5968
      %5970 = vmatmul.bf16.gmra.mxu0 %v5878
      %v5971 = vpop.f32.mrf.mxu0
      %v5972 = vadd.f32 %v5857, %v5971
      %v5973 = vpop.f32.mrf.mxu0
      %v5974 = vadd.f32 %v5857, %v5973
      %5975 = vmatmul.bf16.gmra.mxu0 %v5880
      %v5976 = vpop.f32.mrf.mxu0
      %v5977 = vadd.f32 %v5857, %v5976
      %v5978 = vpop.f32.mrf.mxu0
      %v5979 = vadd.f32 %v5857, %v5978
      %5980 = vmatmul.bf16.gmra.mxu0 %v5882
      %v5981 = vpop.f32.mrf.mxu0
      %v5982 = vadd.f32 %v5857, %v5981
      %v5983 = vpop.f32.mrf.mxu0
      %v5984 = vadd.f32 %v5857, %v5983
      %5985 = vmatmul.bf16.gmra.mxu0 %v5884
      %v5986 = vpop.f32.mrf.mxu0
      %v5987 = vadd.f32 %v5857, %v5986
      %v5988 = vpop.f32.mrf.mxu0
      %v5989 = vadd.f32 %v5857, %v5988
      %5990 = vmatmul.bf16.gmra.mxu0 %v5886
      %v5991 = vpop.f32.mrf.mxu0
      %v5992 = vadd.f32 %v5857, %v5991
      %v5993 = vpop.f32.mrf.mxu0
      %v5994 = vadd.f32 %v5857, %v5993
      %5995 = vmatmul.bf16.gmra.mxu0 %v5888
      %v5996 = vpop.f32.mrf.mxu0
      %v5997 = vadd.f32 %v5857, %v5996
      %v5998 = vpop.f32.mrf.mxu0
      %v5999 = vadd.f32 %v5857, %v5998
      %6000 = vmatmul.bf16.gmra.mxu0 %v5890
      %v6001 = vpop.f32.mrf.mxu0
      %v6002 = vadd.f32 %v5857, %v6001
      %v6003 = vpop.f32.mrf.mxu0
      %v6004 = vadd.f32 %v5857, %v6003
      %6005 = vmatmul.bf16.gmra.mxu0 %v5892
      %v6006 = vpop.f32.mrf.mxu0
      %v6007 = vadd.f32 %v5857, %v6006
      %v6008 = vpop.f32.mrf.mxu0
      %v6009 = vadd.f32 %v5857, %v6008
      %6010 = vmatmul.bf16.gmra.mxu0 %v5894
      %v6011 = vpop.f32.mrf.mxu0
      %v6012 = vadd.f32 %v5857, %v6011
      %v6013 = vpop.f32.mrf.mxu0
      %v6014 = vadd.f32 %v5857, %v6013
      %6015 = vmatmul.bf16.gmra.mxu0 %v5896
      %v6016 = vpop.f32.mrf.mxu0
      %v6017 = vadd.f32 %v5857, %v6016
      %v6018 = vpop.f32.mrf.mxu0
      %v6019 = vadd.f32 %v5857, %v6018
      %6020 = vmatmul.bf16.gmra.mxu0 %v5898
      %v6021 = vpop.f32.mrf.mxu0
      %v6022 = vadd.f32 %v5857, %v6021
      %v6023 = vpop.f32.mrf.mxu0
      %v6024 = vadd.f32 %v5857, %v6023
      %6025 = vmatmul.bf16.gmra.mxu0 %v5900
      %v6026 = vpop.f32.mrf.mxu0
      %v6027 = vadd.f32 %v5857, %v6026
      %v6028 = vpop.f32.mrf.mxu0
      %v6029 = vadd.f32 %v5857, %v6028
      %6030 = vmatmul.bf16.gmra.mxu0 %v5902
      %v6031 = vpop.f32.mrf.mxu0
      %v6032 = vadd.f32 %v5857, %v6031
      %v6033 = vpop.f32.mrf.mxu0
      %v6034 = vadd.f32 %v5857, %v6033
      %6035 = vmatmul.bf16.gmra.mxu0 %v5904
      %v6036 = vpop.f32.mrf.mxu0
      %v6037 = vadd.f32 %v5857, %v6036
      %v6038 = vpop.f32.mrf.mxu0
      %v6039 = vadd.f32 %v5857, %v6038
      %6040 = vmatmul.bf16.gmra.mxu0 %v5906
      %v6041 = vpop.f32.mrf.mxu0
      %v6042 = vadd.f32 %v5857, %v6041
      %v6043 = vpop.f32.mrf.mxu0
      %v6044 = vadd.f32 %v5857, %v6043
      %6045 = vmatmul.bf16.gmra.mxu0 %v5908
      %v6046 = vpop.f32.mrf.mxu0
      %v6047 = vadd.f32 %v5857, %v6046
      %v6048 = vpop.f32.mrf.mxu0
      %v6049 = vadd.f32 %v5857, %v6048
      %6050 = vmatmul.bf16.gmra.mxu0 %v5910
      %v6051 = vpop.f32.mrf.mxu0
      %v6052 = vadd.f32 %v5857, %v6051
      %v6053 = vpop.f32.mrf.mxu0
      %v6054 = vadd.f32 %v5857, %v6053
      %6055 = vmatmul.bf16.gmra.mxu0 %v5912
      %v6056 = vpop.f32.mrf.mxu0
      %v6057 = vadd.f32 %v5857, %v6056
      %v6058 = vpop.f32.mrf.mxu0
      %v6059 = vadd.f32 %v5857, %v6058
      %6060 = vmatmul.bf16.gmra.mxu0 %v5860
      %v6061 = vpop.f32.mrf.mxu0
      %v6062 = vadd.f32 %v5857, %v6061
      %v6063 = vpop.f32.mrf.mxu0
      %v6064 = vadd.f32 %v5857, %v6063
      %6065 = vmatmul.bf16.gmra.mxu0 %v5862
      %v6066 = vpop.f32.mrf.mxu0
      %v6067 = vadd.f32 %v5857, %v6066
      %v6068 = vpop.f32.mrf.mxu0
      %v6069 = vadd.f32 %v5857, %v6068
      %6070 = vmatmul.bf16.gmra.mxu0 %v5864
      %v6071 = vpop.f32.mrf.mxu0
      %v6072 = vadd.f32 %v5857, %v6071
      %v6073 = vpop.f32.mrf.mxu0
      %v6074 = vadd.f32 %v5857, %v6073
      %6075 = vdwg.mxu0
      %v6076 = vadd.f32 %v5794, %v5927
      %v6077 = vadd.f32 %v5795, %v5929
      %v6078 = vadd.f32 %v5796, %v5932
      %v6079 = vadd.f32 %v5797, %v5934
      %v6080 = vadd.f32 %v5798, %v5937
      %v6081 = vadd.f32 %v5799, %v5939
      %v6082 = vadd.f32 %v5800, %v5942
      %v6083 = vadd.f32 %v5801, %v5944
      %v6084 = vadd.f32 %v5802, %v5947
      %v6085 = vadd.f32 %v5803, %v5949
      %v6086 = vadd.f32 %v5804, %v5952
      %v6087 = vadd.f32 %v5805, %v5954
      %v6088 = vadd.f32 %v5806, %v5957
      %v6089 = vadd.f32 %v5807, %v5959
      %v6090 = vadd.f32 %v5808, %v5962
      %v6091 = vadd.f32 %v5809, %v5964
      %v6092 = vadd.f32 %v5810, %v5967
      %v6093 = vadd.f32 %v5811, %v5969
      %v6094 = vadd.f32 %v5812, %v5972
      %v6095 = vadd.f32 %v5813, %v5974
      %v6096 = vadd.f32 %v5814, %v5977
      %v6097 = vadd.f32 %v5815, %v5979
      %v6098 = vadd.f32 %v5816, %v5982
      %v6099 = vadd.f32 %v5817, %v5984
      %v6100 = vadd.f32 %v5818, %v5987
      %v6101 = vadd.f32 %v5819, %v5989
      %v6102 = vadd.f32 %v5820, %v5992
      %v6103 = vadd.f32 %v5821, %v5994
      %v6104 = vadd.f32 %v5822, %v5997
      %v6105 = vadd.f32 %v5823, %v5999
      %v6106 = vadd.f32 %v5824, %v6002
      %v6107 = vadd.f32 %v5825, %v6004
      %v6108 = vadd.f32 %v5826, %v6007
      %v6109 = vadd.f32 %v5827, %v6009
      %v6110 = vadd.f32 %v5828, %v6012
      %v6111 = vadd.f32 %v5829, %v6014
      %v6112 = vadd.f32 %v5830, %v6017
      %v6113 = vadd.f32 %v5831, %v6019
      %v6114 = vadd.f32 %v5832, %v6022
      %v6115 = vadd.f32 %v5833, %v6024
      %v6116 = vadd.f32 %v5834, %v6027
      %v6117 = vadd.f32 %v5835, %v6029
      %v6118 = vadd.f32 %v5836, %v6032
      %v6119 = vadd.f32 %v5837, %v6034
      %v6120 = vadd.f32 %v5838, %v6037
      %v6121 = vadd.f32 %v5839, %v6039
      %v6122 = vadd.f32 %v5840, %v6042
      %v6123 = vadd.f32 %v5841, %v6044
      %v6124 = vadd.f32 %v5842, %v6047
      %v6125 = vadd.f32 %v5843, %v6049
      %v6126 = vadd.f32 %v5844, %v6052
      %v6127 = vadd.f32 %v5845, %v6054
      %v6128 = vadd.f32 %v5846, %v6057
      %v6129 = vadd.f32 %v5847, %v6059
      %v6130 = vadd.f32 %v5848, %v6062
      %v6131 = vadd.f32 %v5849, %v6064
      %v6132 = vadd.f32 %v5850, %v6067
      %v6133 = vadd.f32 %v5851, %v6069
      %v6134 = vadd.f32 %v5852, %v6072
      %v6135 = vadd.f32 %v5853, %v6074
      %s6136 = ssub.s32 %s486, 2
      %v6137 = vstv %s6136
      %v6138 = vadd.s32 %v6137, 1
      %v6139 = vadd.s32 %v6137, 2
      %v6140 = vadd.s32 %v6137, 3
      %v6141 = vadd.s32 %v6137, 4
      %v6142 = vadd.s32 %v6137, 5
      %v6143 = vadd.s32 %v6137, 6
      %v6144 = vadd.s32 %v6137, 7
      %v6145 = vadd.s32 %v6137, 8
      %v6146 = vadd.s32 %v6137, 9
      %v6147 = vadd.s32 %v6137, 10
      %v6148 = vadd.s32 %v6137, 11
      %v6149 = vadd.s32 %v6137, 12
      %v6150 = vadd.s32 %v6137, 13
      %v6151 = vadd.s32 %v6137, 14
      %v6152 = vadd.s32 %v6137, 15
      %v6153 = vadd.s32 %v6137, 16
      %v6154 = vadd.s32 %v6137, 17
      %v6155 = vadd.s32 %v6137, 18
      %v6156 = vadd.s32 %v6137, 19
      %vm6157 = vcmp.ge.s32.totalorder %v6137, 0
      %vm6158 = vcmp.ge.s32.totalorder %v6138, 0
      %vm6159 = vcmp.ge.s32.totalorder %v6139, 0
      %vm6160 = vcmp.ge.s32.totalorder %v6140, 0
      %vm6161 = vcmp.ge.s32.totalorder %v6141, 0
      %vm6162 = vcmp.ge.s32.totalorder %v6142, 0
      %vm6163 = vcmp.ge.s32.totalorder %v6143, 0
      %vm6164 = vcmp.ge.s32.totalorder %v6144, 0
      %vm6165 = vcmp.ge.s32.totalorder %v6145, 0
      %vm6166 = vcmp.ge.s32.totalorder %v6146, 0
      %vm6167 = vcmp.ge.s32.totalorder %v6147, 0
      %vm6168 = vcmp.ge.s32.totalorder %v6148, 0
      %vm6169 = vcmp.ge.s32.totalorder %v6149, 0
      %vm6170 = vcmp.ge.s32.totalorder %v6150, 0
      %vm6171 = vcmp.ge.s32.totalorder %v6151, 0
      %vm6172 = vcmp.ge.s32.totalorder %v6152, 0
      %vm6173 = vcmp.ge.s32.totalorder %v6153, 0
      %vm6174 = vcmp.ge.s32.totalorder %v6154, 0
      %vm6175 = vcmp.ge.s32.totalorder %v6155, 0
      %vm6176 = vcmp.ge.s32.totalorder %v6156, 0
      %vm6177 = vcmp.lt.s32.totalorder %v6137, 16
      %vm6178 = vcmp.lt.s32.totalorder %v6138, 16
      %vm6179 = vcmp.lt.s32.totalorder %v6139, 16
      %vm6180 = vcmp.lt.s32.totalorder %v6140, 16
      %vm6181 = vcmp.lt.s32.totalorder %v6141, 16
      %vm6182 = vcmp.lt.s32.totalorder %v6142, 16
      %vm6183 = vcmp.lt.s32.totalorder %v6143, 16
      %vm6184 = vcmp.lt.s32.totalorder %v6144, 16
      %vm6185 = vcmp.lt.s32.totalorder %v6145, 16
      %vm6186 = vcmp.lt.s32.totalorder %v6146, 16
      %vm6187 = vcmp.lt.s32.totalorder %v6147, 16
      %vm6188 = vcmp.lt.s32.totalorder %v6148, 16
      %vm6189 = vcmp.lt.s32.totalorder %v6149, 16
      %vm6190 = vcmp.lt.s32.totalorder %v6150, 16
      %vm6191 = vcmp.lt.s32.totalorder %v6151, 16
      %vm6192 = vcmp.lt.s32.totalorder %v6152, 16
      %vm6193 = vcmp.lt.s32.totalorder %v6153, 16
      %vm6194 = vcmp.lt.s32.totalorder %v6154, 16
      %vm6195 = vcmp.lt.s32.totalorder %v6155, 16
      %vm6196 = vcmp.lt.s32.totalorder %v6156, 16
      %vm6197 = vmand %vm6157, %vm6177
      %vm6198 = vmand %vm6158, %vm6178
      %vm6199 = vmand %vm6159, %vm6179
      %vm6200 = vmand %vm6160, %vm6180
      %vm6201 = vmand %vm6161, %vm6181
      %vm6202 = vmand %vm6162, %vm6182
      %vm6203 = vmand %vm6163, %vm6183
      %vm6204 = vmand %vm6164, %vm6184
      %vm6205 = vmand %vm6165, %vm6185
      %vm6206 = vmand %vm6166, %vm6186
      %vm6207 = vmand %vm6167, %vm6187
      %vm6208 = vmand %vm6168, %vm6188
      %vm6209 = vmand %vm6169, %vm6189
      %vm6210 = vmand %vm6170, %vm6190
      %vm6211 = vmand %vm6171, %vm6191
      %vm6212 = vmand %vm6172, %vm6192
      %vm6213 = vmand %vm6173, %vm6193
      %vm6214 = vmand %vm6174, %vm6194
      %vm6215 = vmand %vm6175, %vm6195
      %vm6216 = vmand %vm6176, %vm6196
      %vm6217 = vmand %vm6197, %vm1590
      %vm6218 = vmand %vm6197, %vm1591
      %vm6219 = vmand %vm6197, %vm1592
      %vm6220 = vmand %vm6198, %vm1590
      %vm6221 = vmand %vm6198, %vm1591
      %vm6222 = vmand %vm6198, %vm1592
      %vm6223 = vmand %vm6199, %vm1590
      %vm6224 = vmand %vm6199, %vm1591
      %vm6225 = vmand %vm6199, %vm1592
      %vm6226 = vmand %vm6200, %vm1590
      %vm6227 = vmand %vm6200, %vm1591
      %vm6228 = vmand %vm6200, %vm1592
      %vm6229 = vmand %vm6201, %vm1590
      %vm6230 = vmand %vm6201, %vm1591
      %vm6231 = vmand %vm6201, %vm1592
      %vm6232 = vmand %vm6202, %vm1590
      %vm6233 = vmand %vm6202, %vm1591
      %vm6234 = vmand %vm6202, %vm1592
      %vm6235 = vmand %vm6203, %vm1590
      %vm6236 = vmand %vm6203, %vm1591
      %vm6237 = vmand %vm6203, %vm1592
      %vm6238 = vmand %vm6204, %vm1590
      %vm6239 = vmand %vm6204, %vm1591
      %vm6240 = vmand %vm6204, %vm1592
      %vm6241 = vmand %vm6205, %vm1590
      %vm6242 = vmand %vm6205, %vm1591
      %vm6243 = vmand %vm6205, %vm1592
      %vm6244 = vmand %vm6206, %vm1590
      %vm6245 = vmand %vm6206, %vm1591
      %vm6246 = vmand %vm6206, %vm1592
      %vm6247 = vmand %vm6207, %vm1590
      %vm6248 = vmand %vm6207, %vm1591
      %vm6249 = vmand %vm6207, %vm1592
      %vm6250 = vmand %vm6208, %vm1590
      %vm6251 = vmand %vm6208, %vm1591
      %vm6252 = vmand %vm6208, %vm1592
      %vm6253 = vmand %vm6209, %vm1590
      %vm6254 = vmand %vm6209, %vm1591
      %vm6255 = vmand %vm6209, %vm1592
      %vm6256 = vmand %vm6210, %vm1590
      %vm6257 = vmand %vm6210, %vm1591
      %vm6258 = vmand %vm6210, %vm1592
      %vm6259 = vmand %vm6211, %vm1590
      %vm6260 = vmand %vm6211, %vm1591
      %vm6261 = vmand %vm6211, %vm1592
      %vm6262 = vmand %vm6212, %vm1590
      %vm6263 = vmand %vm6212, %vm1591
      %vm6264 = vmand %vm6212, %vm1592
      %vm6265 = vmand %vm6213, %vm1590
      %vm6266 = vmand %vm6213, %vm1591
      %vm6267 = vmand %vm6213, %vm1592
      %vm6268 = vmand %vm6214, %vm1590
      %vm6269 = vmand %vm6214, %vm1591
      %vm6270 = vmand %vm6214, %vm1592
      %vm6271 = vmand %vm6215, %vm1590
      %vm6272 = vmand %vm6215, %vm1591
      %vm6273 = vmand %vm6215, %vm1592
      %vm6274 = vmand %vm6216, %vm1590
      %vm6275 = vmand %vm6216, %vm1591
      %vm6276 = vmand %vm6216, %vm1592
      %v6277 = vsel %vm6217, 1, 0
      %v6278 = vsel %vm6218, 1, 0
      %v6279 = vsel %vm6219, 1, 0
      %v6280 = vsel %vm6220, 1, 0
      %v6281 = vsel %vm6221, 1, 0
      %v6282 = vsel %vm6222, 1, 0
      %v6283 = vsel %vm6223, 1, 0
      %v6284 = vsel %vm6224, 1, 0
      %v6285 = vsel %vm6225, 1, 0
      %v6286 = vsel %vm6226, 1, 0
      %v6287 = vsel %vm6227, 1, 0
      %v6288 = vsel %vm6228, 1, 0
      %v6289 = vsel %vm6229, 1, 0
      %v6290 = vsel %vm6230, 1, 0
      %v6291 = vsel %vm6231, 1, 0
      %v6292 = vsel %vm6232, 1, 0
      %v6293 = vsel %vm6233, 1, 0
      %v6294 = vsel %vm6234, 1, 0
      %v6295 = vsel %vm6235, 1, 0
      %v6296 = vsel %vm6236, 1, 0
      %v6297 = vsel %vm6237, 1, 0
      %v6298 = vsel %vm6238, 1, 0
      %v6299 = vsel %vm6239, 1, 0
      %v6300 = vsel %vm6240, 1, 0
      %v6301 = vsel %vm6241, 1, 0
      %v6302 = vsel %vm6242, 1, 0
      %v6303 = vsel %vm6243, 1, 0
      %v6304 = vsel %vm6244, 1, 0
      %v6305 = vsel %vm6245, 1, 0
      %v6306 = vsel %vm6246, 1, 0
      %v6307 = vsel %vm6247, 1, 0
      %v6308 = vsel %vm6248, 1, 0
      %v6309 = vsel %vm6249, 1, 0
      %v6310 = vsel %vm6250, 1, 0
      %v6311 = vsel %vm6251, 1, 0
      %v6312 = vsel %vm6252, 1, 0
      %v6313 = vsel %vm6253, 1, 0
      %v6314 = vsel %vm6254, 1, 0
      %v6315 = vsel %vm6255, 1, 0
      %v6316 = vsel %vm6256, 1, 0
      %v6317 = vsel %vm6257, 1, 0
      %v6318 = vsel %vm6258, 1, 0
      %v6319 = vsel %vm6259, 1, 0
      %v6320 = vsel %vm6260, 1, 0
      %v6321 = vsel %vm6261, 1, 0
      %v6322 = vsel %vm6262, 1, 0
      %v6323 = vsel %vm6263, 1, 0
      %v6324 = vsel %vm6264, 1, 0
      %v6325 = vsel %vm6265, 1, 0
      %v6326 = vsel %vm6266, 1, 0
      %v6327 = vsel %vm6267, 1, 0
      %v6328 = vsel %vm6268, 1, 0
      %v6329 = vsel %vm6269, 1, 0
      %v6330 = vsel %vm6270, 1, 0
      %v6331 = vsel %vm6271, 1, 0
      %v6332 = vsel %vm6272, 1, 0
      %v6333 = vsel %vm6273, 1, 0
      %v6334 = vsel %vm6274, 1, 0
      %v6335 = vsel %vm6275, 1, 0
      %v6336 = vsel %vm6276, 1, 0
      %vm6337 = vcmp.eq.s32.totalorder %v6277, 1
      %vm6338 = vcmp.eq.s32.totalorder %v6278, 1
      %vm6339 = vcmp.eq.s32.totalorder %v6279, 1
      %vm6340 = vcmp.eq.s32.totalorder %v6280, 1
      %vm6341 = vcmp.eq.s32.totalorder %v6281, 1
      %vm6342 = vcmp.eq.s32.totalorder %v6282, 1
      %vm6343 = vcmp.eq.s32.totalorder %v6283, 1
      %vm6344 = vcmp.eq.s32.totalorder %v6284, 1
      %vm6345 = vcmp.eq.s32.totalorder %v6285, 1
      %vm6346 = vcmp.eq.s32.totalorder %v6286, 1
      %vm6347 = vcmp.eq.s32.totalorder %v6287, 1
      %vm6348 = vcmp.eq.s32.totalorder %v6288, 1
      %vm6349 = vcmp.eq.s32.totalorder %v6289, 1
      %vm6350 = vcmp.eq.s32.totalorder %v6290, 1
      %vm6351 = vcmp.eq.s32.totalorder %v6291, 1
      %vm6352 = vcmp.eq.s32.totalorder %v6292, 1
      %vm6353 = vcmp.eq.s32.totalorder %v6293, 1
      %vm6354 = vcmp.eq.s32.totalorder %v6294, 1
      %vm6355 = vcmp.eq.s32.totalorder %v6295, 1
      %vm6356 = vcmp.eq.s32.totalorder %v6296, 1
      %vm6357 = vcmp.eq.s32.totalorder %v6297, 1
      %vm6358 = vcmp.eq.s32.totalorder %v6298, 1
      %vm6359 = vcmp.eq.s32.totalorder %v6299, 1
      %vm6360 = vcmp.eq.s32.totalorder %v6300, 1
      %vm6361 = vcmp.eq.s32.totalorder %v6301, 1
      %vm6362 = vcmp.eq.s32.totalorder %v6302, 1
      %vm6363 = vcmp.eq.s32.totalorder %v6303, 1
      %vm6364 = vcmp.eq.s32.totalorder %v6304, 1
      %vm6365 = vcmp.eq.s32.totalorder %v6305, 1
      %vm6366 = vcmp.eq.s32.totalorder %v6306, 1
      %vm6367 = vcmp.eq.s32.totalorder %v6307, 1
      %vm6368 = vcmp.eq.s32.totalorder %v6308, 1
      %vm6369 = vcmp.eq.s32.totalorder %v6309, 1
      %vm6370 = vcmp.eq.s32.totalorder %v6310, 1
      %vm6371 = vcmp.eq.s32.totalorder %v6311, 1
      %vm6372 = vcmp.eq.s32.totalorder %v6312, 1
      %vm6373 = vcmp.eq.s32.totalorder %v6313, 1
      %vm6374 = vcmp.eq.s32.totalorder %v6314, 1
      %vm6375 = vcmp.eq.s32.totalorder %v6315, 1
      %vm6376 = vcmp.eq.s32.totalorder %v6316, 1
      %vm6377 = vcmp.eq.s32.totalorder %v6317, 1
      %vm6378 = vcmp.eq.s32.totalorder %v6318, 1
      %vm6379 = vcmp.eq.s32.totalorder %v6319, 1
      %vm6380 = vcmp.eq.s32.totalorder %v6320, 1
      %vm6381 = vcmp.eq.s32.totalorder %v6321, 1
      %vm6382 = vcmp.eq.s32.totalorder %v6322, 1
      %vm6383 = vcmp.eq.s32.totalorder %v6323, 1
      %vm6384 = vcmp.eq.s32.totalorder %v6324, 1
      %vm6385 = vcmp.eq.s32.totalorder %v6325, 1
      %vm6386 = vcmp.eq.s32.totalorder %v6326, 1
      %vm6387 = vcmp.eq.s32.totalorder %v6327, 1
      %vm6388 = vcmp.eq.s32.totalorder %v6328, 1
      %vm6389 = vcmp.eq.s32.totalorder %v6329, 1
      %vm6390 = vcmp.eq.s32.totalorder %v6330, 1
      %vm6391 = vcmp.eq.s32.totalorder %v6331, 1
      %vm6392 = vcmp.eq.s32.totalorder %v6332, 1
      %vm6393 = vcmp.eq.s32.totalorder %v6333, 1
      %vm6394 = vcmp.eq.s32.totalorder %v6334, 1
      %vm6395 = vcmp.eq.s32.totalorder %v6335, 1
      %vm6396 = vcmp.eq.s32.totalorder %v6336, 1
      %v6397 = vsel %vm6337, %v6076, 0.0
      %v6398 = vsel %vm6338, %v6077, 0.0
      %v6399 = vsel %vm6339, %v6078, 0.0
      %v6400 = vsel %vm6340, %v6079, 0.0
      %v6401 = vsel %vm6341, %v6080, 0.0
      %v6402 = vsel %vm6342, %v6081, 0.0
      %v6403 = vsel %vm6343, %v6082, 0.0
      %v6404 = vsel %vm6344, %v6083, 0.0
      %v6405 = vsel %vm6345, %v6084, 0.0
      %v6406 = vsel %vm6346, %v6085, 0.0
      %v6407 = vsel %vm6347, %v6086, 0.0
      %v6408 = vsel %vm6348, %v6087, 0.0
      %v6409 = vsel %vm6349, %v6088, 0.0
      %v6410 = vsel %vm6350, %v6089, 0.0
      %v6411 = vsel %vm6351, %v6090, 0.0
      %v6412 = vsel %vm6352, %v6091, 0.0
      %v6413 = vsel %vm6353, %v6092, 0.0
      %v6414 = vsel %vm6354, %v6093, 0.0
      %v6415 = vsel %vm6355, %v6094, 0.0
      %v6416 = vsel %vm6356, %v6095, 0.0
      %v6417 = vsel %vm6357, %v6096, 0.0
      %v6418 = vsel %vm6358, %v6097, 0.0
      %v6419 = vsel %vm6359, %v6098, 0.0
      %v6420 = vsel %vm6360, %v6099, 0.0
      %v6421 = vsel %vm6361, %v6100, 0.0
      %v6422 = vsel %vm6362, %v6101, 0.0
      %v6423 = vsel %vm6363, %v6102, 0.0
      %v6424 = vsel %vm6364, %v6103, 0.0
      %v6425 = vsel %vm6365, %v6104, 0.0
      %v6426 = vsel %vm6366, %v6105, 0.0
      %v6427 = vsel %vm6367, %v6106, 0.0
      %v6428 = vsel %vm6368, %v6107, 0.0
      %v6429 = vsel %vm6369, %v6108, 0.0
      %v6430 = vsel %vm6370, %v6109, 0.0
      %v6431 = vsel %vm6371, %v6110, 0.0
      %v6432 = vsel %vm6372, %v6111, 0.0
      %v6433 = vsel %vm6373, %v6112, 0.0
      %v6434 = vsel %vm6374, %v6113, 0.0
      %v6435 = vsel %vm6375, %v6114, 0.0
      %v6436 = vsel %vm6376, %v6115, 0.0
      %v6437 = vsel %vm6377, %v6116, 0.0
      %v6438 = vsel %vm6378, %v6117, 0.0
      %v6439 = vsel %vm6379, %v6118, 0.0
      %v6440 = vsel %vm6380, %v6119, 0.0
      %v6441 = vsel %vm6381, %v6120, 0.0
      %v6442 = vsel %vm6382, %v6121, 0.0
      %v6443 = vsel %vm6383, %v6122, 0.0
      %v6444 = vsel %vm6384, %v6123, 0.0
      %v6445 = vsel %vm6385, %v6124, 0.0
      %v6446 = vsel %vm6386, %v6125, 0.0
      %v6447 = vsel %vm6387, %v6126, 0.0
      %v6448 = vsel %vm6388, %v6127, 0.0
      %v6449 = vsel %vm6389, %v6128, 0.0
      %v6450 = vsel %vm6390, %v6129, 0.0
      %v6451 = vsel %vm6391, %v6130, 0.0
      %v6452 = vsel %vm6392, %v6131, 0.0
      %v6453 = vsel %vm6393, %v6132, 0.0
      %v6454 = vsel %vm6394, %v6133, 0.0
      %v6455 = vsel %vm6395, %v6134, 0.0
      %v6456 = vsel %vm6396, %v6135, 0.0
      %v6457 = vpack.c.bf16 %v6397, %v6397
      %v6458 = vpack.c.bf16 %v6398, %v6398
      %v6459 = vpack.c.bf16 %v6399, %v6399
      %v6460 = vpack.c.bf16 %v6400, %v6400
      %v6461 = vpack.c.bf16 %v6401, %v6401
      %v6462 = vpack.c.bf16 %v6402, %v6402
      %v6463 = vpack.c.bf16 %v6403, %v6403
      %v6464 = vpack.c.bf16 %v6404, %v6404
      %v6465 = vpack.c.bf16 %v6405, %v6405
      %v6466 = vpack.c.bf16 %v6406, %v6406
      %v6467 = vpack.c.bf16 %v6407, %v6407
      %v6468 = vpack.c.bf16 %v6408, %v6408
      %v6469 = vpack.c.bf16 %v6409, %v6409
      %v6470 = vpack.c.bf16 %v6410, %v6410
      %v6471 = vpack.c.bf16 %v6411, %v6411
      %v6472 = vpack.c.bf16 %v6412, %v6412
      %v6473 = vpack.c.bf16 %v6413, %v6413
      %v6474 = vpack.c.bf16 %v6414, %v6414
      %v6475 = vpack.c.bf16 %v6415, %v6415
      %v6476 = vpack.c.bf16 %v6416, %v6416
      %v6477 = vpack.c.bf16 %v6417, %v6417
      %v6478 = vpack.c.bf16 %v6418, %v6418
      %v6479 = vpack.c.bf16 %v6419, %v6419
      %v6480 = vpack.c.bf16 %v6420, %v6420
      %v6481 = vpack.c.bf16 %v6421, %v6421
      %v6482 = vpack.c.bf16 %v6422, %v6422
      %v6483 = vpack.c.bf16 %v6423, %v6423
      %v6484 = vpack.c.bf16 %v6424, %v6424
      %v6485 = vpack.c.bf16 %v6425, %v6425
      %v6486 = vpack.c.bf16 %v6426, %v6426
      %v6487 = vpack.c.bf16 %v6427, %v6427
      %v6488 = vpack.c.bf16 %v6428, %v6428
      %v6489 = vpack.c.bf16 %v6429, %v6429
      %v6490 = vpack.c.bf16 %v6430, %v6430
      %v6491 = vpack.c.bf16 %v6431, %v6431
      %v6492 = vpack.c.bf16 %v6432, %v6432
      %v6493 = vpack.c.bf16 %v6433, %v6433
      %v6494 = vpack.c.bf16 %v6434, %v6434
      %v6495 = vpack.c.bf16 %v6435, %v6435
      %v6496 = vpack.c.bf16 %v6436, %v6436
      %v6497 = vpack.c.bf16 %v6437, %v6437
      %v6498 = vpack.c.bf16 %v6438, %v6438
      %v6499 = vpack.c.bf16 %v6439, %v6439
      %v6500 = vpack.c.bf16 %v6440, %v6440
      %v6501 = vpack.c.bf16 %v6441, %v6441
      %v6502 = vpack.c.bf16 %v6442, %v6442
      %v6503 = vpack.c.bf16 %v6443, %v6443
      %v6504 = vpack.c.bf16 %v6444, %v6444
      %v6505 = vpack.c.bf16 %v6445, %v6445
      %v6506 = vpack.c.bf16 %v6446, %v6446
      %v6507 = vpack.c.bf16 %v6447, %v6447
      %v6508 = vpack.c.bf16 %v6448, %v6448
      %v6509 = vpack.c.bf16 %v6449, %v6449
      %v6510 = vpack.c.bf16 %v6450, %v6450
      %v6511 = vpack.c.bf16 %v6451, %v6451
      %v6512 = vpack.c.bf16 %v6452, %v6452
      %v6513 = vpack.c.bf16 %v6453, %v6453
      %v6514 = vpack.c.bf16 %v6454, %v6454
      %v6515 = vpack.c.bf16 %v6455, %v6455
      %v6516 = vpack.c.bf16 %v6456, %v6456
      %v6537 = vunpack.c.l.b16 %v6459
      %v6538 = vunpack.c.l.b16 %v6462
      %v6539 = vunpack.c.l.b16 %v6465
      %v6540 = vunpack.c.l.b16 %v6468
      %v6541 = vunpack.c.l.b16 %v6471
      %v6542 = vunpack.c.l.b16 %v6474
      %v6543 = vunpack.c.l.b16 %v6477
      %v6544 = vunpack.c.l.b16 %v6480
      %v6545 = vunpack.c.l.b16 %v6483
      %v6546 = vunpack.c.l.b16 %v6486
      %v6547 = vunpack.c.l.b16 %v6489
      %v6548 = vunpack.c.l.b16 %v6492
      %v6549 = vunpack.c.l.b16 %v6495
      %v6550 = vunpack.c.l.b16 %v6498
      %v6551 = vunpack.c.l.b16 %v6501
      %v6552 = vunpack.c.l.b16 %v6504
      %v6553 = vunpack.c.l.b16 %v6507
      %v6554 = vunpack.c.l.b16 %v6510
      %v6555 = vunpack.c.l.b16 %v6513
      %v6556 = vunpack.c.l.b16 %v6516
      %v6557 = vpack.c.b16 %v6537, %v6537
      %v6558 = vpack.c.b16 %v6538, %v6538
      %v6559 = vpack.c.b16 %v6539, %v6539
      %v6560 = vpack.c.b16 %v6540, %v6540
      %v6561 = vpack.c.b16 %v6541, %v6541
      %v6562 = vpack.c.b16 %v6542, %v6542
      %v6563 = vpack.c.b16 %v6543, %v6543
      %v6564 = vpack.c.b16 %v6544, %v6544
      %v6565 = vpack.c.b16 %v6545, %v6545
      %v6566 = vpack.c.b16 %v6546, %v6546
      %v6567 = vpack.c.b16 %v6547, %v6547
      %v6568 = vpack.c.b16 %v6548, %v6548
      %v6569 = vpack.c.b16 %v6549, %v6549
      %v6570 = vpack.c.b16 %v6550, %v6550
      %v6571 = vpack.c.b16 %v6551, %v6551
      %v6572 = vpack.c.b16 %v6552, %v6552
      %v6573 = vpack.c.b16 %v6553, %v6553
      %v6574 = vpack.c.b16 %v6554, %v6554
      %v6575 = vpack.c.b16 %v6555, %v6555
      %v6576 = vpack.c.b16 %v6556, %v6556
      %v6578 = vshrl.u32 %v6557, 16
      %v6580 = vrot.slane %v6578, 3
      %v6582 = vshrl.u32 %v6558, 16
      %v6584 = vrot.slane %v6582, 3
      %v6586 = vshrl.u32 %v6559, 16
      %v6588 = vrot.slane %v6586, 3
      %v6590 = vshrl.u32 %v6560, 16
      %v6592 = vrot.slane %v6590, 3
      %v6594 = vshrl.u32 %v6561, 16
      %v6596 = vrot.slane %v6594, 3
      %v6598 = vshrl.u32 %v6562, 16
      %v6600 = vrot.slane %v6598, 3
      %v6602 = vshrl.u32 %v6563, 16
      %v6604 = vrot.slane %v6602, 3
      %v6606 = vshrl.u32 %v6564, 16
      %v6608 = vrot.slane %v6606, 3
      %v6610 = vshrl.u32 %v6565, 16
      %v6612 = vrot.slane %v6610, 3
      %v6614 = vshrl.u32 %v6566, 16
      %v6616 = vrot.slane %v6614, 3
      %v6618 = vshrl.u32 %v6567, 16
      %v6620 = vrot.slane %v6618, 3
      %v6622 = vshrl.u32 %v6568, 16
      %v6624 = vrot.slane %v6622, 3
      %v6626 = vshrl.u32 %v6569, 16
      %v6628 = vrot.slane %v6626, 3
      %v6630 = vshrl.u32 %v6570, 16
      %v6632 = vrot.slane %v6630, 3
      %v6634 = vshrl.u32 %v6571, 16
      %v6636 = vrot.slane %v6634, 3
      %v6638 = vshrl.u32 %v6572, 16
      %v6640 = vrot.slane %v6638, 3
      %v6642 = vshrl.u32 %v6573, 16
      %v6644 = vrot.slane %v6642, 3
      %v6646 = vshrl.u32 %v6574, 16
      %v6648 = vrot.slane %v6646, 3
      %v6650 = vshrl.u32 %v6575, 16
      %v6652 = vrot.slane %v6650, 3
      %v6654 = vshrl.u32 %v6576, 16
      %v6656 = vrot.slane %v6654, 3
      %v6717 = vunpack.c.l.b16 %v6457
      %v6718 = vunpack.c.l.b16 %v6458
      %v6719 = vunpack.c.l.b16 %v6460
      %v6720 = vunpack.c.l.b16 %v6461
      %v6721 = vunpack.c.l.b16 %v6463
      %v6722 = vunpack.c.l.b16 %v6464
      %v6723 = vunpack.c.l.b16 %v6466
      %v6724 = vunpack.c.l.b16 %v6467
      %v6725 = vunpack.c.l.b16 %v6469
      %v6726 = vunpack.c.l.b16 %v6470
      %v6727 = vunpack.c.l.b16 %v6472
      %v6728 = vunpack.c.l.b16 %v6473
      %v6729 = vunpack.c.l.b16 %v6475
      %v6730 = vunpack.c.l.b16 %v6476
      %v6731 = vunpack.c.l.b16 %v6478
      %v6732 = vunpack.c.l.b16 %v6479
      %v6733 = vunpack.c.l.b16 %v6481
      %v6734 = vunpack.c.l.b16 %v6482
      %v6735 = vunpack.c.l.b16 %v6484
      %v6736 = vunpack.c.l.b16 %v6485
      %v6737 = vunpack.c.l.b16 %v6487
      %v6738 = vunpack.c.l.b16 %v6488
      %v6739 = vunpack.c.l.b16 %v6490
      %v6740 = vunpack.c.l.b16 %v6491
      %v6741 = vunpack.c.l.b16 %v6493
      %v6742 = vunpack.c.l.b16 %v6494
      %v6743 = vunpack.c.l.b16 %v6496
      %v6744 = vunpack.c.l.b16 %v6497
      %v6745 = vunpack.c.l.b16 %v6499
      %v6746 = vunpack.c.l.b16 %v6500
      %v6747 = vunpack.c.l.b16 %v6502
      %v6748 = vunpack.c.l.b16 %v6503
      %v6749 = vunpack.c.l.b16 %v6505
      %v6750 = vunpack.c.l.b16 %v6506
      %v6751 = vunpack.c.l.b16 %v6508
      %v6752 = vunpack.c.l.b16 %v6509
      %v6753 = vunpack.c.l.b16 %v6511
      %v6754 = vunpack.c.l.b16 %v6512
      %v6755 = vunpack.c.l.b16 %v6514
      %v6756 = vunpack.c.l.b16 %v6515
      %v6757 = vpack.c.b16 %v6718, %v6717
      %v6758 = vpack.c.b16 %v6720, %v6719
      %v6759 = vpack.c.b16 %v6722, %v6721
      %v6760 = vpack.c.b16 %v6724, %v6723
      %v6761 = vpack.c.b16 %v6726, %v6725
      %v6762 = vpack.c.b16 %v6728, %v6727
      %v6763 = vpack.c.b16 %v6730, %v6729
      %v6764 = vpack.c.b16 %v6732, %v6731
      %v6765 = vpack.c.b16 %v6734, %v6733
      %v6766 = vpack.c.b16 %v6736, %v6735
      %v6767 = vpack.c.b16 %v6738, %v6737
      %v6768 = vpack.c.b16 %v6740, %v6739
      %v6769 = vpack.c.b16 %v6742, %v6741
      %v6770 = vpack.c.b16 %v6744, %v6743
      %v6771 = vpack.c.b16 %v6746, %v6745
      %v6772 = vpack.c.b16 %v6748, %v6747
      %v6773 = vpack.c.b16 %v6750, %v6749
      %v6774 = vpack.c.b16 %v6752, %v6751
      %v6775 = vpack.c.b16 %v6754, %v6753
      %v6776 = vpack.c.b16 %v6756, %v6755
      %v6778 = vshrl.u32 %v6757, 16
      %v6780 = vrot.slane %v6778, 7
      %v6781 = vshll.u32 %v6757, 16
      %v6783 = vor.u32 %v6780, %v6781
      %v6784 = vrot.slane %v6578, 7
      %v6785 = vshll.u32 %v6557, 16
      %v6787 = vor.u32 %v6784, %v6785
      %v6788 = vsel %vm2407, %v6780, %v6787
      %v6790 = vshrl.u32 %v6758, 16
      %v6792 = vrot.slane %v6790, 7
      %v6793 = vshll.u32 %v6758, 16
      %v6795 = vor.u32 %v6792, %v6793
      %v6796 = vrot.slane %v6582, 7
      %v6797 = vshll.u32 %v6558, 16
      %v6799 = vor.u32 %v6796, %v6797
      %v6800 = vsel %vm2407, %v6792, %v6799
      %v6802 = vshrl.u32 %v6759, 16
      %v6804 = vrot.slane %v6802, 7
      %v6805 = vshll.u32 %v6759, 16
      %v6807 = vor.u32 %v6804, %v6805
      %v6808 = vrot.slane %v6586, 7
      %v6809 = vshll.u32 %v6559, 16
      %v6811 = vor.u32 %v6808, %v6809
      %v6812 = vsel %vm2407, %v6804, %v6811
      %v6814 = vshrl.u32 %v6760, 16
      %v6816 = vrot.slane %v6814, 7
      %v6817 = vshll.u32 %v6760, 16
      %v6819 = vor.u32 %v6816, %v6817
      %v6820 = vrot.slane %v6590, 7
      %v6821 = vshll.u32 %v6560, 16
      %v6823 = vor.u32 %v6820, %v6821
      %v6824 = vsel %vm2407, %v6816, %v6823
      %v6826 = vshrl.u32 %v6761, 16
      %v6828 = vrot.slane %v6826, 7
      %v6829 = vshll.u32 %v6761, 16
      %v6831 = vor.u32 %v6828, %v6829
      %v6832 = vrot.slane %v6594, 7
      %v6833 = vshll.u32 %v6561, 16
      %v6835 = vor.u32 %v6832, %v6833
      %v6836 = vsel %vm2407, %v6828, %v6835
      %v6838 = vshrl.u32 %v6762, 16
      %v6840 = vrot.slane %v6838, 7
      %v6841 = vshll.u32 %v6762, 16
      %v6843 = vor.u32 %v6840, %v6841
      %v6844 = vrot.slane %v6598, 7
      %v6845 = vshll.u32 %v6562, 16
      %v6847 = vor.u32 %v6844, %v6845
      %v6848 = vsel %vm2407, %v6840, %v6847
      %v6850 = vshrl.u32 %v6763, 16
      %v6852 = vrot.slane %v6850, 7
      %v6853 = vshll.u32 %v6763, 16
      %v6855 = vor.u32 %v6852, %v6853
      %v6856 = vrot.slane %v6602, 7
      %v6857 = vshll.u32 %v6563, 16
      %v6859 = vor.u32 %v6856, %v6857
      %v6860 = vsel %vm2407, %v6852, %v6859
      %v6862 = vshrl.u32 %v6764, 16
      %v6864 = vrot.slane %v6862, 7
      %v6865 = vshll.u32 %v6764, 16
      %v6867 = vor.u32 %v6864, %v6865
      %v6868 = vrot.slane %v6606, 7
      %v6869 = vshll.u32 %v6564, 16
      %v6871 = vor.u32 %v6868, %v6869
      %v6872 = vsel %vm2407, %v6864, %v6871
      %v6874 = vshrl.u32 %v6765, 16
      %v6876 = vrot.slane %v6874, 7
      %v6877 = vshll.u32 %v6765, 16
      %v6879 = vor.u32 %v6876, %v6877
      %v6880 = vrot.slane %v6610, 7
      %v6881 = vshll.u32 %v6565, 16
      %v6883 = vor.u32 %v6880, %v6881
      %v6884 = vsel %vm2407, %v6876, %v6883
      %v6886 = vshrl.u32 %v6766, 16
      %v6888 = vrot.slane %v6886, 7
      %v6889 = vshll.u32 %v6766, 16
      %v6891 = vor.u32 %v6888, %v6889
      %v6892 = vrot.slane %v6614, 7
      %v6893 = vshll.u32 %v6566, 16
      %v6895 = vor.u32 %v6892, %v6893
      %v6896 = vsel %vm2407, %v6888, %v6895
      %v6898 = vshrl.u32 %v6767, 16
      %v6900 = vrot.slane %v6898, 7
      %v6901 = vshll.u32 %v6767, 16
      %v6903 = vor.u32 %v6900, %v6901
      %v6904 = vrot.slane %v6618, 7
      %v6905 = vshll.u32 %v6567, 16
      %v6907 = vor.u32 %v6904, %v6905
      %v6908 = vsel %vm2407, %v6900, %v6907
      %v6910 = vshrl.u32 %v6768, 16
      %v6912 = vrot.slane %v6910, 7
      %v6913 = vshll.u32 %v6768, 16
      %v6915 = vor.u32 %v6912, %v6913
      %v6916 = vrot.slane %v6622, 7
      %v6917 = vshll.u32 %v6568, 16
      %v6919 = vor.u32 %v6916, %v6917
      %v6920 = vsel %vm2407, %v6912, %v6919
      %v6922 = vshrl.u32 %v6769, 16
      %v6924 = vrot.slane %v6922, 7
      %v6925 = vshll.u32 %v6769, 16
      %v6927 = vor.u32 %v6924, %v6925
      %v6928 = vrot.slane %v6626, 7
      %v6929 = vshll.u32 %v6569, 16
      %v6931 = vor.u32 %v6928, %v6929
      %v6932 = vsel %vm2407, %v6924, %v6931
      %v6934 = vshrl.u32 %v6770, 16
      %v6936 = vrot.slane %v6934, 7
      %v6937 = vshll.u32 %v6770, 16
      %v6939 = vor.u32 %v6936, %v6937
      %v6940 = vrot.slane %v6630, 7
      %v6941 = vshll.u32 %v6570, 16
      %v6943 = vor.u32 %v6940, %v6941
      %v6944 = vsel %vm2407, %v6936, %v6943
      %v6946 = vshrl.u32 %v6771, 16
      %v6948 = vrot.slane %v6946, 7
      %v6949 = vshll.u32 %v6771, 16
      %v6951 = vor.u32 %v6948, %v6949
      %v6952 = vrot.slane %v6634, 7
      %v6953 = vshll.u32 %v6571, 16
      %v6955 = vor.u32 %v6952, %v6953
      %v6956 = vsel %vm2407, %v6948, %v6955
      %v6958 = vshrl.u32 %v6772, 16
      %v6960 = vrot.slane %v6958, 7
      %v6961 = vshll.u32 %v6772, 16
      %v6963 = vor.u32 %v6960, %v6961
      %v6964 = vrot.slane %v6638, 7
      %v6965 = vshll.u32 %v6572, 16
      %v6967 = vor.u32 %v6964, %v6965
      %v6968 = vsel %vm2407, %v6960, %v6967
      %v6970 = vshrl.u32 %v6773, 16
      %v6972 = vrot.slane %v6970, 7
      %v6973 = vshll.u32 %v6773, 16
      %v6975 = vor.u32 %v6972, %v6973
      %v6976 = vrot.slane %v6642, 7
      %v6977 = vshll.u32 %v6573, 16
      %v6979 = vor.u32 %v6976, %v6977
      %v6980 = vsel %vm2407, %v6972, %v6979
      %v6982 = vshrl.u32 %v6774, 16
      %v6984 = vrot.slane %v6982, 7
      %v6985 = vshll.u32 %v6774, 16
      %v6987 = vor.u32 %v6984, %v6985
      %v6988 = vrot.slane %v6646, 7
      %v6989 = vshll.u32 %v6574, 16
      %v6991 = vor.u32 %v6988, %v6989
      %v6992 = vsel %vm2407, %v6984, %v6991
      %v6994 = vshrl.u32 %v6775, 16
      %v6996 = vrot.slane %v6994, 7
      %v6997 = vshll.u32 %v6775, 16
      %v6999 = vor.u32 %v6996, %v6997
      %v7000 = vrot.slane %v6650, 7
      %v7001 = vshll.u32 %v6575, 16
      %v7003 = vor.u32 %v7000, %v7001
      %v7004 = vsel %vm2407, %v6996, %v7003
      %v7006 = vshrl.u32 %v6776, 16
      %v7008 = vrot.slane %v7006, 7
      %v7009 = vshll.u32 %v6776, 16
      %v7011 = vor.u32 %v7008, %v7009
      %v7012 = vrot.slane %v6654, 7
      %v7013 = vshll.u32 %v6576, 16
      %v7015 = vor.u32 %v7012, %v7013
      %v7016 = vsel %vm2407, %v7008, %v7015
      %v7037 = vsel %vm2695, %v6580, %v6783
      %v7038 = vsel %vm2695, %v6584, %v6795
      %v7039 = vsel %vm2695, %v6588, %v6807
      %v7040 = vsel %vm2695, %v6592, %v6819
      %v7041 = vsel %vm2695, %v6596, %v6831
      %v7042 = vsel %vm2695, %v6600, %v6843
      %v7043 = vsel %vm2695, %v6604, %v6855
      %v7044 = vsel %vm2695, %v6608, %v6867
      %v7045 = vsel %vm2695, %v6612, %v6879
      %v7046 = vsel %vm2695, %v6616, %v6891
      %v7047 = vsel %vm2695, %v6620, %v6903
      %v7048 = vsel %vm2695, %v6624, %v6915
      %v7049 = vsel %vm2695, %v6628, %v6927
      %v7050 = vsel %vm2695, %v6632, %v6939
      %v7051 = vsel %vm2695, %v6636, %v6951
      %v7052 = vsel %vm2695, %v6640, %v6963
      %v7053 = vsel %vm2695, %v6644, %v6975
      %v7054 = vsel %vm2695, %v6648, %v6987
      %v7055 = vsel %vm2695, %v6652, %v6999
      %v7056 = vsel %vm2695, %v6656, %v7011
      %v7057 = vrot.slane %v6781, 1
      %v7058 = vor.u32 %v6778, %v7057
      %v7059 = vrot.slane %v6785, 1
      %v7060 = vsel %vm2718, %v7058, %v7059
      %v7061 = vor.u32 %v6578, %v7059
      %v7062 = vrot.slane %v6793, 1
      %v7063 = vor.u32 %v6790, %v7062
      %v7064 = vrot.slane %v6797, 1
      %v7065 = vsel %vm2718, %v7063, %v7064
      %v7066 = vor.u32 %v6582, %v7064
      %v7067 = vrot.slane %v6805, 1
      %v7068 = vor.u32 %v6802, %v7067
      %v7069 = vrot.slane %v6809, 1
      %v7070 = vsel %vm2718, %v7068, %v7069
      %v7071 = vor.u32 %v6586, %v7069
      %v7072 = vrot.slane %v6817, 1
      %v7073 = vor.u32 %v6814, %v7072
      %v7074 = vrot.slane %v6821, 1
      %v7075 = vsel %vm2718, %v7073, %v7074
      %v7076 = vor.u32 %v6590, %v7074
      %v7077 = vrot.slane %v6829, 1
      %v7078 = vor.u32 %v6826, %v7077
      %v7079 = vrot.slane %v6833, 1
      %v7080 = vsel %vm2718, %v7078, %v7079
      %v7081 = vor.u32 %v6594, %v7079
      %v7082 = vrot.slane %v6841, 1
      %v7083 = vor.u32 %v6838, %v7082
      %v7084 = vrot.slane %v6845, 1
      %v7085 = vsel %vm2718, %v7083, %v7084
      %v7086 = vor.u32 %v6598, %v7084
      %v7087 = vrot.slane %v6853, 1
      %v7088 = vor.u32 %v6850, %v7087
      %v7089 = vrot.slane %v6857, 1
      %v7090 = vsel %vm2718, %v7088, %v7089
      %v7091 = vor.u32 %v6602, %v7089
      %v7092 = vrot.slane %v6865, 1
      %v7093 = vor.u32 %v6862, %v7092
      %v7094 = vrot.slane %v6869, 1
      %v7095 = vsel %vm2718, %v7093, %v7094
      %v7096 = vor.u32 %v6606, %v7094
      %v7097 = vrot.slane %v6877, 1
      %v7098 = vor.u32 %v6874, %v7097
      %v7099 = vrot.slane %v6881, 1
      %v7100 = vsel %vm2718, %v7098, %v7099
      %v7101 = vor.u32 %v6610, %v7099
      %v7102 = vrot.slane %v6889, 1
      %v7103 = vor.u32 %v6886, %v7102
      %v7104 = vrot.slane %v6893, 1
      %v7105 = vsel %vm2718, %v7103, %v7104
      %v7106 = vor.u32 %v6614, %v7104
      %v7107 = vrot.slane %v6901, 1
      %v7108 = vor.u32 %v6898, %v7107
      %v7109 = vrot.slane %v6905, 1
      %v7110 = vsel %vm2718, %v7108, %v7109
      %v7111 = vor.u32 %v6618, %v7109
      %v7112 = vrot.slane %v6913, 1
      %v7113 = vor.u32 %v6910, %v7112
      %v7114 = vrot.slane %v6917, 1
      %v7115 = vsel %vm2718, %v7113, %v7114
      %v7116 = vor.u32 %v6622, %v7114
      %v7117 = vrot.slane %v6925, 1
      %v7118 = vor.u32 %v6922, %v7117
      %v7119 = vrot.slane %v6929, 1
      %v7120 = vsel %vm2718, %v7118, %v7119
      %v7121 = vor.u32 %v6626, %v7119
      %v7122 = vrot.slane %v6937, 1
      %v7123 = vor.u32 %v6934, %v7122
      %v7124 = vrot.slane %v6941, 1
      %v7125 = vsel %vm2718, %v7123, %v7124
      %v7126 = vor.u32 %v6630, %v7124
      %v7127 = vrot.slane %v6949, 1
      %v7128 = vor.u32 %v6946, %v7127
      %v7129 = vrot.slane %v6953, 1
      %v7130 = vsel %vm2718, %v7128, %v7129
      %v7131 = vor.u32 %v6634, %v7129
      %v7132 = vrot.slane %v6961, 1
      %v7133 = vor.u32 %v6958, %v7132
      %v7134 = vrot.slane %v6965, 1
      %v7135 = vsel %vm2718, %v7133, %v7134
      %v7136 = vor.u32 %v6638, %v7134
      %v7137 = vrot.slane %v6973, 1
      %v7138 = vor.u32 %v6970, %v7137
      %v7139 = vrot.slane %v6977, 1
      %v7140 = vsel %vm2718, %v7138, %v7139
      %v7141 = vor.u32 %v6642, %v7139
      %v7142 = vrot.slane %v6985, 1
      %v7143 = vor.u32 %v6982, %v7142
      %v7144 = vrot.slane %v6989, 1
      %v7145 = vsel %vm2718, %v7143, %v7144
      %v7146 = vor.u32 %v6646, %v7144
      %v7147 = vrot.slane %v6997, 1
      %v7148 = vor.u32 %v6994, %v7147
      %v7149 = vrot.slane %v7001, 1
      %v7150 = vsel %vm2718, %v7148, %v7149
      %v7151 = vor.u32 %v6650, %v7149
      %v7152 = vrot.slane %v7009, 1
      %v7153 = vor.u32 %v7006, %v7152
      %v7154 = vrot.slane %v7013, 1
      %v7155 = vsel %vm2718, %v7153, %v7154
      %v7156 = vor.u32 %v6654, %v7154
      %v7177 = vpack.c.b16 %v6717, %v6717
      %v7178 = vpack.c.b16 %v6719, %v6719
      %v7179 = vpack.c.b16 %v6721, %v6721
      %v7180 = vpack.c.b16 %v6723, %v6723
      %v7181 = vpack.c.b16 %v6725, %v6725
      %v7182 = vpack.c.b16 %v6727, %v6727
      %v7183 = vpack.c.b16 %v6729, %v6729
      %v7184 = vpack.c.b16 %v6731, %v6731
      %v7185 = vpack.c.b16 %v6733, %v6733
      %v7186 = vpack.c.b16 %v6735, %v6735
      %v7187 = vpack.c.b16 %v6737, %v6737
      %v7188 = vpack.c.b16 %v6739, %v6739
      %v7189 = vpack.c.b16 %v6741, %v6741
      %v7190 = vpack.c.b16 %v6743, %v6743
      %v7191 = vpack.c.b16 %v6745, %v6745
      %v7192 = vpack.c.b16 %v6747, %v6747
      %v7193 = vpack.c.b16 %v6749, %v6749
      %v7194 = vpack.c.b16 %v6751, %v6751
      %v7195 = vpack.c.b16 %v6753, %v6753
      %v7196 = vpack.c.b16 %v6755, %v6755
      %v7198 = vshll.u32 %v7177, 16
      %v7200 = vrot.slane %v7198, 5
      %v7202 = vshll.u32 %v7178, 16
      %v7204 = vrot.slane %v7202, 5
      %v7206 = vshll.u32 %v7179, 16
      %v7208 = vrot.slane %v7206, 5
      %v7210 = vshll.u32 %v7180, 16
      %v7212 = vrot.slane %v7210, 5
      %v7214 = vshll.u32 %v7181, 16
      %v7216 = vrot.slane %v7214, 5
      %v7218 = vshll.u32 %v7182, 16
      %v7220 = vrot.slane %v7218, 5
      %v7222 = vshll.u32 %v7183, 16
      %v7224 = vrot.slane %v7222, 5
      %v7226 = vshll.u32 %v7184, 16
      %v7228 = vrot.slane %v7226, 5
      %v7230 = vshll.u32 %v7185, 16
      %v7232 = vrot.slane %v7230, 5
      %v7234 = vshll.u32 %v7186, 16
      %v7236 = vrot.slane %v7234, 5
      %v7238 = vshll.u32 %v7187, 16
      %v7240 = vrot.slane %v7238, 5
      %v7242 = vshll.u32 %v7188, 16
      %v7244 = vrot.slane %v7242, 5
      %v7246 = vshll.u32 %v7189, 16
      %v7248 = vrot.slane %v7246, 5
      %v7250 = vshll.u32 %v7190, 16
      %v7252 = vrot.slane %v7250, 5
      %v7254 = vshll.u32 %v7191, 16
      %v7256 = vrot.slane %v7254, 5
      %v7258 = vshll.u32 %v7192, 16
      %v7260 = vrot.slane %v7258, 5
      %v7262 = vshll.u32 %v7193, 16
      %v7264 = vrot.slane %v7262, 5
      %v7266 = vshll.u32 %v7194, 16
      %v7268 = vrot.slane %v7266, 5
      %v7270 = vshll.u32 %v7195, 16
      %v7272 = vrot.slane %v7270, 5
      %v7274 = vshll.u32 %v7196, 16
      %v7276 = vrot.slane %v7274, 5
      %v7297 = vsel %vm2985, %v7061, %v7200
      %v7298 = vsel %vm2985, %v7066, %v7204
      %v7299 = vsel %vm2985, %v7071, %v7208
      %v7300 = vsel %vm2985, %v7076, %v7212
      %v7301 = vsel %vm2985, %v7081, %v7216
      %v7302 = vsel %vm2985, %v7086, %v7220
      %v7303 = vsel %vm2985, %v7091, %v7224
      %v7304 = vsel %vm2985, %v7096, %v7228
      %v7305 = vsel %vm2985, %v7101, %v7232
      %v7306 = vsel %vm2985, %v7106, %v7236
      %v7307 = vsel %vm2985, %v7111, %v7240
      %v7308 = vsel %vm2985, %v7116, %v7244
      %v7309 = vsel %vm2985, %v7121, %v7248
      %v7310 = vsel %vm2985, %v7126, %v7252
      %v7311 = vsel %vm2985, %v7131, %v7256
      %v7312 = vsel %vm2985, %v7136, %v7260
      %v7313 = vsel %vm2985, %v7141, %v7264
      %v7314 = vsel %vm2985, %v7146, %v7268
      %v7315 = vsel %vm2985, %v7151, %v7272
      %v7316 = vsel %vm2985, %v7156, %v7276
      %v7353 = vunpack.c.l.b16 %v7037
      %v7354 = vunpack.c.l.b16 %v7060
      %v7355 = vunpack.c.h.b16 %v7037
      %v7356 = vunpack.c.h.b16 %v7060
      %v7357 = vunpack.c.l.b16 %v6788
      %v7358 = vunpack.c.l.b16 %v7297
      %v7359 = vunpack.c.l.b16 %v7038
      %v7360 = vunpack.c.l.b16 %v7065
      %v7361 = vunpack.c.h.b16 %v7038
      %v7362 = vunpack.c.h.b16 %v7065
      %v7363 = vunpack.c.l.b16 %v6800
      %v7364 = vunpack.c.l.b16 %v7298
      %v7365 = vunpack.c.l.b16 %v7039
      %v7366 = vunpack.c.l.b16 %v7070
      %v7367 = vunpack.c.h.b16 %v7039
      %v7368 = vunpack.c.h.b16 %v7070
      %v7369 = vunpack.c.l.b16 %v6812
      %v7370 = vunpack.c.l.b16 %v7299
      %v7371 = vunpack.c.l.b16 %v7040
      %v7372 = vunpack.c.l.b16 %v7075
      %v7373 = vunpack.c.h.b16 %v7040
      %v7374 = vunpack.c.h.b16 %v7075
      %v7375 = vunpack.c.l.b16 %v6824
      %v7376 = vunpack.c.l.b16 %v7300
      %v7377 = vunpack.c.l.b16 %v7041
      %v7378 = vunpack.c.l.b16 %v7080
      %v7379 = vunpack.c.h.b16 %v7041
      %v7380 = vunpack.c.h.b16 %v7080
      %v7381 = vunpack.c.l.b16 %v6836
      %v7382 = vunpack.c.l.b16 %v7301
      %v7383 = vunpack.c.l.b16 %v7042
      %v7384 = vunpack.c.l.b16 %v7085
      %v7385 = vunpack.c.h.b16 %v7042
      %v7386 = vunpack.c.h.b16 %v7085
      %v7387 = vunpack.c.l.b16 %v6848
      %v7388 = vunpack.c.l.b16 %v7302
      %v7389 = vunpack.c.l.b16 %v7043
      %v7390 = vunpack.c.l.b16 %v7090
      %v7391 = vunpack.c.h.b16 %v7043
      %v7392 = vunpack.c.h.b16 %v7090
      %v7393 = vunpack.c.l.b16 %v6860
      %v7394 = vunpack.c.l.b16 %v7303
      %v7395 = vunpack.c.l.b16 %v7044
      %v7396 = vunpack.c.l.b16 %v7095
      %v7397 = vunpack.c.h.b16 %v7044
      %v7398 = vunpack.c.h.b16 %v7095
      %v7399 = vunpack.c.l.b16 %v6872
      %v7400 = vunpack.c.l.b16 %v7304
      %v7401 = vunpack.c.l.b16 %v7045
      %v7402 = vunpack.c.l.b16 %v7100
      %v7403 = vunpack.c.h.b16 %v7045
      %v7404 = vunpack.c.h.b16 %v7100
      %v7405 = vunpack.c.l.b16 %v6884
      %v7406 = vunpack.c.l.b16 %v7305
      %v7407 = vunpack.c.l.b16 %v7046
      %v7408 = vunpack.c.l.b16 %v7105
      %v7409 = vunpack.c.h.b16 %v7046
      %v7410 = vunpack.c.h.b16 %v7105
      %v7411 = vunpack.c.l.b16 %v6896
      %v7412 = vunpack.c.l.b16 %v7306
      %v7413 = vunpack.c.l.b16 %v7047
      %v7414 = vunpack.c.l.b16 %v7110
      %v7415 = vunpack.c.h.b16 %v7047
      %v7416 = vunpack.c.h.b16 %v7110
      %v7417 = vunpack.c.l.b16 %v6908
      %v7418 = vunpack.c.l.b16 %v7307
      %v7419 = vunpack.c.l.b16 %v7048
      %v7420 = vunpack.c.l.b16 %v7115
      %v7421 = vunpack.c.h.b16 %v7048
      %v7422 = vunpack.c.h.b16 %v7115
      %v7423 = vunpack.c.l.b16 %v6920
      %v7424 = vunpack.c.l.b16 %v7308
      %v7425 = vunpack.c.l.b16 %v7049
      %v7426 = vunpack.c.l.b16 %v7120
      %v7427 = vunpack.c.h.b16 %v7049
      %v7428 = vunpack.c.h.b16 %v7120
      %v7429 = vunpack.c.l.b16 %v6932
      %v7430 = vunpack.c.l.b16 %v7309
      %v7431 = vunpack.c.l.b16 %v7050
      %v7432 = vunpack.c.l.b16 %v7125
      %v7433 = vunpack.c.h.b16 %v7050
      %v7434 = vunpack.c.h.b16 %v7125
      %v7435 = vunpack.c.l.b16 %v6944
      %v7436 = vunpack.c.l.b16 %v7310
      %v7437 = vunpack.c.l.b16 %v7051
      %v7438 = vunpack.c.l.b16 %v7130
      %v7439 = vunpack.c.h.b16 %v7051
      %v7440 = vunpack.c.h.b16 %v7130
      %v7441 = vunpack.c.l.b16 %v6956
      %v7442 = vunpack.c.l.b16 %v7311
      %v7443 = vunpack.c.l.b16 %v7052
      %v7444 = vunpack.c.l.b16 %v7135
      %v7445 = vunpack.c.h.b16 %v7052
      %v7446 = vunpack.c.h.b16 %v7135
      %v7447 = vunpack.c.l.b16 %v6968
      %v7448 = vunpack.c.l.b16 %v7312
      %v7449 = vunpack.c.l.b16 %v7053
      %v7450 = vunpack.c.l.b16 %v7140
      %v7451 = vunpack.c.h.b16 %v7053
      %v7452 = vunpack.c.h.b16 %v7140
      %v7453 = vunpack.c.l.b16 %v6980
      %v7454 = vunpack.c.l.b16 %v7313
      %v7455 = vunpack.c.l.b16 %v7054
      %v7456 = vunpack.c.l.b16 %v7145
      %v7457 = vunpack.c.h.b16 %v7054
      %v7458 = vunpack.c.h.b16 %v7145
      %v7459 = vunpack.c.l.b16 %v6992
      %v7460 = vunpack.c.l.b16 %v7314
      %v7461 = vld [vmem:[%s7] sm:$0xf]
      %v7462 = vld [vmem:[%s7 + $0x4] sm:$0xf]
      %v7463 = vld [vmem:[%s7 + $0x8] sm:$0xf]
      %v7464 = vld [vmem:[%s7 + $0xc] sm:$0xf]
      %v7465 = vld [vmem:[%s7 + $0x10] sm:$0xf]
      %v7466 = vld [vmem:[%s7 + $0x14] sm:$0xf]
      %v7467 = vld [vmem:[%s7 + $0x18] sm:$0xf]
      %v7468 = vld [vmem:[%s7 + $0x1c] sm:$0xf]
      %v7469 = vld [vmem:[%s7 + $0x20] sm:$0xf]
      %v7470 = vld [vmem:[%s7 + $0x24] sm:$0xf]
      %v7471 = vld [vmem:[%s7 + $0x28] sm:$0xf]
      %v7472 = vld [vmem:[%s7 + $0x2c] sm:$0xf]
      %v7473 = vld [vmem:[%s7 + $0x30] sm:$0xf]
      %v7474 = vld [vmem:[%s7 + $0x34] sm:$0xf]
      %v7475 = vld [vmem:[%s7 + $0x38] sm:$0xf]
      %v7476 = vld [vmem:[%s7 + $0x3c] sm:$0xf]
      %v7477 = vld [vmem:[%s7 + $0x40] sm:$0xf]
      %v7478 = vld [vmem:[%s7 + $0x44] sm:$0xf]
      %v7479 = vld [vmem:[%s7 + $0x48] sm:$0xf]
      %v7480 = vld [vmem:[%s7 + $0x4c] sm:$0xf]
      %v7481 = vld [vmem:[%s7 + $0x50] sm:$0xf]
      %v7482 = vld [vmem:[%s7 + $0x54] sm:$0xf]
      %v7483 = vld [vmem:[%s7 + $0x58] sm:$0xf]
      %v7484 = vld [vmem:[%s7 + $0x5c] sm:$0xf]
      %v7485 = vld [vmem:[%s7 + $0x60] sm:$0xf]
      %v7486 = vld [vmem:[%s7 + $0x64] sm:$0xf]
      %v7487 = vld [vmem:[%s7 + $0x68] sm:$0xf]
      %v7488 = vld [vmem:[%s7 + $0x6c] sm:$0xf]
      %v7489 = vld [vmem:[%s7 + $0x70] sm:$0xf]
      %v7490 = vld [vmem:[%s7 + $0x74] sm:$0xf]
      %v7491 = vld [vmem:[%s7 + $0x78] sm:$0xf]
      %v7492 = vld [vmem:[%s7 + $0x7c] sm:$0xf]
      %v7493 = vld [vmem:[%s7 + $0x80] sm:$0xf]
      %v7494 = vld [vmem:[%s7 + $0x84] sm:$0xf]
      %v7495 = vld [vmem:[%s7 + $0x88] sm:$0xf]
      %v7496 = vld [vmem:[%s7 + $0x8c] sm:$0xf]
      %v7497 = vld [vmem:[%s7 + $0x90] sm:$0xf]
      %v7498 = vld [vmem:[%s7 + $0x94] sm:$0xf]
      %v7499 = vld [vmem:[%s7 + $0x98] sm:$0xf]
      %v7500 = vld [vmem:[%s7 + $0x9c] sm:$0xf]
      %v7501 = vld [vmem:[%s7 + $0xa0] sm:$0xf]
      %v7502 = vld [vmem:[%s7 + $0xa4] sm:$0xf]
      %v7503 = vld [vmem:[%s7 + $0xa8] sm:$0xf]
      %v7504 = vld [vmem:[%s7 + $0xac] sm:$0xf]
      %v7505 = vld [vmem:[%s7 + $0xb0] sm:$0xf]
      %v7506 = vld [vmem:[%s7 + $0xb4] sm:$0xf]
      %v7507 = vld [vmem:[%s7 + $0xb8] sm:$0xf]
      %v7508 = vld [vmem:[%s7 + $0xbc] sm:$0xf]
      %v7511 = vunpack.c.l.b16 %v7055
      %v7512 = vunpack.c.l.b16 %v7150
      %v7513 = vunpack.c.h.b16 %v7055
      %v7514 = vunpack.c.h.b16 %v7150
      %v7515 = vunpack.c.l.b16 %v7004
      %v7516 = vunpack.c.l.b16 %v7315
      %s7517 = scalar_lea.vmem %s7, 192
      %v7518 = vld [vmem:[%s7517] sm:$0xf]
      %v7519 = vld [vmem:[%s7517 + $0x4] sm:$0xf]
      %v7520 = vld [vmem:[%s7517 + $0x8] sm:$0xf]
      %v7521 = vld [vmem:[%s7517 + $0xc] sm:$0xf]
      %v7522 = vld [vmem:[%s7517 + $0x10] sm:$0xf]
      %v7523 = vld [vmem:[%s7517 + $0x14] sm:$0xf]
      %v7524 = vld [vmem:[%s7517 + $0x18] sm:$0xf]
      %v7525 = vld [vmem:[%s7517 + $0x1c] sm:$0xf]
      %v7526 = vld [vmem:[%s7517 + $0x20] sm:$0xf]
      %v7527 = vld [vmem:[%s7517 + $0x24] sm:$0xf]
      %v7528 = vld [vmem:[%s7517 + $0x28] sm:$0xf]
      %v7529 = vld [vmem:[%s7517 + $0x2c] sm:$0xf]
      %v7530 = vld [vmem:[%s7517 + $0x30] sm:$0xf]
      %v7531 = vld [vmem:[%s7517 + $0x34] sm:$0xf]
      %v7532 = vld [vmem:[%s7517 + $0x38] sm:$0xf]
      %v7533 = vld [vmem:[%s7517 + $0x3c] sm:$0xf]
      %v7534 = vld [vmem:[%s7517 + $0x40] sm:$0xf]
      %v7535 = vld [vmem:[%s7517 + $0x44] sm:$0xf]
      %v7536 = vld [vmem:[%s7517 + $0x48] sm:$0xf]
      %v7537 = vld [vmem:[%s7517 + $0x4c] sm:$0xf]
      %v7538 = vld [vmem:[%s7517 + $0x50] sm:$0xf]
      %v7539 = vld [vmem:[%s7517 + $0x54] sm:$0xf]
      %v7540 = vld [vmem:[%s7517 + $0x58] sm:$0xf]
      %v7541 = vld [vmem:[%s7517 + $0x5c] sm:$0xf]
      %v7542 = vld [vmem:[%s7517 + $0x60] sm:$0xf]
      %v7543 = vld [vmem:[%s7517 + $0x64] sm:$0xf]
      %v7544 = vld [vmem:[%s7517 + $0x68] sm:$0xf]
      %v7545 = vld [vmem:[%s7517 + $0x6c] sm:$0xf]
      %v7546 = vld [vmem:[%s7517 + $0x70] sm:$0xf]
      %v7547 = vld [vmem:[%s7517 + $0x74] sm:$0xf]
      %v7548 = vld [vmem:[%s7517 + $0x78] sm:$0xf]
      %v7549 = vld [vmem:[%s7517 + $0x7c] sm:$0xf]
      %v7550 = vld [vmem:[%s7517 + $0x80] sm:$0xf]
      %v7551 = vld [vmem:[%s7517 + $0x84] sm:$0xf]
      %v7552 = vld [vmem:[%s7517 + $0x88] sm:$0xf]
      %v7553 = vld [vmem:[%s7517 + $0x8c] sm:$0xf]
      %v7554 = vld [vmem:[%s7517 + $0x90] sm:$0xf]
      %v7555 = vld [vmem:[%s7517 + $0x94] sm:$0xf]
      %v7556 = vld [vmem:[%s7517 + $0x98] sm:$0xf]
      %v7557 = vld [vmem:[%s7517 + $0x9c] sm:$0xf]
      %v7558 = vld [vmem:[%s7517 + $0xa0] sm:$0xf]
      %v7559 = vld [vmem:[%s7517 + $0xa4] sm:$0xf]
      %v7560 = vld [vmem:[%s7517 + $0xa8] sm:$0xf]
      %v7561 = vld [vmem:[%s7517 + $0xac] sm:$0xf]
      %v7562 = vld [vmem:[%s7517 + $0xb0] sm:$0xf]
      %v7563 = vld [vmem:[%s7517 + $0xb4] sm:$0xf]
      %v7564 = vld [vmem:[%s7517 + $0xb8] sm:$0xf]
      %v7565 = vld [vmem:[%s7517 + $0xbc] sm:$0xf]
      %v7566 = vpack.c.b16 %v7361, %v7359
      %v7567 = vpack.c.b16 %v7362, %v7360
      %v7568 = vpack.c.b16 %v7365, %v7363
      %v7569 = vpack.c.b16 %v6721, %v6538
      %v7570 = vpack.c.b16 %v7366, %v7364
      %v7571 = vpack.c.b16 %v7369, %v7367
      %v7572 = vpack.c.b16 %v6539, %v6722
      %v7573 = vpack.c.b16 %v7370, %v7368
      %v7574 = vpack.c.b16 %v7373, %v7371
      %v7575 = vpack.c.b16 %v7374, %v7372
      %v7576 = vpack.c.b16 %v7377, %v7375
      %v7577 = vpack.c.b16 %v6725, %v6540
      %v7578 = vpack.c.b16 %v7378, %v7376
      %v7579 = vpack.c.b16 %v7381, %v7379
      %v7580 = vpack.c.b16 %v6541, %v6726
      %v7581 = vpack.c.b16 %v7382, %v7380
      %v7582 = vpack.c.b16 %v7385, %v7383
      %v7583 = vpack.c.b16 %v7386, %v7384
      %v7584 = vpack.c.b16 %v7389, %v7387
      %v7585 = vpack.c.b16 %v6729, %v6542
      %v7586 = vpack.c.b16 %v7390, %v7388
      %v7587 = vpack.c.b16 %v7393, %v7391
      %v7588 = vpack.c.b16 %v6543, %v6730
      %v7589 = vpack.c.b16 %v7394, %v7392
      %v7590 = vpack.c.b16 %v7397, %v7395
      %v7591 = vpack.c.b16 %v7398, %v7396
      %v7592 = vpack.c.b16 %v7401, %v7399
      %v7593 = vpack.c.b16 %v6733, %v6544
      %v7594 = vpack.c.b16 %v7402, %v7400
      %v7595 = vpack.c.b16 %v7405, %v7403
      %v7596 = vpack.c.b16 %v6545, %v6734
      %v7597 = vpack.c.b16 %v7406, %v7404
      %v7598 = vpack.c.b16 %v7409, %v7407
      %v7599 = vpack.c.b16 %v7410, %v7408
      %v7600 = vpack.c.b16 %v7413, %v7411
      %v7601 = vpack.c.b16 %v6737, %v6546
      %v7602 = vpack.c.b16 %v7414, %v7412
      %v7603 = vpack.c.b16 %v7417, %v7415
      %v7604 = vpack.c.b16 %v6547, %v6738
      %v7605 = vpack.c.b16 %v7418, %v7416
      %v7606 = vpack.c.b16 %v7421, %v7419
      %v7607 = vpack.c.b16 %v7422, %v7420
      %v7608 = vpack.c.b16 %v7425, %v7423
      %v7609 = vpack.c.b16 %v6741, %v6548
      %v7610 = vpack.c.b16 %v7426, %v7424
      %v7611 = vpack.c.b16 %v7429, %v7427
      %v7612 = vpack.c.b16 %v6549, %v6742
      %v7613 = vpack.c.b16 %v7430, %v7428
      %v7614 = vpack.c.b16 %v7433, %v7431
      %v7615 = vpack.c.b16 %v7434, %v7432
      %v7616 = vpack.c.b16 %v7437, %v7435
      %v7617 = vpack.c.b16 %v6745, %v6550
      %v7618 = vpack.c.b16 %v7438, %v7436
      %v7619 = vpack.c.b16 %v7441, %v7439
      %v7620 = vpack.c.b16 %v6551, %v6746
      %v7621 = vpack.c.b16 %v7442, %v7440
      %v7622 = vpack.c.b16 %v7445, %v7443
      %v7623 = vpack.c.b16 %v7446, %v7444
      %v7624 = vpack.c.b16 %v7449, %v7447
      %v7625 = vpack.c.b16 %v6749, %v6552
      %v7626 = vpack.c.b16 %v7450, %v7448
      %v7627 = vpack.c.b16 %v7453, %v7451
      %v7628 = vpack.c.b16 %v6553, %v6750
      %v7629 = vpack.c.b16 %v7454, %v7452
      %v7630 = vpack.c.b16 %v7457, %v7455
      %v7631 = vpack.c.b16 %v7458, %v7456
      %v7632 = vpack.c.b16 %v7511, %v7459
      %v7633 = vpack.c.b16 %v6753, %v6554
      %v7634 = vpack.c.b16 %v7512, %v7460
      %v7635 = vpack.c.b16 %v7515, %v7513
      %v7636 = vpack.c.b16 %v6555, %v6754
      %v7637 = vpack.c.b16 %v7516, %v7514
      %v7767 = vunpack.c.l.b16 %v7518
      %v7768 = vunpack.c.l.b16 %v7519
      %v7769 = vunpack.c.l.b16 %v7520
      %v7770 = vunpack.c.l.b16 %v7521
      %v7771 = vunpack.c.l.b16 %v7522
      %v7772 = vunpack.c.l.b16 %v7523
      %v7773 = vunpack.c.l.b16 %v7524
      %v7774 = vunpack.c.l.b16 %v7525
      %v7775 = vunpack.c.l.b16 %v7526
      %v7776 = vunpack.c.l.b16 %v7527
      %v7777 = vunpack.c.l.b16 %v7528
      %v7778 = vunpack.c.l.b16 %v7529
      %v7779 = vunpack.c.l.b16 %v7530
      %v7780 = vunpack.c.l.b16 %v7531
      %v7781 = vunpack.c.l.b16 %v7532
      %v7782 = vunpack.c.l.b16 %v7533
      %v7783 = vunpack.c.l.b16 %v7534
      %v7784 = vunpack.c.l.b16 %v7535
      %v7785 = vunpack.c.l.b16 %v7536
      %v7786 = vunpack.c.l.b16 %v7537
      %v7787 = vunpack.c.l.b16 %v7538
      %v7788 = vunpack.c.l.b16 %v7539
      %v7789 = vunpack.c.l.b16 %v7540
      %v7790 = vunpack.c.l.b16 %v7541
      %v7791 = vunpack.c.l.b16 %v7542
      %v7792 = vunpack.c.l.b16 %v7543
      %v7793 = vunpack.c.l.b16 %v7544
      %v7794 = vunpack.c.l.b16 %v7545
      %v7795 = vunpack.c.l.b16 %v7546
      %v7796 = vunpack.c.l.b16 %v7547
      %v7797 = vunpack.c.l.b16 %v7548
      %v7798 = vunpack.c.l.b16 %v7549
      %v7799 = vunpack.c.l.b16 %v7550
      %v7800 = vunpack.c.l.b16 %v7551
      %v7801 = vunpack.c.l.b16 %v7552
      %v7802 = vunpack.c.l.b16 %v7553
      %v7803 = vunpack.c.l.b16 %v7554
      %v7804 = vunpack.c.l.b16 %v7555
      %v7805 = vunpack.c.l.b16 %v7556
      %v7806 = vunpack.c.l.b16 %v7557
      %v7807 = vunpack.c.l.b16 %v7558
      %v7808 = vunpack.c.l.b16 %v7559
      %v7809 = vunpack.c.l.b16 %v7560
      %v7810 = vunpack.c.l.b16 %v7561
      %v7811 = vunpack.c.l.b16 %v7562
      %v7812 = vunpack.c.l.b16 %v7563
      %v7813 = vunpack.c.l.b16 %v7564
      %v7814 = vunpack.c.l.b16 %v7565
      %v7815 = vpack.c.b16 %v7768, %v7767
      %v7816 = vpack.c.b16 %v7770, %v7769
      %v7817 = vpack.c.b16 %v7772, %v7771
      %v7818 = vpack.c.b16 %v7774, %v7773
      %v7819 = vpack.c.b16 %v7776, %v7775
      %v7820 = vpack.c.b16 %v7778, %v7777
      %v7821 = vpack.c.b16 %v7780, %v7779
      %v7822 = vpack.c.b16 %v7782, %v7781
      %v7823 = vpack.c.b16 %v7784, %v7783
      %v7824 = vpack.c.b16 %v7786, %v7785
      %v7825 = vpack.c.b16 %v7788, %v7787
      %v7826 = vpack.c.b16 %v7790, %v7789
      %v7827 = vpack.c.b16 %v7792, %v7791
      %v7828 = vpack.c.b16 %v7794, %v7793
      %v7829 = vpack.c.b16 %v7796, %v7795
      %v7830 = vpack.c.b16 %v7798, %v7797
      %v7831 = vpack.c.b16 %v7800, %v7799
      %v7832 = vpack.c.b16 %v7802, %v7801
      %v7833 = vpack.c.b16 %v7804, %v7803
      %v7834 = vpack.c.b16 %v7806, %v7805
      %v7835 = vpack.c.b16 %v7808, %v7807
      %v7836 = vpack.c.b16 %v7810, %v7809
      %v7837 = vpack.c.b16 %v7812, %v7811
      %v7838 = vpack.c.b16 %v7814, %v7813
      %7863 = vmatpush.bf16.msra.mxu0 %v7822
      %7864 = vmatpush.bf16.msra.mxu0 %v7821
      %7865 = vmatpush.bf16.msra.mxu0 %v7820
      %7866 = vmatpush.bf16.msra.mxu0 %v7819
      %7867 = vmatpush.bf16.msra.mxu0 %v7818
      %7868 = vmatpush.bf16.msra.mxu0 %v7817
      %7869 = vmatpush.bf16.msra.mxu0 %v7816
      %7870 = vmatpush.bf16.msra.mxu0 %v7815
      %7871 = vmatmul.bf16.gmra.mxu0 %v7566
      %v7872 = vpop.f32.mrf.mxu0
      %v7873 = vadd.f32 0.0, %v7872
      %v7874 = vpop.f32.mrf.mxu0
      %v7875 = vadd.f32 0.0, %v7874
      %7876 = vmatmul.bf16.gmra.mxu0 %v7568
      %v7877 = vpop.f32.mrf.mxu0
      %v7878 = vadd.f32 0.0, %v7877
      %v7879 = vpop.f32.mrf.mxu0
      %v7880 = vadd.f32 0.0, %v7879
      %7881 = vmatmul.bf16.gmra.mxu0 %v7571
      %v7882 = vpop.f32.mrf.mxu0
      %v7883 = vadd.f32 0.0, %v7882
      %v7884 = vpop.f32.mrf.mxu0
      %v7885 = vadd.f32 0.0, %v7884
      %7886 = vmatmul.bf16.gmra.mxu0 %v7574
      %v7887 = vpop.f32.mrf.mxu0
      %v7888 = vadd.f32 0.0, %v7887
      %v7889 = vpop.f32.mrf.mxu0
      %v7890 = vadd.f32 0.0, %v7889
      %7891 = vmatmul.bf16.gmra.mxu0 %v7576
      %v7892 = vpop.f32.mrf.mxu0
      %v7893 = vadd.f32 0.0, %v7892
      %v7894 = vpop.f32.mrf.mxu0
      %v7895 = vadd.f32 0.0, %v7894
      %7896 = vmatmul.bf16.gmra.mxu0 %v7579
      %v7897 = vpop.f32.mrf.mxu0
      %v7898 = vadd.f32 0.0, %v7897
      %v7899 = vpop.f32.mrf.mxu0
      %v7900 = vadd.f32 0.0, %v7899
      %7901 = vmatmul.bf16.gmra.mxu0 %v7582
      %v7902 = vpop.f32.mrf.mxu0
      %v7903 = vadd.f32 0.0, %v7902
      %v7904 = vpop.f32.mrf.mxu0
      %v7905 = vadd.f32 0.0, %v7904
      %7906 = vmatmul.bf16.gmra.mxu0 %v7584
      %v7907 = vpop.f32.mrf.mxu0
      %v7908 = vadd.f32 0.0, %v7907
      %v7909 = vpop.f32.mrf.mxu0
      %v7910 = vadd.f32 0.0, %v7909
      %7911 = vmatmul.bf16.gmra.mxu0 %v7587
      %v7912 = vpop.f32.mrf.mxu0
      %v7913 = vadd.f32 0.0, %v7912
      %v7914 = vpop.f32.mrf.mxu0
      %v7915 = vadd.f32 0.0, %v7914
      %7916 = vmatmul.bf16.gmra.mxu0 %v7590
      %v7917 = vpop.f32.mrf.mxu0
      %v7918 = vadd.f32 0.0, %v7917
      %v7919 = vpop.f32.mrf.mxu0
      %v7920 = vadd.f32 0.0, %v7919
      %7921 = vmatmul.bf16.gmra.mxu0 %v7592
      %v7922 = vpop.f32.mrf.mxu0
      %v7923 = vadd.f32 0.0, %v7922
      %v7924 = vpop.f32.mrf.mxu0
      %v7925 = vadd.f32 0.0, %v7924
      %7926 = vmatmul.bf16.gmra.mxu0 %v7595
      %v7927 = vpop.f32.mrf.mxu0
      %v7928 = vadd.f32 0.0, %v7927
      %v7929 = vpop.f32.mrf.mxu0
      %v7930 = vadd.f32 0.0, %v7929
      %7931 = vmatmul.bf16.gmra.mxu0 %v7598
      %v7932 = vpop.f32.mrf.mxu0
      %v7933 = vadd.f32 0.0, %v7932
      %v7934 = vpop.f32.mrf.mxu0
      %v7935 = vadd.f32 0.0, %v7934
      %7936 = vmatmul.bf16.gmra.mxu0 %v7600
      %v7937 = vpop.f32.mrf.mxu0
      %v7938 = vadd.f32 0.0, %v7937
      %v7939 = vpop.f32.mrf.mxu0
      %v7940 = vadd.f32 0.0, %v7939
      %7941 = vmatmul.bf16.gmra.mxu0 %v7603
      %v7942 = vpop.f32.mrf.mxu0
      %v7943 = vadd.f32 0.0, %v7942
      %v7944 = vpop.f32.mrf.mxu0
      %v7945 = vadd.f32 0.0, %v7944
      %7946 = vmatmul.bf16.gmra.mxu0 %v7606
      %v7947 = vpop.f32.mrf.mxu0
      %v7948 = vadd.f32 0.0, %v7947
      %v7949 = vpop.f32.mrf.mxu0
      %v7950 = vadd.f32 0.0, %v7949
      %7951 = vmatmul.bf16.gmra.mxu0 %v7608
      %v7952 = vpop.f32.mrf.mxu0
      %v7953 = vadd.f32 0.0, %v7952
      %v7954 = vpop.f32.mrf.mxu0
      %v7955 = vadd.f32 0.0, %v7954
      %7956 = vmatmul.bf16.gmra.mxu0 %v7611
      %v7957 = vpop.f32.mrf.mxu0
      %v7958 = vadd.f32 0.0, %v7957
      %v7959 = vpop.f32.mrf.mxu0
      %v7960 = vadd.f32 0.0, %v7959
      %7961 = vmatmul.bf16.gmra.mxu0 %v7614
      %v7962 = vpop.f32.mrf.mxu0
      %v7963 = vadd.f32 0.0, %v7962
      %v7964 = vpop.f32.mrf.mxu0
      %v7965 = vadd.f32 0.0, %v7964
      %7966 = vmatmul.bf16.gmra.mxu0 %v7616
      %v7967 = vpop.f32.mrf.mxu0
      %v7968 = vadd.f32 0.0, %v7967
      %v7969 = vpop.f32.mrf.mxu0
      %v7970 = vadd.f32 0.0, %v7969
      %7971 = vmatmul.bf16.gmra.mxu0 %v7619
      %v7972 = vpop.f32.mrf.mxu0
      %v7973 = vadd.f32 0.0, %v7972
      %v7974 = vpop.f32.mrf.mxu0
      %v7975 = vadd.f32 0.0, %v7974
      %7976 = vmatmul.bf16.gmra.mxu0 %v7622
      %v7977 = vpop.f32.mrf.mxu0
      %v7978 = vadd.f32 0.0, %v7977
      %v7979 = vpop.f32.mrf.mxu0
      %v7980 = vadd.f32 0.0, %v7979
      %7981 = vmatmul.bf16.gmra.mxu0 %v7624
      %v7982 = vpop.f32.mrf.mxu0
      %v7983 = vadd.f32 0.0, %v7982
      %v7984 = vpop.f32.mrf.mxu0
      %v7985 = vadd.f32 0.0, %v7984
      %7986 = vmatmul.bf16.gmra.mxu0 %v7627
      %v7987 = vpop.f32.mrf.mxu0
      %v7988 = vadd.f32 0.0, %v7987
      %v7989 = vpop.f32.mrf.mxu0
      %v7990 = vadd.f32 0.0, %v7989
      %7991 = vmatmul.bf16.gmra.mxu0 %v7630
      %v7992 = vpop.f32.mrf.mxu0
      %v7993 = vadd.f32 0.0, %v7992
      %v7994 = vpop.f32.mrf.mxu0
      %v7995 = vadd.f32 0.0, %v7994
      %7996 = vmatmul.bf16.gmra.mxu0 %v7632
      %v7997 = vpop.f32.mrf.mxu0
      %v7998 = vadd.f32 0.0, %v7997
      %v7999 = vpop.f32.mrf.mxu0
      %v8000 = vadd.f32 0.0, %v7999
      %8001 = vmatmul.bf16.gmra.mxu0 %v7635
      %v8002 = vpop.f32.mrf.mxu0
      %v8003 = vadd.f32 0.0, %v8002
      %v8004 = vpop.f32.mrf.mxu0
      %v8005 = vadd.f32 0.0, %v8004
      %8006 = vdwg.mxu0
      %8007 = vmatpush.bf16.msra.mxu0 %v7830
      %8008 = vmatpush.bf16.msra.mxu0 %v7829
      %8009 = vmatpush.bf16.msra.mxu0 %v7828
      %8010 = vmatpush.bf16.msra.mxu0 %v7827
      %8011 = vmatpush.bf16.msra.mxu0 %v7826
      %8012 = vmatpush.bf16.msra.mxu0 %v7825
      %8013 = vmatpush.bf16.msra.mxu0 %v7824
      %8014 = vmatpush.bf16.msra.mxu0 %v7823
      %8015 = vmatmul.bf16.gmra.mxu0 %v6758
      %v8016 = vpop.f32.mrf.mxu0
      %v8017 = vadd.f32 %v7873, %v8016
      %v8018 = vpop.f32.mrf.mxu0
      %v8019 = vadd.f32 %v7875, %v8018
      %8020 = vmatmul.bf16.gmra.mxu0 %v7569
      %v8021 = vpop.f32.mrf.mxu0
      %v8022 = vadd.f32 %v7878, %v8021
      %v8023 = vpop.f32.mrf.mxu0
      %v8024 = vadd.f32 %v7880, %v8023
      %8025 = vmatmul.bf16.gmra.mxu0 %v7572
      %v8026 = vpop.f32.mrf.mxu0
      %v8027 = vadd.f32 %v7883, %v8026
      %v8028 = vpop.f32.mrf.mxu0
      %v8029 = vadd.f32 %v7885, %v8028
      %8030 = vmatmul.bf16.gmra.mxu0 %v6760
      %v8031 = vpop.f32.mrf.mxu0
      %v8032 = vadd.f32 %v7888, %v8031
      %v8033 = vpop.f32.mrf.mxu0
      %v8034 = vadd.f32 %v7890, %v8033
      %8035 = vmatmul.bf16.gmra.mxu0 %v7577
      %v8036 = vpop.f32.mrf.mxu0
      %v8037 = vadd.f32 %v7893, %v8036
      %v8038 = vpop.f32.mrf.mxu0
      %v8039 = vadd.f32 %v7895, %v8038
      %8040 = vmatmul.bf16.gmra.mxu0 %v7580
      %v8041 = vpop.f32.mrf.mxu0
      %v8042 = vadd.f32 %v7898, %v8041
      %v8043 = vpop.f32.mrf.mxu0
      %v8044 = vadd.f32 %v7900, %v8043
      %8045 = vmatmul.bf16.gmra.mxu0 %v6762
      %v8046 = vpop.f32.mrf.mxu0
      %v8047 = vadd.f32 %v7903, %v8046
      %v8048 = vpop.f32.mrf.mxu0
      %v8049 = vadd.f32 %v7905, %v8048
      %8050 = vmatmul.bf16.gmra.mxu0 %v7585
      %v8051 = vpop.f32.mrf.mxu0
      %v8052 = vadd.f32 %v7908, %v8051
      %v8053 = vpop.f32.mrf.mxu0
      %v8054 = vadd.f32 %v7910, %v8053
      %8055 = vmatmul.bf16.gmra.mxu0 %v7588
      %v8056 = vpop.f32.mrf.mxu0
      %v8057 = vadd.f32 %v7913, %v8056
      %v8058 = vpop.f32.mrf.mxu0
      %v8059 = vadd.f32 %v7915, %v8058
      %8060 = vmatmul.bf16.gmra.mxu0 %v6764
      %v8061 = vpop.f32.mrf.mxu0
      %v8062 = vadd.f32 %v7918, %v8061
      %v8063 = vpop.f32.mrf.mxu0
      %v8064 = vadd.f32 %v7920, %v8063
      %8065 = vmatmul.bf16.gmra.mxu0 %v7593
      %v8066 = vpop.f32.mrf.mxu0
      %v8067 = vadd.f32 %v7923, %v8066
      %v8068 = vpop.f32.mrf.mxu0
      %v8069 = vadd.f32 %v7925, %v8068
      %8070 = vmatmul.bf16.gmra.mxu0 %v7596
      %v8071 = vpop.f32.mrf.mxu0
      %v8072 = vadd.f32 %v7928, %v8071
      %v8073 = vpop.f32.mrf.mxu0
      %v8074 = vadd.f32 %v7930, %v8073
      %8075 = vmatmul.bf16.gmra.mxu0 %v6766
      %v8076 = vpop.f32.mrf.mxu0
      %v8077 = vadd.f32 %v7933, %v8076
      %v8078 = vpop.f32.mrf.mxu0
      %v8079 = vadd.f32 %v7935, %v8078
      %8080 = vmatmul.bf16.gmra.mxu0 %v7601
      %v8081 = vpop.f32.mrf.mxu0
      %v8082 = vadd.f32 %v7938, %v8081
      %v8083 = vpop.f32.mrf.mxu0
      %v8084 = vadd.f32 %v7940, %v8083
      %8085 = vmatmul.bf16.gmra.mxu0 %v7604
      %v8086 = vpop.f32.mrf.mxu0
      %v8087 = vadd.f32 %v7943, %v8086
      %v8088 = vpop.f32.mrf.mxu0
      %v8089 = vadd.f32 %v7945, %v8088
      %8090 = vmatmul.bf16.gmra.mxu0 %v6768
      %v8091 = vpop.f32.mrf.mxu0
      %v8092 = vadd.f32 %v7948, %v8091
      %v8093 = vpop.f32.mrf.mxu0
      %v8094 = vadd.f32 %v7950, %v8093
      %8095 = vmatmul.bf16.gmra.mxu0 %v7609
      %v8096 = vpop.f32.mrf.mxu0
      %v8097 = vadd.f32 %v7953, %v8096
      %v8098 = vpop.f32.mrf.mxu0
      %v8099 = vadd.f32 %v7955, %v8098
      %8100 = vmatmul.bf16.gmra.mxu0 %v7612
      %v8101 = vpop.f32.mrf.mxu0
      %v8102 = vadd.f32 %v7958, %v8101
      %v8103 = vpop.f32.mrf.mxu0
      %v8104 = vadd.f32 %v7960, %v8103
      %8105 = vmatmul.bf16.gmra.mxu0 %v6770
      %v8106 = vpop.f32.mrf.mxu0
      %v8107 = vadd.f32 %v7963, %v8106
      %v8108 = vpop.f32.mrf.mxu0
      %v8109 = vadd.f32 %v7965, %v8108
      %8110 = vmatmul.bf16.gmra.mxu0 %v7617
      %v8111 = vpop.f32.mrf.mxu0
      %v8112 = vadd.f32 %v7968, %v8111
      %v8113 = vpop.f32.mrf.mxu0
      %v8114 = vadd.f32 %v7970, %v8113
      %8115 = vmatmul.bf16.gmra.mxu0 %v7620
      %v8116 = vpop.f32.mrf.mxu0
      %v8117 = vadd.f32 %v7973, %v8116
      %v8118 = vpop.f32.mrf.mxu0
      %v8119 = vadd.f32 %v7975, %v8118
      %8120 = vmatmul.bf16.gmra.mxu0 %v6772
      %v8121 = vpop.f32.mrf.mxu0
      %v8122 = vadd.f32 %v7978, %v8121
      %v8123 = vpop.f32.mrf.mxu0
      %v8124 = vadd.f32 %v7980, %v8123
      %8125 = vmatmul.bf16.gmra.mxu0 %v7625
      %v8126 = vpop.f32.mrf.mxu0
      %v8127 = vadd.f32 %v7983, %v8126
      %v8128 = vpop.f32.mrf.mxu0
      %v8129 = vadd.f32 %v7985, %v8128
      %8130 = vmatmul.bf16.gmra.mxu0 %v7628
      %v8131 = vpop.f32.mrf.mxu0
      %v8132 = vadd.f32 %v7988, %v8131
      %v8133 = vpop.f32.mrf.mxu0
      %v8134 = vadd.f32 %v7990, %v8133
      %8135 = vmatmul.bf16.gmra.mxu0 %v6774
      %v8136 = vpop.f32.mrf.mxu0
      %v8137 = vadd.f32 %v7993, %v8136
      %v8138 = vpop.f32.mrf.mxu0
      %v8139 = vadd.f32 %v7995, %v8138
      %8140 = vmatmul.bf16.gmra.mxu0 %v7633
      %v8141 = vpop.f32.mrf.mxu0
      %v8142 = vadd.f32 %v7998, %v8141
      %v8143 = vpop.f32.mrf.mxu0
      %v8144 = vadd.f32 %v8000, %v8143
      %8145 = vmatmul.bf16.gmra.mxu0 %v7636
      %v8146 = vpop.f32.mrf.mxu0
      %v8147 = vadd.f32 %v8003, %v8146
      %v8148 = vpop.f32.mrf.mxu0
      %v8149 = vadd.f32 %v8005, %v8148
      %8150 = vdwg.mxu0
      %8151 = vmatpush.bf16.msra.mxu0 %v7838
      %8152 = vmatpush.bf16.msra.mxu0 %v7837
      %8153 = vmatpush.bf16.msra.mxu0 %v7836
      %8154 = vmatpush.bf16.msra.mxu0 %v7835
      %8155 = vmatpush.bf16.msra.mxu0 %v7834
      %8156 = vmatpush.bf16.msra.mxu0 %v7833
      %8157 = vmatpush.bf16.msra.mxu0 %v7832
      %8158 = vmatpush.bf16.msra.mxu0 %v7831
      %8159 = vmatmul.bf16.gmra.mxu0 %v7567
      %v8160 = vpop.f32.mrf.mxu0
      %v8161 = vadd.f32 %v8017, %v8160
      %v8162 = vpop.f32.mrf.mxu0
      %v8163 = vadd.f32 %v8019, %v8162
      %8164 = vmatmul.bf16.gmra.mxu0 %v7570
      %v8165 = vpop.f32.mrf.mxu0
      %v8166 = vadd.f32 %v8022, %v8165
      %v8167 = vpop.f32.mrf.mxu0
      %v8168 = vadd.f32 %v8024, %v8167
      %8169 = vmatmul.bf16.gmra.mxu0 %v7573
      %v8170 = vpop.f32.mrf.mxu0
      %v8171 = vadd.f32 %v8027, %v8170
      %v8172 = vpop.f32.mrf.mxu0
      %v8173 = vadd.f32 %v8029, %v8172
      %8174 = vmatmul.bf16.gmra.mxu0 %v7575
      %v8175 = vpop.f32.mrf.mxu0
      %v8176 = vadd.f32 %v8032, %v8175
      %v8177 = vpop.f32.mrf.mxu0
      %v8178 = vadd.f32 %v8034, %v8177
      %8179 = vmatmul.bf16.gmra.mxu0 %v7578
      %v8180 = vpop.f32.mrf.mxu0
      %v8181 = vadd.f32 %v8037, %v8180
      %v8182 = vpop.f32.mrf.mxu0
      %v8183 = vadd.f32 %v8039, %v8182
      %8184 = vmatmul.bf16.gmra.mxu0 %v7581
      %v8185 = vpop.f32.mrf.mxu0
      %v8186 = vadd.f32 %v8042, %v8185
      %v8187 = vpop.f32.mrf.mxu0
      %v8188 = vadd.f32 %v8044, %v8187
      %8189 = vmatmul.bf16.gmra.mxu0 %v7583
      %v8190 = vpop.f32.mrf.mxu0
      %v8191 = vadd.f32 %v8047, %v8190
      %v8192 = vpop.f32.mrf.mxu0
      %v8193 = vadd.f32 %v8049, %v8192
      %8194 = vmatmul.bf16.gmra.mxu0 %v7586
      %v8195 = vpop.f32.mrf.mxu0
      %v8196 = vadd.f32 %v8052, %v8195
      %v8197 = vpop.f32.mrf.mxu0
      %v8198 = vadd.f32 %v8054, %v8197
      %8199 = vmatmul.bf16.gmra.mxu0 %v7589
      %v8200 = vpop.f32.mrf.mxu0
      %v8201 = vadd.f32 %v8057, %v8200
      %v8202 = vpop.f32.mrf.mxu0
      %v8203 = vadd.f32 %v8059, %v8202
      %8204 = vmatmul.bf16.gmra.mxu0 %v7591
      %v8205 = vpop.f32.mrf.mxu0
      %v8206 = vadd.f32 %v8062, %v8205
      %v8207 = vpop.f32.mrf.mxu0
      %v8208 = vadd.f32 %v8064, %v8207
      %8209 = vmatmul.bf16.gmra.mxu0 %v7594
      %v8210 = vpop.f32.mrf.mxu0
      %v8211 = vadd.f32 %v8067, %v8210
      %v8212 = vpop.f32.mrf.mxu0
      %v8213 = vadd.f32 %v8069, %v8212
      %8214 = vmatmul.bf16.gmra.mxu0 %v7597
      %v8215 = vpop.f32.mrf.mxu0
      %v8216 = vadd.f32 %v8072, %v8215
      %v8217 = vpop.f32.mrf.mxu0
      %v8218 = vadd.f32 %v8074, %v8217
      %8219 = vmatmul.bf16.gmra.mxu0 %v7599
      %v8220 = vpop.f32.mrf.mxu0
      %v8221 = vadd.f32 %v8077, %v8220
      %v8222 = vpop.f32.mrf.mxu0
      %v8223 = vadd.f32 %v8079, %v8222
      %8224 = vmatmul.bf16.gmra.mxu0 %v7602
      %v8225 = vpop.f32.mrf.mxu0
      %v8226 = vadd.f32 %v8082, %v8225
      %v8227 = vpop.f32.mrf.mxu0
      %v8228 = vadd.f32 %v8084, %v8227
      %8229 = vmatmul.bf16.gmra.mxu0 %v7605
      %v8230 = vpop.f32.mrf.mxu0
      %v8231 = vadd.f32 %v8087, %v8230
      %v8232 = vpop.f32.mrf.mxu0
      %v8233 = vadd.f32 %v8089, %v8232
      %8234 = vmatmul.bf16.gmra.mxu0 %v7607
      %v8235 = vpop.f32.mrf.mxu0
      %v8236 = vadd.f32 %v8092, %v8235
      %v8237 = vpop.f32.mrf.mxu0
      %v8238 = vadd.f32 %v8094, %v8237
      %8239 = vmatmul.bf16.gmra.mxu0 %v7610
      %v8240 = vpop.f32.mrf.mxu0
      %v8241 = vadd.f32 %v8097, %v8240
      %v8242 = vpop.f32.mrf.mxu0
      %v8243 = vadd.f32 %v8099, %v8242
      %8244 = vmatmul.bf16.gmra.mxu0 %v7613
      %v8245 = vpop.f32.mrf.mxu0
      %v8246 = vadd.f32 %v8102, %v8245
      %v8247 = vpop.f32.mrf.mxu0
      %v8248 = vadd.f32 %v8104, %v8247
      %8249 = vmatmul.bf16.gmra.mxu0 %v7615
      %v8250 = vpop.f32.mrf.mxu0
      %v8251 = vadd.f32 %v8107, %v8250
      %v8252 = vpop.f32.mrf.mxu0
      %v8253 = vadd.f32 %v8109, %v8252
      %8254 = vmatmul.bf16.gmra.mxu0 %v7618
      %v8255 = vpop.f32.mrf.mxu0
      %v8256 = vadd.f32 %v8112, %v8255
      %v8257 = vpop.f32.mrf.mxu0
      %v8258 = vadd.f32 %v8114, %v8257
      %8259 = vmatmul.bf16.gmra.mxu0 %v7621
      %v8260 = vpop.f32.mrf.mxu0
      %v8261 = vadd.f32 %v8117, %v8260
      %v8262 = vpop.f32.mrf.mxu0
      %v8263 = vadd.f32 %v8119, %v8262
      %8264 = vmatmul.bf16.gmra.mxu0 %v7623
      %v8265 = vpop.f32.mrf.mxu0
      %v8266 = vadd.f32 %v8122, %v8265
      %v8267 = vpop.f32.mrf.mxu0
      %v8268 = vadd.f32 %v8124, %v8267
      %8269 = vmatmul.bf16.gmra.mxu0 %v7626
      %v8270 = vpop.f32.mrf.mxu0
      %v8271 = vadd.f32 %v8127, %v8270
      %v8272 = vpop.f32.mrf.mxu0
      %v8273 = vadd.f32 %v8129, %v8272
      %8274 = vmatmul.bf16.gmra.mxu0 %v7629
      %v8275 = vpop.f32.mrf.mxu0
      %v8276 = vadd.f32 %v8132, %v8275
      %v8277 = vpop.f32.mrf.mxu0
      %v8278 = vadd.f32 %v8134, %v8277
      %8279 = vmatmul.bf16.gmra.mxu0 %v7631
      %v8280 = vpop.f32.mrf.mxu0
      %v8281 = vadd.f32 %v8137, %v8280
      %v8282 = vpop.f32.mrf.mxu0
      %v8283 = vadd.f32 %v8139, %v8282
      %8284 = vmatmul.bf16.gmra.mxu0 %v7634
      %v8285 = vpop.f32.mrf.mxu0
      %v8286 = vadd.f32 %v8142, %v8285
      %v8287 = vpop.f32.mrf.mxu0
      %v8288 = vadd.f32 %v8144, %v8287
      %8289 = vmatmul.bf16.gmra.mxu0 %v7637
      %v8290 = vpop.f32.mrf.mxu0
      %v8291 = vadd.f32 %v8147, %v8290
      %v8292 = vpop.f32.mrf.mxu0
      %v8293 = vadd.f32 %v8149, %v8292
      %8294 = vdwg.mxu0
      %v8295 = vpack.c.b16 %v7355, %v7353
      %v8296 = vpack.c.b16 %v7356, %v7354
      %v8297 = vpack.c.b16 %v7359, %v7357
      %v8298 = vpack.c.b16 %v6719, %v6537
      %v8299 = vpack.c.b16 %v7360, %v7358
      %v8300 = vpack.c.b16 %v7363, %v7361
      %v8301 = vpack.c.b16 %v6538, %v6720
      %v8302 = vpack.c.b16 %v7364, %v7362
      %v8303 = vpack.c.b16 %v7367, %v7365
      %v8304 = vpack.c.b16 %v7368, %v7366
      %v8305 = vpack.c.b16 %v7371, %v7369
      %v8306 = vpack.c.b16 %v6723, %v6539
      %v8307 = vpack.c.b16 %v7372, %v7370
      %v8308 = vpack.c.b16 %v7375, %v7373
      %v8309 = vpack.c.b16 %v6540, %v6724
      %v8310 = vpack.c.b16 %v7376, %v7374
      %v8311 = vpack.c.b16 %v7379, %v7377
      %v8312 = vpack.c.b16 %v7380, %v7378
      %v8313 = vpack.c.b16 %v7383, %v7381
      %v8314 = vpack.c.b16 %v6727, %v6541
      %v8315 = vpack.c.b16 %v7384, %v7382
      %v8316 = vpack.c.b16 %v7387, %v7385
      %v8317 = vpack.c.b16 %v6542, %v6728
      %v8318 = vpack.c.b16 %v7388, %v7386
      %v8319 = vpack.c.b16 %v7391, %v7389
      %v8320 = vpack.c.b16 %v7392, %v7390
      %v8321 = vpack.c.b16 %v7395, %v7393
      %v8322 = vpack.c.b16 %v6731, %v6543
      %v8323 = vpack.c.b16 %v7396, %v7394
      %v8324 = vpack.c.b16 %v7399, %v7397
      %v8325 = vpack.c.b16 %v6544, %v6732
      %v8326 = vpack.c.b16 %v7400, %v7398
      %v8327 = vpack.c.b16 %v7403, %v7401
      %v8328 = vpack.c.b16 %v7404, %v7402
      %v8329 = vpack.c.b16 %v7407, %v7405
      %v8330 = vpack.c.b16 %v6735, %v6545
      %v8331 = vpack.c.b16 %v7408, %v7406
      %v8332 = vpack.c.b16 %v7411, %v7409
      %v8333 = vpack.c.b16 %v6546, %v6736
      %v8334 = vpack.c.b16 %v7412, %v7410
      %v8335 = vpack.c.b16 %v7415, %v7413
      %v8336 = vpack.c.b16 %v7416, %v7414
      %v8337 = vpack.c.b16 %v7419, %v7417
      %v8338 = vpack.c.b16 %v6739, %v6547
      %v8339 = vpack.c.b16 %v7420, %v7418
      %v8340 = vpack.c.b16 %v7423, %v7421
      %v8341 = vpack.c.b16 %v6548, %v6740
      %v8342 = vpack.c.b16 %v7424, %v7422
      %v8343 = vpack.c.b16 %v7427, %v7425
      %v8344 = vpack.c.b16 %v7428, %v7426
      %v8345 = vpack.c.b16 %v7431, %v7429
      %v8346 = vpack.c.b16 %v6743, %v6549
      %v8347 = vpack.c.b16 %v7432, %v7430
      %v8348 = vpack.c.b16 %v7435, %v7433
      %v8349 = vpack.c.b16 %v6550, %v6744
      %v8350 = vpack.c.b16 %v7436, %v7434
      %v8351 = vpack.c.b16 %v7439, %v7437
      %v8352 = vpack.c.b16 %v7440, %v7438
      %v8353 = vpack.c.b16 %v7443, %v7441
      %v8354 = vpack.c.b16 %v6747, %v6551
      %v8355 = vpack.c.b16 %v7444, %v7442
      %v8356 = vpack.c.b16 %v7447, %v7445
      %v8357 = vpack.c.b16 %v6552, %v6748
      %v8358 = vpack.c.b16 %v7448, %v7446
      %v8359 = vpack.c.b16 %v7451, %v7449
      %v8360 = vpack.c.b16 %v7452, %v7450
      %v8361 = vpack.c.b16 %v7455, %v7453
      %v8362 = vpack.c.b16 %v6751, %v6553
      %v8363 = vpack.c.b16 %v7456, %v7454
      %v8364 = vpack.c.b16 %v7459, %v7457
      %v8365 = vpack.c.b16 %v6554, %v6752
      %v8366 = vpack.c.b16 %v7460, %v7458
      %v8496 = vunpack.c.l.b16 %v7461
      %v8497 = vunpack.c.l.b16 %v7462
      %v8498 = vunpack.c.l.b16 %v7463
      %v8499 = vunpack.c.l.b16 %v7464
      %v8500 = vunpack.c.l.b16 %v7465
      %v8501 = vunpack.c.l.b16 %v7466
      %v8502 = vunpack.c.l.b16 %v7467
      %v8503 = vunpack.c.l.b16 %v7468
      %v8504 = vunpack.c.l.b16 %v7469
      %v8505 = vunpack.c.l.b16 %v7470
      %v8506 = vunpack.c.l.b16 %v7471
      %v8507 = vunpack.c.l.b16 %v7472
      %v8508 = vunpack.c.l.b16 %v7473
      %v8509 = vunpack.c.l.b16 %v7474
      %v8510 = vunpack.c.l.b16 %v7475
      %v8511 = vunpack.c.l.b16 %v7476
      %v8512 = vunpack.c.l.b16 %v7477
      %v8513 = vunpack.c.l.b16 %v7478
      %v8514 = vunpack.c.l.b16 %v7479
      %v8515 = vunpack.c.l.b16 %v7480
      %v8516 = vunpack.c.l.b16 %v7481
      %v8517 = vunpack.c.l.b16 %v7482
      %v8518 = vunpack.c.l.b16 %v7483
      %v8519 = vunpack.c.l.b16 %v7484
      %v8520 = vunpack.c.l.b16 %v7485
      %v8521 = vunpack.c.l.b16 %v7486
      %v8522 = vunpack.c.l.b16 %v7487
      %v8523 = vunpack.c.l.b16 %v7488
      %v8524 = vunpack.c.l.b16 %v7489
      %v8525 = vunpack.c.l.b16 %v7490
      %v8526 = vunpack.c.l.b16 %v7491
      %v8527 = vunpack.c.l.b16 %v7492
      %v8528 = vunpack.c.l.b16 %v7493
      %v8529 = vunpack.c.l.b16 %v7494
      %v8530 = vunpack.c.l.b16 %v7495
      %v8531 = vunpack.c.l.b16 %v7496
      %v8532 = vunpack.c.l.b16 %v7497
      %v8533 = vunpack.c.l.b16 %v7498
      %v8534 = vunpack.c.l.b16 %v7499
      %v8535 = vunpack.c.l.b16 %v7500
      %v8536 = vunpack.c.l.b16 %v7501
      %v8537 = vunpack.c.l.b16 %v7502
      %v8538 = vunpack.c.l.b16 %v7503
      %v8539 = vunpack.c.l.b16 %v7504
      %v8540 = vunpack.c.l.b16 %v7505
      %v8541 = vunpack.c.l.b16 %v7506
      %v8542 = vunpack.c.l.b16 %v7507
      %v8543 = vunpack.c.l.b16 %v7508
      %v8544 = vpack.c.b16 %v8497, %v8496
      %v8545 = vpack.c.b16 %v8499, %v8498
      %v8546 = vpack.c.b16 %v8501, %v8500
      %v8547 = vpack.c.b16 %v8503, %v8502
      %v8548 = vpack.c.b16 %v8505, %v8504
      %v8549 = vpack.c.b16 %v8507, %v8506
      %v8550 = vpack.c.b16 %v8509, %v8508
      %v8551 = vpack.c.b16 %v8511, %v8510
      %v8552 = vpack.c.b16 %v8513, %v8512
      %v8553 = vpack.c.b16 %v8515, %v8514
      %v8554 = vpack.c.b16 %v8517, %v8516
      %v8555 = vpack.c.b16 %v8519, %v8518
      %v8556 = vpack.c.b16 %v8521, %v8520
      %v8557 = vpack.c.b16 %v8523, %v8522
      %v8558 = vpack.c.b16 %v8525, %v8524
      %v8559 = vpack.c.b16 %v8527, %v8526
      %v8560 = vpack.c.b16 %v8529, %v8528
      %v8561 = vpack.c.b16 %v8531, %v8530
      %v8562 = vpack.c.b16 %v8533, %v8532
      %v8563 = vpack.c.b16 %v8535, %v8534
      %v8564 = vpack.c.b16 %v8537, %v8536
      %v8565 = vpack.c.b16 %v8539, %v8538
      %v8566 = vpack.c.b16 %v8541, %v8540
      %v8567 = vpack.c.b16 %v8543, %v8542
      %8592 = vmatpush.bf16.msra.mxu0 %v8551
      %8593 = vmatpush.bf16.msra.mxu0 %v8550
      %8594 = vmatpush.bf16.msra.mxu0 %v8549
      %8595 = vmatpush.bf16.msra.mxu0 %v8548
      %8596 = vmatpush.bf16.msra.mxu0 %v8547
      %8597 = vmatpush.bf16.msra.mxu0 %v8546
      %8598 = vmatpush.bf16.msra.mxu0 %v8545
      %8599 = vmatpush.bf16.msra.mxu0 %v8544
      %8600 = vmatmul.bf16.gmra.mxu0 %v8295
      %v8601 = vpop.f32.mrf.mxu0
      %v8602 = vadd.f32 %v8161, %v8601
      %v8603 = vpop.f32.mrf.mxu0
      %v8604 = vadd.f32 %v8163, %v8603
      %8605 = vmatmul.bf16.gmra.mxu0 %v8297
      %v8606 = vpop.f32.mrf.mxu0
      %v8607 = vadd.f32 %v8166, %v8606
      %v8608 = vpop.f32.mrf.mxu0
      %v8609 = vadd.f32 %v8168, %v8608
      %8610 = vmatmul.bf16.gmra.mxu0 %v8300
      %v8611 = vpop.f32.mrf.mxu0
      %v8612 = vadd.f32 %v8171, %v8611
      %v8613 = vpop.f32.mrf.mxu0
      %v8614 = vadd.f32 %v8173, %v8613
      %8615 = vmatmul.bf16.gmra.mxu0 %v8303
      %v8616 = vpop.f32.mrf.mxu0
      %v8617 = vadd.f32 %v8176, %v8616
      %v8618 = vpop.f32.mrf.mxu0
      %v8619 = vadd.f32 %v8178, %v8618
      %8620 = vmatmul.bf16.gmra.mxu0 %v8305
      %v8621 = vpop.f32.mrf.mxu0
      %v8622 = vadd.f32 %v8181, %v8621
      %v8623 = vpop.f32.mrf.mxu0
      %v8624 = vadd.f32 %v8183, %v8623
      %8625 = vmatmul.bf16.gmra.mxu0 %v8308
      %v8626 = vpop.f32.mrf.mxu0
      %v8627 = vadd.f32 %v8186, %v8626
      %v8628 = vpop.f32.mrf.mxu0
      %v8629 = vadd.f32 %v8188, %v8628
      %8630 = vmatmul.bf16.gmra.mxu0 %v8311
      %v8631 = vpop.f32.mrf.mxu0
      %v8632 = vadd.f32 %v8191, %v8631
      %v8633 = vpop.f32.mrf.mxu0
      %v8634 = vadd.f32 %v8193, %v8633
      %8635 = vmatmul.bf16.gmra.mxu0 %v8313
      %v8636 = vpop.f32.mrf.mxu0
      %v8637 = vadd.f32 %v8196, %v8636
      %v8638 = vpop.f32.mrf.mxu0
      %v8639 = vadd.f32 %v8198, %v8638
      %8640 = vmatmul.bf16.gmra.mxu0 %v8316
      %v8641 = vpop.f32.mrf.mxu0
      %v8642 = vadd.f32 %v8201, %v8641
      %v8643 = vpop.f32.mrf.mxu0
      %v8644 = vadd.f32 %v8203, %v8643
      %8645 = vmatmul.bf16.gmra.mxu0 %v8319
      %v8646 = vpop.f32.mrf.mxu0
      %v8647 = vadd.f32 %v8206, %v8646
      %v8648 = vpop.f32.mrf.mxu0
      %v8649 = vadd.f32 %v8208, %v8648
      %8650 = vmatmul.bf16.gmra.mxu0 %v8321
      %v8651 = vpop.f32.mrf.mxu0
      %v8652 = vadd.f32 %v8211, %v8651
      %v8653 = vpop.f32.mrf.mxu0
      %v8654 = vadd.f32 %v8213, %v8653
      %8655 = vmatmul.bf16.gmra.mxu0 %v8324
      %v8656 = vpop.f32.mrf.mxu0
      %v8657 = vadd.f32 %v8216, %v8656
      %v8658 = vpop.f32.mrf.mxu0
      %v8659 = vadd.f32 %v8218, %v8658
      %8660 = vmatmul.bf16.gmra.mxu0 %v8327
      %v8661 = vpop.f32.mrf.mxu0
      %v8662 = vadd.f32 %v8221, %v8661
      %v8663 = vpop.f32.mrf.mxu0
      %v8664 = vadd.f32 %v8223, %v8663
      %8665 = vmatmul.bf16.gmra.mxu0 %v8329
      %v8666 = vpop.f32.mrf.mxu0
      %v8667 = vadd.f32 %v8226, %v8666
      %v8668 = vpop.f32.mrf.mxu0
      %v8669 = vadd.f32 %v8228, %v8668
      %8670 = vmatmul.bf16.gmra.mxu0 %v8332
      %v8671 = vpop.f32.mrf.mxu0
      %v8672 = vadd.f32 %v8231, %v8671
      %v8673 = vpop.f32.mrf.mxu0
      %v8674 = vadd.f32 %v8233, %v8673
      %8675 = vmatmul.bf16.gmra.mxu0 %v8335
      %v8676 = vpop.f32.mrf.mxu0
      %v8677 = vadd.f32 %v8236, %v8676
      %v8678 = vpop.f32.mrf.mxu0
      %v8679 = vadd.f32 %v8238, %v8678
      %8680 = vmatmul.bf16.gmra.mxu0 %v8337
      %v8681 = vpop.f32.mrf.mxu0
      %v8682 = vadd.f32 %v8241, %v8681
      %v8683 = vpop.f32.mrf.mxu0
      %v8684 = vadd.f32 %v8243, %v8683
      %8685 = vmatmul.bf16.gmra.mxu0 %v8340
      %v8686 = vpop.f32.mrf.mxu0
      %v8687 = vadd.f32 %v8246, %v8686
      %v8688 = vpop.f32.mrf.mxu0
      %v8689 = vadd.f32 %v8248, %v8688
      %8690 = vmatmul.bf16.gmra.mxu0 %v8343
      %v8691 = vpop.f32.mrf.mxu0
      %v8692 = vadd.f32 %v8251, %v8691
      %v8693 = vpop.f32.mrf.mxu0
      %v8694 = vadd.f32 %v8253, %v8693
      %8695 = vmatmul.bf16.gmra.mxu0 %v8345
      %v8696 = vpop.f32.mrf.mxu0
      %v8697 = vadd.f32 %v8256, %v8696
      %v8698 = vpop.f32.mrf.mxu0
      %v8699 = vadd.f32 %v8258, %v8698
      %8700 = vmatmul.bf16.gmra.mxu0 %v8348
      %v8701 = vpop.f32.mrf.mxu0
      %v8702 = vadd.f32 %v8261, %v8701
      %v8703 = vpop.f32.mrf.mxu0
      %v8704 = vadd.f32 %v8263, %v8703
      %8705 = vmatmul.bf16.gmra.mxu0 %v8351
      %v8706 = vpop.f32.mrf.mxu0
      %v8707 = vadd.f32 %v8266, %v8706
      %v8708 = vpop.f32.mrf.mxu0
      %v8709 = vadd.f32 %v8268, %v8708
      %8710 = vmatmul.bf16.gmra.mxu0 %v8353
      %v8711 = vpop.f32.mrf.mxu0
      %v8712 = vadd.f32 %v8271, %v8711
      %v8713 = vpop.f32.mrf.mxu0
      %v8714 = vadd.f32 %v8273, %v8713
      %8715 = vmatmul.bf16.gmra.mxu0 %v8356
      %v8716 = vpop.f32.mrf.mxu0
      %v8717 = vadd.f32 %v8276, %v8716
      %v8718 = vpop.f32.mrf.mxu0
      %v8719 = vadd.f32 %v8278, %v8718
      %8720 = vmatmul.bf16.gmra.mxu0 %v8359
      %v8721 = vpop.f32.mrf.mxu0
      %v8722 = vadd.f32 %v8281, %v8721
      %v8723 = vpop.f32.mrf.mxu0
      %v8724 = vadd.f32 %v8283, %v8723
      %8725 = vmatmul.bf16.gmra.mxu0 %v8361
      %v8726 = vpop.f32.mrf.mxu0
      %v8727 = vadd.f32 %v8286, %v8726
      %v8728 = vpop.f32.mrf.mxu0
      %v8729 = vadd.f32 %v8288, %v8728
      %8730 = vmatmul.bf16.gmra.mxu0 %v8364
      %v8731 = vpop.f32.mrf.mxu0
      %v8732 = vadd.f32 %v8291, %v8731
      %v8733 = vpop.f32.mrf.mxu0
      %v8734 = vadd.f32 %v8293, %v8733
      %8735 = vdwg.mxu0
      %8736 = vmatpush.bf16.msra.mxu0 %v8559
      %8737 = vmatpush.bf16.msra.mxu0 %v8558
      %8738 = vmatpush.bf16.msra.mxu0 %v8557
      %8739 = vmatpush.bf16.msra.mxu0 %v8556
      %8740 = vmatpush.bf16.msra.mxu0 %v8555
      %8741 = vmatpush.bf16.msra.mxu0 %v8554
      %8742 = vmatpush.bf16.msra.mxu0 %v8553
      %8743 = vmatpush.bf16.msra.mxu0 %v8552
      %8744 = vmatmul.bf16.gmra.mxu0 %v6757
      %v8745 = vpop.f32.mrf.mxu0
      %v8746 = vadd.f32 %v8602, %v8745
      %v8747 = vpop.f32.mrf.mxu0
      %v8748 = vadd.f32 %v8604, %v8747
      %8749 = vmatmul.bf16.gmra.mxu0 %v8298
      %v8750 = vpop.f32.mrf.mxu0
      %v8751 = vadd.f32 %v8607, %v8750
      %v8752 = vpop.f32.mrf.mxu0
      %v8753 = vadd.f32 %v8609, %v8752
      %8754 = vmatmul.bf16.gmra.mxu0 %v8301
      %v8755 = vpop.f32.mrf.mxu0
      %v8756 = vadd.f32 %v8612, %v8755
      %v8757 = vpop.f32.mrf.mxu0
      %v8758 = vadd.f32 %v8614, %v8757
      %8759 = vmatmul.bf16.gmra.mxu0 %v6759
      %v8760 = vpop.f32.mrf.mxu0
      %v8761 = vadd.f32 %v8617, %v8760
      %v8762 = vpop.f32.mrf.mxu0
      %v8763 = vadd.f32 %v8619, %v8762
      %8764 = vmatmul.bf16.gmra.mxu0 %v8306
      %v8765 = vpop.f32.mrf.mxu0
      %v8766 = vadd.f32 %v8622, %v8765
      %v8767 = vpop.f32.mrf.mxu0
      %v8768 = vadd.f32 %v8624, %v8767
      %8769 = vmatmul.bf16.gmra.mxu0 %v8309
      %v8770 = vpop.f32.mrf.mxu0
      %v8771 = vadd.f32 %v8627, %v8770
      %v8772 = vpop.f32.mrf.mxu0
      %v8773 = vadd.f32 %v8629, %v8772
      %8774 = vmatmul.bf16.gmra.mxu0 %v6761
      %v8775 = vpop.f32.mrf.mxu0
      %v8776 = vadd.f32 %v8632, %v8775
      %v8777 = vpop.f32.mrf.mxu0
      %v8778 = vadd.f32 %v8634, %v8777
      %8779 = vmatmul.bf16.gmra.mxu0 %v8314
      %v8780 = vpop.f32.mrf.mxu0
      %v8781 = vadd.f32 %v8637, %v8780
      %v8782 = vpop.f32.mrf.mxu0
      %v8783 = vadd.f32 %v8639, %v8782
      %8784 = vmatmul.bf16.gmra.mxu0 %v8317
      %v8785 = vpop.f32.mrf.mxu0
      %v8786 = vadd.f32 %v8642, %v8785
      %v8787 = vpop.f32.mrf.mxu0
      %v8788 = vadd.f32 %v8644, %v8787
      %8789 = vmatmul.bf16.gmra.mxu0 %v6763
      %v8790 = vpop.f32.mrf.mxu0
      %v8791 = vadd.f32 %v8647, %v8790
      %v8792 = vpop.f32.mrf.mxu0
      %v8793 = vadd.f32 %v8649, %v8792
      %8794 = vmatmul.bf16.gmra.mxu0 %v8322
      %v8795 = vpop.f32.mrf.mxu0
      %v8796 = vadd.f32 %v8652, %v8795
      %v8797 = vpop.f32.mrf.mxu0
      %v8798 = vadd.f32 %v8654, %v8797
      %8799 = vmatmul.bf16.gmra.mxu0 %v8325
      %v8800 = vpop.f32.mrf.mxu0
      %v8801 = vadd.f32 %v8657, %v8800
      %v8802 = vpop.f32.mrf.mxu0
      %v8803 = vadd.f32 %v8659, %v8802
      %8804 = vmatmul.bf16.gmra.mxu0 %v6765
      %v8805 = vpop.f32.mrf.mxu0
      %v8806 = vadd.f32 %v8662, %v8805
      %v8807 = vpop.f32.mrf.mxu0
      %v8808 = vadd.f32 %v8664, %v8807
      %8809 = vmatmul.bf16.gmra.mxu0 %v8330
      %v8810 = vpop.f32.mrf.mxu0
      %v8811 = vadd.f32 %v8667, %v8810
      %v8812 = vpop.f32.mrf.mxu0
      %v8813 = vadd.f32 %v8669, %v8812
      %8814 = vmatmul.bf16.gmra.mxu0 %v8333
      %v8815 = vpop.f32.mrf.mxu0
      %v8816 = vadd.f32 %v8672, %v8815
      %v8817 = vpop.f32.mrf.mxu0
      %v8818 = vadd.f32 %v8674, %v8817
      %8819 = vmatmul.bf16.gmra.mxu0 %v6767
      %v8820 = vpop.f32.mrf.mxu0
      %v8821 = vadd.f32 %v8677, %v8820
      %v8822 = vpop.f32.mrf.mxu0
      %v8823 = vadd.f32 %v8679, %v8822
      %8824 = vmatmul.bf16.gmra.mxu0 %v8338
      %v8825 = vpop.f32.mrf.mxu0
      %v8826 = vadd.f32 %v8682, %v8825
      %v8827 = vpop.f32.mrf.mxu0
      %v8828 = vadd.f32 %v8684, %v8827
      %8829 = vmatmul.bf16.gmra.mxu0 %v8341
      %v8830 = vpop.f32.mrf.mxu0
      %v8831 = vadd.f32 %v8687, %v8830
      %v8832 = vpop.f32.mrf.mxu0
      %v8833 = vadd.f32 %v8689, %v8832
      %8834 = vmatmul.bf16.gmra.mxu0 %v6769
      %v8835 = vpop.f32.mrf.mxu0
      %v8836 = vadd.f32 %v8692, %v8835
      %v8837 = vpop.f32.mrf.mxu0
      %v8838 = vadd.f32 %v8694, %v8837
      %8839 = vmatmul.bf16.gmra.mxu0 %v8346
      %v8840 = vpop.f32.mrf.mxu0
      %v8841 = vadd.f32 %v8697, %v8840
      %v8842 = vpop.f32.mrf.mxu0
      %v8843 = vadd.f32 %v8699, %v8842
      %8844 = vmatmul.bf16.gmra.mxu0 %v8349
      %v8845 = vpop.f32.mrf.mxu0
      %v8846 = vadd.f32 %v8702, %v8845
      %v8847 = vpop.f32.mrf.mxu0
      %v8848 = vadd.f32 %v8704, %v8847
      %8849 = vmatmul.bf16.gmra.mxu0 %v6771
      %v8850 = vpop.f32.mrf.mxu0
      %v8851 = vadd.f32 %v8707, %v8850
      %v8852 = vpop.f32.mrf.mxu0
      %v8853 = vadd.f32 %v8709, %v8852
      %8854 = vmatmul.bf16.gmra.mxu0 %v8354
      %v8855 = vpop.f32.mrf.mxu0
      %v8856 = vadd.f32 %v8712, %v8855
      %v8857 = vpop.f32.mrf.mxu0
      %v8858 = vadd.f32 %v8714, %v8857
      %8859 = vmatmul.bf16.gmra.mxu0 %v8357
      %v8860 = vpop.f32.mrf.mxu0
      %v8861 = vadd.f32 %v8717, %v8860
      %v8862 = vpop.f32.mrf.mxu0
      %v8863 = vadd.f32 %v8719, %v8862
      %8864 = vmatmul.bf16.gmra.mxu0 %v6773
      %v8865 = vpop.f32.mrf.mxu0
      %v8866 = vadd.f32 %v8722, %v8865
      %v8867 = vpop.f32.mrf.mxu0
      %v8868 = vadd.f32 %v8724, %v8867
      %8869 = vmatmul.bf16.gmra.mxu0 %v8362
      %v8870 = vpop.f32.mrf.mxu0
      %v8871 = vadd.f32 %v8727, %v8870
      %v8872 = vpop.f32.mrf.mxu0
      %v8873 = vadd.f32 %v8729, %v8872
      %8874 = vmatmul.bf16.gmra.mxu0 %v8365
      %v8875 = vpop.f32.mrf.mxu0
      %v8876 = vadd.f32 %v8732, %v8875
      %v8877 = vpop.f32.mrf.mxu0
      %v8878 = vadd.f32 %v8734, %v8877
      %8879 = vdwg.mxu0
      %8880 = vmatpush.bf16.msra.mxu0 %v8567
      %8881 = vmatpush.bf16.msra.mxu0 %v8566
      %8882 = vmatpush.bf16.msra.mxu0 %v8565
      %8883 = vmatpush.bf16.msra.mxu0 %v8564
      %8884 = vmatpush.bf16.msra.mxu0 %v8563
      %8885 = vmatpush.bf16.msra.mxu0 %v8562
      %8886 = vmatpush.bf16.msra.mxu0 %v8561
      %8887 = vmatpush.bf16.msra.mxu0 %v8560
      %8888 = vmatmul.bf16.gmra.mxu0 %v8296
      %v8889 = vpop.f32.mrf.mxu0
      %v8890 = vadd.f32 %v8746, %v8889
      %v8891 = vpop.f32.mrf.mxu0
      %v8892 = vadd.f32 %v8748, %v8891
      %8893 = vmatmul.bf16.gmra.mxu0 %v8299
      %v8894 = vpop.f32.mrf.mxu0
      %v8895 = vadd.f32 %v8751, %v8894
      %v8896 = vpop.f32.mrf.mxu0
      %v8897 = vadd.f32 %v8753, %v8896
      %8898 = vmatmul.bf16.gmra.mxu0 %v8302
      %v8899 = vpop.f32.mrf.mxu0
      %v8900 = vadd.f32 %v8756, %v8899
      %v8901 = vpop.f32.mrf.mxu0
      %v8902 = vadd.f32 %v8758, %v8901
      %8903 = vmatmul.bf16.gmra.mxu0 %v8304
      %v8904 = vpop.f32.mrf.mxu0
      %v8905 = vadd.f32 %v8761, %v8904
      %v8906 = vpop.f32.mrf.mxu0
      %v8907 = vadd.f32 %v8763, %v8906
      %8908 = vmatmul.bf16.gmra.mxu0 %v8307
      %v8909 = vpop.f32.mrf.mxu0
      %v8910 = vadd.f32 %v8766, %v8909
      %v8911 = vpop.f32.mrf.mxu0
      %v8912 = vadd.f32 %v8768, %v8911
      %8913 = vmatmul.bf16.gmra.mxu0 %v8310
      %v8914 = vpop.f32.mrf.mxu0
      %v8915 = vadd.f32 %v8771, %v8914
      %v8916 = vpop.f32.mrf.mxu0
      %v8917 = vadd.f32 %v8773, %v8916
      %8918 = vmatmul.bf16.gmra.mxu0 %v8312
      %v8919 = vpop.f32.mrf.mxu0
      %v8920 = vadd.f32 %v8776, %v8919
      %v8921 = vpop.f32.mrf.mxu0
      %v8922 = vadd.f32 %v8778, %v8921
      %8923 = vmatmul.bf16.gmra.mxu0 %v8315
      %v8924 = vpop.f32.mrf.mxu0
      %v8925 = vadd.f32 %v8781, %v8924
      %v8926 = vpop.f32.mrf.mxu0
      %v8927 = vadd.f32 %v8783, %v8926
      %8928 = vmatmul.bf16.gmra.mxu0 %v8318
      %v8929 = vpop.f32.mrf.mxu0
      %v8930 = vadd.f32 %v8786, %v8929
      %v8931 = vpop.f32.mrf.mxu0
      %v8932 = vadd.f32 %v8788, %v8931
      %8933 = vmatmul.bf16.gmra.mxu0 %v8320
      %v8934 = vpop.f32.mrf.mxu0
      %v8935 = vadd.f32 %v8791, %v8934
      %v8936 = vpop.f32.mrf.mxu0
      %v8937 = vadd.f32 %v8793, %v8936
      %8938 = vmatmul.bf16.gmra.mxu0 %v8323
      %v8939 = vpop.f32.mrf.mxu0
      %v8940 = vadd.f32 %v8796, %v8939
      %v8941 = vpop.f32.mrf.mxu0
      %v8942 = vadd.f32 %v8798, %v8941
      %8943 = vmatmul.bf16.gmra.mxu0 %v8326
      %v8944 = vpop.f32.mrf.mxu0
      %v8945 = vadd.f32 %v8801, %v8944
      %v8946 = vpop.f32.mrf.mxu0
      %v8947 = vadd.f32 %v8803, %v8946
      %8948 = vmatmul.bf16.gmra.mxu0 %v8328
      %v8949 = vpop.f32.mrf.mxu0
      %v8950 = vadd.f32 %v8806, %v8949
      %v8951 = vpop.f32.mrf.mxu0
      %v8952 = vadd.f32 %v8808, %v8951
      %8953 = vmatmul.bf16.gmra.mxu0 %v8331
      %v8954 = vpop.f32.mrf.mxu0
      %v8955 = vadd.f32 %v8811, %v8954
      %v8956 = vpop.f32.mrf.mxu0
      %v8957 = vadd.f32 %v8813, %v8956
      %8958 = vmatmul.bf16.gmra.mxu0 %v8334
      %v8959 = vpop.f32.mrf.mxu0
      %v8960 = vadd.f32 %v8816, %v8959
      %v8961 = vpop.f32.mrf.mxu0
      %v8962 = vadd.f32 %v8818, %v8961
      %8963 = vmatmul.bf16.gmra.mxu0 %v8336
      %v8964 = vpop.f32.mrf.mxu0
      %v8965 = vadd.f32 %v8821, %v8964
      %v8966 = vpop.f32.mrf.mxu0
      %v8967 = vadd.f32 %v8823, %v8966
      %8968 = vmatmul.bf16.gmra.mxu0 %v8339
      %v8969 = vpop.f32.mrf.mxu0
      %v8970 = vadd.f32 %v8826, %v8969
      %v8971 = vpop.f32.mrf.mxu0
      %v8972 = vadd.f32 %v8828, %v8971
      %8973 = vmatmul.bf16.gmra.mxu0 %v8342
      %v8974 = vpop.f32.mrf.mxu0
      %v8975 = vadd.f32 %v8831, %v8974
      %v8976 = vpop.f32.mrf.mxu0
      %v8977 = vadd.f32 %v8833, %v8976
      %8978 = vmatmul.bf16.gmra.mxu0 %v8344
      %v8979 = vpop.f32.mrf.mxu0
      %v8980 = vadd.f32 %v8836, %v8979
      %v8981 = vpop.f32.mrf.mxu0
      %v8982 = vadd.f32 %v8838, %v8981
      %8983 = vmatmul.bf16.gmra.mxu0 %v8347
      %v8984 = vpop.f32.mrf.mxu0
      %v8985 = vadd.f32 %v8841, %v8984
      %v8986 = vpop.f32.mrf.mxu0
      %v8987 = vadd.f32 %v8843, %v8986
      %8988 = vmatmul.bf16.gmra.mxu0 %v8350
      %v8989 = vpop.f32.mrf.mxu0
      %v8990 = vadd.f32 %v8846, %v8989
      %v8991 = vpop.f32.mrf.mxu0
      %v8992 = vadd.f32 %v8848, %v8991
      %8993 = vmatmul.bf16.gmra.mxu0 %v8352
      %v8994 = vpop.f32.mrf.mxu0
      %v8995 = vadd.f32 %v8851, %v8994
      %v8996 = vpop.f32.mrf.mxu0
      %v8997 = vadd.f32 %v8853, %v8996
      %8998 = vmatmul.bf16.gmra.mxu0 %v8355
      %v8999 = vpop.f32.mrf.mxu0
      %v9000 = vadd.f32 %v8856, %v8999
      %v9001 = vpop.f32.mrf.mxu0
      %v9002 = vadd.f32 %v8858, %v9001
      %9003 = vmatmul.bf16.gmra.mxu0 %v8358
      %v9004 = vpop.f32.mrf.mxu0
      %v9005 = vadd.f32 %v8861, %v9004
      %v9006 = vpop.f32.mrf.mxu0
      %v9007 = vadd.f32 %v8863, %v9006
      %9008 = vmatmul.bf16.gmra.mxu0 %v8360
      %v9009 = vpop.f32.mrf.mxu0
      %v9010 = vadd.f32 %v8866, %v9009
      %v9011 = vpop.f32.mrf.mxu0
      %v9012 = vadd.f32 %v8868, %v9011
      %9013 = vmatmul.bf16.gmra.mxu0 %v8363
      %v9014 = vpop.f32.mrf.mxu0
      %v9015 = vadd.f32 %v8871, %v9014
      %v9016 = vpop.f32.mrf.mxu0
      %v9017 = vadd.f32 %v8873, %v9016
      %9018 = vmatmul.bf16.gmra.mxu0 %v8366
      %v9019 = vpop.f32.mrf.mxu0
      %v9020 = vadd.f32 %v8876, %v9019
      %v9021 = vpop.f32.mrf.mxu0
      %v9022 = vadd.f32 %v8878, %v9021
      %9023 = vdwg.mxu0
      %v9026 = vunpack.c.l.b16 %v7056
      %v9027 = vunpack.c.l.b16 %v7155
      %v9028 = vunpack.c.h.b16 %v7056
      %v9029 = vunpack.c.h.b16 %v7155
      %v9030 = vunpack.c.l.b16 %v7016
      %v9031 = vunpack.c.l.b16 %v7316
      %s9032 = scalar_lea.vmem %s7, 384
      %v9033 = vld [vmem:[%s9032] sm:$0xf]
      %v9034 = vld [vmem:[%s9032 + $0x4] sm:$0xf]
      %v9035 = vld [vmem:[%s9032 + $0x8] sm:$0xf]
      %v9036 = vld [vmem:[%s9032 + $0xc] sm:$0xf]
      %v9037 = vld [vmem:[%s9032 + $0x10] sm:$0xf]
      %v9038 = vld [vmem:[%s9032 + $0x14] sm:$0xf]
      %v9039 = vld [vmem:[%s9032 + $0x18] sm:$0xf]
      %v9040 = vld [vmem:[%s9032 + $0x1c] sm:$0xf]
      %v9041 = vld [vmem:[%s9032 + $0x20] sm:$0xf]
      %v9042 = vld [vmem:[%s9032 + $0x24] sm:$0xf]
      %v9043 = vld [vmem:[%s9032 + $0x28] sm:$0xf]
      %v9044 = vld [vmem:[%s9032 + $0x2c] sm:$0xf]
      %v9045 = vld [vmem:[%s9032 + $0x30] sm:$0xf]
      %v9046 = vld [vmem:[%s9032 + $0x34] sm:$0xf]
      %v9047 = vld [vmem:[%s9032 + $0x38] sm:$0xf]
      %v9048 = vld [vmem:[%s9032 + $0x3c] sm:$0xf]
      %v9049 = vld [vmem:[%s9032 + $0x40] sm:$0xf]
      %v9050 = vld [vmem:[%s9032 + $0x44] sm:$0xf]
      %v9051 = vld [vmem:[%s9032 + $0x48] sm:$0xf]
      %v9052 = vld [vmem:[%s9032 + $0x4c] sm:$0xf]
      %v9053 = vld [vmem:[%s9032 + $0x50] sm:$0xf]
      %v9054 = vld [vmem:[%s9032 + $0x54] sm:$0xf]
      %v9055 = vld [vmem:[%s9032 + $0x58] sm:$0xf]
      %v9056 = vld [vmem:[%s9032 + $0x5c] sm:$0xf]
      %v9057 = vld [vmem:[%s9032 + $0x60] sm:$0xf]
      %v9058 = vld [vmem:[%s9032 + $0x64] sm:$0xf]
      %v9059 = vld [vmem:[%s9032 + $0x68] sm:$0xf]
      %v9060 = vld [vmem:[%s9032 + $0x6c] sm:$0xf]
      %v9061 = vld [vmem:[%s9032 + $0x70] sm:$0xf]
      %v9062 = vld [vmem:[%s9032 + $0x74] sm:$0xf]
      %v9063 = vld [vmem:[%s9032 + $0x78] sm:$0xf]
      %v9064 = vld [vmem:[%s9032 + $0x7c] sm:$0xf]
      %v9065 = vld [vmem:[%s9032 + $0x80] sm:$0xf]
      %v9066 = vld [vmem:[%s9032 + $0x84] sm:$0xf]
      %v9067 = vld [vmem:[%s9032 + $0x88] sm:$0xf]
      %v9068 = vld [vmem:[%s9032 + $0x8c] sm:$0xf]
      %v9069 = vld [vmem:[%s9032 + $0x90] sm:$0xf]
      %v9070 = vld [vmem:[%s9032 + $0x94] sm:$0xf]
      %v9071 = vld [vmem:[%s9032 + $0x98] sm:$0xf]
      %v9072 = vld [vmem:[%s9032 + $0x9c] sm:$0xf]
      %v9073 = vld [vmem:[%s9032 + $0xa0] sm:$0xf]
      %v9074 = vld [vmem:[%s9032 + $0xa4] sm:$0xf]
      %v9075 = vld [vmem:[%s9032 + $0xa8] sm:$0xf]
      %v9076 = vld [vmem:[%s9032 + $0xac] sm:$0xf]
      %v9077 = vld [vmem:[%s9032 + $0xb0] sm:$0xf]
      %v9078 = vld [vmem:[%s9032 + $0xb4] sm:$0xf]
      %v9079 = vld [vmem:[%s9032 + $0xb8] sm:$0xf]
      %v9080 = vld [vmem:[%s9032 + $0xbc] sm:$0xf]
      %v9081 = vpack.c.b16 %v7513, %v7511
      %v9082 = vpack.c.b16 %v7514, %v7512
      %v9083 = vpack.c.b16 %v9026, %v7515
      %v9084 = vpack.c.b16 %v6755, %v6555
      %v9085 = vpack.c.b16 %v9027, %v7516
      %v9086 = vpack.c.b16 %v9030, %v9028
      %v9087 = vpack.c.b16 %v6556, %v6756
      %v9088 = vpack.c.b16 %v9031, %v9029
      %v9146 = vunpack.c.l.b16 %v9033
      %v9147 = vunpack.c.l.b16 %v9034
      %v9148 = vunpack.c.l.b16 %v9035
      %v9149 = vunpack.c.l.b16 %v9036
      %v9150 = vunpack.c.l.b16 %v9037
      %v9151 = vunpack.c.l.b16 %v9038
      %v9152 = vunpack.c.l.b16 %v9039
      %v9153 = vunpack.c.l.b16 %v9040
      %v9154 = vunpack.c.l.b16 %v9041
      %v9155 = vunpack.c.l.b16 %v9042
      %v9156 = vunpack.c.l.b16 %v9043
      %v9157 = vunpack.c.l.b16 %v9044
      %v9158 = vunpack.c.l.b16 %v9045
      %v9159 = vunpack.c.l.b16 %v9046
      %v9160 = vunpack.c.l.b16 %v9047
      %v9161 = vunpack.c.l.b16 %v9048
      %v9162 = vunpack.c.l.b16 %v9049
      %v9163 = vunpack.c.l.b16 %v9050
      %v9164 = vunpack.c.l.b16 %v9051
      %v9165 = vunpack.c.l.b16 %v9052
      %v9166 = vunpack.c.l.b16 %v9053
      %v9167 = vunpack.c.l.b16 %v9054
      %v9168 = vunpack.c.l.b16 %v9055
      %v9169 = vunpack.c.l.b16 %v9056
      %v9170 = vunpack.c.l.b16 %v9057
      %v9171 = vunpack.c.l.b16 %v9058
      %v9172 = vunpack.c.l.b16 %v9059
      %v9173 = vunpack.c.l.b16 %v9060
      %v9174 = vunpack.c.l.b16 %v9061
      %v9175 = vunpack.c.l.b16 %v9062
      %v9176 = vunpack.c.l.b16 %v9063
      %v9177 = vunpack.c.l.b16 %v9064
      %v9178 = vunpack.c.l.b16 %v9065
      %v9179 = vunpack.c.l.b16 %v9066
      %v9180 = vunpack.c.l.b16 %v9067
      %v9181 = vunpack.c.l.b16 %v9068
      %v9182 = vunpack.c.l.b16 %v9069
      %v9183 = vunpack.c.l.b16 %v9070
      %v9184 = vunpack.c.l.b16 %v9071
      %v9185 = vunpack.c.l.b16 %v9072
      %v9186 = vunpack.c.l.b16 %v9073
      %v9187 = vunpack.c.l.b16 %v9074
      %v9188 = vunpack.c.l.b16 %v9075
      %v9189 = vunpack.c.l.b16 %v9076
      %v9190 = vunpack.c.l.b16 %v9077
      %v9191 = vunpack.c.l.b16 %v9078
      %v9192 = vunpack.c.l.b16 %v9079
      %v9193 = vunpack.c.l.b16 %v9080
      %v9194 = vpack.c.b16 %v9147, %v9146
      %v9195 = vpack.c.b16 %v9149, %v9148
      %v9196 = vpack.c.b16 %v9151, %v9150
      %v9197 = vpack.c.b16 %v9153, %v9152
      %v9198 = vpack.c.b16 %v9155, %v9154
      %v9199 = vpack.c.b16 %v9157, %v9156
      %v9200 = vpack.c.b16 %v9159, %v9158
      %v9201 = vpack.c.b16 %v9161, %v9160
      %v9202 = vpack.c.b16 %v9163, %v9162
      %v9203 = vpack.c.b16 %v9165, %v9164
      %v9204 = vpack.c.b16 %v9167, %v9166
      %v9205 = vpack.c.b16 %v9169, %v9168
      %v9206 = vpack.c.b16 %v9171, %v9170
      %v9207 = vpack.c.b16 %v9173, %v9172
      %v9208 = vpack.c.b16 %v9175, %v9174
      %v9209 = vpack.c.b16 %v9177, %v9176
      %v9210 = vpack.c.b16 %v9179, %v9178
      %v9211 = vpack.c.b16 %v9181, %v9180
      %v9212 = vpack.c.b16 %v9183, %v9182
      %v9213 = vpack.c.b16 %v9185, %v9184
      %v9214 = vpack.c.b16 %v9187, %v9186
      %v9215 = vpack.c.b16 %v9189, %v9188
      %v9216 = vpack.c.b16 %v9191, %v9190
      %v9217 = vpack.c.b16 %v9193, %v9192
      %9242 = vmatpush.bf16.msra.mxu0 %v9201
      %9243 = vmatpush.bf16.msra.mxu0 %v9200
      %9244 = vmatpush.bf16.msra.mxu0 %v9199
      %9245 = vmatpush.bf16.msra.mxu0 %v9198
      %9246 = vmatpush.bf16.msra.mxu0 %v9197
      %9247 = vmatpush.bf16.msra.mxu0 %v9196
      %9248 = vmatpush.bf16.msra.mxu0 %v9195
      %9249 = vmatpush.bf16.msra.mxu0 %v9194
      %9250 = vmatmul.bf16.gmra.mxu0 %v8303
      %v9251 = vpop.f32.mrf.mxu0
      %v9252 = vadd.f32 0.0, %v9251
      %v9253 = vpop.f32.mrf.mxu0
      %v9254 = vadd.f32 0.0, %v9253
      %9255 = vmatmul.bf16.gmra.mxu0 %v8305
      %v9256 = vpop.f32.mrf.mxu0
      %v9257 = vadd.f32 0.0, %v9256
      %v9258 = vpop.f32.mrf.mxu0
      %v9259 = vadd.f32 0.0, %v9258
      %9260 = vmatmul.bf16.gmra.mxu0 %v8308
      %v9261 = vpop.f32.mrf.mxu0
      %v9262 = vadd.f32 0.0, %v9261
      %v9263 = vpop.f32.mrf.mxu0
      %v9264 = vadd.f32 0.0, %v9263
      %9265 = vmatmul.bf16.gmra.mxu0 %v8311
      %v9266 = vpop.f32.mrf.mxu0
      %v9267 = vadd.f32 0.0, %v9266
      %v9268 = vpop.f32.mrf.mxu0
      %v9269 = vadd.f32 0.0, %v9268
      %9270 = vmatmul.bf16.gmra.mxu0 %v8313
      %v9271 = vpop.f32.mrf.mxu0
      %v9272 = vadd.f32 0.0, %v9271
      %v9273 = vpop.f32.mrf.mxu0
      %v9274 = vadd.f32 0.0, %v9273
      %9275 = vmatmul.bf16.gmra.mxu0 %v8316
      %v9276 = vpop.f32.mrf.mxu0
      %v9277 = vadd.f32 0.0, %v9276
      %v9278 = vpop.f32.mrf.mxu0
      %v9279 = vadd.f32 0.0, %v9278
      %9280 = vmatmul.bf16.gmra.mxu0 %v8319
      %v9281 = vpop.f32.mrf.mxu0
      %v9282 = vadd.f32 0.0, %v9281
      %v9283 = vpop.f32.mrf.mxu0
      %v9284 = vadd.f32 0.0, %v9283
      %9285 = vmatmul.bf16.gmra.mxu0 %v8321
      %v9286 = vpop.f32.mrf.mxu0
      %v9287 = vadd.f32 0.0, %v9286
      %v9288 = vpop.f32.mrf.mxu0
      %v9289 = vadd.f32 0.0, %v9288
      %9290 = vmatmul.bf16.gmra.mxu0 %v8324
      %v9291 = vpop.f32.mrf.mxu0
      %v9292 = vadd.f32 0.0, %v9291
      %v9293 = vpop.f32.mrf.mxu0
      %v9294 = vadd.f32 0.0, %v9293
      %9295 = vmatmul.bf16.gmra.mxu0 %v8327
      %v9296 = vpop.f32.mrf.mxu0
      %v9297 = vadd.f32 0.0, %v9296
      %v9298 = vpop.f32.mrf.mxu0
      %v9299 = vadd.f32 0.0, %v9298
      %9300 = vmatmul.bf16.gmra.mxu0 %v8329
      %v9301 = vpop.f32.mrf.mxu0
      %v9302 = vadd.f32 0.0, %v9301
      %v9303 = vpop.f32.mrf.mxu0
      %v9304 = vadd.f32 0.0, %v9303
      %9305 = vmatmul.bf16.gmra.mxu0 %v8332
      %v9306 = vpop.f32.mrf.mxu0
      %v9307 = vadd.f32 0.0, %v9306
      %v9308 = vpop.f32.mrf.mxu0
      %v9309 = vadd.f32 0.0, %v9308
      %9310 = vmatmul.bf16.gmra.mxu0 %v8335
      %v9311 = vpop.f32.mrf.mxu0
      %v9312 = vadd.f32 0.0, %v9311
      %v9313 = vpop.f32.mrf.mxu0
      %v9314 = vadd.f32 0.0, %v9313
      %9315 = vmatmul.bf16.gmra.mxu0 %v8337
      %v9316 = vpop.f32.mrf.mxu0
      %v9317 = vadd.f32 0.0, %v9316
      %v9318 = vpop.f32.mrf.mxu0
      %v9319 = vadd.f32 0.0, %v9318
      %9320 = vmatmul.bf16.gmra.mxu0 %v8340
      %v9321 = vpop.f32.mrf.mxu0
      %v9322 = vadd.f32 0.0, %v9321
      %v9323 = vpop.f32.mrf.mxu0
      %v9324 = vadd.f32 0.0, %v9323
      %9325 = vmatmul.bf16.gmra.mxu0 %v8343
      %v9326 = vpop.f32.mrf.mxu0
      %v9327 = vadd.f32 0.0, %v9326
      %v9328 = vpop.f32.mrf.mxu0
      %v9329 = vadd.f32 0.0, %v9328
      %9330 = vmatmul.bf16.gmra.mxu0 %v8345
      %v9331 = vpop.f32.mrf.mxu0
      %v9332 = vadd.f32 0.0, %v9331
      %v9333 = vpop.f32.mrf.mxu0
      %v9334 = vadd.f32 0.0, %v9333
      %9335 = vmatmul.bf16.gmra.mxu0 %v8348
      %v9336 = vpop.f32.mrf.mxu0
      %v9337 = vadd.f32 0.0, %v9336
      %v9338 = vpop.f32.mrf.mxu0
      %v9339 = vadd.f32 0.0, %v9338
      %9340 = vmatmul.bf16.gmra.mxu0 %v8351
      %v9341 = vpop.f32.mrf.mxu0
      %v9342 = vadd.f32 0.0, %v9341
      %v9343 = vpop.f32.mrf.mxu0
      %v9344 = vadd.f32 0.0, %v9343
      %9345 = vmatmul.bf16.gmra.mxu0 %v8353
      %v9346 = vpop.f32.mrf.mxu0
      %v9347 = vadd.f32 0.0, %v9346
      %v9348 = vpop.f32.mrf.mxu0
      %v9349 = vadd.f32 0.0, %v9348
      %9350 = vmatmul.bf16.gmra.mxu0 %v8356
      %v9351 = vpop.f32.mrf.mxu0
      %v9352 = vadd.f32 0.0, %v9351
      %v9353 = vpop.f32.mrf.mxu0
      %v9354 = vadd.f32 0.0, %v9353
      %9355 = vmatmul.bf16.gmra.mxu0 %v8359
      %v9356 = vpop.f32.mrf.mxu0
      %v9357 = vadd.f32 0.0, %v9356
      %v9358 = vpop.f32.mrf.mxu0
      %v9359 = vadd.f32 0.0, %v9358
      %9360 = vmatmul.bf16.gmra.mxu0 %v8361
      %v9361 = vpop.f32.mrf.mxu0
      %v9362 = vadd.f32 0.0, %v9361
      %v9363 = vpop.f32.mrf.mxu0
      %v9364 = vadd.f32 0.0, %v9363
      %9365 = vmatmul.bf16.gmra.mxu0 %v8364
      %v9366 = vpop.f32.mrf.mxu0
      %v9367 = vadd.f32 0.0, %v9366
      %v9368 = vpop.f32.mrf.mxu0
      %v9369 = vadd.f32 0.0, %v9368
      %9370 = vmatmul.bf16.gmra.mxu0 %v9081
      %v9371 = vpop.f32.mrf.mxu0
      %v9372 = vadd.f32 0.0, %v9371
      %v9373 = vpop.f32.mrf.mxu0
      %v9374 = vadd.f32 0.0, %v9373
      %9375 = vmatmul.bf16.gmra.mxu0 %v9083
      %v9376 = vpop.f32.mrf.mxu0
      %v9377 = vadd.f32 0.0, %v9376
      %v9378 = vpop.f32.mrf.mxu0
      %v9379 = vadd.f32 0.0, %v9378
      %9380 = vmatmul.bf16.gmra.mxu0 %v9086
      %v9381 = vpop.f32.mrf.mxu0
      %v9382 = vadd.f32 0.0, %v9381
      %v9383 = vpop.f32.mrf.mxu0
      %v9384 = vadd.f32 0.0, %v9383
      %9385 = vdwg.mxu0
      %9386 = vmatpush.bf16.msra.mxu0 %v9209
      %9387 = vmatpush.bf16.msra.mxu0 %v9208
      %9388 = vmatpush.bf16.msra.mxu0 %v9207
      %9389 = vmatpush.bf16.msra.mxu0 %v9206
      %9390 = vmatpush.bf16.msra.mxu0 %v9205
      %9391 = vmatpush.bf16.msra.mxu0 %v9204
      %9392 = vmatpush.bf16.msra.mxu0 %v9203
      %9393 = vmatpush.bf16.msra.mxu0 %v9202
      %9394 = vmatmul.bf16.gmra.mxu0 %v6759
      %v9395 = vpop.f32.mrf.mxu0
      %v9396 = vadd.f32 %v9252, %v9395
      %v9397 = vpop.f32.mrf.mxu0
      %v9398 = vadd.f32 %v9254, %v9397
      %9399 = vmatmul.bf16.gmra.mxu0 %v8306
      %v9400 = vpop.f32.mrf.mxu0
      %v9401 = vadd.f32 %v9257, %v9400
      %v9402 = vpop.f32.mrf.mxu0
      %v9403 = vadd.f32 %v9259, %v9402
      %9404 = vmatmul.bf16.gmra.mxu0 %v8309
      %v9405 = vpop.f32.mrf.mxu0
      %v9406 = vadd.f32 %v9262, %v9405
      %v9407 = vpop.f32.mrf.mxu0
      %v9408 = vadd.f32 %v9264, %v9407
      %9409 = vmatmul.bf16.gmra.mxu0 %v6761
      %v9410 = vpop.f32.mrf.mxu0
      %v9411 = vadd.f32 %v9267, %v9410
      %v9412 = vpop.f32.mrf.mxu0
      %v9413 = vadd.f32 %v9269, %v9412
      %9414 = vmatmul.bf16.gmra.mxu0 %v8314
      %v9415 = vpop.f32.mrf.mxu0
      %v9416 = vadd.f32 %v9272, %v9415
      %v9417 = vpop.f32.mrf.mxu0
      %v9418 = vadd.f32 %v9274, %v9417
      %9419 = vmatmul.bf16.gmra.mxu0 %v8317
      %v9420 = vpop.f32.mrf.mxu0
      %v9421 = vadd.f32 %v9277, %v9420
      %v9422 = vpop.f32.mrf.mxu0
      %v9423 = vadd.f32 %v9279, %v9422
      %9424 = vmatmul.bf16.gmra.mxu0 %v6763
      %v9425 = vpop.f32.mrf.mxu0
      %v9426 = vadd.f32 %v9282, %v9425
      %v9427 = vpop.f32.mrf.mxu0
      %v9428 = vadd.f32 %v9284, %v9427
      %9429 = vmatmul.bf16.gmra.mxu0 %v8322
      %v9430 = vpop.f32.mrf.mxu0
      %v9431 = vadd.f32 %v9287, %v9430
      %v9432 = vpop.f32.mrf.mxu0
      %v9433 = vadd.f32 %v9289, %v9432
      %9434 = vmatmul.bf16.gmra.mxu0 %v8325
      %v9435 = vpop.f32.mrf.mxu0
      %v9436 = vadd.f32 %v9292, %v9435
      %v9437 = vpop.f32.mrf.mxu0
      %v9438 = vadd.f32 %v9294, %v9437
      %9439 = vmatmul.bf16.gmra.mxu0 %v6765
      %v9440 = vpop.f32.mrf.mxu0
      %v9441 = vadd.f32 %v9297, %v9440
      %v9442 = vpop.f32.mrf.mxu0
      %v9443 = vadd.f32 %v9299, %v9442
      %9444 = vmatmul.bf16.gmra.mxu0 %v8330
      %v9445 = vpop.f32.mrf.mxu0
      %v9446 = vadd.f32 %v9302, %v9445
      %v9447 = vpop.f32.mrf.mxu0
      %v9448 = vadd.f32 %v9304, %v9447
      %9449 = vmatmul.bf16.gmra.mxu0 %v8333
      %v9450 = vpop.f32.mrf.mxu0
      %v9451 = vadd.f32 %v9307, %v9450
      %v9452 = vpop.f32.mrf.mxu0
      %v9453 = vadd.f32 %v9309, %v9452
      %9454 = vmatmul.bf16.gmra.mxu0 %v6767
      %v9455 = vpop.f32.mrf.mxu0
      %v9456 = vadd.f32 %v9312, %v9455
      %v9457 = vpop.f32.mrf.mxu0
      %v9458 = vadd.f32 %v9314, %v9457
      %9459 = vmatmul.bf16.gmra.mxu0 %v8338
      %v9460 = vpop.f32.mrf.mxu0
      %v9461 = vadd.f32 %v9317, %v9460
      %v9462 = vpop.f32.mrf.mxu0
      %v9463 = vadd.f32 %v9319, %v9462
      %9464 = vmatmul.bf16.gmra.mxu0 %v8341
      %v9465 = vpop.f32.mrf.mxu0
      %v9466 = vadd.f32 %v9322, %v9465
      %v9467 = vpop.f32.mrf.mxu0
      %v9468 = vadd.f32 %v9324, %v9467
      %9469 = vmatmul.bf16.gmra.mxu0 %v6769
      %v9470 = vpop.f32.mrf.mxu0
      %v9471 = vadd.f32 %v9327, %v9470
      %v9472 = vpop.f32.mrf.mxu0
      %v9473 = vadd.f32 %v9329, %v9472
      %9474 = vmatmul.bf16.gmra.mxu0 %v8346
      %v9475 = vpop.f32.mrf.mxu0
      %v9476 = vadd.f32 %v9332, %v9475
      %v9477 = vpop.f32.mrf.mxu0
      %v9478 = vadd.f32 %v9334, %v9477
      %9479 = vmatmul.bf16.gmra.mxu0 %v8349
      %v9480 = vpop.f32.mrf.mxu0
      %v9481 = vadd.f32 %v9337, %v9480
      %v9482 = vpop.f32.mrf.mxu0
      %v9483 = vadd.f32 %v9339, %v9482
      %9484 = vmatmul.bf16.gmra.mxu0 %v6771
      %v9485 = vpop.f32.mrf.mxu0
      %v9486 = vadd.f32 %v9342, %v9485
      %v9487 = vpop.f32.mrf.mxu0
      %v9488 = vadd.f32 %v9344, %v9487
      %9489 = vmatmul.bf16.gmra.mxu0 %v8354
      %v9490 = vpop.f32.mrf.mxu0
      %v9491 = vadd.f32 %v9347, %v9490
      %v9492 = vpop.f32.mrf.mxu0
      %v9493 = vadd.f32 %v9349, %v9492
      %9494 = vmatmul.bf16.gmra.mxu0 %v8357
      %v9495 = vpop.f32.mrf.mxu0
      %v9496 = vadd.f32 %v9352, %v9495
      %v9497 = vpop.f32.mrf.mxu0
      %v9498 = vadd.f32 %v9354, %v9497
      %9499 = vmatmul.bf16.gmra.mxu0 %v6773
      %v9500 = vpop.f32.mrf.mxu0
      %v9501 = vadd.f32 %v9357, %v9500
      %v9502 = vpop.f32.mrf.mxu0
      %v9503 = vadd.f32 %v9359, %v9502
      %9504 = vmatmul.bf16.gmra.mxu0 %v8362
      %v9505 = vpop.f32.mrf.mxu0
      %v9506 = vadd.f32 %v9362, %v9505
      %v9507 = vpop.f32.mrf.mxu0
      %v9508 = vadd.f32 %v9364, %v9507
      %9509 = vmatmul.bf16.gmra.mxu0 %v8365
      %v9510 = vpop.f32.mrf.mxu0
      %v9511 = vadd.f32 %v9367, %v9510
      %v9512 = vpop.f32.mrf.mxu0
      %v9513 = vadd.f32 %v9369, %v9512
      %9514 = vmatmul.bf16.gmra.mxu0 %v6775
      %v9515 = vpop.f32.mrf.mxu0
      %v9516 = vadd.f32 %v9372, %v9515
      %v9517 = vpop.f32.mrf.mxu0
      %v9518 = vadd.f32 %v9374, %v9517
      %9519 = vmatmul.bf16.gmra.mxu0 %v9084
      %v9520 = vpop.f32.mrf.mxu0
      %v9521 = vadd.f32 %v9377, %v9520
      %v9522 = vpop.f32.mrf.mxu0
      %v9523 = vadd.f32 %v9379, %v9522
      %9524 = vmatmul.bf16.gmra.mxu0 %v9087
      %v9525 = vpop.f32.mrf.mxu0
      %v9526 = vadd.f32 %v9382, %v9525
      %v9527 = vpop.f32.mrf.mxu0
      %v9528 = vadd.f32 %v9384, %v9527
      %9529 = vdwg.mxu0
      %9530 = vmatpush.bf16.msra.mxu0 %v9217
      %9531 = vmatpush.bf16.msra.mxu0 %v9216
      %9532 = vmatpush.bf16.msra.mxu0 %v9215
      %9533 = vmatpush.bf16.msra.mxu0 %v9214
      %9534 = vmatpush.bf16.msra.mxu0 %v9213
      %9535 = vmatpush.bf16.msra.mxu0 %v9212
      %9536 = vmatpush.bf16.msra.mxu0 %v9211
      %9537 = vmatpush.bf16.msra.mxu0 %v9210
      %9538 = vmatmul.bf16.gmra.mxu0 %v8304
      %v9539 = vpop.f32.mrf.mxu0
      %v9540 = vadd.f32 %v9396, %v9539
      %v9541 = vpop.f32.mrf.mxu0
      %v9542 = vadd.f32 %v9398, %v9541
      %9543 = vmatmul.bf16.gmra.mxu0 %v8307
      %v9544 = vpop.f32.mrf.mxu0
      %v9545 = vadd.f32 %v9401, %v9544
      %v9546 = vpop.f32.mrf.mxu0
      %v9547 = vadd.f32 %v9403, %v9546
      %9548 = vmatmul.bf16.gmra.mxu0 %v8310
      %v9549 = vpop.f32.mrf.mxu0
      %v9550 = vadd.f32 %v9406, %v9549
      %v9551 = vpop.f32.mrf.mxu0
      %v9552 = vadd.f32 %v9408, %v9551
      %9553 = vmatmul.bf16.gmra.mxu0 %v8312
      %v9554 = vpop.f32.mrf.mxu0
      %v9555 = vadd.f32 %v9411, %v9554
      %v9556 = vpop.f32.mrf.mxu0
      %v9557 = vadd.f32 %v9413, %v9556
      %9558 = vmatmul.bf16.gmra.mxu0 %v8315
      %v9559 = vpop.f32.mrf.mxu0
      %v9560 = vadd.f32 %v9416, %v9559
      %v9561 = vpop.f32.mrf.mxu0
      %v9562 = vadd.f32 %v9418, %v9561
      %9563 = vmatmul.bf16.gmra.mxu0 %v8318
      %v9564 = vpop.f32.mrf.mxu0
      %v9565 = vadd.f32 %v9421, %v9564
      %v9566 = vpop.f32.mrf.mxu0
      %v9567 = vadd.f32 %v9423, %v9566
      %9568 = vmatmul.bf16.gmra.mxu0 %v8320
      %v9569 = vpop.f32.mrf.mxu0
      %v9570 = vadd.f32 %v9426, %v9569
      %v9571 = vpop.f32.mrf.mxu0
      %v9572 = vadd.f32 %v9428, %v9571
      %9573 = vmatmul.bf16.gmra.mxu0 %v8323
      %v9574 = vpop.f32.mrf.mxu0
      %v9575 = vadd.f32 %v9431, %v9574
      %v9576 = vpop.f32.mrf.mxu0
      %v9577 = vadd.f32 %v9433, %v9576
      %9578 = vmatmul.bf16.gmra.mxu0 %v8326
      %v9579 = vpop.f32.mrf.mxu0
      %v9580 = vadd.f32 %v9436, %v9579
      %v9581 = vpop.f32.mrf.mxu0
      %v9582 = vadd.f32 %v9438, %v9581
      %9583 = vmatmul.bf16.gmra.mxu0 %v8328
      %v9584 = vpop.f32.mrf.mxu0
      %v9585 = vadd.f32 %v9441, %v9584
      %v9586 = vpop.f32.mrf.mxu0
      %v9587 = vadd.f32 %v9443, %v9586
      %9588 = vmatmul.bf16.gmra.mxu0 %v8331
      %v9589 = vpop.f32.mrf.mxu0
      %v9590 = vadd.f32 %v9446, %v9589
      %v9591 = vpop.f32.mrf.mxu0
      %v9592 = vadd.f32 %v9448, %v9591
      %9593 = vmatmul.bf16.gmra.mxu0 %v8334
      %v9594 = vpop.f32.mrf.mxu0
      %v9595 = vadd.f32 %v9451, %v9594
      %v9596 = vpop.f32.mrf.mxu0
      %v9597 = vadd.f32 %v9453, %v9596
      %9598 = vmatmul.bf16.gmra.mxu0 %v8336
      %v9599 = vpop.f32.mrf.mxu0
      %v9600 = vadd.f32 %v9456, %v9599
      %v9601 = vpop.f32.mrf.mxu0
      %v9602 = vadd.f32 %v9458, %v9601
      %9603 = vmatmul.bf16.gmra.mxu0 %v8339
      %v9604 = vpop.f32.mrf.mxu0
      %v9605 = vadd.f32 %v9461, %v9604
      %v9606 = vpop.f32.mrf.mxu0
      %v9607 = vadd.f32 %v9463, %v9606
      %9608 = vmatmul.bf16.gmra.mxu0 %v8342
      %v9609 = vpop.f32.mrf.mxu0
      %v9610 = vadd.f32 %v9466, %v9609
      %v9611 = vpop.f32.mrf.mxu0
      %v9612 = vadd.f32 %v9468, %v9611
      %9613 = vmatmul.bf16.gmra.mxu0 %v8344
      %v9614 = vpop.f32.mrf.mxu0
      %v9615 = vadd.f32 %v9471, %v9614
      %v9616 = vpop.f32.mrf.mxu0
      %v9617 = vadd.f32 %v9473, %v9616
      %9618 = vmatmul.bf16.gmra.mxu0 %v8347
      %v9619 = vpop.f32.mrf.mxu0
      %v9620 = vadd.f32 %v9476, %v9619
      %v9621 = vpop.f32.mrf.mxu0
      %v9622 = vadd.f32 %v9478, %v9621
      %9623 = vmatmul.bf16.gmra.mxu0 %v8350
      %v9624 = vpop.f32.mrf.mxu0
      %v9625 = vadd.f32 %v9481, %v9624
      %v9626 = vpop.f32.mrf.mxu0
      %v9627 = vadd.f32 %v9483, %v9626
      %9628 = vmatmul.bf16.gmra.mxu0 %v8352
      %v9629 = vpop.f32.mrf.mxu0
      %v9630 = vadd.f32 %v9486, %v9629
      %v9631 = vpop.f32.mrf.mxu0
      %v9632 = vadd.f32 %v9488, %v9631
      %9633 = vmatmul.bf16.gmra.mxu0 %v8355
      %v9634 = vpop.f32.mrf.mxu0
      %v9635 = vadd.f32 %v9491, %v9634
      %v9636 = vpop.f32.mrf.mxu0
      %v9637 = vadd.f32 %v9493, %v9636
      %9638 = vmatmul.bf16.gmra.mxu0 %v8358
      %v9639 = vpop.f32.mrf.mxu0
      %v9640 = vadd.f32 %v9496, %v9639
      %v9641 = vpop.f32.mrf.mxu0
      %v9642 = vadd.f32 %v9498, %v9641
      %9643 = vmatmul.bf16.gmra.mxu0 %v8360
      %v9644 = vpop.f32.mrf.mxu0
      %v9645 = vadd.f32 %v9501, %v9644
      %v9646 = vpop.f32.mrf.mxu0
      %v9647 = vadd.f32 %v9503, %v9646
      %9648 = vmatmul.bf16.gmra.mxu0 %v8363
      %v9649 = vpop.f32.mrf.mxu0
      %v9650 = vadd.f32 %v9506, %v9649
      %v9651 = vpop.f32.mrf.mxu0
      %v9652 = vadd.f32 %v9508, %v9651
      %9653 = vmatmul.bf16.gmra.mxu0 %v8366
      %v9654 = vpop.f32.mrf.mxu0
      %v9655 = vadd.f32 %v9511, %v9654
      %v9656 = vpop.f32.mrf.mxu0
      %v9657 = vadd.f32 %v9513, %v9656
      %9658 = vmatmul.bf16.gmra.mxu0 %v9082
      %v9659 = vpop.f32.mrf.mxu0
      %v9660 = vadd.f32 %v9516, %v9659
      %v9661 = vpop.f32.mrf.mxu0
      %v9662 = vadd.f32 %v9518, %v9661
      %9663 = vmatmul.bf16.gmra.mxu0 %v9085
      %v9664 = vpop.f32.mrf.mxu0
      %v9665 = vadd.f32 %v9521, %v9664
      %v9666 = vpop.f32.mrf.mxu0
      %v9667 = vadd.f32 %v9523, %v9666
      %9668 = vmatmul.bf16.gmra.mxu0 %v9088
      %v9669 = vpop.f32.mrf.mxu0
      %v9670 = vadd.f32 %v9526, %v9669
      %v9671 = vpop.f32.mrf.mxu0
      %v9672 = vadd.f32 %v9528, %v9671
      %9673 = vdwg.mxu0
      %v9674 = vadd.f32 %v8890, %v9540
      %v9675 = vadd.f32 %v8892, %v9542
      %v9676 = vadd.f32 %v8895, %v9545
      %v9677 = vadd.f32 %v8897, %v9547
      %v9678 = vadd.f32 %v8900, %v9550
      %v9679 = vadd.f32 %v8902, %v9552
      %v9680 = vadd.f32 %v8905, %v9555
      %v9681 = vadd.f32 %v8907, %v9557
      %v9682 = vadd.f32 %v8910, %v9560
      %v9683 = vadd.f32 %v8912, %v9562
      %v9684 = vadd.f32 %v8915, %v9565
      %v9685 = vadd.f32 %v8917, %v9567
      %v9686 = vadd.f32 %v8920, %v9570
      %v9687 = vadd.f32 %v8922, %v9572
      %v9688 = vadd.f32 %v8925, %v9575
      %v9689 = vadd.f32 %v8927, %v9577
      %v9690 = vadd.f32 %v8930, %v9580
      %v9691 = vadd.f32 %v8932, %v9582
      %v9692 = vadd.f32 %v8935, %v9585
      %v9693 = vadd.f32 %v8937, %v9587
      %v9694 = vadd.f32 %v8940, %v9590
      %v9695 = vadd.f32 %v8942, %v9592
      %v9696 = vadd.f32 %v8945, %v9595
      %v9697 = vadd.f32 %v8947, %v9597
      %v9698 = vadd.f32 %v8950, %v9600
      %v9699 = vadd.f32 %v8952, %v9602
      %v9700 = vadd.f32 %v8955, %v9605
      %v9701 = vadd.f32 %v8957, %v9607
      %v9702 = vadd.f32 %v8960, %v9610
      %v9703 = vadd.f32 %v8962, %v9612
      %v9704 = vadd.f32 %v8965, %v9615
      %v9705 = vadd.f32 %v8967, %v9617
      %v9706 = vadd.f32 %v8970, %v9620
      %v9707 = vadd.f32 %v8972, %v9622
      %v9708 = vadd.f32 %v8975, %v9625
      %v9709 = vadd.f32 %v8977, %v9627
      %v9710 = vadd.f32 %v8980, %v9630
      %v9711 = vadd.f32 %v8982, %v9632
      %v9712 = vadd.f32 %v8985, %v9635
      %v9713 = vadd.f32 %v8987, %v9637
      %v9714 = vadd.f32 %v8990, %v9640
      %v9715 = vadd.f32 %v8992, %v9642
      %v9716 = vadd.f32 %v8995, %v9645
      %v9717 = vadd.f32 %v8997, %v9647
      %v9718 = vadd.f32 %v9000, %v9650
      %v9719 = vadd.f32 %v9002, %v9652
      %v9720 = vadd.f32 %v9005, %v9655
      %v9721 = vadd.f32 %v9007, %v9657
      %v9722 = vadd.f32 %v9010, %v9660
      %v9723 = vadd.f32 %v9012, %v9662
      %v9724 = vadd.f32 %v9015, %v9665
      %v9725 = vadd.f32 %v9017, %v9667
      %v9726 = vadd.f32 %v9020, %v9670
      %v9727 = vadd.f32 %v9022, %v9672
      %v9728 = vld [vmem:[%s8] sm:$0x1]
      %v9730 = vperm.slane %v9728, 0
      %v9732 = vadd.f32 %v9674, %v9730
      %v9733 = vadd.f32 %v9675, %v9730
      %v9734 = vadd.f32 %v9676, %v9730
      %v9735 = vadd.f32 %v9677, %v9730
      %v9736 = vadd.f32 %v9678, %v9730
      %v9737 = vadd.f32 %v9679, %v9730
      %v9738 = vadd.f32 %v9680, %v9730
      %v9739 = vadd.f32 %v9681, %v9730
      %v9740 = vadd.f32 %v9682, %v9730
      %v9741 = vadd.f32 %v9683, %v9730
      %v9742 = vadd.f32 %v9684, %v9730
      %v9743 = vadd.f32 %v9685, %v9730
      %v9744 = vadd.f32 %v9686, %v9730
      %v9745 = vadd.f32 %v9687, %v9730
      %v9746 = vadd.f32 %v9688, %v9730
      %v9747 = vadd.f32 %v9689, %v9730
      %v9748 = vadd.f32 %v9690, %v9730
      %v9749 = vadd.f32 %v9691, %v9730
      %v9750 = vadd.f32 %v9692, %v9730
      %v9751 = vadd.f32 %v9693, %v9730
      %v9752 = vadd.f32 %v9694, %v9730
      %v9753 = vadd.f32 %v9695, %v9730
      %v9754 = vadd.f32 %v9696, %v9730
      %v9755 = vadd.f32 %v9697, %v9730
      %v9756 = vadd.f32 %v9698, %v9730
      %v9757 = vadd.f32 %v9699, %v9730
      %v9758 = vadd.f32 %v9700, %v9730
      %v9759 = vadd.f32 %v9701, %v9730
      %v9760 = vadd.f32 %v9702, %v9730
      %v9761 = vadd.f32 %v9703, %v9730
      %v9762 = vadd.f32 %v9704, %v9730
      %v9763 = vadd.f32 %v9705, %v9730
      %v9764 = vadd.f32 %v9706, %v9730
      %v9765 = vadd.f32 %v9707, %v9730
      %v9766 = vadd.f32 %v9708, %v9730
      %v9767 = vadd.f32 %v9709, %v9730
      %v9768 = vadd.f32 %v9710, %v9730
      %v9769 = vadd.f32 %v9711, %v9730
      %v9770 = vadd.f32 %v9712, %v9730
      %v9771 = vadd.f32 %v9713, %v9730
      %v9772 = vadd.f32 %v9714, %v9730
      %v9773 = vadd.f32 %v9715, %v9730
      %v9774 = vadd.f32 %v9716, %v9730
      %v9775 = vadd.f32 %v9717, %v9730
      %v9776 = vadd.f32 %v9718, %v9730
      %v9777 = vadd.f32 %v9719, %v9730
      %v9778 = vadd.f32 %v9720, %v9730
      %v9779 = vadd.f32 %v9721, %v9730
      %v9780 = vadd.f32 %v9722, %v9730
      %v9781 = vadd.f32 %v9723, %v9730
      %v9782 = vadd.f32 %v9724, %v9730
      %v9783 = vadd.f32 %v9725, %v9730
      %v9784 = vadd.f32 %v9726, %v9730
      %v9785 = vadd.f32 %v9727, %v9730
      %s9786 = ssub.s32 %s486, 1
      %v9787 = vstv %s9786
      %v9788 = vadd.s32 %v9787, 1
      %v9789 = vadd.s32 %v9787, 2
      %v9790 = vadd.s32 %v9787, 3
      %v9791 = vadd.s32 %v9787, 4
      %v9792 = vadd.s32 %v9787, 5
      %v9793 = vadd.s32 %v9787, 6
      %v9794 = vadd.s32 %v9787, 7
      %v9795 = vadd.s32 %v9787, 8
      %v9796 = vadd.s32 %v9787, 9
      %v9797 = vadd.s32 %v9787, 10
      %v9798 = vadd.s32 %v9787, 11
      %v9799 = vadd.s32 %v9787, 12
      %v9800 = vadd.s32 %v9787, 13
      %v9801 = vadd.s32 %v9787, 14
      %v9802 = vadd.s32 %v9787, 15
      %v9803 = vadd.s32 %v9787, 16
      %v9804 = vadd.s32 %v9787, 17
      %vm9805 = vcmp.ge.s32.totalorder %v9787, 0
      %vm9806 = vcmp.ge.s32.totalorder %v9788, 0
      %vm9807 = vcmp.ge.s32.totalorder %v9789, 0
      %vm9808 = vcmp.ge.s32.totalorder %v9790, 0
      %vm9809 = vcmp.ge.s32.totalorder %v9791, 0
      %vm9810 = vcmp.ge.s32.totalorder %v9792, 0
      %vm9811 = vcmp.ge.s32.totalorder %v9793, 0
      %vm9812 = vcmp.ge.s32.totalorder %v9794, 0
      %vm9813 = vcmp.ge.s32.totalorder %v9795, 0
      %vm9814 = vcmp.ge.s32.totalorder %v9796, 0
      %vm9815 = vcmp.ge.s32.totalorder %v9797, 0
      %vm9816 = vcmp.ge.s32.totalorder %v9798, 0
      %vm9817 = vcmp.ge.s32.totalorder %v9799, 0
      %vm9818 = vcmp.ge.s32.totalorder %v9800, 0
      %vm9819 = vcmp.ge.s32.totalorder %v9801, 0
      %vm9820 = vcmp.ge.s32.totalorder %v9802, 0
      %vm9821 = vcmp.ge.s32.totalorder %v9803, 0
      %vm9822 = vcmp.ge.s32.totalorder %v9804, 0
      %vm9823 = vcmp.lt.s32.totalorder %v9787, 16
      %vm9824 = vcmp.lt.s32.totalorder %v9788, 16
      %vm9825 = vcmp.lt.s32.totalorder %v9789, 16
      %vm9826 = vcmp.lt.s32.totalorder %v9790, 16
      %vm9827 = vcmp.lt.s32.totalorder %v9791, 16
      %vm9828 = vcmp.lt.s32.totalorder %v9792, 16
      %vm9829 = vcmp.lt.s32.totalorder %v9793, 16
      %vm9830 = vcmp.lt.s32.totalorder %v9794, 16
      %vm9831 = vcmp.lt.s32.totalorder %v9795, 16
      %vm9832 = vcmp.lt.s32.totalorder %v9796, 16
      %vm9833 = vcmp.lt.s32.totalorder %v9797, 16
      %vm9834 = vcmp.lt.s32.totalorder %v9798, 16
      %vm9835 = vcmp.lt.s32.totalorder %v9799, 16
      %vm9836 = vcmp.lt.s32.totalorder %v9800, 16
      %vm9837 = vcmp.lt.s32.totalorder %v9801, 16
      %vm9838 = vcmp.lt.s32.totalorder %v9802, 16
      %vm9839 = vcmp.lt.s32.totalorder %v9803, 16
      %vm9840 = vcmp.lt.s32.totalorder %v9804, 16
      %vm9841 = vmand %vm9805, %vm9823
      %vm9842 = vmand %vm9806, %vm9824
      %vm9843 = vmand %vm9807, %vm9825
      %vm9844 = vmand %vm9808, %vm9826
      %vm9845 = vmand %vm9809, %vm9827
      %vm9846 = vmand %vm9810, %vm9828
      %vm9847 = vmand %vm9811, %vm9829
      %vm9848 = vmand %vm9812, %vm9830
      %vm9849 = vmand %vm9813, %vm9831
      %vm9850 = vmand %vm9814, %vm9832
      %vm9851 = vmand %vm9815, %vm9833
      %vm9852 = vmand %vm9816, %vm9834
      %vm9853 = vmand %vm9817, %vm9835
      %vm9854 = vmand %vm9818, %vm9836
      %vm9855 = vmand %vm9819, %vm9837
      %vm9856 = vmand %vm9820, %vm9838
      %vm9857 = vmand %vm9821, %vm9839
      %vm9858 = vmand %vm9822, %vm9840
      %vm9859 = vmand %vm9841, %vm1590
      %vm9860 = vmand %vm9841, %vm1591
      %vm9861 = vmand %vm9841, %vm1592
      %vm9862 = vmand %vm9842, %vm1590
      %vm9863 = vmand %vm9842, %vm1591
      %vm9864 = vmand %vm9842, %vm1592
      %vm9865 = vmand %vm9843, %vm1590
      %vm9866 = vmand %vm9843, %vm1591
      %vm9867 = vmand %vm9843, %vm1592
      %vm9868 = vmand %vm9844, %vm1590
      %vm9869 = vmand %vm9844, %vm1591
      %vm9870 = vmand %vm9844, %vm1592
      %vm9871 = vmand %vm9845, %vm1590
      %vm9872 = vmand %vm9845, %vm1591
      %vm9873 = vmand %vm9845, %vm1592
      %vm9874 = vmand %vm9846, %vm1590
      %vm9875 = vmand %vm9846, %vm1591
      %vm9876 = vmand %vm9846, %vm1592
      %vm9877 = vmand %vm9847, %vm1590
      %vm9878 = vmand %vm9847, %vm1591
      %vm9879 = vmand %vm9847, %vm1592
      %vm9880 = vmand %vm9848, %vm1590
      %vm9881 = vmand %vm9848, %vm1591
      %vm9882 = vmand %vm9848, %vm1592
      %vm9883 = vmand %vm9849, %vm1590
      %vm9884 = vmand %vm9849, %vm1591
      %vm9885 = vmand %vm9849, %vm1592
      %vm9886 = vmand %vm9850, %vm1590
      %vm9887 = vmand %vm9850, %vm1591
      %vm9888 = vmand %vm9850, %vm1592
      %vm9889 = vmand %vm9851, %vm1590
      %vm9890 = vmand %vm9851, %vm1591
      %vm9891 = vmand %vm9851, %vm1592
      %vm9892 = vmand %vm9852, %vm1590
      %vm9893 = vmand %vm9852, %vm1591
      %vm9894 = vmand %vm9852, %vm1592
      %vm9895 = vmand %vm9853, %vm1590
      %vm9896 = vmand %vm9853, %vm1591
      %vm9897 = vmand %vm9853, %vm1592
      %vm9898 = vmand %vm9854, %vm1590
      %vm9899 = vmand %vm9854, %vm1591
      %vm9900 = vmand %vm9854, %vm1592
      %vm9901 = vmand %vm9855, %vm1590
      %vm9902 = vmand %vm9855, %vm1591
      %vm9903 = vmand %vm9855, %vm1592
      %vm9904 = vmand %vm9856, %vm1590
      %vm9905 = vmand %vm9856, %vm1591
      %vm9906 = vmand %vm9856, %vm1592
      %vm9907 = vmand %vm9857, %vm1590
      %vm9908 = vmand %vm9857, %vm1591
      %vm9909 = vmand %vm9857, %vm1592
      %vm9910 = vmand %vm9858, %vm1590
      %vm9911 = vmand %vm9858, %vm1591
      %vm9912 = vmand %vm9858, %vm1592
      %vm9913 = vcmp.ge.f32.partialorder %v9732, 0.0
      %vm9914 = vcmp.ge.f32.partialorder %v9733, 0.0
      %vm9915 = vcmp.ge.f32.partialorder %v9734, 0.0
      %vm9916 = vcmp.ge.f32.partialorder %v9735, 0.0
      %vm9917 = vcmp.ge.f32.partialorder %v9736, 0.0
      %vm9918 = vcmp.ge.f32.partialorder %v9737, 0.0
      %vm9919 = vcmp.ge.f32.partialorder %v9738, 0.0
      %vm9920 = vcmp.ge.f32.partialorder %v9739, 0.0
      %vm9921 = vcmp.ge.f32.partialorder %v9740, 0.0
      %vm9922 = vcmp.ge.f32.partialorder %v9741, 0.0
      %vm9923 = vcmp.ge.f32.partialorder %v9742, 0.0
      %vm9924 = vcmp.ge.f32.partialorder %v9743, 0.0
      %vm9925 = vcmp.ge.f32.partialorder %v9744, 0.0
      %vm9926 = vcmp.ge.f32.partialorder %v9745, 0.0
      %vm9927 = vcmp.ge.f32.partialorder %v9746, 0.0
      %vm9928 = vcmp.ge.f32.partialorder %v9747, 0.0
      %vm9929 = vcmp.ge.f32.partialorder %v9748, 0.0
      %vm9930 = vcmp.ge.f32.partialorder %v9749, 0.0
      %vm9931 = vcmp.ge.f32.partialorder %v9750, 0.0
      %vm9932 = vcmp.ge.f32.partialorder %v9751, 0.0
      %vm9933 = vcmp.ge.f32.partialorder %v9752, 0.0
      %vm9934 = vcmp.ge.f32.partialorder %v9753, 0.0
      %vm9935 = vcmp.ge.f32.partialorder %v9754, 0.0
      %vm9936 = vcmp.ge.f32.partialorder %v9755, 0.0
      %vm9937 = vcmp.ge.f32.partialorder %v9756, 0.0
      %vm9938 = vcmp.ge.f32.partialorder %v9757, 0.0
      %vm9939 = vcmp.ge.f32.partialorder %v9758, 0.0
      %vm9940 = vcmp.ge.f32.partialorder %v9759, 0.0
      %vm9941 = vcmp.ge.f32.partialorder %v9760, 0.0
      %vm9942 = vcmp.ge.f32.partialorder %v9761, 0.0
      %vm9943 = vcmp.ge.f32.partialorder %v9762, 0.0
      %vm9944 = vcmp.ge.f32.partialorder %v9763, 0.0
      %vm9945 = vcmp.ge.f32.partialorder %v9764, 0.0
      %vm9946 = vcmp.ge.f32.partialorder %v9765, 0.0
      %vm9947 = vcmp.ge.f32.partialorder %v9766, 0.0
      %vm9948 = vcmp.ge.f32.partialorder %v9767, 0.0
      %vm9949 = vcmp.ge.f32.partialorder %v9768, 0.0
      %vm9950 = vcmp.ge.f32.partialorder %v9769, 0.0
      %vm9951 = vcmp.ge.f32.partialorder %v9770, 0.0
      %vm9952 = vcmp.ge.f32.partialorder %v9771, 0.0
      %vm9953 = vcmp.ge.f32.partialorder %v9772, 0.0
      %vm9954 = vcmp.ge.f32.partialorder %v9773, 0.0
      %vm9955 = vcmp.ge.f32.partialorder %v9774, 0.0
      %vm9956 = vcmp.ge.f32.partialorder %v9775, 0.0
      %vm9957 = vcmp.ge.f32.partialorder %v9776, 0.0
      %vm9958 = vcmp.ge.f32.partialorder %v9777, 0.0
      %vm9959 = vcmp.ge.f32.partialorder %v9778, 0.0
      %vm9960 = vcmp.ge.f32.partialorder %v9779, 0.0
      %vm9961 = vcmp.ge.f32.partialorder %v9780, 0.0
      %vm9962 = vcmp.ge.f32.partialorder %v9781, 0.0
      %vm9963 = vcmp.ge.f32.partialorder %v9782, 0.0
      %vm9964 = vcmp.ge.f32.partialorder %v9783, 0.0
      %vm9965 = vcmp.ge.f32.partialorder %v9784, 0.0
      %vm9966 = vcmp.ge.f32.partialorder %v9785, 0.0
      %v9967 = vmul.f32 %v9732, 0.2
      %v9968 = vmul.f32 %v9733, 0.2
      %v9969 = vmul.f32 %v9734, 0.2
      %v9970 = vmul.f32 %v9735, 0.2
      %v9971 = vmul.f32 %v9736, 0.2
      %v9972 = vmul.f32 %v9737, 0.2
      %v9973 = vmul.f32 %v9738, 0.2
      %v9974 = vmul.f32 %v9739, 0.2
      %v9975 = vmul.f32 %v9740, 0.2
      %v9976 = vmul.f32 %v9741, 0.2
      %v9977 = vmul.f32 %v9742, 0.2
      %v9978 = vmul.f32 %v9743, 0.2
      %v9979 = vmul.f32 %v9744, 0.2
      %v9980 = vmul.f32 %v9745, 0.2
      %v9981 = vmul.f32 %v9746, 0.2
      %v9982 = vmul.f32 %v9747, 0.2
      %v9983 = vmul.f32 %v9748, 0.2
      %v9984 = vmul.f32 %v9749, 0.2
      %v9985 = vmul.f32 %v9750, 0.2
      %v9986 = vmul.f32 %v9751, 0.2
      %v9987 = vmul.f32 %v9752, 0.2
      %v9988 = vmul.f32 %v9753, 0.2
      %v9989 = vmul.f32 %v9754, 0.2
      %v9990 = vmul.f32 %v9755, 0.2
      %v9991 = vmul.f32 %v9756, 0.2
      %v9992 = vmul.f32 %v9757, 0.2
      %v9993 = vmul.f32 %v9758, 0.2
      %v9994 = vmul.f32 %v9759, 0.2
      %v9995 = vmul.f32 %v9760, 0.2
      %v9996 = vmul.f32 %v9761, 0.2
      %v9997 = vmul.f32 %v9762, 0.2
      %v9998 = vmul.f32 %v9763, 0.2
      %v9999 = vmul.f32 %v9764, 0.2
      %v10000 = vmul.f32 %v9765, 0.2
      %v10001 = vmul.f32 %v9766, 0.2
      %v10002 = vmul.f32 %v9767, 0.2
      %v10003 = vmul.f32 %v9768, 0.2
      %v10004 = vmul.f32 %v9769, 0.2
      %v10005 = vmul.f32 %v9770, 0.2
      %v10006 = vmul.f32 %v9771, 0.2
      %v10007 = vmul.f32 %v9772, 0.2
      %v10008 = vmul.f32 %v9773, 0.2
      %v10009 = vmul.f32 %v9774, 0.2
      %v10010 = vmul.f32 %v9775, 0.2
      %v10011 = vmul.f32 %v9776, 0.2
      %v10012 = vmul.f32 %v9777, 0.2
      %v10013 = vmul.f32 %v9778, 0.2
      %v10014 = vmul.f32 %v9779, 0.2
      %v10015 = vmul.f32 %v9780, 0.2
      %v10016 = vmul.f32 %v9781, 0.2
      %v10017 = vmul.f32 %v9782, 0.2
      %v10018 = vmul.f32 %v9783, 0.2
      %v10019 = vmul.f32 %v9784, 0.2
      %v10020 = vmul.f32 %v9785, 0.2
      %v10021 = vsel %vm9913, %v9732, %v9967
      %v10022 = vsel %vm9914, %v9733, %v9968
      %v10023 = vsel %vm9915, %v9734, %v9969
      %v10024 = vsel %vm9916, %v9735, %v9970
      %v10025 = vsel %vm9917, %v9736, %v9971
      %v10026 = vsel %vm9918, %v9737, %v9972
      %v10027 = vsel %vm9919, %v9738, %v9973
      %v10028 = vsel %vm9920, %v9739, %v9974
      %v10029 = vsel %vm9921, %v9740, %v9975
      %v10030 = vsel %vm9922, %v9741, %v9976
      %v10031 = vsel %vm9923, %v9742, %v9977
      %v10032 = vsel %vm9924, %v9743, %v9978
      %v10033 = vsel %vm9925, %v9744, %v9979
      %v10034 = vsel %vm9926, %v9745, %v9980
      %v10035 = vsel %vm9927, %v9746, %v9981
      %v10036 = vsel %vm9928, %v9747, %v9982
      %v10037 = vsel %vm9929, %v9748, %v9983
      %v10038 = vsel %vm9930, %v9749, %v9984
      %v10039 = vsel %vm9931, %v9750, %v9985
      %v10040 = vsel %vm9932, %v9751, %v9986
      %v10041 = vsel %vm9933, %v9752, %v9987
      %v10042 = vsel %vm9934, %v9753, %v9988
      %v10043 = vsel %vm9935, %v9754, %v9989
      %v10044 = vsel %vm9936, %v9755, %v9990
      %v10045 = vsel %vm9937, %v9756, %v9991
      %v10046 = vsel %vm9938, %v9757, %v9992
      %v10047 = vsel %vm9939, %v9758, %v9993
      %v10048 = vsel %vm9940, %v9759, %v9994
      %v10049 = vsel %vm9941, %v9760, %v9995
      %v10050 = vsel %vm9942, %v9761, %v9996
      %v10051 = vsel %vm9943, %v9762, %v9997
      %v10052 = vsel %vm9944, %v9763, %v9998
      %v10053 = vsel %vm9945, %v9764, %v9999
      %v10054 = vsel %vm9946, %v9765, %v10000
      %v10055 = vsel %vm9947, %v9766, %v10001
      %v10056 = vsel %vm9948, %v9767, %v10002
      %v10057 = vsel %vm9949, %v9768, %v10003
      %v10058 = vsel %vm9950, %v9769, %v10004
      %v10059 = vsel %vm9951, %v9770, %v10005
      %v10060 = vsel %vm9952, %v9771, %v10006
      %v10061 = vsel %vm9953, %v9772, %v10007
      %v10062 = vsel %vm9954, %v9773, %v10008
      %v10063 = vsel %vm9955, %v9774, %v10009
      %v10064 = vsel %vm9956, %v9775, %v10010
      %v10065 = vsel %vm9957, %v9776, %v10011
      %v10066 = vsel %vm9958, %v9777, %v10012
      %v10067 = vsel %vm9959, %v9778, %v10013
      %v10068 = vsel %vm9960, %v9779, %v10014
      %v10069 = vsel %vm9961, %v9780, %v10015
      %v10070 = vsel %vm9962, %v9781, %v10016
      %v10071 = vsel %vm9963, %v9782, %v10017
      %v10072 = vsel %vm9964, %v9783, %v10018
      %v10073 = vsel %vm9965, %v9784, %v10019
      %v10074 = vsel %vm9966, %v9785, %v10020
      %v10075 = vsel %vm9859, 1, 0
      %v10076 = vsel %vm9860, 1, 0
      %v10077 = vsel %vm9861, 1, 0
      %v10078 = vsel %vm9862, 1, 0
      %v10079 = vsel %vm9863, 1, 0
      %v10080 = vsel %vm9864, 1, 0
      %v10081 = vsel %vm9865, 1, 0
      %v10082 = vsel %vm9866, 1, 0
      %v10083 = vsel %vm9867, 1, 0
      %v10084 = vsel %vm9868, 1, 0
      %v10085 = vsel %vm9869, 1, 0
      %v10086 = vsel %vm9870, 1, 0
      %v10087 = vsel %vm9871, 1, 0
      %v10088 = vsel %vm9872, 1, 0
      %v10089 = vsel %vm9873, 1, 0
      %v10090 = vsel %vm9874, 1, 0
      %v10091 = vsel %vm9875, 1, 0
      %v10092 = vsel %vm9876, 1, 0
      %v10093 = vsel %vm9877, 1, 0
      %v10094 = vsel %vm9878, 1, 0
      %v10095 = vsel %vm9879, 1, 0
      %v10096 = vsel %vm9880, 1, 0
      %v10097 = vsel %vm9881, 1, 0
      %v10098 = vsel %vm9882, 1, 0
      %v10099 = vsel %vm9883, 1, 0
      %v10100 = vsel %vm9884, 1, 0
      %v10101 = vsel %vm9885, 1, 0
      %v10102 = vsel %vm9886, 1, 0
      %v10103 = vsel %vm9887, 1, 0
      %v10104 = vsel %vm9888, 1, 0
      %v10105 = vsel %vm9889, 1, 0
      %v10106 = vsel %vm9890, 1, 0
      %v10107 = vsel %vm9891, 1, 0
      %v10108 = vsel %vm9892, 1, 0
      %v10109 = vsel %vm9893, 1, 0
      %v10110 = vsel %vm9894, 1, 0
      %v10111 = vsel %vm9895, 1, 0
      %v10112 = vsel %vm9896, 1, 0
      %v10113 = vsel %vm9897, 1, 0
      %v10114 = vsel %vm9898, 1, 0
      %v10115 = vsel %vm9899, 1, 0
      %v10116 = vsel %vm9900, 1, 0
      %v10117 = vsel %vm9901, 1, 0
      %v10118 = vsel %vm9902, 1, 0
      %v10119 = vsel %vm9903, 1, 0
      %v10120 = vsel %vm9904, 1, 0
      %v10121 = vsel %vm9905, 1, 0
      %v10122 = vsel %vm9906, 1, 0
      %v10123 = vsel %vm9907, 1, 0
      %v10124 = vsel %vm9908, 1, 0
      %v10125 = vsel %vm9909, 1, 0
      %v10126 = vsel %vm9910, 1, 0
      %v10127 = vsel %vm9911, 1, 0
      %v10128 = vsel %vm9912, 1, 0
      %vm10129 = vcmp.eq.s32.totalorder %v10075, 1
      %vm10130 = vcmp.eq.s32.totalorder %v10076, 1
      %vm10131 = vcmp.eq.s32.totalorder %v10077, 1
      %vm10132 = vcmp.eq.s32.totalorder %v10078, 1
      %vm10133 = vcmp.eq.s32.totalorder %v10079, 1
      %vm10134 = vcmp.eq.s32.totalorder %v10080, 1
      %vm10135 = vcmp.eq.s32.totalorder %v10081, 1
      %vm10136 = vcmp.eq.s32.totalorder %v10082, 1
      %vm10137 = vcmp.eq.s32.totalorder %v10083, 1
      %vm10138 = vcmp.eq.s32.totalorder %v10084, 1
      %vm10139 = vcmp.eq.s32.totalorder %v10085, 1
      %vm10140 = vcmp.eq.s32.totalorder %v10086, 1
      %vm10141 = vcmp.eq.s32.totalorder %v10087, 1
      %vm10142 = vcmp.eq.s32.totalorder %v10088, 1
      %vm10143 = vcmp.eq.s32.totalorder %v10089, 1
      %vm10144 = vcmp.eq.s32.totalorder %v10090, 1
      %vm10145 = vcmp.eq.s32.totalorder %v10091, 1
      %vm10146 = vcmp.eq.s32.totalorder %v10092, 1
      %vm10147 = vcmp.eq.s32.totalorder %v10093, 1
      %vm10148 = vcmp.eq.s32.totalorder %v10094, 1
      %vm10149 = vcmp.eq.s32.totalorder %v10095, 1
      %vm10150 = vcmp.eq.s32.totalorder %v10096, 1
      %vm10151 = vcmp.eq.s32.totalorder %v10097, 1
      %vm10152 = vcmp.eq.s32.totalorder %v10098, 1
      %vm10153 = vcmp.eq.s32.totalorder %v10099, 1
      %vm10154 = vcmp.eq.s32.totalorder %v10100, 1
      %vm10155 = vcmp.eq.s32.totalorder %v10101, 1
      %vm10156 = vcmp.eq.s32.totalorder %v10102, 1
      %vm10157 = vcmp.eq.s32.totalorder %v10103, 1
      %vm10158 = vcmp.eq.s32.totalorder %v10104, 1
      %vm10159 = vcmp.eq.s32.totalorder %v10105, 1
      %vm10160 = vcmp.eq.s32.totalorder %v10106, 1
      %vm10161 = vcmp.eq.s32.totalorder %v10107, 1
      %vm10162 = vcmp.eq.s32.totalorder %v10108, 1
      %vm10163 = vcmp.eq.s32.totalorder %v10109, 1
      %vm10164 = vcmp.eq.s32.totalorder %v10110, 1
      %vm10165 = vcmp.eq.s32.totalorder %v10111, 1
      %vm10166 = vcmp.eq.s32.totalorder %v10112, 1
      %vm10167 = vcmp.eq.s32.totalorder %v10113, 1
      %vm10168 = vcmp.eq.s32.totalorder %v10114, 1
      %vm10169 = vcmp.eq.s32.totalorder %v10115, 1
      %vm10170 = vcmp.eq.s32.totalorder %v10116, 1
      %vm10171 = vcmp.eq.s32.totalorder %v10117, 1
      %vm10172 = vcmp.eq.s32.totalorder %v10118, 1
      %vm10173 = vcmp.eq.s32.totalorder %v10119, 1
      %vm10174 = vcmp.eq.s32.totalorder %v10120, 1
      %vm10175 = vcmp.eq.s32.totalorder %v10121, 1
      %vm10176 = vcmp.eq.s32.totalorder %v10122, 1
      %vm10177 = vcmp.eq.s32.totalorder %v10123, 1
      %vm10178 = vcmp.eq.s32.totalorder %v10124, 1
      %vm10179 = vcmp.eq.s32.totalorder %v10125, 1
      %vm10180 = vcmp.eq.s32.totalorder %v10126, 1
      %vm10181 = vcmp.eq.s32.totalorder %v10127, 1
      %vm10182 = vcmp.eq.s32.totalorder %v10128, 1
      %v10183 = vsel %vm10129, %v10021, 0.0
      %v10184 = vsel %vm10130, %v10022, 0.0
      %v10185 = vsel %vm10131, %v10023, 0.0
      %v10186 = vsel %vm10132, %v10024, 0.0
      %v10187 = vsel %vm10133, %v10025, 0.0
      %v10188 = vsel %vm10134, %v10026, 0.0
      %v10189 = vsel %vm10135, %v10027, 0.0
      %v10190 = vsel %vm10136, %v10028, 0.0
      %v10191 = vsel %vm10137, %v10029, 0.0
      %v10192 = vsel %vm10138, %v10030, 0.0
      %v10193 = vsel %vm10139, %v10031, 0.0
      %v10194 = vsel %vm10140, %v10032, 0.0
      %v10195 = vsel %vm10141, %v10033, 0.0
      %v10196 = vsel %vm10142, %v10034, 0.0
      %v10197 = vsel %vm10143, %v10035, 0.0
      %v10198 = vsel %vm10144, %v10036, 0.0
      %v10199 = vsel %vm10145, %v10037, 0.0
      %v10200 = vsel %vm10146, %v10038, 0.0
      %v10201 = vsel %vm10147, %v10039, 0.0
      %v10202 = vsel %vm10148, %v10040, 0.0
      %v10203 = vsel %vm10149, %v10041, 0.0
      %v10204 = vsel %vm10150, %v10042, 0.0
      %v10205 = vsel %vm10151, %v10043, 0.0
      %v10206 = vsel %vm10152, %v10044, 0.0
      %v10207 = vsel %vm10153, %v10045, 0.0
      %v10208 = vsel %vm10154, %v10046, 0.0
      %v10209 = vsel %vm10155, %v10047, 0.0
      %v10210 = vsel %vm10156, %v10048, 0.0
      %v10211 = vsel %vm10157, %v10049, 0.0
      %v10212 = vsel %vm10158, %v10050, 0.0
      %v10213 = vsel %vm10159, %v10051, 0.0
      %v10214 = vsel %vm10160, %v10052, 0.0
      %v10215 = vsel %vm10161, %v10053, 0.0
      %v10216 = vsel %vm10162, %v10054, 0.0
      %v10217 = vsel %vm10163, %v10055, 0.0
      %v10218 = vsel %vm10164, %v10056, 0.0
      %v10219 = vsel %vm10165, %v10057, 0.0
      %v10220 = vsel %vm10166, %v10058, 0.0
      %v10221 = vsel %vm10167, %v10059, 0.0
      %v10222 = vsel %vm10168, %v10060, 0.0
      %v10223 = vsel %vm10169, %v10061, 0.0
      %v10224 = vsel %vm10170, %v10062, 0.0
      %v10225 = vsel %vm10171, %v10063, 0.0
      %v10226 = vsel %vm10172, %v10064, 0.0
      %v10227 = vsel %vm10173, %v10065, 0.0
      %v10228 = vsel %vm10174, %v10066, 0.0
      %v10229 = vsel %vm10175, %v10067, 0.0
      %v10230 = vsel %vm10176, %v10068, 0.0
      %v10231 = vsel %vm10177, %v10069, 0.0
      %v10232 = vsel %vm10178, %v10070, 0.0
      %v10233 = vsel %vm10179, %v10071, 0.0
      %v10234 = vsel %vm10180, %v10072, 0.0
      %v10235 = vsel %vm10181, %v10073, 0.0
      %v10236 = vsel %vm10182, %v10074, 0.0
      %v10237 = vpack.c.bf16 %v10183, %v10183
      %v10238 = vpack.c.bf16 %v10184, %v10184
      %v10239 = vpack.c.bf16 %v10185, %v10185
      %v10240 = vpack.c.bf16 %v10186, %v10186
      %v10241 = vpack.c.bf16 %v10187, %v10187
      %v10242 = vpack.c.bf16 %v10188, %v10188
      %v10243 = vpack.c.bf16 %v10189, %v10189
      %v10244 = vpack.c.bf16 %v10190, %v10190
      %v10245 = vpack.c.bf16 %v10191, %v10191
      %v10246 = vpack.c.bf16 %v10192, %v10192
      %v10247 = vpack.c.bf16 %v10193, %v10193
      %v10248 = vpack.c.bf16 %v10194, %v10194
      %v10249 = vpack.c.bf16 %v10195, %v10195
      %v10250 = vpack.c.bf16 %v10196, %v10196
      %v10251 = vpack.c.bf16 %v10197, %v10197
      %v10252 = vpack.c.bf16 %v10198, %v10198
      %v10253 = vpack.c.bf16 %v10199, %v10199
      %v10254 = vpack.c.bf16 %v10200, %v10200
      %v10255 = vpack.c.bf16 %v10201, %v10201
      %v10256 = vpack.c.bf16 %v10202, %v10202
      %v10257 = vpack.c.bf16 %v10203, %v10203
      %v10258 = vpack.c.bf16 %v10204, %v10204
      %v10259 = vpack.c.bf16 %v10205, %v10205
      %v10260 = vpack.c.bf16 %v10206, %v10206
      %v10261 = vpack.c.bf16 %v10207, %v10207
      %v10262 = vpack.c.bf16 %v10208, %v10208
      %v10263 = vpack.c.bf16 %v10209, %v10209
      %v10264 = vpack.c.bf16 %v10210, %v10210
      %v10265 = vpack.c.bf16 %v10211, %v10211
      %v10266 = vpack.c.bf16 %v10212, %v10212
      %v10267 = vpack.c.bf16 %v10213, %v10213
      %v10268 = vpack.c.bf16 %v10214, %v10214
      %v10269 = vpack.c.bf16 %v10215, %v10215
      %v10270 = vpack.c.bf16 %v10216, %v10216
      %v10271 = vpack.c.bf16 %v10217, %v10217
      %v10272 = vpack.c.bf16 %v10218, %v10218
      %v10273 = vpack.c.bf16 %v10219, %v10219
      %v10274 = vpack.c.bf16 %v10220, %v10220
      %v10275 = vpack.c.bf16 %v10221, %v10221
      %v10276 = vpack.c.bf16 %v10222, %v10222
      %v10277 = vpack.c.bf16 %v10223, %v10223
      %v10278 = vpack.c.bf16 %v10224, %v10224
      %v10279 = vpack.c.bf16 %v10225, %v10225
      %v10280 = vpack.c.bf16 %v10226, %v10226
      %v10281 = vpack.c.bf16 %v10227, %v10227
      %v10282 = vpack.c.bf16 %v10228, %v10228
      %v10283 = vpack.c.bf16 %v10229, %v10229
      %v10284 = vpack.c.bf16 %v10230, %v10230
      %v10285 = vpack.c.bf16 %v10231, %v10231
      %v10286 = vpack.c.bf16 %v10232, %v10232
      %v10287 = vpack.c.bf16 %v10233, %v10233
      %v10288 = vpack.c.bf16 %v10234, %v10234
      %v10289 = vpack.c.bf16 %v10235, %v10235
      %v10290 = vpack.c.bf16 %v10236, %v10236
      %v10309 = vunpack.c.l.b16 %v10239
      %v10310 = vunpack.c.l.b16 %v10242
      %v10311 = vunpack.c.l.b16 %v10245
      %v10312 = vunpack.c.l.b16 %v10248
      %v10313 = vunpack.c.l.b16 %v10251
      %v10314 = vunpack.c.l.b16 %v10254
      %v10315 = vunpack.c.l.b16 %v10257
      %v10316 = vunpack.c.l.b16 %v10260
      %v10317 = vunpack.c.l.b16 %v10263
      %v10318 = vunpack.c.l.b16 %v10266
      %v10319 = vunpack.c.l.b16 %v10269
      %v10320 = vunpack.c.l.b16 %v10272
      %v10321 = vunpack.c.l.b16 %v10275
      %v10322 = vunpack.c.l.b16 %v10278
      %v10323 = vunpack.c.l.b16 %v10281
      %v10324 = vunpack.c.l.b16 %v10284
      %v10325 = vunpack.c.l.b16 %v10287
      %v10326 = vunpack.c.l.b16 %v10290
      %v10327 = vpack.c.b16 %v10309, %v10309
      %v10328 = vpack.c.b16 %v10310, %v10310
      %v10329 = vpack.c.b16 %v10311, %v10311
      %v10330 = vpack.c.b16 %v10312, %v10312
      %v10331 = vpack.c.b16 %v10313, %v10313
      %v10332 = vpack.c.b16 %v10314, %v10314
      %v10333 = vpack.c.b16 %v10315, %v10315
      %v10334 = vpack.c.b16 %v10316, %v10316
      %v10335 = vpack.c.b16 %v10317, %v10317
      %v10336 = vpack.c.b16 %v10318, %v10318
      %v10337 = vpack.c.b16 %v10319, %v10319
      %v10338 = vpack.c.b16 %v10320, %v10320
      %v10339 = vpack.c.b16 %v10321, %v10321
      %v10340 = vpack.c.b16 %v10322, %v10322
      %v10341 = vpack.c.b16 %v10323, %v10323
      %v10342 = vpack.c.b16 %v10324, %v10324
      %v10343 = vpack.c.b16 %v10325, %v10325
      %v10344 = vpack.c.b16 %v10326, %v10326
      %v10346 = vshrl.u32 %v10327, 16
      %v10348 = vrot.slane %v10346, 3
      %v10350 = vshrl.u32 %v10328, 16
      %v10352 = vrot.slane %v10350, 3
      %v10354 = vshrl.u32 %v10329, 16
      %v10356 = vrot.slane %v10354, 3
      %v10358 = vshrl.u32 %v10330, 16
      %v10360 = vrot.slane %v10358, 3
      %v10362 = vshrl.u32 %v10331, 16
      %v10364 = vrot.slane %v10362, 3
      %v10366 = vshrl.u32 %v10332, 16
      %v10368 = vrot.slane %v10366, 3
      %v10370 = vshrl.u32 %v10333, 16
      %v10372 = vrot.slane %v10370, 3
      %v10374 = vshrl.u32 %v10334, 16
      %v10376 = vrot.slane %v10374, 3
      %v10378 = vshrl.u32 %v10335, 16
      %v10380 = vrot.slane %v10378, 3
      %v10382 = vshrl.u32 %v10336, 16
      %v10384 = vrot.slane %v10382, 3
      %v10386 = vshrl.u32 %v10337, 16
      %v10388 = vrot.slane %v10386, 3
      %v10390 = vshrl.u32 %v10338, 16
      %v10392 = vrot.slane %v10390, 3
      %v10394 = vshrl.u32 %v10339, 16
      %v10396 = vrot.slane %v10394, 3
      %v10398 = vshrl.u32 %v10340, 16
      %v10400 = vrot.slane %v10398, 3
      %v10402 = vshrl.u32 %v10341, 16
      %v10404 = vrot.slane %v10402, 3
      %v10406 = vshrl.u32 %v10342, 16
      %v10408 = vrot.slane %v10406, 3
      %v10410 = vshrl.u32 %v10343, 16
      %v10412 = vrot.slane %v10410, 3
      %v10414 = vshrl.u32 %v10344, 16
      %v10416 = vrot.slane %v10414, 3
      %v10471 = vunpack.c.l.b16 %v10237
      %v10472 = vunpack.c.l.b16 %v10238
      %v10473 = vunpack.c.l.b16 %v10240
      %v10474 = vunpack.c.l.b16 %v10241
      %v10475 = vunpack.c.l.b16 %v10243
      %v10476 = vunpack.c.l.b16 %v10244
      %v10477 = vunpack.c.l.b16 %v10246
      %v10478 = vunpack.c.l.b16 %v10247
      %v10479 = vunpack.c.l.b16 %v10249
      %v10480 = vunpack.c.l.b16 %v10250
      %v10481 = vunpack.c.l.b16 %v10252
      %v10482 = vunpack.c.l.b16 %v10253
      %v10483 = vunpack.c.l.b16 %v10255
      %v10484 = vunpack.c.l.b16 %v10256
      %v10485 = vunpack.c.l.b16 %v10258
      %v10486 = vunpack.c.l.b16 %v10259
      %v10487 = vunpack.c.l.b16 %v10261
      %v10488 = vunpack.c.l.b16 %v10262
      %v10489 = vunpack.c.l.b16 %v10264
      %v10490 = vunpack.c.l.b16 %v10265
      %v10491 = vunpack.c.l.b16 %v10267
      %v10492 = vunpack.c.l.b16 %v10268
      %v10493 = vunpack.c.l.b16 %v10270
      %v10494 = vunpack.c.l.b16 %v10271
      %v10495 = vunpack.c.l.b16 %v10273
      %v10496 = vunpack.c.l.b16 %v10274
      %v10497 = vunpack.c.l.b16 %v10276
      %v10498 = vunpack.c.l.b16 %v10277
      %v10499 = vunpack.c.l.b16 %v10279
      %v10500 = vunpack.c.l.b16 %v10280
      %v10501 = vunpack.c.l.b16 %v10282
      %v10502 = vunpack.c.l.b16 %v10283
      %v10503 = vunpack.c.l.b16 %v10285
      %v10504 = vunpack.c.l.b16 %v10286
      %v10505 = vunpack.c.l.b16 %v10288
      %v10506 = vunpack.c.l.b16 %v10289
      %v10507 = vpack.c.b16 %v10472, %v10471
      %v10508 = vpack.c.b16 %v10474, %v10473
      %v10509 = vpack.c.b16 %v10476, %v10475
      %v10510 = vpack.c.b16 %v10478, %v10477
      %v10511 = vpack.c.b16 %v10480, %v10479
      %v10512 = vpack.c.b16 %v10482, %v10481
      %v10513 = vpack.c.b16 %v10484, %v10483
      %v10514 = vpack.c.b16 %v10486, %v10485
      %v10515 = vpack.c.b16 %v10488, %v10487
      %v10516 = vpack.c.b16 %v10490, %v10489
      %v10517 = vpack.c.b16 %v10492, %v10491
      %v10518 = vpack.c.b16 %v10494, %v10493
      %v10519 = vpack.c.b16 %v10496, %v10495
      %v10520 = vpack.c.b16 %v10498, %v10497
      %v10521 = vpack.c.b16 %v10500, %v10499
      %v10522 = vpack.c.b16 %v10502, %v10501
      %v10523 = vpack.c.b16 %v10504, %v10503
      %v10524 = vpack.c.b16 %v10506, %v10505
      %v10526 = vshrl.u32 %v10507, 16
      %v10528 = vrot.slane %v10526, 7
      %v10529 = vshll.u32 %v10507, 16
      %v10531 = vor.u32 %v10528, %v10529
      %v10532 = vrot.slane %v10346, 7
      %v10533 = vshll.u32 %v10327, 16
      %v10535 = vor.u32 %v10532, %v10533
      %v10536 = vsel %vm2407, %v10528, %v10535
      %v10538 = vshrl.u32 %v10508, 16
      %v10540 = vrot.slane %v10538, 7
      %v10541 = vshll.u32 %v10508, 16
      %v10543 = vor.u32 %v10540, %v10541
      %v10544 = vrot.slane %v10350, 7
      %v10545 = vshll.u32 %v10328, 16
      %v10547 = vor.u32 %v10544, %v10545
      %v10548 = vsel %vm2407, %v10540, %v10547
      %v10550 = vshrl.u32 %v10509, 16
      %v10552 = vrot.slane %v10550, 7
      %v10553 = vshll.u32 %v10509, 16
      %v10555 = vor.u32 %v10552, %v10553
      %v10556 = vrot.slane %v10354, 7
      %v10557 = vshll.u32 %v10329, 16
      %v10559 = vor.u32 %v10556, %v10557
      %v10560 = vsel %vm2407, %v10552, %v10559
      %v10562 = vshrl.u32 %v10510, 16
      %v10564 = vrot.slane %v10562, 7
      %v10565 = vshll.u32 %v10510, 16
      %v10567 = vor.u32 %v10564, %v10565
      %v10568 = vrot.slane %v10358, 7
      %v10569 = vshll.u32 %v10330, 16
      %v10571 = vor.u32 %v10568, %v10569
      %v10572 = vsel %vm2407, %v10564, %v10571
      %v10574 = vshrl.u32 %v10511, 16
      %v10576 = vrot.slane %v10574, 7
      %v10577 = vshll.u32 %v10511, 16
      %v10579 = vor.u32 %v10576, %v10577
      %v10580 = vrot.slane %v10362, 7
      %v10581 = vshll.u32 %v10331, 16
      %v10583 = vor.u32 %v10580, %v10581
      %v10584 = vsel %vm2407, %v10576, %v10583
      %v10586 = vshrl.u32 %v10512, 16
      %v10588 = vrot.slane %v10586, 7
      %v10589 = vshll.u32 %v10512, 16
      %v10591 = vor.u32 %v10588, %v10589
      %v10592 = vrot.slane %v10366, 7
      %v10593 = vshll.u32 %v10332, 16
      %v10595 = vor.u32 %v10592, %v10593
      %v10596 = vsel %vm2407, %v10588, %v10595
      %v10598 = vshrl.u32 %v10513, 16
      %v10600 = vrot.slane %v10598, 7
      %v10601 = vshll.u32 %v10513, 16
      %v10603 = vor.u32 %v10600, %v10601
      %v10604 = vrot.slane %v10370, 7
      %v10605 = vshll.u32 %v10333, 16
      %v10607 = vor.u32 %v10604, %v10605
      %v10608 = vsel %vm2407, %v10600, %v10607
      %v10610 = vshrl.u32 %v10514, 16
      %v10612 = vrot.slane %v10610, 7
      %v10613 = vshll.u32 %v10514, 16
      %v10615 = vor.u32 %v10612, %v10613
      %v10616 = vrot.slane %v10374, 7
      %v10617 = vshll.u32 %v10334, 16
      %v10619 = vor.u32 %v10616, %v10617
      %v10620 = vsel %vm2407, %v10612, %v10619
      %v10622 = vshrl.u32 %v10515, 16
      %v10624 = vrot.slane %v10622, 7
      %v10625 = vshll.u32 %v10515, 16
      %v10627 = vor.u32 %v10624, %v10625
      %v10628 = vrot.slane %v10378, 7
      %v10629 = vshll.u32 %v10335, 16
      %v10631 = vor.u32 %v10628, %v10629
      %v10632 = vsel %vm2407, %v10624, %v10631
      %v10634 = vshrl.u32 %v10516, 16
      %v10636 = vrot.slane %v10634, 7
      %v10637 = vshll.u32 %v10516, 16
      %v10639 = vor.u32 %v10636, %v10637
      %v10640 = vrot.slane %v10382, 7
      %v10641 = vshll.u32 %v10336, 16
      %v10643 = vor.u32 %v10640, %v10641
      %v10644 = vsel %vm2407, %v10636, %v10643
      %v10646 = vshrl.u32 %v10517, 16
      %v10648 = vrot.slane %v10646, 7
      %v10649 = vshll.u32 %v10517, 16
      %v10651 = vor.u32 %v10648, %v10649
      %v10652 = vrot.slane %v10386, 7
      %v10653 = vshll.u32 %v10337, 16
      %v10655 = vor.u32 %v10652, %v10653
      %v10656 = vsel %vm2407, %v10648, %v10655
      %v10658 = vshrl.u32 %v10518, 16
      %v10660 = vrot.slane %v10658, 7
      %v10661 = vshll.u32 %v10518, 16
      %v10663 = vor.u32 %v10660, %v10661
      %v10664 = vrot.slane %v10390, 7
      %v10665 = vshll.u32 %v10338, 16
      %v10667 = vor.u32 %v10664, %v10665
      %v10668 = vsel %vm2407, %v10660, %v10667
      %v10670 = vshrl.u32 %v10519, 16
      %v10672 = vrot.slane %v10670, 7
      %v10673 = vshll.u32 %v10519, 16
      %v10675 = vor.u32 %v10672, %v10673
      %v10676 = vrot.slane %v10394, 7
      %v10677 = vshll.u32 %v10339, 16
      %v10679 = vor.u32 %v10676, %v10677
      %v10680 = vsel %vm2407, %v10672, %v10679
      %v10682 = vshrl.u32 %v10520, 16
      %v10684 = vrot.slane %v10682, 7
      %v10685 = vshll.u32 %v10520, 16
      %v10687 = vor.u32 %v10684, %v10685
      %v10688 = vrot.slane %v10398, 7
      %v10689 = vshll.u32 %v10340, 16
      %v10691 = vor.u32 %v10688, %v10689
      %v10692 = vsel %vm2407, %v10684, %v10691
      %v10694 = vshrl.u32 %v10521, 16
      %v10696 = vrot.slane %v10694, 7
      %v10697 = vshll.u32 %v10521, 16
      %v10699 = vor.u32 %v10696, %v10697
      %v10700 = vrot.slane %v10402, 7
      %v10701 = vshll.u32 %v10341, 16
      %v10703 = vor.u32 %v10700, %v10701
      %v10704 = vsel %vm2407, %v10696, %v10703
      %v10706 = vshrl.u32 %v10522, 16
      %v10708 = vrot.slane %v10706, 7
      %v10709 = vshll.u32 %v10522, 16
      %v10711 = vor.u32 %v10708, %v10709
      %v10712 = vrot.slane %v10406, 7
      %v10713 = vshll.u32 %v10342, 16
      %v10715 = vor.u32 %v10712, %v10713
      %v10716 = vsel %vm2407, %v10708, %v10715
      %v10718 = vshrl.u32 %v10523, 16
      %v10720 = vrot.slane %v10718, 7
      %v10721 = vshll.u32 %v10523, 16
      %v10723 = vor.u32 %v10720, %v10721
      %v10724 = vrot.slane %v10410, 7
      %v10725 = vshll.u32 %v10343, 16
      %v10727 = vor.u32 %v10724, %v10725
      %v10728 = vsel %vm2407, %v10720, %v10727
      %v10730 = vshrl.u32 %v10524, 16
      %v10732 = vrot.slane %v10730, 7
      %v10733 = vshll.u32 %v10524, 16
      %v10735 = vor.u32 %v10732, %v10733
      %v10736 = vrot.slane %v10414, 7
      %v10737 = vshll.u32 %v10344, 16
      %v10739 = vor.u32 %v10736, %v10737
      %v10740 = vsel %vm2407, %v10732, %v10739
      %v10759 = vsel %vm2695, %v10348, %v10531
      %v10760 = vsel %vm2695, %v10352, %v10543
      %v10761 = vsel %vm2695, %v10356, %v10555
      %v10762 = vsel %vm2695, %v10360, %v10567
      %v10763 = vsel %vm2695, %v10364, %v10579
      %v10764 = vsel %vm2695, %v10368, %v10591
      %v10765 = vsel %vm2695, %v10372, %v10603
      %v10766 = vsel %vm2695, %v10376, %v10615
      %v10767 = vsel %vm2695, %v10380, %v10627
      %v10768 = vsel %vm2695, %v10384, %v10639
      %v10769 = vsel %vm2695, %v10388, %v10651
      %v10770 = vsel %vm2695, %v10392, %v10663
      %v10771 = vsel %vm2695, %v10396, %v10675
      %v10772 = vsel %vm2695, %v10400, %v10687
      %v10773 = vsel %vm2695, %v10404, %v10699
      %v10774 = vsel %vm2695, %v10408, %v10711
      %v10775 = vsel %vm2695, %v10412, %v10723
      %v10776 = vsel %vm2695, %v10416, %v10735
      %v10777 = vrot.slane %v10529, 1
      %v10778 = vor.u32 %v10526, %v10777
      %v10779 = vrot.slane %v10533, 1
      %v10780 = vsel %vm2718, %v10778, %v10779
      %v10781 = vor.u32 %v10346, %v10779
      %v10782 = vrot.slane %v10541, 1
      %v10783 = vor.u32 %v10538, %v10782
      %v10784 = vrot.slane %v10545, 1
      %v10785 = vsel %vm2718, %v10783, %v10784
      %v10786 = vor.u32 %v10350, %v10784
      %v10787 = vrot.slane %v10553, 1
      %v10788 = vor.u32 %v10550, %v10787
      %v10789 = vrot.slane %v10557, 1
      %v10790 = vsel %vm2718, %v10788, %v10789
      %v10791 = vor.u32 %v10354, %v10789
      %v10792 = vrot.slane %v10565, 1
      %v10793 = vor.u32 %v10562, %v10792
      %v10794 = vrot.slane %v10569, 1
      %v10795 = vsel %vm2718, %v10793, %v10794
      %v10796 = vor.u32 %v10358, %v10794
      %v10797 = vrot.slane %v10577, 1
      %v10798 = vor.u32 %v10574, %v10797
      %v10799 = vrot.slane %v10581, 1
      %v10800 = vsel %vm2718, %v10798, %v10799
      %v10801 = vor.u32 %v10362, %v10799
      %v10802 = vrot.slane %v10589, 1
      %v10803 = vor.u32 %v10586, %v10802
      %v10804 = vrot.slane %v10593, 1
      %v10805 = vsel %vm2718, %v10803, %v10804
      %v10806 = vor.u32 %v10366, %v10804
      %v10807 = vrot.slane %v10601, 1
      %v10808 = vor.u32 %v10598, %v10807
      %v10809 = vrot.slane %v10605, 1
      %v10810 = vsel %vm2718, %v10808, %v10809
      %v10811 = vor.u32 %v10370, %v10809
      %v10812 = vrot.slane %v10613, 1
      %v10813 = vor.u32 %v10610, %v10812
      %v10814 = vrot.slane %v10617, 1
      %v10815 = vsel %vm2718, %v10813, %v10814
      %v10816 = vor.u32 %v10374, %v10814
      %v10817 = vrot.slane %v10625, 1
      %v10818 = vor.u32 %v10622, %v10817
      %v10819 = vrot.slane %v10629, 1
      %v10820 = vsel %vm2718, %v10818, %v10819
      %v10821 = vor.u32 %v10378, %v10819
      %v10822 = vrot.slane %v10637, 1
      %v10823 = vor.u32 %v10634, %v10822
      %v10824 = vrot.slane %v10641, 1
      %v10825 = vsel %vm2718, %v10823, %v10824
      %v10826 = vor.u32 %v10382, %v10824
      %v10827 = vrot.slane %v10649, 1
      %v10828 = vor.u32 %v10646, %v10827
      %v10829 = vrot.slane %v10653, 1
      %v10830 = vsel %vm2718, %v10828, %v10829
      %v10831 = vor.u32 %v10386, %v10829
      %v10832 = vrot.slane %v10661, 1
      %v10833 = vor.u32 %v10658, %v10832
      %v10834 = vrot.slane %v10665, 1
      %v10835 = vsel %vm2718, %v10833, %v10834
      %v10836 = vor.u32 %v10390, %v10834
      %v10837 = vrot.slane %v10673, 1
      %v10838 = vor.u32 %v10670, %v10837
      %v10839 = vrot.slane %v10677, 1
      %v10840 = vsel %vm2718, %v10838, %v10839
      %v10841 = vor.u32 %v10394, %v10839
      %v10842 = vrot.slane %v10685, 1
      %v10843 = vor.u32 %v10682, %v10842
      %v10844 = vrot.slane %v10689, 1
      %v10845 = vsel %vm2718, %v10843, %v10844
      %v10846 = vor.u32 %v10398, %v10844
      %v10847 = vrot.slane %v10697, 1
      %v10848 = vor.u32 %v10694, %v10847
      %v10849 = vrot.slane %v10701, 1
      %v10850 = vsel %vm2718, %v10848, %v10849
      %v10851 = vor.u32 %v10402, %v10849
      %v10852 = vrot.slane %v10709, 1
      %v10853 = vor.u32 %v10706, %v10852
      %v10854 = vrot.slane %v10713, 1
      %v10855 = vsel %vm2718, %v10853, %v10854
      %v10856 = vor.u32 %v10406, %v10854
      %v10857 = vrot.slane %v10721, 1
      %v10858 = vor.u32 %v10718, %v10857
      %v10859 = vrot.slane %v10725, 1
      %v10860 = vsel %vm2718, %v10858, %v10859
      %v10861 = vor.u32 %v10410, %v10859
      %v10862 = vrot.slane %v10733, 1
      %v10863 = vor.u32 %v10730, %v10862
      %v10864 = vrot.slane %v10737, 1
      %v10865 = vsel %vm2718, %v10863, %v10864
      %v10866 = vor.u32 %v10414, %v10864
      %v10885 = vpack.c.b16 %v10471, %v10471
      %v10886 = vpack.c.b16 %v10473, %v10473
      %v10887 = vpack.c.b16 %v10475, %v10475
      %v10888 = vpack.c.b16 %v10477, %v10477
      %v10889 = vpack.c.b16 %v10479, %v10479
      %v10890 = vpack.c.b16 %v10481, %v10481
      %v10891 = vpack.c.b16 %v10483, %v10483
      %v10892 = vpack.c.b16 %v10485, %v10485
      %v10893 = vpack.c.b16 %v10487, %v10487
      %v10894 = vpack.c.b16 %v10489, %v10489
      %v10895 = vpack.c.b16 %v10491, %v10491
      %v10896 = vpack.c.b16 %v10493, %v10493
      %v10897 = vpack.c.b16 %v10495, %v10495
      %v10898 = vpack.c.b16 %v10497, %v10497
      %v10899 = vpack.c.b16 %v10499, %v10499
      %v10900 = vpack.c.b16 %v10501, %v10501
      %v10901 = vpack.c.b16 %v10503, %v10503
      %v10902 = vpack.c.b16 %v10505, %v10505
      %v10904 = vshll.u32 %v10885, 16
      %v10906 = vrot.slane %v10904, 5
      %v10908 = vshll.u32 %v10886, 16
      %v10910 = vrot.slane %v10908, 5
      %v10912 = vshll.u32 %v10887, 16
      %v10914 = vrot.slane %v10912, 5
      %v10916 = vshll.u32 %v10888, 16
      %v10918 = vrot.slane %v10916, 5
      %v10920 = vshll.u32 %v10889, 16
      %v10922 = vrot.slane %v10920, 5
      %v10924 = vshll.u32 %v10890, 16
      %v10926 = vrot.slane %v10924, 5
      %v10928 = vshll.u32 %v10891, 16
      %v10930 = vrot.slane %v10928, 5
      %v10932 = vshll.u32 %v10892, 16
      %v10934 = vrot.slane %v10932, 5
      %v10936 = vshll.u32 %v10893, 16
      %v10938 = vrot.slane %v10936, 5
      %v10940 = vshll.u32 %v10894, 16
      %v10942 = vrot.slane %v10940, 5
      %v10944 = vshll.u32 %v10895, 16
      %v10946 = vrot.slane %v10944, 5
      %v10948 = vshll.u32 %v10896, 16
      %v10950 = vrot.slane %v10948, 5
      %v10952 = vshll.u32 %v10897, 16
      %v10954 = vrot.slane %v10952, 5
      %v10956 = vshll.u32 %v10898, 16
      %v10958 = vrot.slane %v10956, 5
      %v10960 = vshll.u32 %v10899, 16
      %v10962 = vrot.slane %v10960, 5
      %v10964 = vshll.u32 %v10900, 16
      %v10966 = vrot.slane %v10964, 5
      %v10968 = vshll.u32 %v10901, 16
      %v10970 = vrot.slane %v10968, 5
      %v10972 = vshll.u32 %v10902, 16
      %v10974 = vrot.slane %v10972, 5
      %v10993 = vsel %vm2985, %v10781, %v10906
      %v10994 = vsel %vm2985, %v10786, %v10910
      %v10995 = vsel %vm2985, %v10791, %v10914
      %v10996 = vsel %vm2985, %v10796, %v10918
      %v10997 = vsel %vm2985, %v10801, %v10922
      %v10998 = vsel %vm2985, %v10806, %v10926
      %v10999 = vsel %vm2985, %v10811, %v10930
      %v11000 = vsel %vm2985, %v10816, %v10934
      %v11001 = vsel %vm2985, %v10821, %v10938
      %v11002 = vsel %vm2985, %v10826, %v10942
      %v11003 = vsel %vm2985, %v10831, %v10946
      %v11004 = vsel %vm2985, %v10836, %v10950
      %v11005 = vsel %vm2985, %v10841, %v10954
      %v11006 = vsel %vm2985, %v10846, %v10958
      %v11007 = vsel %vm2985, %v10851, %v10962
      %v11008 = vsel %vm2985, %v10856, %v10966
      %v11009 = vsel %vm2985, %v10861, %v10970
      %v11010 = vsel %vm2985, %v10866, %v10974
      %11011 = vrot.lane.b32.xlu0 %v10507, 8
      %v11012 = vpop.permute.xlu0 %11011
      %11013 = vrot.lane.b32.xlu0 %v10327, 8
      %v11014 = vpop.permute.xlu0 %11013
      %11015 = vrot.lane.b32.xlu0 %v10508, 8
      %v11016 = vpop.permute.xlu0 %11015
      %11017 = vrot.lane.b32.xlu0 %v10328, 8
      %v11018 = vpop.permute.xlu0 %11017
      %11019 = vrot.lane.b32.xlu0 %v10509, 8
      %v11020 = vpop.permute.xlu0 %11019
      %11021 = vrot.lane.b32.xlu0 %v10329, 8
      %v11022 = vpop.permute.xlu0 %11021
      %11023 = vrot.lane.b32.xlu0 %v10510, 8
      %v11024 = vpop.permute.xlu0 %11023
      %11025 = vrot.lane.b32.xlu0 %v10330, 8
      %v11026 = vpop.permute.xlu0 %11025
      %11027 = vrot.lane.b32.xlu0 %v10511, 8
      %v11028 = vpop.permute.xlu0 %11027
      %11029 = vrot.lane.b32.xlu0 %v10331, 8
      %v11030 = vpop.permute.xlu0 %11029
      %11031 = vrot.lane.b32.xlu0 %v10512, 8
      %v11032 = vpop.permute.xlu0 %11031
      %11033 = vrot.lane.b32.xlu0 %v10332, 8
      %v11034 = vpop.permute.xlu0 %11033
      %11035 = vrot.lane.b32.xlu0 %v10513, 8
      %v11036 = vpop.permute.xlu0 %11035
      %11037 = vrot.lane.b32.xlu0 %v10333, 8
      %v11038 = vpop.permute.xlu0 %11037
      %11039 = vrot.lane.b32.xlu0 %v10514, 8
      %v11040 = vpop.permute.xlu0 %11039
      %11041 = vrot.lane.b32.xlu0 %v10334, 8
      %v11042 = vpop.permute.xlu0 %11041
      %11043 = vrot.lane.b32.xlu0 %v10515, 8
      %v11044 = vpop.permute.xlu0 %11043
      %11045 = vrot.lane.b32.xlu0 %v10335, 8
      %v11046 = vpop.permute.xlu0 %11045
      %11047 = vrot.lane.b32.xlu0 %v10516, 8
      %v11048 = vpop.permute.xlu0 %11047
      %11049 = vrot.lane.b32.xlu0 %v10336, 8
      %v11050 = vpop.permute.xlu0 %11049
      %11051 = vrot.lane.b32.xlu0 %v10517, 8
      %v11052 = vpop.permute.xlu0 %11051
      %11053 = vrot.lane.b32.xlu0 %v10337, 8
      %v11054 = vpop.permute.xlu0 %11053
      %11055 = vrot.lane.b32.xlu0 %v10518, 8
      %v11056 = vpop.permute.xlu0 %11055
      %11057 = vrot.lane.b32.xlu0 %v10338, 8
      %v11058 = vpop.permute.xlu0 %11057
      %11059 = vrot.lane.b32.xlu0 %v10519, 8
      %v11060 = vpop.permute.xlu0 %11059
      %11061 = vrot.lane.b32.xlu0 %v10339, 8
      %v11062 = vpop.permute.xlu0 %11061
      %11063 = vrot.lane.b32.xlu0 %v10520, 8
      %v11064 = vpop.permute.xlu0 %11063
      %11065 = vrot.lane.b32.xlu0 %v10340, 8
      %v11066 = vpop.permute.xlu0 %11065
      %11067 = vrot.lane.b32.xlu0 %v10521, 8
      %v11068 = vpop.permute.xlu0 %11067
      %11069 = vrot.lane.b32.xlu0 %v10341, 8
      %v11070 = vpop.permute.xlu0 %11069
      %11071 = vrot.lane.b32.xlu0 %v10522, 8
      %v11072 = vpop.permute.xlu0 %11071
      %11073 = vrot.lane.b32.xlu0 %v10342, 8
      %v11074 = vpop.permute.xlu0 %11073
      %11075 = vrot.lane.b32.xlu0 %v10523, 8
      %v11076 = vpop.permute.xlu0 %11075
      %11077 = vrot.lane.b32.xlu0 %v10343, 8
      %v11078 = vpop.permute.xlu0 %11077
      %11079 = vrot.lane.b32.xlu0 %v10524, 8
      %v11080 = vpop.permute.xlu0 %11079
      %11081 = vrot.lane.b32.xlu0 %v10344, 8
      %v11082 = vpop.permute.xlu0 %11081
      %11101 = vrot.lane.b32.xlu0 %v10780, 16
      %v11102 = vpop.permute.xlu0 %11101
      %11103 = vrot.lane.b32.xlu0 %v10993, 16
      %v11104 = vpop.permute.xlu0 %11103
      %11105 = vrot.lane.b32.xlu0 %v10785, 16
      %v11106 = vpop.permute.xlu0 %11105
      %11107 = vrot.lane.b32.xlu0 %v10994, 16
      %v11108 = vpop.permute.xlu0 %11107
      %11109 = vrot.lane.b32.xlu0 %v10790, 16
      %v11110 = vpop.permute.xlu0 %11109
      %11111 = vrot.lane.b32.xlu0 %v10995, 16
      %v11112 = vpop.permute.xlu0 %11111
      %11113 = vrot.lane.b32.xlu0 %v10795, 16
      %v11114 = vpop.permute.xlu0 %11113
      %11115 = vrot.lane.b32.xlu0 %v10996, 16
      %v11116 = vpop.permute.xlu0 %11115
      %11117 = vrot.lane.b32.xlu0 %v10800, 16
      %v11118 = vpop.permute.xlu0 %11117
      %11119 = vrot.lane.b32.xlu0 %v10997, 16
      %v11120 = vpop.permute.xlu0 %11119
      %11121 = vrot.lane.b32.xlu0 %v10805, 16
      %v11122 = vpop.permute.xlu0 %11121
      %11123 = vrot.lane.b32.xlu0 %v10998, 16
      %v11124 = vpop.permute.xlu0 %11123
      %11125 = vrot.lane.b32.xlu0 %v10810, 16
      %v11126 = vpop.permute.xlu0 %11125
      %11127 = vrot.lane.b32.xlu0 %v10999, 16
      %v11128 = vpop.permute.xlu0 %11127
      %11129 = vrot.lane.b32.xlu0 %v10815, 16
      %v11130 = vpop.permute.xlu0 %11129
      %11131 = vrot.lane.b32.xlu0 %v11000, 16
      %v11132 = vpop.permute.xlu0 %11131
      %11133 = vrot.lane.b32.xlu0 %v10820, 16
      %v11134 = vpop.permute.xlu0 %11133
      %11135 = vrot.lane.b32.xlu0 %v11001, 16
      %v11136 = vpop.permute.xlu0 %11135
      %11137 = vrot.lane.b32.xlu0 %v10825, 16
      %v11138 = vpop.permute.xlu0 %11137
      %11139 = vrot.lane.b32.xlu0 %v11002, 16
      %v11140 = vpop.permute.xlu0 %11139
      %11141 = vrot.lane.b32.xlu0 %v10830, 16
      %v11142 = vpop.permute.xlu0 %11141
      %11143 = vrot.lane.b32.xlu0 %v11003, 16
      %v11144 = vpop.permute.xlu0 %11143
      %11145 = vrot.lane.b32.xlu0 %v10835, 16
      %v11146 = vpop.permute.xlu0 %11145
      %11147 = vrot.lane.b32.xlu0 %v11004, 16
      %v11148 = vpop.permute.xlu0 %11147
      %11149 = vrot.lane.b32.xlu0 %v10840, 16
      %v11150 = vpop.permute.xlu0 %11149
      %11151 = vrot.lane.b32.xlu0 %v11005, 16
      %v11152 = vpop.permute.xlu0 %11151
      %11153 = vrot.lane.b32.xlu0 %v10845, 16
      %v11154 = vpop.permute.xlu0 %11153
      %11155 = vrot.lane.b32.xlu0 %v11006, 16
      %v11156 = vpop.permute.xlu0 %11155
      %11157 = vrot.lane.b32.xlu0 %v10850, 16
      %v11158 = vpop.permute.xlu0 %11157
      %11159 = vrot.lane.b32.xlu0 %v11007, 16
      %v11160 = vpop.permute.xlu0 %11159
      %11161 = vrot.lane.b32.xlu0 %v10855, 16
      %v11162 = vpop.permute.xlu0 %11161
      %11163 = vrot.lane.b32.xlu0 %v11008, 16
      %v11164 = vpop.permute.xlu0 %11163
      %11165 = vrot.lane.b32.xlu0 %v10860, 16
      %v11166 = vpop.permute.xlu0 %11165
      %11167 = vrot.lane.b32.xlu0 %v11009, 16
      %v11168 = vpop.permute.xlu0 %11167
      %11169 = vrot.lane.b32.xlu0 %v10865, 16
      %v11170 = vpop.permute.xlu0 %11169
      %11171 = vrot.lane.b32.xlu0 %v11010, 16
      %v11172 = vpop.permute.xlu0 %11171
      %v11175 = vsel %vm5859, %v10759, %v11012
      %v11178 = vsel %vm5859, %v10536, %v11014
      %v11181 = vsel %vm5859, %v10760, %v11016
      %v11184 = vsel %vm5859, %v10548, %v11018
      %v11187 = vsel %vm5859, %v10761, %v11020
      %v11190 = vsel %vm5859, %v10560, %v11022
      %v11193 = vsel %vm5859, %v10762, %v11024
      %v11196 = vsel %vm5859, %v10572, %v11026
      %v11199 = vsel %vm5859, %v10763, %v11028
      %v11202 = vsel %vm5859, %v10584, %v11030
      %v11205 = vsel %vm5859, %v10764, %v11032
      %v11208 = vsel %vm5859, %v10596, %v11034
      %v11211 = vsel %vm5859, %v10765, %v11036
      %v11214 = vsel %vm5859, %v10608, %v11038
      %v11217 = vsel %vm5859, %v10766, %v11040
      %v11220 = vsel %vm5859, %v10620, %v11042
      %v11223 = vsel %vm5859, %v10767, %v11044
      %v11226 = vsel %vm5859, %v10632, %v11046
      %v11229 = vsel %vm5859, %v10768, %v11048
      %v11232 = vsel %vm5859, %v10644, %v11050
      %v11235 = vsel %vm5859, %v10769, %v11052
      %v11238 = vsel %vm5859, %v10656, %v11054
      %v11241 = vsel %vm5859, %v10770, %v11056
      %v11244 = vsel %vm5859, %v10668, %v11058
      %v11247 = vsel %vm5859, %v10771, %v11060
      %v11250 = vsel %vm5859, %v10680, %v11062
      %v11253 = vsel %vm5859, %v10772, %v11064
      %v11256 = vsel %vm5859, %v10692, %v11066
      %v11259 = vsel %vm5859, %v10773, %v11068
      %v11262 = vsel %vm5859, %v10704, %v11070
      %v11265 = vsel %vm5859, %v10774, %v11072
      %v11268 = vsel %vm5859, %v10716, %v11074
      %v11271 = vsel %vm5859, %v10775, %v11076
      %v11274 = vsel %vm5859, %v10728, %v11078
      %v11277 = vsel %vm5859, %v10776, %v11080
      %v11280 = vsel %vm5859, %v10740, %v11082
      %vm11281 = vcmask 130048
      %v11283 = vsel %vm11281, %v11175, %v11102
      %v11285 = vsel %vm11281, %v11178, %v11104
      %v11287 = vsel %vm11281, %v11181, %v11106
      %v11289 = vsel %vm11281, %v11184, %v11108
      %v11291 = vsel %vm11281, %v11187, %v11110
      %v11293 = vsel %vm11281, %v11190, %v11112
      %v11295 = vsel %vm11281, %v11193, %v11114
      %v11297 = vsel %vm11281, %v11196, %v11116
      %v11299 = vsel %vm11281, %v11199, %v11118
      %v11301 = vsel %vm11281, %v11202, %v11120
      %v11303 = vsel %vm11281, %v11205, %v11122
      %v11305 = vsel %vm11281, %v11208, %v11124
      %v11307 = vsel %vm11281, %v11211, %v11126
      %v11309 = vsel %vm11281, %v11214, %v11128
      %v11311 = vsel %vm11281, %v11217, %v11130
      %v11313 = vsel %vm11281, %v11220, %v11132
      %v11315 = vsel %vm11281, %v11223, %v11134
      %v11317 = vsel %vm11281, %v11226, %v11136
      %v11319 = vsel %vm11281, %v11229, %v11138
      %v11321 = vsel %vm11281, %v11232, %v11140
      %v11323 = vsel %vm11281, %v11235, %v11142
      %v11325 = vsel %vm11281, %v11238, %v11144
      %v11327 = vsel %vm11281, %v11241, %v11146
      %v11329 = vsel %vm11281, %v11244, %v11148
      %v11331 = vsel %vm11281, %v11247, %v11150
      %v11333 = vsel %vm11281, %v11250, %v11152
      %v11335 = vsel %vm11281, %v11253, %v11154
      %v11337 = vsel %vm11281, %v11256, %v11156
      %v11339 = vsel %vm11281, %v11259, %v11158
      %v11341 = vsel %vm11281, %v11262, %v11160
      %v11343 = vsel %vm11281, %v11265, %v11162
      %v11345 = vsel %vm11281, %v11268, %v11164
      %v11347 = vsel %vm11281, %v11271, %v11166
      %v11349 = vsel %vm11281, %v11274, %v11168
      %v11351 = vsel %vm11281, %v11277, %v11170
      %v11353 = vsel %vm11281, %v11280, %v11172
      %v11386 = vunpack.c.l.b16 %v11283
      %v11387 = vunpack.c.h.b16 %v11283
      %v11388 = vunpack.c.l.b16 %v11285
      %v11389 = vunpack.c.l.b16 %v11287
      %v11390 = vunpack.c.h.b16 %v11287
      %v11391 = vunpack.c.l.b16 %v11289
      %v11392 = vunpack.c.l.b16 %v11291
      %v11393 = vunpack.c.h.b16 %v11291
      %v11394 = vunpack.c.l.b16 %v11293
      %v11395 = vunpack.c.l.b16 %v11295
      %v11396 = vunpack.c.h.b16 %v11295
      %v11397 = vunpack.c.l.b16 %v11297
      %v11398 = vunpack.c.l.b16 %v11299
      %v11399 = vunpack.c.h.b16 %v11299
      %v11400 = vunpack.c.l.b16 %v11301
      %v11401 = vunpack.c.l.b16 %v11303
      %v11402 = vunpack.c.h.b16 %v11303
      %v11403 = vunpack.c.l.b16 %v11305
      %v11404 = vunpack.c.l.b16 %v11307
      %v11405 = vunpack.c.h.b16 %v11307
      %v11406 = vunpack.c.l.b16 %v11309
      %v11407 = vunpack.c.l.b16 %v11311
      %v11408 = vunpack.c.h.b16 %v11311
      %v11409 = vunpack.c.l.b16 %v11313
      %v11410 = vunpack.c.l.b16 %v11315
      %v11411 = vunpack.c.h.b16 %v11315
      %v11412 = vunpack.c.l.b16 %v11317
      %v11413 = vunpack.c.l.b16 %v11319
      %v11414 = vunpack.c.h.b16 %v11319
      %v11415 = vunpack.c.l.b16 %v11321
      %v11416 = vunpack.c.l.b16 %v11323
      %v11417 = vunpack.c.h.b16 %v11323
      %v11418 = vunpack.c.l.b16 %v11325
      %v11419 = vunpack.c.l.b16 %v11327
      %v11420 = vunpack.c.h.b16 %v11327
      %v11421 = vunpack.c.l.b16 %v11329
      %v11422 = vunpack.c.l.b16 %v11331
      %v11423 = vunpack.c.h.b16 %v11331
      %v11424 = vunpack.c.l.b16 %v11333
      %v11425 = vunpack.c.l.b16 %v11335
      %v11426 = vunpack.c.h.b16 %v11335
      %v11427 = vunpack.c.l.b16 %v11337
      %v11428 = vunpack.c.l.b16 %v11339
      %v11429 = vunpack.c.h.b16 %v11339
      %v11430 = vunpack.c.l.b16 %v11341
      %v11431 = vunpack.c.l.b16 %v11343
      %v11432 = vunpack.c.h.b16 %v11343
      %v11433 = vunpack.c.l.b16 %v11345
      %v11434 = vld [vmem:[%s9] sm:$0xf]
      %v11435 = vld [vmem:[%s9 + $0x4] sm:$0xf]
      %v11436 = vld [vmem:[%s9 + $0x8] sm:$0xf]
      %v11439 = vunpack.c.l.b16 %v11347
      %v11440 = vunpack.c.h.b16 %v11347
      %v11441 = vunpack.c.l.b16 %v11349
      %s11442 = scalar_lea.vmem %s9, 12
      %v11443 = vld [vmem:[%s11442] sm:$0xf]
      %v11444 = vld [vmem:[%s11442 + $0x4] sm:$0xf]
      %v11445 = vld [vmem:[%s11442 + $0x8] sm:$0xf]
      %v11446 = vpack.c.b16 %v11390, %v11389
      %v11447 = vpack.c.b16 %v11392, %v11391
      %v11448 = vpack.c.b16 %v11394, %v11393
      %v11449 = vpack.c.b16 %v11396, %v11395
      %v11450 = vpack.c.b16 %v11398, %v11397
      %v11451 = vpack.c.b16 %v11400, %v11399
      %v11452 = vpack.c.b16 %v11402, %v11401
      %v11453 = vpack.c.b16 %v11404, %v11403
      %v11454 = vpack.c.b16 %v11406, %v11405
      %v11455 = vpack.c.b16 %v11408, %v11407
      %v11456 = vpack.c.b16 %v11410, %v11409
      %v11457 = vpack.c.b16 %v11412, %v11411
      %v11458 = vpack.c.b16 %v11414, %v11413
      %v11459 = vpack.c.b16 %v11416, %v11415
      %v11460 = vpack.c.b16 %v11418, %v11417
      %v11461 = vpack.c.b16 %v11420, %v11419
      %v11462 = vpack.c.b16 %v11422, %v11421
      %v11463 = vpack.c.b16 %v11424, %v11423
      %v11464 = vpack.c.b16 %v11426, %v11425
      %v11465 = vpack.c.b16 %v11428, %v11427
      %v11466 = vpack.c.b16 %v11430, %v11429
      %v11467 = vpack.c.b16 %v11432, %v11431
      %v11468 = vpack.c.b16 %v11439, %v11433
      %v11469 = vpack.c.b16 %v11441, %v11440
      %v11473 = vunpack.c.l.b16 %v11443
      %v11474 = vunpack.c.l.b16 %v11444
      %v11475 = vunpack.c.l.b16 %v11445
      %v11476 = vpack.c.b16 %v11474, %v11473
      %v11477 = vpack.c.b16 %v11475, %v11475
      %v11480 = vsel %vm629, %v11446, 0
      %v11483 = vsel %vm629, %v11447, 0
      %v11486 = vsel %vm629, %v11448, 0
      %v11489 = vsel %vm629, %v11449, 0
      %v11492 = vsel %vm629, %v11450, 0
      %v11495 = vsel %vm629, %v11451, 0
      %v11498 = vsel %vm629, %v11452, 0
      %v11501 = vsel %vm629, %v11453, 0
      %v11504 = vsel %vm629, %v11454, 0
      %v11507 = vsel %vm629, %v11455, 0
      %v11510 = vsel %vm629, %v11456, 0
      %v11513 = vsel %vm629, %v11457, 0
      %v11516 = vsel %vm629, %v11458, 0
      %v11519 = vsel %vm629, %v11459, 0
      %v11522 = vsel %vm629, %v11460, 0
      %v11525 = vsel %vm629, %v11461, 0
      %v11528 = vsel %vm629, %v11462, 0
      %v11531 = vsel %vm629, %v11463, 0
      %v11534 = vsel %vm629, %v11464, 0
      %v11537 = vsel %vm629, %v11465, 0
      %v11540 = vsel %vm629, %v11466, 0
      %v11543 = vsel %vm629, %v11467, 0
      %v11546 = vsel %vm629, %v11468, 0
      %v11549 = vsel %vm629, %v11469, 0
      %v11552 = vsel %vm711, %v11477, 0
      %11554 = vmatpush.bf16.msra.mxu0 0
      %11555 = vmatpush.bf16.msra.mxu0 0
      %11556 = vmatpush.bf16.msra.mxu0 0
      %11557 = vmatpush.bf16.msra.mxu0 0
      %11558 = vmatpush.bf16.msra.mxu0 0
      %11559 = vmatpush.bf16.msra.mxu0 0
      %11560 = vmatpush.bf16.msra.mxu0 %v11552
      %11561 = vmatpush.bf16.msra.mxu0 %v11476
      %11562 = vmatmul.bf16.gmra.mxu0 %v11480
      %v11563 = vpop.f32.mrf.mxu0
      %v11564 = vadd.f32 0.0, %v11563
      %v11565 = vpop.f32.mrf.mxu0
      %v11566 = vadd.f32 0.0, %v11565
      %11567 = vmatmul.bf16.gmra.mxu0 %v11483
      %v11568 = vpop.f32.mrf.mxu0
      %v11569 = vpop.f32.mrf.mxu0
      %v11570 = vadd.f32 0.0, %v11569
      %11571 = vmatmul.bf16.gmra.mxu0 %v11486
      %v11572 = vpop.f32.mrf.mxu0
      %v11573 = vadd.f32 0.0, %v11572
      %v11574 = vpop.f32.mrf.mxu0
      %11575 = vmatmul.bf16.gmra.mxu0 %v11489
      %v11576 = vpop.f32.mrf.mxu0
      %v11577 = vadd.f32 0.0, %v11576
      %v11578 = vpop.f32.mrf.mxu0
      %v11579 = vadd.f32 0.0, %v11578
      %11580 = vmatmul.bf16.gmra.mxu0 %v11492
      %v11581 = vpop.f32.mrf.mxu0
      %v11582 = vpop.f32.mrf.mxu0
      %v11583 = vadd.f32 0.0, %v11582
      %11584 = vmatmul.bf16.gmra.mxu0 %v11495
      %v11585 = vpop.f32.mrf.mxu0
      %v11586 = vadd.f32 0.0, %v11585
      %v11587 = vpop.f32.mrf.mxu0
      %11588 = vmatmul.bf16.gmra.mxu0 %v11498
      %v11589 = vpop.f32.mrf.mxu0
      %v11590 = vadd.f32 0.0, %v11589
      %v11591 = vpop.f32.mrf.mxu0
      %v11592 = vadd.f32 0.0, %v11591
      %11593 = vmatmul.bf16.gmra.mxu0 %v11501
      %v11594 = vpop.f32.mrf.mxu0
      %v11595 = vpop.f32.mrf.mxu0
      %v11596 = vadd.f32 0.0, %v11595
      %11597 = vmatmul.bf16.gmra.mxu0 %v11504
      %v11598 = vpop.f32.mrf.mxu0
      %v11599 = vadd.f32 0.0, %v11598
      %v11600 = vpop.f32.mrf.mxu0
      %11601 = vmatmul.bf16.gmra.mxu0 %v11507
      %v11602 = vpop.f32.mrf.mxu0
      %v11603 = vadd.f32 0.0, %v11602
      %v11604 = vpop.f32.mrf.mxu0
      %v11605 = vadd.f32 0.0, %v11604
      %11606 = vmatmul.bf16.gmra.mxu0 %v11510
      %v11607 = vpop.f32.mrf.mxu0
      %v11608 = vpop.f32.mrf.mxu0
      %v11609 = vadd.f32 0.0, %v11608
      %11610 = vmatmul.bf16.gmra.mxu0 %v11513
      %v11611 = vpop.f32.mrf.mxu0
      %v11612 = vadd.f32 0.0, %v11611
      %v11613 = vpop.f32.mrf.mxu0
      %11614 = vmatmul.bf16.gmra.mxu0 %v11516
      %v11615 = vpop.f32.mrf.mxu0
      %v11616 = vadd.f32 0.0, %v11615
      %v11617 = vpop.f32.mrf.mxu0
      %v11618 = vadd.f32 0.0, %v11617
      %11619 = vmatmul.bf16.gmra.mxu0 %v11519
      %v11620 = vpop.f32.mrf.mxu0
      %v11621 = vpop.f32.mrf.mxu0
      %v11622 = vadd.f32 0.0, %v11621
      %11623 = vmatmul.bf16.gmra.mxu0 %v11522
      %v11624 = vpop.f32.mrf.mxu0
      %v11625 = vadd.f32 0.0, %v11624
      %v11626 = vpop.f32.mrf.mxu0
      %11627 = vmatmul.bf16.gmra.mxu0 %v11525
      %v11628 = vpop.f32.mrf.mxu0
      %v11629 = vadd.f32 0.0, %v11628
      %v11630 = vpop.f32.mrf.mxu0
      %v11631 = vadd.f32 0.0, %v11630
      %11632 = vmatmul.bf16.gmra.mxu0 %v11528
      %v11633 = vpop.f32.mrf.mxu0
      %v11634 = vpop.f32.mrf.mxu0
      %v11635 = vadd.f32 0.0, %v11634
      %11636 = vmatmul.bf16.gmra.mxu0 %v11531
      %v11637 = vpop.f32.mrf.mxu0
      %v11638 = vadd.f32 0.0, %v11637
      %v11639 = vpop.f32.mrf.mxu0
      %11640 = vmatmul.bf16.gmra.mxu0 %v11534
      %v11641 = vpop.f32.mrf.mxu0
      %v11642 = vadd.f32 0.0, %v11641
      %v11643 = vpop.f32.mrf.mxu0
      %v11644 = vadd.f32 0.0, %v11643
      %11645 = vmatmul.bf16.gmra.mxu0 %v11537
      %v11646 = vpop.f32.mrf.mxu0
      %v11647 = vpop.f32.mrf.mxu0
      %v11648 = vadd.f32 0.0, %v11647
      %11649 = vmatmul.bf16.gmra.mxu0 %v11540
      %v11650 = vpop.f32.mrf.mxu0
      %v11651 = vadd.f32 0.0, %v11650
      %v11652 = vpop.f32.mrf.mxu0
      %11653 = vmatmul.bf16.gmra.mxu0 %v11543
      %v11654 = vpop.f32.mrf.mxu0
      %v11655 = vadd.f32 0.0, %v11654
      %v11656 = vpop.f32.mrf.mxu0
      %v11657 = vadd.f32 0.0, %v11656
      %11658 = vmatmul.bf16.gmra.mxu0 %v11546
      %v11659 = vpop.f32.mrf.mxu0
      %v11660 = vpop.f32.mrf.mxu0
      %v11661 = vadd.f32 0.0, %v11660
      %11662 = vmatmul.bf16.gmra.mxu0 %v11549
      %v11663 = vpop.f32.mrf.mxu0
      %v11664 = vadd.f32 0.0, %v11663
      %v11665 = vpop.f32.mrf.mxu0
      %11666 = vdwg.mxu0
      %v11667 = vpack.c.b16 %v11387, %v11386
      %v11668 = vpack.c.b16 %v11389, %v11388
      %v11669 = vpack.c.b16 %v11391, %v11390
      %v11670 = vpack.c.b16 %v11393, %v11392
      %v11671 = vpack.c.b16 %v11395, %v11394
      %v11672 = vpack.c.b16 %v11397, %v11396
      %v11673 = vpack.c.b16 %v11399, %v11398
      %v11674 = vpack.c.b16 %v11401, %v11400
      %v11675 = vpack.c.b16 %v11403, %v11402
      %v11676 = vpack.c.b16 %v11405, %v11404
      %v11677 = vpack.c.b16 %v11407, %v11406
      %v11678 = vpack.c.b16 %v11409, %v11408
      %v11679 = vpack.c.b16 %v11411, %v11410
      %v11680 = vpack.c.b16 %v11413, %v11412
      %v11681 = vpack.c.b16 %v11415, %v11414
      %v11682 = vpack.c.b16 %v11417, %v11416
      %v11683 = vpack.c.b16 %v11419, %v11418
      %v11684 = vpack.c.b16 %v11421, %v11420
      %v11685 = vpack.c.b16 %v11423, %v11422
      %v11686 = vpack.c.b16 %v11425, %v11424
      %v11687 = vpack.c.b16 %v11427, %v11426
      %v11688 = vpack.c.b16 %v11429, %v11428
      %v11689 = vpack.c.b16 %v11431, %v11430
      %v11690 = vpack.c.b16 %v11433, %v11432
      %v11694 = vunpack.c.l.b16 %v11434
      %v11695 = vunpack.c.l.b16 %v11435
      %v11696 = vunpack.c.l.b16 %v11436
      %v11697 = vpack.c.b16 %v11695, %v11694
      %v11698 = vpack.c.b16 %v11696, %v11696
      %v11701 = vsel %vm629, %v11667, 0
      %v11704 = vsel %vm629, %v11668, 0
      %v11707 = vsel %vm629, %v11669, 0
      %v11710 = vsel %vm629, %v11670, 0
      %v11713 = vsel %vm629, %v11671, 0
      %v11716 = vsel %vm629, %v11672, 0
      %v11719 = vsel %vm629, %v11673, 0
      %v11722 = vsel %vm629, %v11674, 0
      %v11725 = vsel %vm629, %v11675, 0
      %v11728 = vsel %vm629, %v11676, 0
      %v11731 = vsel %vm629, %v11677, 0
      %v11734 = vsel %vm629, %v11678, 0
      %v11737 = vsel %vm629, %v11679, 0
      %v11740 = vsel %vm629, %v11680, 0
      %v11743 = vsel %vm629, %v11681, 0
      %v11746 = vsel %vm629, %v11682, 0
      %v11749 = vsel %vm629, %v11683, 0
      %v11752 = vsel %vm629, %v11684, 0
      %v11755 = vsel %vm629, %v11685, 0
      %v11758 = vsel %vm629, %v11686, 0
      %v11761 = vsel %vm629, %v11687, 0
      %v11764 = vsel %vm629, %v11688, 0
      %v11767 = vsel %vm629, %v11689, 0
      %v11770 = vsel %vm629, %v11690, 0
      %v11773 = vsel %vm711, %v11698, 0
      %11775 = vmatpush.bf16.msra.mxu0 0
      %11776 = vmatpush.bf16.msra.mxu0 0
      %11777 = vmatpush.bf16.msra.mxu0 0
      %11778 = vmatpush.bf16.msra.mxu0 0
      %11779 = vmatpush.bf16.msra.mxu0 0
      %11780 = vmatpush.bf16.msra.mxu0 0
      %11781 = vmatpush.bf16.msra.mxu0 %v11773
      %11782 = vmatpush.bf16.msra.mxu0 %v11697
      %11783 = vmatmul.bf16.gmra.mxu0 %v11701
      %v11784 = vpop.f32.mrf.mxu0
      %v11785 = vadd.f32 %v11564, %v11784
      %v11786 = vpop.f32.mrf.mxu0
      %v11787 = vadd.f32 %v11566, %v11786
      %11788 = vmatmul.bf16.gmra.mxu0 %v11704
      %v11789 = vpop.f32.mrf.mxu0
      %v11790 = vpop.f32.mrf.mxu0
      %v11791 = vadd.f32 %v11570, %v11790
      %11792 = vmatmul.bf16.gmra.mxu0 %v11707
      %v11793 = vpop.f32.mrf.mxu0
      %v11794 = vadd.f32 %v11573, %v11793
      %v11795 = vpop.f32.mrf.mxu0
      %11796 = vmatmul.bf16.gmra.mxu0 %v11710
      %v11797 = vpop.f32.mrf.mxu0
      %v11798 = vadd.f32 %v11577, %v11797
      %v11799 = vpop.f32.mrf.mxu0
      %v11800 = vadd.f32 %v11579, %v11799
      %11801 = vmatmul.bf16.gmra.mxu0 %v11713
      %v11802 = vpop.f32.mrf.mxu0
      %v11803 = vpop.f32.mrf.mxu0
      %v11804 = vadd.f32 %v11583, %v11803
      %11805 = vmatmul.bf16.gmra.mxu0 %v11716
      %v11806 = vpop.f32.mrf.mxu0
      %v11807 = vadd.f32 %v11586, %v11806
      %v11808 = vpop.f32.mrf.mxu0
      %11809 = vmatmul.bf16.gmra.mxu0 %v11719
      %v11810 = vpop.f32.mrf.mxu0
      %v11811 = vadd.f32 %v11590, %v11810
      %v11812 = vpop.f32.mrf.mxu0
      %v11813 = vadd.f32 %v11592, %v11812
      %11814 = vmatmul.bf16.gmra.mxu0 %v11722
      %v11815 = vpop.f32.mrf.mxu0
      %v11816 = vpop.f32.mrf.mxu0
      %v11817 = vadd.f32 %v11596, %v11816
      %11818 = vmatmul.bf16.gmra.mxu0 %v11725
      %v11819 = vpop.f32.mrf.mxu0
      %v11820 = vadd.f32 %v11599, %v11819
      %v11821 = vpop.f32.mrf.mxu0
      %11822 = vmatmul.bf16.gmra.mxu0 %v11728
      %v11823 = vpop.f32.mrf.mxu0
      %v11824 = vadd.f32 %v11603, %v11823
      %v11825 = vpop.f32.mrf.mxu0
      %v11826 = vadd.f32 %v11605, %v11825
      %11827 = vmatmul.bf16.gmra.mxu0 %v11731
      %v11828 = vpop.f32.mrf.mxu0
      %v11829 = vpop.f32.mrf.mxu0
      %v11830 = vadd.f32 %v11609, %v11829
      %11831 = vmatmul.bf16.gmra.mxu0 %v11734
      %v11832 = vpop.f32.mrf.mxu0
      %v11833 = vadd.f32 %v11612, %v11832
      %v11834 = vpop.f32.mrf.mxu0
      %11835 = vmatmul.bf16.gmra.mxu0 %v11737
      %v11836 = vpop.f32.mrf.mxu0
      %v11837 = vadd.f32 %v11616, %v11836
      %v11838 = vpop.f32.mrf.mxu0
      %v11839 = vadd.f32 %v11618, %v11838
      %11840 = vmatmul.bf16.gmra.mxu0 %v11740
      %v11841 = vpop.f32.mrf.mxu0
      %v11842 = vpop.f32.mrf.mxu0
      %v11843 = vadd.f32 %v11622, %v11842
      %11844 = vmatmul.bf16.gmra.mxu0 %v11743
      %v11845 = vpop.f32.mrf.mxu0
      %v11846 = vadd.f32 %v11625, %v11845
      %v11847 = vpop.f32.mrf.mxu0
      %11848 = vmatmul.bf16.gmra.mxu0 %v11746
      %v11849 = vpop.f32.mrf.mxu0
      %v11850 = vadd.f32 %v11629, %v11849
      %v11851 = vpop.f32.mrf.mxu0
      %v11852 = vadd.f32 %v11631, %v11851
      %11853 = vmatmul.bf16.gmra.mxu0 %v11749
      %v11854 = vpop.f32.mrf.mxu0
      %v11855 = vpop.f32.mrf.mxu0
      %v11856 = vadd.f32 %v11635, %v11855
      %11857 = vmatmul.bf16.gmra.mxu0 %v11752
      %v11858 = vpop.f32.mrf.mxu0
      %v11859 = vadd.f32 %v11638, %v11858
      %v11860 = vpop.f32.mrf.mxu0
      %11861 = vmatmul.bf16.gmra.mxu0 %v11755
      %v11862 = vpop.f32.mrf.mxu0
      %v11863 = vadd.f32 %v11642, %v11862
      %v11864 = vpop.f32.mrf.mxu0
      %v11865 = vadd.f32 %v11644, %v11864
      %11866 = vmatmul.bf16.gmra.mxu0 %v11758
      %v11867 = vpop.f32.mrf.mxu0
      %v11868 = vpop.f32.mrf.mxu0
      %v11869 = vadd.f32 %v11648, %v11868
      %11870 = vmatmul.bf16.gmra.mxu0 %v11761
      %v11871 = vpop.f32.mrf.mxu0
      %v11872 = vadd.f32 %v11651, %v11871
      %v11873 = vpop.f32.mrf.mxu0
      %11874 = vmatmul.bf16.gmra.mxu0 %v11764
      %v11875 = vpop.f32.mrf.mxu0
      %v11876 = vadd.f32 %v11655, %v11875
      %v11877 = vpop.f32.mrf.mxu0
      %v11878 = vadd.f32 %v11657, %v11877
      %11879 = vmatmul.bf16.gmra.mxu0 %v11767
      %v11880 = vpop.f32.mrf.mxu0
      %v11881 = vpop.f32.mrf.mxu0
      %v11882 = vadd.f32 %v11661, %v11881
      %11883 = vmatmul.bf16.gmra.mxu0 %v11770
      %v11884 = vpop.f32.mrf.mxu0
      %v11885 = vadd.f32 %v11664, %v11884
      %v11886 = vpop.f32.mrf.mxu0
      %11887 = vdwg.mxu0
      %v11890 = vunpack.c.l.b16 %v11351
      %v11891 = vunpack.c.h.b16 %v11351
      %v11892 = vunpack.c.l.b16 %v11353
      %s11893 = scalar_lea.vmem %s9, 24
      %v11894 = vld [vmem:[%s11893] sm:$0xf]
      %v11895 = vld [vmem:[%s11893 + $0x4] sm:$0xf]
      %v11896 = vld [vmem:[%s11893 + $0x8] sm:$0xf]
      %v11897 = vpack.c.b16 %v11440, %v11439
      %v11898 = vpack.c.b16 %v11890, %v11441
      %v11899 = vpack.c.b16 %v11892, %v11891
      %v11903 = vunpack.c.l.b16 %v11894
      %v11904 = vunpack.c.l.b16 %v11895
      %v11905 = vunpack.c.l.b16 %v11896
      %v11906 = vpack.c.b16 %v11904, %v11903
      %v11907 = vpack.c.b16 %v11905, %v11905
      %v11910 = vsel %vm629, %v11897, 0
      %v11913 = vsel %vm629, %v11898, 0
      %v11916 = vsel %vm629, %v11899, 0
      %v11919 = vsel %vm711, %v11907, 0
      %11921 = vmatpush.bf16.msra.mxu0 0
      %11922 = vmatpush.bf16.msra.mxu0 0
      %11923 = vmatpush.bf16.msra.mxu0 0
      %11924 = vmatpush.bf16.msra.mxu0 0
      %11925 = vmatpush.bf16.msra.mxu0 0
      %11926 = vmatpush.bf16.msra.mxu0 0
      %11927 = vmatpush.bf16.msra.mxu0 %v11919
      %11928 = vmatpush.bf16.msra.mxu0 %v11906
      %11929 = vmatmul.bf16.gmra.mxu0 %v11710
      %v11930 = vpop.f32.mrf.mxu0
      %v11931 = vadd.f32 0.0, %v11930
      %v11932 = vpop.f32.mrf.mxu0
      %v11933 = vadd.f32 0.0, %v11932
      %11934 = vmatmul.bf16.gmra.mxu0 %v11713
      %v11935 = vpop.f32.mrf.mxu0
      %v11936 = vpop.f32.mrf.mxu0
      %v11937 = vadd.f32 0.0, %v11936
      %11938 = vmatmul.bf16.gmra.mxu0 %v11716
      %v11939 = vpop.f32.mrf.mxu0
      %v11940 = vadd.f32 0.0, %v11939
      %v11941 = vpop.f32.mrf.mxu0
      %11942 = vmatmul.bf16.gmra.mxu0 %v11719
      %v11943 = vpop.f32.mrf.mxu0
      %v11944 = vadd.f32 0.0, %v11943
      %v11945 = vpop.f32.mrf.mxu0
      %v11946 = vadd.f32 0.0, %v11945
      %11947 = vmatmul.bf16.gmra.mxu0 %v11722
      %v11948 = vpop.f32.mrf.mxu0
      %v11949 = vpop.f32.mrf.mxu0
      %v11950 = vadd.f32 0.0, %v11949
      %11951 = vmatmul.bf16.gmra.mxu0 %v11725
      %v11952 = vpop.f32.mrf.mxu0
      %v11953 = vadd.f32 0.0, %v11952
      %v11954 = vpop.f32.mrf.mxu0
      %11955 = vmatmul.bf16.gmra.mxu0 %v11728
      %v11956 = vpop.f32.mrf.mxu0
      %v11957 = vadd.f32 0.0, %v11956
      %v11958 = vpop.f32.mrf.mxu0
      %v11959 = vadd.f32 0.0, %v11958
      %11960 = vmatmul.bf16.gmra.mxu0 %v11731
      %v11961 = vpop.f32.mrf.mxu0
      %v11962 = vpop.f32.mrf.mxu0
      %v11963 = vadd.f32 0.0, %v11962
      %11964 = vmatmul.bf16.gmra.mxu0 %v11734
      %v11965 = vpop.f32.mrf.mxu0
      %v11966 = vadd.f32 0.0, %v11965
      %v11967 = vpop.f32.mrf.mxu0
      %11968 = vmatmul.bf16.gmra.mxu0 %v11737
      %v11969 = vpop.f32.mrf.mxu0
      %v11970 = vadd.f32 0.0, %v11969
      %v11971 = vpop.f32.mrf.mxu0
      %v11972 = vadd.f32 0.0, %v11971
      %11973 = vmatmul.bf16.gmra.mxu0 %v11740
      %v11974 = vpop.f32.mrf.mxu0
      %v11975 = vpop.f32.mrf.mxu0
      %v11976 = vadd.f32 0.0, %v11975
      %11977 = vmatmul.bf16.gmra.mxu0 %v11743
      %v11978 = vpop.f32.mrf.mxu0
      %v11979 = vadd.f32 0.0, %v11978
      %v11980 = vpop.f32.mrf.mxu0
      %11981 = vmatmul.bf16.gmra.mxu0 %v11746
      %v11982 = vpop.f32.mrf.mxu0
      %v11983 = vadd.f32 0.0, %v11982
      %v11984 = vpop.f32.mrf.mxu0
      %v11985 = vadd.f32 0.0, %v11984
      %11986 = vmatmul.bf16.gmra.mxu0 %v11749
      %v11987 = vpop.f32.mrf.mxu0
      %v11988 = vpop.f32.mrf.mxu0
      %v11989 = vadd.f32 0.0, %v11988
      %11990 = vmatmul.bf16.gmra.mxu0 %v11752
      %v11991 = vpop.f32.mrf.mxu0
      %v11992 = vadd.f32 0.0, %v11991
      %v11993 = vpop.f32.mrf.mxu0
      %11994 = vmatmul.bf16.gmra.mxu0 %v11755
      %v11995 = vpop.f32.mrf.mxu0
      %v11996 = vadd.f32 0.0, %v11995
      %v11997 = vpop.f32.mrf.mxu0
      %v11998 = vadd.f32 0.0, %v11997
      %11999 = vmatmul.bf16.gmra.mxu0 %v11758
      %v12000 = vpop.f32.mrf.mxu0
      %v12001 = vpop.f32.mrf.mxu0
      %v12002 = vadd.f32 0.0, %v12001
      %12003 = vmatmul.bf16.gmra.mxu0 %v11761
      %v12004 = vpop.f32.mrf.mxu0
      %v12005 = vadd.f32 0.0, %v12004
      %v12006 = vpop.f32.mrf.mxu0
      %12007 = vmatmul.bf16.gmra.mxu0 %v11764
      %v12008 = vpop.f32.mrf.mxu0
      %v12009 = vadd.f32 0.0, %v12008
      %v12010 = vpop.f32.mrf.mxu0
      %v12011 = vadd.f32 0.0, %v12010
      %12012 = vmatmul.bf16.gmra.mxu0 %v11767
      %v12013 = vpop.f32.mrf.mxu0
      %v12014 = vpop.f32.mrf.mxu0
      %v12015 = vadd.f32 0.0, %v12014
      %12016 = vmatmul.bf16.gmra.mxu0 %v11770
      %v12017 = vpop.f32.mrf.mxu0
      %v12018 = vadd.f32 0.0, %v12017
      %v12019 = vpop.f32.mrf.mxu0
      %12020 = vmatmul.bf16.gmra.mxu0 %v11910
      %v12021 = vpop.f32.mrf.mxu0
      %v12022 = vadd.f32 0.0, %v12021
      %v12023 = vpop.f32.mrf.mxu0
      %v12024 = vadd.f32 0.0, %v12023
      %12025 = vmatmul.bf16.gmra.mxu0 %v11913
      %v12026 = vpop.f32.mrf.mxu0
      %v12027 = vpop.f32.mrf.mxu0
      %v12028 = vadd.f32 0.0, %v12027
      %12029 = vmatmul.bf16.gmra.mxu0 %v11916
      %v12030 = vpop.f32.mrf.mxu0
      %v12031 = vadd.f32 0.0, %v12030
      %v12032 = vpop.f32.mrf.mxu0
      %12033 = vdwg.mxu0
      %v12034 = vadd.f32 %v11785, %v11931
      %v12035 = vadd.f32 %v11787, %v11933
      %v12036 = vadd.f32 %v11791, %v11937
      %v12037 = vadd.f32 %v11794, %v11940
      %v12038 = vadd.f32 %v11798, %v11944
      %v12039 = vadd.f32 %v11800, %v11946
      %v12040 = vadd.f32 %v11804, %v11950
      %v12041 = vadd.f32 %v11807, %v11953
      %v12042 = vadd.f32 %v11811, %v11957
      %v12043 = vadd.f32 %v11813, %v11959
      %v12044 = vadd.f32 %v11817, %v11963
      %v12045 = vadd.f32 %v11820, %v11966
      %v12046 = vadd.f32 %v11824, %v11970
      %v12047 = vadd.f32 %v11826, %v11972
      %v12048 = vadd.f32 %v11830, %v11976
      %v12049 = vadd.f32 %v11833, %v11979
      %v12050 = vadd.f32 %v11837, %v11983
      %v12051 = vadd.f32 %v11839, %v11985
      %v12052 = vadd.f32 %v11843, %v11989
      %v12053 = vadd.f32 %v11846, %v11992
      %v12054 = vadd.f32 %v11850, %v11996
      %v12055 = vadd.f32 %v11852, %v11998
      %v12056 = vadd.f32 %v11856, %v12002
      %v12057 = vadd.f32 %v11859, %v12005
      %v12058 = vadd.f32 %v11863, %v12009
      %v12059 = vadd.f32 %v11865, %v12011
      %v12060 = vadd.f32 %v11869, %v12015
      %v12061 = vadd.f32 %v11872, %v12018
      %v12062 = vadd.f32 %v11876, %v12022
      %v12063 = vadd.f32 %v11878, %v12024
      %v12064 = vadd.f32 %v11882, %v12028
      %v12065 = vadd.f32 %v11885, %v12031
      %v12066 = vld [vmem:[%s10] sm:$0x1]
      %v12068 = vperm.slane %v12066, 0
      %v12070 = vadd.f32 %v12034, %v12068
      %v12071 = vadd.f32 %v12035, %v12068
      %v12072 = vadd.f32 %v12036, %v12068
      %v12073 = vadd.f32 %v12037, %v12068
      %v12074 = vadd.f32 %v12038, %v12068
      %v12075 = vadd.f32 %v12039, %v12068
      %v12076 = vadd.f32 %v12040, %v12068
      %v12077 = vadd.f32 %v12041, %v12068
      %v12078 = vadd.f32 %v12042, %v12068
      %v12079 = vadd.f32 %v12043, %v12068
      %v12080 = vadd.f32 %v12044, %v12068
      %v12081 = vadd.f32 %v12045, %v12068
      %v12082 = vadd.f32 %v12046, %v12068
      %v12083 = vadd.f32 %v12047, %v12068
      %v12084 = vadd.f32 %v12048, %v12068
      %v12085 = vadd.f32 %v12049, %v12068
      %v12086 = vadd.f32 %v12050, %v12068
      %v12087 = vadd.f32 %v12051, %v12068
      %v12088 = vadd.f32 %v12052, %v12068
      %v12089 = vadd.f32 %v12053, %v12068
      %v12090 = vadd.f32 %v12054, %v12068
      %v12091 = vadd.f32 %v12055, %v12068
      %v12092 = vadd.f32 %v12056, %v12068
      %v12093 = vadd.f32 %v12057, %v12068
      %v12094 = vadd.f32 %v12058, %v12068
      %v12095 = vadd.f32 %v12059, %v12068
      %v12096 = vadd.f32 %v12060, %v12068
      %v12097 = vadd.f32 %v12061, %v12068
      %v12098 = vadd.f32 %v12062, %v12068
      %v12099 = vadd.f32 %v12063, %v12068
      %v12100 = vadd.f32 %v12064, %v12068
      %v12101 = vadd.f32 %v12065, %v12068
      %vm12102 = vcmp.ge.f32.partialorder %v12070, 0.0
      %vm12103 = vcmp.ge.f32.partialorder %v12071, 0.0
      %vm12104 = vcmp.ge.f32.partialorder %v12072, 0.0
      %vm12105 = vcmp.ge.f32.partialorder %v12073, 0.0
      %vm12106 = vcmp.ge.f32.partialorder %v12074, 0.0
      %vm12107 = vcmp.ge.f32.partialorder %v12075, 0.0
      %vm12108 = vcmp.ge.f32.partialorder %v12076, 0.0
      %vm12109 = vcmp.ge.f32.partialorder %v12077, 0.0
      %vm12110 = vcmp.ge.f32.partialorder %v12078, 0.0
      %vm12111 = vcmp.ge.f32.partialorder %v12079, 0.0
      %vm12112 = vcmp.ge.f32.partialorder %v12080, 0.0
      %vm12113 = vcmp.ge.f32.partialorder %v12081, 0.0
      %vm12114 = vcmp.ge.f32.partialorder %v12082, 0.0
      %vm12115 = vcmp.ge.f32.partialorder %v12083, 0.0
      %vm12116 = vcmp.ge.f32.partialorder %v12084, 0.0
      %vm12117 = vcmp.ge.f32.partialorder %v12085, 0.0
      %vm12118 = vcmp.ge.f32.partialorder %v12086, 0.0
      %vm12119 = vcmp.ge.f32.partialorder %v12087, 0.0
      %vm12120 = vcmp.ge.f32.partialorder %v12088, 0.0
      %vm12121 = vcmp.ge.f32.partialorder %v12089, 0.0
      %vm12122 = vcmp.ge.f32.partialorder %v12090, 0.0
      %vm12123 = vcmp.ge.f32.partialorder %v12091, 0.0
      %vm12124 = vcmp.ge.f32.partialorder %v12092, 0.0
      %vm12125 = vcmp.ge.f32.partialorder %v12093, 0.0
      %vm12126 = vcmp.ge.f32.partialorder %v12094, 0.0
      %vm12127 = vcmp.ge.f32.partialorder %v12095, 0.0
      %vm12128 = vcmp.ge.f32.partialorder %v12096, 0.0
      %vm12129 = vcmp.ge.f32.partialorder %v12097, 0.0
      %vm12130 = vcmp.ge.f32.partialorder %v12098, 0.0
      %vm12131 = vcmp.ge.f32.partialorder %v12099, 0.0
      %vm12132 = vcmp.ge.f32.partialorder %v12100, 0.0
      %vm12133 = vcmp.ge.f32.partialorder %v12101, 0.0
      %v12134 = vmul.f32 %v12070, 0.2
      %v12135 = vmul.f32 %v12071, 0.2
      %v12136 = vmul.f32 %v12072, 0.2
      %v12137 = vmul.f32 %v12073, 0.2
      %v12138 = vmul.f32 %v12074, 0.2
      %v12139 = vmul.f32 %v12075, 0.2
      %v12140 = vmul.f32 %v12076, 0.2
      %v12141 = vmul.f32 %v12077, 0.2
      %v12142 = vmul.f32 %v12078, 0.2
      %v12143 = vmul.f32 %v12079, 0.2
      %v12144 = vmul.f32 %v12080, 0.2
      %v12145 = vmul.f32 %v12081, 0.2
      %v12146 = vmul.f32 %v12082, 0.2
      %v12147 = vmul.f32 %v12083, 0.2
      %v12148 = vmul.f32 %v12084, 0.2
      %v12149 = vmul.f32 %v12085, 0.2
      %v12150 = vmul.f32 %v12086, 0.2
      %v12151 = vmul.f32 %v12087, 0.2
      %v12152 = vmul.f32 %v12088, 0.2
      %v12153 = vmul.f32 %v12089, 0.2
      %v12154 = vmul.f32 %v12090, 0.2
      %v12155 = vmul.f32 %v12091, 0.2
      %v12156 = vmul.f32 %v12092, 0.2
      %v12157 = vmul.f32 %v12093, 0.2
      %v12158 = vmul.f32 %v12094, 0.2
      %v12159 = vmul.f32 %v12095, 0.2
      %v12160 = vmul.f32 %v12096, 0.2
      %v12161 = vmul.f32 %v12097, 0.2
      %v12162 = vmul.f32 %v12098, 0.2
      %v12163 = vmul.f32 %v12099, 0.2
      %v12164 = vmul.f32 %v12100, 0.2
      %v12165 = vmul.f32 %v12101, 0.2
      %v12166 = vsel %vm12102, %v12070, %v12134
      %v12167 = vsel %vm12103, %v12071, %v12135
      %v12168 = vsel %vm12104, %v12072, %v12136
      %v12169 = vsel %vm12105, %v12073, %v12137
      %v12170 = vsel %vm12106, %v12074, %v12138
      %v12171 = vsel %vm12107, %v12075, %v12139
      %v12172 = vsel %vm12108, %v12076, %v12140
      %v12173 = vsel %vm12109, %v12077, %v12141
      %v12174 = vsel %vm12110, %v12078, %v12142
      %v12175 = vsel %vm12111, %v12079, %v12143
      %v12176 = vsel %vm12112, %v12080, %v12144
      %v12177 = vsel %vm12113, %v12081, %v12145
      %v12178 = vsel %vm12114, %v12082, %v12146
      %v12179 = vsel %vm12115, %v12083, %v12147
      %v12180 = vsel %vm12116, %v12084, %v12148
      %v12181 = vsel %vm12117, %v12085, %v12149
      %v12182 = vsel %vm12118, %v12086, %v12150
      %v12183 = vsel %vm12119, %v12087, %v12151
      %v12184 = vsel %vm12120, %v12088, %v12152
      %v12185 = vsel %vm12121, %v12089, %v12153
      %v12186 = vsel %vm12122, %v12090, %v12154
      %v12187 = vsel %vm12123, %v12091, %v12155
      %v12188 = vsel %vm12124, %v12092, %v12156
      %v12189 = vsel %vm12125, %v12093, %v12157
      %v12190 = vsel %vm12126, %v12094, %v12158
      %v12191 = vsel %vm12127, %v12095, %v12159
      %v12192 = vsel %vm12128, %v12096, %v12160
      %v12193 = vsel %vm12129, %v12097, %v12161
      %v12194 = vsel %vm12130, %v12098, %v12162
      %v12195 = vsel %vm12131, %v12099, %v12163
      %v12196 = vsel %vm12132, %v12100, %v12164
      %v12197 = vsel %vm12133, %v12101, %v12165
      %v12198 = vld [vmem:[%s11] sm:$0xf]
      %v12199 = vld [vmem:[%s11 + $0x4] sm:$0xf]
      %v12200 = vld [vmem:[%s11 + $0x8] sm:$0xf]
      %v12201 = vld [vmem:[%s11 + $0xc] sm:$0xf]
      %v12202 = vld [vmem:[%s11 + $0x10] sm:$0xf]
      %v12203 = vld [vmem:[%s11 + $0x14] sm:$0xf]
      %v12204 = vld [vmem:[%s11 + $0x18] sm:$0xf]
      %v12205 = vld [vmem:[%s11 + $0x1c] sm:$0xf]
      %v12206 = vld [vmem:[%s11 + $0x20] sm:$0xf]
      %v12207 = vld [vmem:[%s11 + $0x24] sm:$0xf]
      %v12208 = vld [vmem:[%s11 + $0x28] sm:$0xf]
      %v12209 = vld [vmem:[%s11 + $0x2c] sm:$0xf]
      %v12210 = vld [vmem:[%s11 + $0x30] sm:$0xf]
      %v12211 = vld [vmem:[%s11 + $0x34] sm:$0xf]
      %v12212 = vld [vmem:[%s11 + $0x38] sm:$0xf]
      %v12213 = vld [vmem:[%s11 + $0x3c] sm:$0xf]
      %v12214 = vld [vmem:[%s11 + $0x40] sm:$0xf]
      %v12215 = vld [vmem:[%s12] sm:$0x1]
      %v12217 = vperm.slane %v12215, 0
      %v12236 = vunpack.c.l.b16 %v12198
      %v12237 = vunpack.c.l.b16 %v12199
      %v12238 = vunpack.c.l.b16 %v12200
      %v12239 = vunpack.c.l.b16 %v12201
      %v12240 = vunpack.c.l.b16 %v12202
      %v12241 = vunpack.c.l.b16 %v12203
      %v12242 = vunpack.c.l.b16 %v12204
      %v12243 = vunpack.c.l.b16 %v12205
      %v12244 = vunpack.c.l.b16 %v12206
      %v12245 = vunpack.c.l.b16 %v12207
      %v12246 = vunpack.c.l.b16 %v12208
      %v12247 = vunpack.c.l.b16 %v12209
      %v12248 = vunpack.c.l.b16 %v12210
      %v12249 = vunpack.c.l.b16 %v12211
      %v12250 = vunpack.c.l.b16 %v12212
      %v12251 = vunpack.c.l.b16 %v12213
      %v12252 = vunpack.c.l.b16 %v12214
      %v12253 = vpack.c.b16 %v12237, %v12236
      %v12254 = vpack.c.b16 %v12239, %v12238
      %v12255 = vpack.c.b16 %v12241, %v12240
      %v12256 = vpack.c.b16 %v12243, %v12242
      %v12257 = vpack.c.b16 %v12245, %v12244
      %v12258 = vpack.c.b16 %v12247, %v12246
      %v12259 = vpack.c.b16 %v12249, %v12248
      %v12260 = vpack.c.b16 %v12251, %v12250
      %v12261 = vpack.c.b16 %v12252, %v12252
      %v12271 = vsel %vm711, %v12261, 0
      %12273 = vmatpush.bf16.msra.mxu0 %v12260
      %12274 = vmatpush.bf16.msra.mxu0 %v12259
      %12275 = vmatpush.bf16.msra.mxu0 %v12258
      %12276 = vmatpush.bf16.msra.mxu0 %v12257
      %12277 = vmatpush.bf16.msra.mxu0 %v12256
      %12278 = vmatpush.bf16.msra.mxu0 %v12255
      %12279 = vmatpush.bf16.msra.mxu0 %v12254
      %12280 = vmatpush.bf16.msra.mxu0 %v12253
      %12281 = vmatmul.bf16.gmra.mxu0 %v6759
      %v12282 = vpop.f32.mrf.mxu0
      %v12283 = vadd.f32 %v12217, %v12282
      %v12284 = vpop.f32.mrf.mxu0
      %v12285 = vadd.f32 %v12217, %v12284
      %12286 = vmatmul.bf16.gmra.mxu0 %v8306
      %v12287 = vpop.f32.mrf.mxu0
      %v12288 = vpop.f32.mrf.mxu0
      %v12289 = vadd.f32 %v12217, %v12288
      %12290 = vmatmul.bf16.gmra.mxu0 %v8309
      %v12291 = vpop.f32.mrf.mxu0
      %v12292 = vadd.f32 %v12217, %v12291
      %v12293 = vpop.f32.mrf.mxu0
      %12294 = vmatmul.bf16.gmra.mxu0 %v6761
      %v12295 = vpop.f32.mrf.mxu0
      %v12296 = vadd.f32 %v12217, %v12295
      %v12297 = vpop.f32.mrf.mxu0
      %v12298 = vadd.f32 %v12217, %v12297
      %12299 = vmatmul.bf16.gmra.mxu0 %v8314
      %v12300 = vpop.f32.mrf.mxu0
      %v12301 = vpop.f32.mrf.mxu0
      %v12302 = vadd.f32 %v12217, %v12301
      %12303 = vmatmul.bf16.gmra.mxu0 %v8317
      %v12304 = vpop.f32.mrf.mxu0
      %v12305 = vadd.f32 %v12217, %v12304
      %v12306 = vpop.f32.mrf.mxu0
      %12307 = vmatmul.bf16.gmra.mxu0 %v6763
      %v12308 = vpop.f32.mrf.mxu0
      %v12309 = vadd.f32 %v12217, %v12308
      %v12310 = vpop.f32.mrf.mxu0
      %v12311 = vadd.f32 %v12217, %v12310
      %12312 = vmatmul.bf16.gmra.mxu0 %v8322
      %v12313 = vpop.f32.mrf.mxu0
      %v12314 = vpop.f32.mrf.mxu0
      %v12315 = vadd.f32 %v12217, %v12314
      %12316 = vmatmul.bf16.gmra.mxu0 %v8325
      %v12317 = vpop.f32.mrf.mxu0
      %v12318 = vadd.f32 %v12217, %v12317
      %v12319 = vpop.f32.mrf.mxu0
      %12320 = vmatmul.bf16.gmra.mxu0 %v6765
      %v12321 = vpop.f32.mrf.mxu0
      %v12322 = vadd.f32 %v12217, %v12321
      %v12323 = vpop.f32.mrf.mxu0
      %v12324 = vadd.f32 %v12217, %v12323
      %12325 = vmatmul.bf16.gmra.mxu0 %v8330
      %v12326 = vpop.f32.mrf.mxu0
      %v12327 = vpop.f32.mrf.mxu0
      %v12328 = vadd.f32 %v12217, %v12327
      %12329 = vmatmul.bf16.gmra.mxu0 %v8333
      %v12330 = vpop.f32.mrf.mxu0
      %v12331 = vadd.f32 %v12217, %v12330
      %v12332 = vpop.f32.mrf.mxu0
      %12333 = vmatmul.bf16.gmra.mxu0 %v6767
      %v12334 = vpop.f32.mrf.mxu0
      %v12335 = vadd.f32 %v12217, %v12334
      %v12336 = vpop.f32.mrf.mxu0
      %v12337 = vadd.f32 %v12217, %v12336
      %12338 = vmatmul.bf16.gmra.mxu0 %v8338
      %v12339 = vpop.f32.mrf.mxu0
      %v12340 = vpop.f32.mrf.mxu0
      %v12341 = vadd.f32 %v12217, %v12340
      %12342 = vmatmul.bf16.gmra.mxu0 %v8341
      %v12343 = vpop.f32.mrf.mxu0
      %v12344 = vadd.f32 %v12217, %v12343
      %v12345 = vpop.f32.mrf.mxu0
      %12346 = vmatmul.bf16.gmra.mxu0 %v6769
      %v12347 = vpop.f32.mrf.mxu0
      %v12348 = vadd.f32 %v12217, %v12347
      %v12349 = vpop.f32.mrf.mxu0
      %v12350 = vadd.f32 %v12217, %v12349
      %12351 = vmatmul.bf16.gmra.mxu0 %v8346
      %v12352 = vpop.f32.mrf.mxu0
      %v12353 = vpop.f32.mrf.mxu0
      %v12354 = vadd.f32 %v12217, %v12353
      %12355 = vmatmul.bf16.gmra.mxu0 %v8349
      %v12356 = vpop.f32.mrf.mxu0
      %v12357 = vadd.f32 %v12217, %v12356
      %v12358 = vpop.f32.mrf.mxu0
      %12359 = vmatmul.bf16.gmra.mxu0 %v6771
      %v12360 = vpop.f32.mrf.mxu0
      %v12361 = vadd.f32 %v12217, %v12360
      %v12362 = vpop.f32.mrf.mxu0
      %v12363 = vadd.f32 %v12217, %v12362
      %12364 = vmatmul.bf16.gmra.mxu0 %v8354
      %v12365 = vpop.f32.mrf.mxu0
      %v12366 = vpop.f32.mrf.mxu0
      %v12367 = vadd.f32 %v12217, %v12366
      %12368 = vmatmul.bf16.gmra.mxu0 %v8357
      %v12369 = vpop.f32.mrf.mxu0
      %v12370 = vadd.f32 %v12217, %v12369
      %v12371 = vpop.f32.mrf.mxu0
      %12372 = vmatmul.bf16.gmra.mxu0 %v6773
      %v12373 = vpop.f32.mrf.mxu0
      %v12374 = vadd.f32 %v12217, %v12373
      %v12375 = vpop.f32.mrf.mxu0
      %v12376 = vadd.f32 %v12217, %v12375
      %12377 = vmatmul.bf16.gmra.mxu0 %v8362
      %v12378 = vpop.f32.mrf.mxu0
      %v12379 = vpop.f32.mrf.mxu0
      %v12380 = vadd.f32 %v12217, %v12379
      %12381 = vmatmul.bf16.gmra.mxu0 %v8365
      %v12382 = vpop.f32.mrf.mxu0
      %v12383 = vadd.f32 %v12217, %v12382
      %v12384 = vpop.f32.mrf.mxu0
      %12385 = vdwg.mxu0
      %12386 = vmatpush.bf16.msra.mxu0 0
      %12387 = vmatpush.bf16.msra.mxu0 0
      %12388 = vmatpush.bf16.msra.mxu0 0
      %12389 = vmatpush.bf16.msra.mxu0 0
      %12390 = vmatpush.bf16.msra.mxu0 0
      %12391 = vmatpush.bf16.msra.mxu0 0
      %12392 = vmatpush.bf16.msra.mxu0 0
      %12393 = vmatpush.bf16.msra.mxu0 %v12271
      %12394 = vmatmul.bf16.gmra.mxu0 %v5866
      %v12395 = vpop.f32.mrf.mxu0
      %v12396 = vadd.f32 %v12283, %v12395
      %v12397 = vpop.f32.mrf.mxu0
      %v12398 = vadd.f32 %v12285, %v12397
      %12399 = vmatmul.bf16.gmra.mxu0 %v5868
      %v12400 = vpop.f32.mrf.mxu0
      %v12401 = vpop.f32.mrf.mxu0
      %v12402 = vadd.f32 %v12289, %v12401
      %12403 = vmatmul.bf16.gmra.mxu0 %v5870
      %v12404 = vpop.f32.mrf.mxu0
      %v12405 = vadd.f32 %v12292, %v12404
      %v12406 = vpop.f32.mrf.mxu0
      %12407 = vmatmul.bf16.gmra.mxu0 %v5872
      %v12408 = vpop.f32.mrf.mxu0
      %v12409 = vadd.f32 %v12296, %v12408
      %v12410 = vpop.f32.mrf.mxu0
      %v12411 = vadd.f32 %v12298, %v12410
      %12412 = vmatmul.bf16.gmra.mxu0 %v5874
      %v12413 = vpop.f32.mrf.mxu0
      %v12414 = vpop.f32.mrf.mxu0
      %v12415 = vadd.f32 %v12302, %v12414
      %12416 = vmatmul.bf16.gmra.mxu0 %v5876
      %v12417 = vpop.f32.mrf.mxu0
      %v12418 = vadd.f32 %v12305, %v12417
      %v12419 = vpop.f32.mrf.mxu0
      %12420 = vmatmul.bf16.gmra.mxu0 %v5878
      %v12421 = vpop.f32.mrf.mxu0
      %v12422 = vadd.f32 %v12309, %v12421
      %v12423 = vpop.f32.mrf.mxu0
      %v12424 = vadd.f32 %v12311, %v12423
      %12425 = vmatmul.bf16.gmra.mxu0 %v5880
      %v12426 = vpop.f32.mrf.mxu0
      %v12427 = vpop.f32.mrf.mxu0
      %v12428 = vadd.f32 %v12315, %v12427
      %12429 = vmatmul.bf16.gmra.mxu0 %v5882
      %v12430 = vpop.f32.mrf.mxu0
      %v12431 = vadd.f32 %v12318, %v12430
      %v12432 = vpop.f32.mrf.mxu0
      %12433 = vmatmul.bf16.gmra.mxu0 %v5884
      %v12434 = vpop.f32.mrf.mxu0
      %v12435 = vadd.f32 %v12322, %v12434
      %v12436 = vpop.f32.mrf.mxu0
      %v12437 = vadd.f32 %v12324, %v12436
      %12438 = vmatmul.bf16.gmra.mxu0 %v5886
      %v12439 = vpop.f32.mrf.mxu0
      %v12440 = vpop.f32.mrf.mxu0
      %v12441 = vadd.f32 %v12328, %v12440
      %12442 = vmatmul.bf16.gmra.mxu0 %v5888
      %v12443 = vpop.f32.mrf.mxu0
      %v12444 = vadd.f32 %v12331, %v12443
      %v12445 = vpop.f32.mrf.mxu0
      %12446 = vmatmul.bf16.gmra.mxu0 %v5890
      %v12447 = vpop.f32.mrf.mxu0
      %v12448 = vadd.f32 %v12335, %v12447
      %v12449 = vpop.f32.mrf.mxu0
      %v12450 = vadd.f32 %v12337, %v12449
      %12451 = vmatmul.bf16.gmra.mxu0 %v5892
      %v12452 = vpop.f32.mrf.mxu0
      %v12453 = vpop.f32.mrf.mxu0
      %v12454 = vadd.f32 %v12341, %v12453
      %12455 = vmatmul.bf16.gmra.mxu0 %v5894
      %v12456 = vpop.f32.mrf.mxu0
      %v12457 = vadd.f32 %v12344, %v12456
      %v12458 = vpop.f32.mrf.mxu0
      %12459 = vmatmul.bf16.gmra.mxu0 %v5896
      %v12460 = vpop.f32.mrf.mxu0
      %v12461 = vadd.f32 %v12348, %v12460
      %v12462 = vpop.f32.mrf.mxu0
      %v12463 = vadd.f32 %v12350, %v12462
      %12464 = vmatmul.bf16.gmra.mxu0 %v5898
      %v12465 = vpop.f32.mrf.mxu0
      %v12466 = vpop.f32.mrf.mxu0
      %v12467 = vadd.f32 %v12354, %v12466
      %12468 = vmatmul.bf16.gmra.mxu0 %v5900
      %v12469 = vpop.f32.mrf.mxu0
      %v12470 = vadd.f32 %v12357, %v12469
      %v12471 = vpop.f32.mrf.mxu0
      %12472 = vmatmul.bf16.gmra.mxu0 %v5902
      %v12473 = vpop.f32.mrf.mxu0
      %v12474 = vadd.f32 %v12361, %v12473
      %v12475 = vpop.f32.mrf.mxu0
      %v12476 = vadd.f32 %v12363, %v12475
      %12477 = vmatmul.bf16.gmra.mxu0 %v5904
      %v12478 = vpop.f32.mrf.mxu0
      %v12479 = vpop.f32.mrf.mxu0
      %v12480 = vadd.f32 %v12367, %v12479
      %12481 = vmatmul.bf16.gmra.mxu0 %v5906
      %v12482 = vpop.f32.mrf.mxu0
      %v12483 = vadd.f32 %v12370, %v12482
      %v12484 = vpop.f32.mrf.mxu0
      %12485 = vmatmul.bf16.gmra.mxu0 %v5908
      %v12486 = vpop.f32.mrf.mxu0
      %v12487 = vadd.f32 %v12374, %v12486
      %v12488 = vpop.f32.mrf.mxu0
      %v12489 = vadd.f32 %v12376, %v12488
      %12490 = vmatmul.bf16.gmra.mxu0 %v5910
      %v12491 = vpop.f32.mrf.mxu0
      %v12492 = vpop.f32.mrf.mxu0
      %v12493 = vadd.f32 %v12380, %v12492
      %12494 = vmatmul.bf16.gmra.mxu0 %v5912
      %v12495 = vpop.f32.mrf.mxu0
      %v12496 = vadd.f32 %v12383, %v12495
      %v12497 = vpop.f32.mrf.mxu0
      %12498 = vdwg.mxu0
      %v12499 = vadd.f32 %v12166, %v12396
      %v12500 = vadd.f32 %v12167, %v12398
      %v12501 = vadd.f32 %v12168, %v12402
      %v12502 = vadd.f32 %v12169, %v12405
      %v12503 = vadd.f32 %v12170, %v12409
      %v12504 = vadd.f32 %v12171, %v12411
      %v12505 = vadd.f32 %v12172, %v12415
      %v12506 = vadd.f32 %v12173, %v12418
      %v12507 = vadd.f32 %v12174, %v12422
      %v12508 = vadd.f32 %v12175, %v12424
      %v12509 = vadd.f32 %v12176, %v12428
      %v12510 = vadd.f32 %v12177, %v12431
      %v12511 = vadd.f32 %v12178, %v12435
      %v12512 = vadd.f32 %v12179, %v12437
      %v12513 = vadd.f32 %v12180, %v12441
      %v12514 = vadd.f32 %v12181, %v12444
      %v12515 = vadd.f32 %v12182, %v12448
      %v12516 = vadd.f32 %v12183, %v12450
      %v12517 = vadd.f32 %v12184, %v12454
      %v12518 = vadd.f32 %v12185, %v12457
      %v12519 = vadd.f32 %v12186, %v12461
      %v12520 = vadd.f32 %v12187, %v12463
      %v12521 = vadd.f32 %v12188, %v12467
      %v12522 = vadd.f32 %v12189, %v12470
      %v12523 = vadd.f32 %v12190, %v12474
      %v12524 = vadd.f32 %v12191, %v12476
      %v12525 = vadd.f32 %v12192, %v12480
      %v12526 = vadd.f32 %v12193, %v12483
      %v12527 = vadd.f32 %v12194, %v12487
      %v12528 = vadd.f32 %v12195, %v12489
      %v12529 = vadd.f32 %v12196, %v12493
      %v12530 = vadd.f32 %v12197, %v12496
      %12531 = vst.msk [vmem:[%s483] sm:$0xff] %vm5859, %v12499
      %12532 = vst.msk [vmem:[%s483 + $0x8] sm:$0xff] %vm5859, %v12500
      %12533 = vst.msk [vmem:[%s483 + $0x10] sm:$0xff] %vm5859, %v12501
      %12534 = vst.msk [vmem:[%s483 + $0x18] sm:$0xff] %vm5859, %v12502
      %12535 = vst.msk [vmem:[%s483 + $0x20] sm:$0xff] %vm5859, %v12503
      %12536 = vst.msk [vmem:[%s483 + $0x28] sm:$0xff] %vm5859, %v12504
      %12537 = vst.msk [vmem:[%s483 + $0x30] sm:$0xff] %vm5859, %v12505
      %12538 = vst.msk [vmem:[%s483 + $0x38] sm:$0xff] %vm5859, %v12506
      %12539 = vst.msk [vmem:[%s483 + $0x40] sm:$0xff] %vm5859, %v12507
      %12540 = vst.msk [vmem:[%s483 + $0x48] sm:$0xff] %vm5859, %v12508
      %12541 = vst.msk [vmem:[%s483 + $0x50] sm:$0xff] %vm5859, %v12509
      %12542 = vst.msk [vmem:[%s483 + $0x58] sm:$0xff] %vm5859, %v12510
      %12543 = vst.msk [vmem:[%s483 + $0x60] sm:$0xff] %vm5859, %v12511
      %12544 = vst.msk [vmem:[%s483 + $0x68] sm:$0xff] %vm5859, %v12512
      %12545 = vst.msk [vmem:[%s483 + $0x70] sm:$0xff] %vm5859, %v12513
      %12546 = vst.msk [vmem:[%s483 + $0x78] sm:$0xff] %vm5859, %v12514
      %12547 = vst.msk [vmem:[%s483 + $0x80] sm:$0xff] %vm5859, %v12515
      %12548 = vst.msk [vmem:[%s483 + $0x88] sm:$0xff] %vm5859, %v12516
      %12549 = vst.msk [vmem:[%s483 + $0x90] sm:$0xff] %vm5859, %v12517
      %12550 = vst.msk [vmem:[%s483 + $0x98] sm:$0xff] %vm5859, %v12518
      %12551 = vst.msk [vmem:[%s483 + $0xa0] sm:$0xff] %vm5859, %v12519
      %12552 = vst.msk [vmem:[%s483 + $0xa8] sm:$0xff] %vm5859, %v12520
      %12553 = vst.msk [vmem:[%s483 + $0xb0] sm:$0xff] %vm5859, %v12521
      %12554 = vst.msk [vmem:[%s483 + $0xb8] sm:$0xff] %vm5859, %v12522
      %12555 = vst.msk [vmem:[%s483 + $0xc0] sm:$0xff] %vm5859, %v12523
      %12556 = vst.msk [vmem:[%s483 + $0xc8] sm:$0xff] %vm5859, %v12524
      %12557 = vst.msk [vmem:[%s483 + $0xd0] sm:$0xff] %vm5859, %v12525
      %12558 = vst.msk [vmem:[%s483 + $0xd8] sm:$0xff] %vm5859, %v12526
      %12559 = vst.msk [vmem:[%s483 + $0xe0] sm:$0xff] %vm5859, %v12527
      %12560 = vst.msk [vmem:[%s483 + $0xe8] sm:$0xff] %vm5859, %v12528
      %12561 = vst.msk [vmem:[%s483 + $0xf0] sm:$0xff] %vm5859, %v12529
      %12562 = vst.msk [vmem:[%s483 + $0xf8] sm:$0xff] %vm5859, %v12530
      %s12563 = smul.u32 16, %s29
      %p12564 = scmp.lt.s32.totalorder %s28, 1
      %s12565 = scalar_select %p12564, %s28, 1
      %p12566 = scmp.lt.s32.totalorder %s12563, 15
      %s12567 = scalar_select %p12566, %s12563, 15
      %s12568 = smul.addr %s12567, 2
      %s12569 = smul.addr %s12565, 32
      %s12570 = sadd.s32 %s12568, %s12569
      %s12571 = smul.addr %s12570, 8
      %s12572 = scalar_lea.vmem %s13, %s12571
      // Predicated region
      $region73: #{skip_blocks_forward.1} parent=71 // pred_check
        %p12573 = pneg %p336
      $region74: #{skip_blocks_forward.1} parent=71 // pred_check_branch
        %12575 = sbr.rel (%p12573) target = $region76
      $region75: #{skip_blocks_forward.1} parent=71 // pred_region
        %s12576 = smul.u32 16, %s29
      $region76: #{skip_blocks_forward.1} parent=71 // pred_fallthru
        _
    $region72: #{skip_blocks_forward.1} parent=5 // pred_fallthru
      _
    %p12577 = scmp.le.s32.totalorder 2, %s19
    // Predicated region
    $region77: #{skip_blocks_forward.1} parent=5 // pred_check
      %p12578 = pneg %p12577
    $region78: #{skip_blocks_forward.1} parent=5 // pred_check_branch
      %12580 = sbr.rel (%p12578) target = $region80
    $region79: #{skip_blocks_forward.1} parent=5 // pred_region
      %s12581 = ssub.s32 %s19, 2
      // Predicated region
      $region81: #{skip_blocks_forward.1} parent=79 // pred_check
        %p12582 = pneg %p342
      $region82: #{skip_blocks_forward.1} parent=79 // pred_check_branch
        %12584 = sbr.rel (%p12582) target = $region84
      $region83: #{skip_blocks_forward.1} parent=79 // pred_region
        %s12585 = smul.u32 16, %s31
        %p12586 = scmp.lt.s32.totalorder %s30, 1
        %s12587 = scalar_select %p12586, %s30, 1
        %p12588 = scmp.lt.s32.totalorder %s12585, 15
        %s12589 = scalar_select %p12588, %s12585, 15
        %s12590 = smul.addr %s12589, 2
        %s12591 = smul.addr %s12587, 32
        %s12592 = sadd.s32 %s12590, %s12591
        %s12593 = smul.addr %s12592, 8
        %s12594 = scalar_lea.vmem %s13, %s12593
      $region84: #{skip_blocks_forward.1} parent=79 // pred_fallthru
        _
    $region80: #{skip_blocks_forward.1} parent=5 // pred_fallthru
      _
  $region6: #{skip_blocks_forward.1} parent=0 // loop_footer
    %s23 = sadd.s32 1, %s19
  $region7: #{skip_blocks_forward.1} parent=0 // loop_footer_branch
    %18 = sbr.rel target = $region3
  $region8: #{skip_blocks_forward.1} parent=0 // loop_exit
    _

</llo_original>
